<compile_context>
chip_gen: v6e
topology: v6e:2x2x1
jax: 0.10.0
libtpu: 0.0.40
codegen_flags: <defaults>
</compile_context>

<pallas_src>
import functools

import jax
import jax.numpy as jnp
from jax.experimental import pallas as pl
from jax.experimental.pallas import tpu as pltpu

C_PAD = 128  # lane-padded channel width used inside the kernel


# ------------------------------------------------------------------ kernel


def _encoder_kernel(*refs, cfgs, L, HALO, CP):
    """Fused 14-layer encoder for one batch element.

    refs = (x_ref,
            w_0, b_0, ..., w_{n-1}, b_{n-1},
            o_ref,
            buf0, buf1)

    x_ref : [L, CP]            bf16, channel-padded input
    w_i   : [K_i*CP, Cout_i]   bf16, BN-scale-folded, channel-padded conv weight
    b_i   : [1, Cout_i]        f32,  BN shift (bias)
    o_ref : [L, CP]            f32,  channel-padded output
    buf*  : [L + 2*HALO, CP]   bf16 ping-pong activation scratch (zero halo)
    """
    n = len(cfgs)
    x_ref = refs[0]
    w_refs = refs[1:1 + 2 * n:2]
    b_refs = refs[2:2 + 2 * n:2]
    o_ref = refs[1 + 2 * n]
    buf0 = refs[2 + 2 * n]
    buf1 = refs[3 + 2 * n]

    # Zero both buffers once (halos must be zero for every layer's 'same' pad),
    # then drop the input into the valid region of buffer 0.
    buf0[...] = jnp.zeros_like(buf0)
    buf1[...] = jnp.zeros_like(buf1)
    buf0[HALO:HALO + L, :] = x_ref[...]

    bufs = (buf0, buf1)
    src = 0
    for li, cfg in enumerate(cfgs):  # static unroll over the 14 layers
        K, dil, kind = cfg["K"], cfg["dil"], cfg["kind"]
        pad = (K - 1) * dil // 2
        xbuf = bufs[src]
        s0 = HALO - pad

        # Collapse the K dilated taps into one lane-concatenated operand and do a
        # single bf16 MXU matmul with f32 accumulation.
        if K == 1:
            xt = xbuf[HALO:HALO + L, :]
        else:
            xt = jnp.concatenate(
                [xbuf[s0 + k * dil: s0 + k * dil + L, :] for k in range(K)],
                axis=-1)
        h = jnp.dot(xt, w_refs[li][...], preferred_element_type=jnp.float32)
        h = h + b_refs[li][...]  # BN shift (f32)

        if kind == "conv":
            if cfg["relu"]:
                h = jnp.maximum(h, 0.0)
            y = h
        else:
            # Highway: gate half lives in lanes [0:CP), content half in [CP:2CP)
            # (both lane-aligned at a 128 boundary).
            gate = jax.nn.sigmoid(h[:, :CP])
            content = h[:, CP:]
            x_in = xbuf[HALO:HALO + L, :].astype(jnp.float32)
            y = content * gate + x_in * (1.0 - gate)

        if li == n - 1:
            o_ref[...] = y.astype(o_ref.dtype)
        else:
            bufs[1 - src][HALO:HALO + L, :] = y.astype(buf0.dtype)
        src = 1 - src


# --------------------------------------------------------------- the encoder


def make_layer_configs(input_dim, output_dim):
    cfgs = [
        dict(kind="conv", K=1, dil=1, relu=True, cin=input_dim, cout=output_dim),
        dict(kind="conv", K=1, dil=1, relu=False, cin=output_dim, cout=output_dim),
    ]
    for _ in range(2):
        for i in range(4):
            cfgs.append(dict(kind="hw", K=3, dil=3 ** i, cin=output_dim, cout=output_dim))
    for _ in range(2):
        cfgs.append(dict(kind="hw", K=3, dil=1, cin=output_dim, cout=output_dim))
    for _ in range(2):
        cfgs.append(dict(kind="hw", K=1, dil=1, cin=output_dim, cout=output_dim))
    return cfgs


def init_params(key, cfgs, eps=1e-5):
    """Deterministic synthetic parameters.

    Conv has no bias; BatchNorm(eval, running_mean=0, running_var=1) is folded into
    the conv weight (scale) and a bias (shift).  Weights are channel-padded to the
    kernel's 128-lane layout, tap-flattened to [K*C_PAD, Cout_pad], and cast bf16.
    For highway layers the gate half goes to output lanes [0:C_PAD) and the content
    half to [C_PAD:2*C_PAD).
    """
    params = []
    for cfg in cfgs:
        K, cin, cout = cfg["K"], cfg["cin"], cfg["cout"]
        is_hw = cfg["kind"] == "hw"
        cout_eff = cout * (2 if is_hw else 1)
        key, kw, kg, kb = jax.random.split(key, 4)
        w = 0.05 * jax.random.normal(kw, (K, cin, cout_eff), jnp.float32)
        gamma = 1.0 + 0.1 * jax.random.normal(kg, (cout_eff,), jnp.float32)
        beta = 0.1 * jax.random.normal(kb, (cout_eff,), jnp.float32)

        scale = gamma / jnp.sqrt(1.0 + eps)      # BN eval scale
        w_folded = w * scale[None, None, :]      # fold scale into conv weight
        bias = beta                              # BN eval shift

        cout_pad = C_PAD * (2 if is_hw else 1)
        wp = jnp.zeros((K, C_PAD, cout_pad), jnp.float32)
        bp = jnp.zeros((cout_pad,), jnp.float32)
        if is_hw:
            wp = wp.at[:, :cin, :cout].set(w_folded[:, :, :cout])                # gate
            wp = wp.at[:, :cin, C_PAD:C_PAD + cout].set(w_folded[:, :, cout:])   # content
            bp = bp.at[:cout].set(bias[:cout])
            bp = bp.at[C_PAD:C_PAD + cout].set(bias[cout:])
        else:
            wp = wp.at[:, :cin, :cout].set(w_folded)
            bp = bp.at[:cout].set(bias)

        params.append(dict(
            w=wp.reshape(K * C_PAD, cout_pad).astype(jnp.bfloat16),
            b=bp.reshape(1, cout_pad),
        ))
    return params


def convolutional_encoder_forward(x, cfgs, params, output_dim):
    """x: [B*N, L, F] channel-last (groups=1 so the group-reshape is identity).

    Returns [B*N, L, output_dim] (same layout as the PyTorch module's output).
    """
    B, L, F = x.shape
    n = len(cfgs)

    # One-time input prep: pad channels to the 128-lane layout and cast to bf16.
    x_p = jnp.pad(x, ((0, 0), (0, 0), (0, C_PAD - F))).astype(jnp.bfloat16)

    # Halo large enough for the biggest dilated receptive field of a single layer,
    # rounded up to a multiple of 16 (bf16 sublane packing).
    max_pad = max((c["K"] - 1) * c["dil"] // 2 for c in cfgs)
    HALO = ((max_pad + 15) // 16) * 16

    in_specs = [pl.BlockSpec((None, L, C_PAD), lambda b: (b, 0, 0))]
    args = [x_p]
    for p in params:
        in_specs.append(pl.BlockSpec(p["w"].shape, lambda b: (0, 0)))
        in_specs.append(pl.BlockSpec(p["b"].shape, lambda b: (0, 0)))
        args += [p["w"], p["b"]]

    out = pl.pallas_call(
        functools.partial(_encoder_kernel, cfgs=cfgs, L=L, HALO=HALO, CP=C_PAD),
        grid=(B,),
        out_shape=jax.ShapeDtypeStruct((B, L, C_PAD), jnp.float32),
        in_specs=in_specs,
        out_specs=pl.BlockSpec((None, L, C_PAD), lambda b: (b, 0, 0)),
        scratch_shapes=[
            pltpu.VMEM((L + 2 * HALO, C_PAD), jnp.bfloat16),
            pltpu.VMEM((L + 2 * HALO, C_PAD), jnp.bfloat16),
        ],
        compiler_params=pltpu.CompilerParams(
            dimension_semantics=("parallel",),
            vmem_limit_bytes=32 * 1024 * 1024,
        ),
    )(*args)

    # Padded channels are identically zero through the stack; slice them off.
    return out[:, :, :output_dim]


# ---------------------------------------------------------------------- main

if __name__ == "__main__":
    B = 2            # batch (B * N with N = groups = 1)
    L = 32           # sequence length
    INPUT_DIM = 16   # character-embedding size F
    OUTPUT_DIM = 32  # encoder channels C

    key = jax.random.PRNGKey(0)
    kx, kp = jax.random.split(key)
    x = jax.random.normal(kx, (B, L, INPUT_DIM), jnp.float32)

    cfgs = make_layer_configs(INPUT_DIM, OUTPUT_DIM)
    params = init_params(kp, cfgs)

    fwd = jax.jit(lambda xx: convolutional_encoder_forward(xx, cfgs, params, OUTPUT_DIM))
    out = fwd(x)
    jax.block_until_ready(out)

    assert out.shape == (B, L, OUTPUT_DIM), out.shape
    assert bool(jnp.all(jnp.isfinite(out)))
    print("KERNEL_OK")
</pallas_src>

<mosaic_0001>
module attributes {stable_mosaic.version = 11 : i64} {
  func.func @_encoder_kernel(%arg0: i32, %arg1: memref<1x32x128xbf16, #tpu.memory_space<vmem>>, %arg2: memref<128x128xbf16, #tpu.memory_space<vmem>>, %arg3: memref<1x128xf32, #tpu.memory_space<vmem>>, %arg4: memref<128x128xbf16, #tpu.memory_space<vmem>>, %arg5: memref<1x128xf32, #tpu.memory_space<vmem>>, %arg6: memref<384x256xbf16, #tpu.memory_space<vmem>>, %arg7: memref<1x256xf32, #tpu.memory_space<vmem>>, %arg8: memref<384x256xbf16, #tpu.memory_space<vmem>>, %arg9: memref<1x256xf32, #tpu.memory_space<vmem>>, %arg10: memref<384x256xbf16, #tpu.memory_space<vmem>>, %arg11: memref<1x256xf32, #tpu.memory_space<vmem>>, %arg12: memref<384x256xbf16, #tpu.memory_space<vmem>>, %arg13: memref<1x256xf32, #tpu.memory_space<vmem>>, %arg14: memref<384x256xbf16, #tpu.memory_space<vmem>>, %arg15: memref<1x256xf32, #tpu.memory_space<vmem>>, %arg16: memref<384x256xbf16, #tpu.memory_space<vmem>>, %arg17: memref<1x256xf32, #tpu.memory_space<vmem>>, %arg18: memref<384x256xbf16, #tpu.memory_space<vmem>>, %arg19: memref<1x256xf32, #tpu.memory_space<vmem>>, %arg20: memref<384x256xbf16, #tpu.memory_space<vmem>>, %arg21: memref<1x256xf32, #tpu.memory_space<vmem>>, %arg22: memref<384x256xbf16, #tpu.memory_space<vmem>>, %arg23: memref<1x256xf32, #tpu.memory_space<vmem>>, %arg24: memref<384x256xbf16, #tpu.memory_space<vmem>>, %arg25: memref<1x256xf32, #tpu.memory_space<vmem>>, %arg26: memref<128x256xbf16, #tpu.memory_space<vmem>>, %arg27: memref<1x256xf32, #tpu.memory_space<vmem>>, %arg28: memref<128x256xbf16, #tpu.memory_space<vmem>>, %arg29: memref<1x256xf32, #tpu.memory_space<vmem>>, %arg30: memref<1x32x128xf32, #tpu.memory_space<vmem>>, %arg31: memref<96x128xbf16, #tpu.memory_space<vmem>>, %arg32: memref<96x128xbf16, #tpu.memory_space<vmem>>) attributes {dimension_semantics = [#tpu.dimension_semantics<parallel>], iteration_bounds = array<i64: 2>, scalar_prefetch = 0 : i64, scratch_operands = 2 : i64, tpu.core_type = #tpu.core_type<tc>, window_params = [{transform_indices = @transform_0, window_bounds = array<i64: 1, 32, 128>}, {pipeline_mode = #tpu.pipeline_mode<synchronous>, transform_indices = @transform_1, window_bounds = array<i64: 128, 128>}, {pipeline_mode = #tpu.pipeline_mode<synchronous>, transform_indices = @transform_2, window_bounds = array<i64: 1, 128>}, {pipeline_mode = #tpu.pipeline_mode<synchronous>, transform_indices = @transform_3, window_bounds = array<i64: 128, 128>}, {pipeline_mode = #tpu.pipeline_mode<synchronous>, transform_indices = @transform_4, window_bounds = array<i64: 1, 128>}, {pipeline_mode = #tpu.pipeline_mode<synchronous>, transform_indices = @transform_5, window_bounds = array<i64: 384, 256>}, {pipeline_mode = #tpu.pipeline_mode<synchronous>, transform_indices = @transform_6, window_bounds = array<i64: 1, 256>}, {pipeline_mode = #tpu.pipeline_mode<synchronous>, transform_indices = @transform_7, window_bounds = array<i64: 384, 256>}, {pipeline_mode = #tpu.pipeline_mode<synchronous>, transform_indices = @transform_8, window_bounds = array<i64: 1, 256>}, {pipeline_mode = #tpu.pipeline_mode<synchronous>, transform_indices = @transform_9, window_bounds = array<i64: 384, 256>}, {pipeline_mode = #tpu.pipeline_mode<synchronous>, transform_indices = @transform_10, window_bounds = array<i64: 1, 256>}, {pipeline_mode = #tpu.pipeline_mode<synchronous>, transform_indices = @transform_11, window_bounds = array<i64: 384, 256>}, {pipeline_mode = #tpu.pipeline_mode<synchronous>, transform_indices = @transform_12, window_bounds = array<i64: 1, 256>}, {pipeline_mode = #tpu.pipeline_mode<synchronous>, transform_indices = @transform_13, window_bounds = array<i64: 384, 256>}, {pipeline_mode = #tpu.pipeline_mode<synchronous>, transform_indices = @transform_14, window_bounds = array<i64: 1, 256>}, {pipeline_mode = #tpu.pipeline_mode<synchronous>, transform_indices = @transform_15, window_bounds = array<i64: 384, 256>}, {pipeline_mode = #tpu.pipeline_mode<synchronous>, transform_indices = @transform_16, window_bounds = array<i64: 1, 256>}, {pipeline_mode = #tpu.pipeline_mode<synchronous>, transform_indices = @transform_17, window_bounds = array<i64: 384, 256>}, {pipeline_mode = #tpu.pipeline_mode<synchronous>, transform_indices = @transform_18, window_bounds = array<i64: 1, 256>}, {pipeline_mode = #tpu.pipeline_mode<synchronous>, transform_indices = @transform_19, window_bounds = array<i64: 384, 256>}, {pipeline_mode = #tpu.pipeline_mode<synchronous>, transform_indices = @transform_20, window_bounds = array<i64: 1, 256>}, {pipeline_mode = #tpu.pipeline_mode<synchronous>, transform_indices = @transform_21, window_bounds = array<i64: 384, 256>}, {pipeline_mode = #tpu.pipeline_mode<synchronous>, transform_indices = @transform_22, window_bounds = array<i64: 1, 256>}, {pipeline_mode = #tpu.pipeline_mode<synchronous>, transform_indices = @transform_23, window_bounds = array<i64: 384, 256>}, {pipeline_mode = #tpu.pipeline_mode<synchronous>, transform_indices = @transform_24, window_bounds = array<i64: 1, 256>}, {pipeline_mode = #tpu.pipeline_mode<synchronous>, transform_indices = @transform_25, window_bounds = array<i64: 128, 256>}, {pipeline_mode = #tpu.pipeline_mode<synchronous>, transform_indices = @transform_26, window_bounds = array<i64: 1, 256>}, {pipeline_mode = #tpu.pipeline_mode<synchronous>, transform_indices = @transform_27, window_bounds = array<i64: 128, 256>}, {pipeline_mode = #tpu.pipeline_mode<synchronous>, transform_indices = @transform_28, window_bounds = array<i64: 1, 256>}, {transform_indices = @transform_29, window_bounds = array<i64: 1, 32, 128>}]} {
    %cst = arith.constant 0.000000e+00 : bf16
    %0 = vector.broadcast %cst : bf16 to vector<96x128xbf16>
    %c0 = arith.constant 0 : index
    %c0_0 = arith.constant 0 : index
    %1 = vector.load %arg31[%c0, %c0_0] : memref<96x128xbf16, #tpu.memory_space<vmem>>, vector<96x128xbf16>
    tpu.vector_store %arg31[%c0, %c0_0], %0 {strides = array<i32>} : memref<96x128xbf16, #tpu.memory_space<vmem>>, vector<96x128xbf16>,
    %cst_1 = arith.constant 0.000000e+00 : bf16
    %2 = vector.broadcast %cst_1 : bf16 to vector<96x128xbf16>
    %c0_2 = arith.constant 0 : index
    %c0_3 = arith.constant 0 : index
    %3 = vector.load %arg32[%c0_2, %c0_3] : memref<96x128xbf16, #tpu.memory_space<vmem>>, vector<96x128xbf16>
    tpu.vector_store %arg32[%c0_2, %c0_3], %2 {strides = array<i32>} : memref<96x128xbf16, #tpu.memory_space<vmem>>, vector<96x128xbf16>,
    %c0_4 = arith.constant 0 : index
    %c0_5 = arith.constant 0 : index
    %c0_6 = arith.constant 0 : index
    %4 = vector.load %arg1[%c0_4, %c0_5, %c0_6] : memref<1x32x128xbf16, #tpu.memory_space<vmem>>, vector<1x32x128xbf16>
    %5 = vector.shape_cast %4 : vector<1x32x128xbf16> to vector<32x128xbf16>
    %c32 = arith.constant 32 : index
    %c0_7 = arith.constant 0 : index
    %6 = vector.load %arg31[%c32, %c0_7] : memref<96x128xbf16, #tpu.memory_space<vmem>>, vector<32x128xbf16>
    tpu.vector_store %arg31[%c32, %c0_7], %5 {strides = array<i32>} : memref<96x128xbf16, #tpu.memory_space<vmem>>, vector<32x128xbf16>,
    %c32_8 = arith.constant 32 : index
    %c0_9 = arith.constant 0 : index
    %7 = vector.load %arg31[%c32_8, %c0_9] : memref<96x128xbf16, #tpu.memory_space<vmem>>, vector<32x128xbf16>
    %c0_10 = arith.constant 0 : index
    %c0_11 = arith.constant 0 : index
    %8 = vector.load %arg2[%c0_10, %c0_11] : memref<128x128xbf16, #tpu.memory_space<vmem>>, vector<128x128xbf16>
    %cst_12 = arith.constant dense<0.000000e+00> : vector<32x128xf32>
    %9 = tpu.matmul %7, %8, %cst_12 {dimension_numbers = #tpu.dot_dimension_numbers<[1], [0], [0], [1], [0, 0, 1, 1], [], []>} : vector<32x128xbf16>, vector<128x128xbf16>, vector<32x128xf32> -> vector<32x128xf32>
    %c0_13 = arith.constant 0 : index
    %c0_14 = arith.constant 0 : index
    %10 = vector.load %arg3[%c0_13, %c0_14] : memref<1x128xf32, #tpu.memory_space<vmem>>, vector<1x128xf32>
    %11 = vector.broadcast %10 : vector<1x128xf32> to vector<32x128xf32>
    %12 = arith.addf %9, %11 : vector<32x128xf32>
    %cst_15 = arith.constant 0.000000e+00 : f32
    %13 = vector.broadcast %cst_15 : f32 to vector<32x128xf32>
    %14 = arith.maximumf %12, %13 : vector<32x128xf32>
    %15 = arith.truncf %14 : vector<32x128xf32> to vector<32x128xbf16>
    %c32_16 = arith.constant 32 : index
    %c0_17 = arith.constant 0 : index
    %16 = vector.load %arg32[%c32_16, %c0_17] : memref<96x128xbf16, #tpu.memory_space<vmem>>, vector<32x128xbf16>
    tpu.vector_store %arg32[%c32_16, %c0_17], %15 {strides = array<i32>} : memref<96x128xbf16, #tpu.memory_space<vmem>>, vector<32x128xbf16>,
    %c32_18 = arith.constant 32 : index
    %c0_19 = arith.constant 0 : index
    %17 = vector.load %arg32[%c32_18, %c0_19] : memref<96x128xbf16, #tpu.memory_space<vmem>>, vector<32x128xbf16>
    %c0_20 = arith.constant 0 : index
    %c0_21 = arith.constant 0 : index
    %18 = vector.load %arg4[%c0_20, %c0_21] : memref<128x128xbf16, #tpu.memory_space<vmem>>, vector<128x128xbf16>
    %cst_22 = arith.constant dense<0.000000e+00> : vector<32x128xf32>
    %19 = tpu.matmul %17, %18, %cst_22 {dimension_numbers = #tpu.dot_dimension_numbers<[1], [0], [0], [1], [0, 0, 1, 1], [], []>} : vector<32x128xbf16>, vector<128x128xbf16>, vector<32x128xf32> -> vector<32x128xf32>
    %c0_23 = arith.constant 0 : index
    %c0_24 = arith.constant 0 : index
    %20 = vector.load %arg5[%c0_23, %c0_24] : memref<1x128xf32, #tpu.memory_space<vmem>>, vector<1x128xf32>
    %21 = vector.broadcast %20 : vector<1x128xf32> to vector<32x128xf32>
    %22 = arith.addf %19, %21 : vector<32x128xf32>
    %23 = arith.truncf %22 : vector<32x128xf32> to vector<32x128xbf16>
    %c32_25 = arith.constant 32 : index
    %c0_26 = arith.constant 0 : index
    %24 = vector.load %arg31[%c32_25, %c0_26] : memref<96x128xbf16, #tpu.memory_space<vmem>>, vector<32x128xbf16>
    tpu.vector_store %arg31[%c32_25, %c0_26], %23 {strides = array<i32>} : memref<96x128xbf16, #tpu.memory_space<vmem>>, vector<32x128xbf16>,
    %c31 = arith.constant 31 : index
    %c0_27 = arith.constant 0 : index
    %25 = vector.load %arg31[%c31, %c0_27] : memref<96x128xbf16, #tpu.memory_space<vmem>>, vector<32x128xbf16>
    %c32_28 = arith.constant 32 : index
    %c0_29 = arith.constant 0 : index
    %26 = vector.load %arg31[%c32_28, %c0_29] : memref<96x128xbf16, #tpu.memory_space<vmem>>, vector<32x128xbf16>
    %c33 = arith.constant 33 : index
    %c0_30 = arith.constant 0 : index
    %27 = vector.load %arg31[%c33, %c0_30] : memref<96x128xbf16, #tpu.memory_space<vmem>>, vector<32x128xbf16>
    %28 = tpu.concatenate %25, %26, %27 in 1 : vector<32x128xbf16>, vector<32x128xbf16>, vector<32x128xbf16> -> vector<32x384xbf16>
    %c0_31 = arith.constant 0 : index
    %c0_32 = arith.constant 0 : index
    %29 = vector.load %arg6[%c0_31, %c0_32] : memref<384x256xbf16, #tpu.memory_space<vmem>>, vector<384x256xbf16>
    %cst_33 = arith.constant dense<0.000000e+00> : vector<32x256xf32>
    %30 = tpu.matmul %28, %29, %cst_33 {dimension_numbers = #tpu.dot_dimension_numbers<[1], [0], [0], [1], [0, 0, 1, 1], [], []>} : vector<32x384xbf16>, vector<384x256xbf16>, vector<32x256xf32> -> vector<32x256xf32>
    %c0_34 = arith.constant 0 : index
    %c0_35 = arith.constant 0 : index
    %31 = vector.load %arg7[%c0_34, %c0_35] : memref<1x256xf32, #tpu.memory_space<vmem>>, vector<1x256xf32>
    %32 = vector.broadcast %31 : vector<1x256xf32> to vector<32x256xf32>
    %33 = arith.addf %30, %32 : vector<32x256xf32>
    %34 = vector.extract_strided_slice %33 {offsets = [0, 0], sizes = [32, 128], strides = [1, 1]} : vector<32x256xf32> to vector<32x128xf32>
    %35 = arith.negf %34 : vector<32x128xf32>
    %36 = math.exp %35 : vector<32x128xf32>
    %cst_36 = arith.constant 1.000000e+00 : f32
    %37 = vector.broadcast %cst_36 : f32 to vector<32x128xf32>
    %38 = arith.addf %37, %36 : vector<32x128xf32>
    %39 = arith.divf %37, %38 : vector<32x128xf32>
    %40 = vector.extract_strided_slice %33 {offsets = [0, 128], sizes = [32, 128], strides = [1, 1]} : vector<32x256xf32> to vector<32x128xf32>
    %c32_37 = arith.constant 32 : index
    %c0_38 = arith.constant 0 : index
    %41 = vector.load %arg31[%c32_37, %c0_38] : memref<96x128xbf16, #tpu.memory_space<vmem>>, vector<32x128xbf16>
    %42 = arith.extf %41 : vector<32x128xbf16> to vector<32x128xf32>
    %43 = arith.mulf %40, %39 : vector<32x128xf32>
    %cst_39 = arith.constant 1.000000e+00 : f32
    %44 = vector.broadcast %cst_39 : f32 to vector<32x128xf32>
    %45 = arith.subf %44, %39 : vector<32x128xf32>
    %46 = arith.mulf %42, %45 : vector<32x128xf32>
    %47 = arith.addf %43, %46 : vector<32x128xf32>
    %48 = arith.truncf %47 : vector<32x128xf32> to vector<32x128xbf16>
    %c32_40 = arith.constant 32 : index
    %c0_41 = arith.constant 0 : index
    %49 = vector.load %arg32[%c32_40, %c0_41] : memref<96x128xbf16, #tpu.memory_space<vmem>>, vector<32x128xbf16>
    tpu.vector_store %arg32[%c32_40, %c0_41], %48 {strides = array<i32>} : memref<96x128xbf16, #tpu.memory_space<vmem>>, vector<32x128xbf16>,
    %c29 = arith.constant 29 : index
    %c0_42 = arith.constant 0 : index
    %50 = vector.load %arg32[%c29, %c0_42] : memref<96x128xbf16, #tpu.memory_space<vmem>>, vector<32x128xbf16>
    %c32_43 = arith.constant 32 : index
    %c0_44 = arith.constant 0 : index
    %51 = vector.load %arg32[%c32_43, %c0_44] : memref<96x128xbf16, #tpu.memory_space<vmem>>, vector<32x128xbf16>
    %c35 = arith.constant 35 : index
    %c0_45 = arith.constant 0 : index
    %52 = vector.load %arg32[%c35, %c0_45] : memref<96x128xbf16, #tpu.memory_space<vmem>>, vector<32x128xbf16>
    %53 = tpu.concatenate %50, %51, %52 in 1 : vector<32x128xbf16>, vector<32x128xbf16>, vector<32x128xbf16> -> vector<32x384xbf16>
    %c0_46 = arith.constant 0 : index
    %c0_47 = arith.constant 0 : index
    %54 = vector.load %arg8[%c0_46, %c0_47] : memref<384x256xbf16, #tpu.memory_space<vmem>>, vector<384x256xbf16>
    %cst_48 = arith.constant dense<0.000000e+00> : vector<32x256xf32>
    %55 = tpu.matmul %53, %54, %cst_48 {dimension_numbers = #tpu.dot_dimension_numbers<[1], [0], [0], [1], [0, 0, 1, 1], [], []>} : vector<32x384xbf16>, vector<384x256xbf16>, vector<32x256xf32> -> vector<32x256xf32>
    %c0_49 = arith.constant 0 : index
    %c0_50 = arith.constant 0 : index
    %56 = vector.load %arg9[%c0_49, %c0_50] : memref<1x256xf32, #tpu.memory_space<vmem>>, vector<1x256xf32>
    %57 = vector.broadcast %56 : vector<1x256xf32> to vector<32x256xf32>
    %58 = arith.addf %55, %57 : vector<32x256xf32>
    %59 = vector.extract_strided_slice %58 {offsets = [0, 0], sizes = [32, 128], strides = [1, 1]} : vector<32x256xf32> to vector<32x128xf32>
    %60 = arith.negf %59 : vector<32x128xf32>
    %61 = math.exp %60 : vector<32x128xf32>
    %cst_51 = arith.constant 1.000000e+00 : f32
    %62 = vector.broadcast %cst_51 : f32 to vector<32x128xf32>
    %63 = arith.addf %62, %61 : vector<32x128xf32>
    %64 = arith.divf %62, %63 : vector<32x128xf32>
    %65 = vector.extract_strided_slice %58 {offsets = [0, 128], sizes = [32, 128], strides = [1, 1]} : vector<32x256xf32> to vector<32x128xf32>
    %c32_52 = arith.constant 32 : index
    %c0_53 = arith.constant 0 : index
    %66 = vector.load %arg32[%c32_52, %c0_53] : memref<96x128xbf16, #tpu.memory_space<vmem>>, vector<32x128xbf16>
    %67 = arith.extf %66 : vector<32x128xbf16> to vector<32x128xf32>
    %68 = arith.mulf %65, %64 : vector<32x128xf32>
    %cst_54 = arith.constant 1.000000e+00 : f32
    %69 = vector.broadcast %cst_54 : f32 to vector<32x128xf32>
    %70 = arith.subf %69, %64 : vector<32x128xf32>
    %71 = arith.mulf %67, %70 : vector<32x128xf32>
    %72 = arith.addf %68, %71 : vector<32x128xf32>
    %73 = arith.truncf %72 : vector<32x128xf32> to vector<32x128xbf16>
    %c32_55 = arith.constant 32 : index
    %c0_56 = arith.constant 0 : index
    %74 = vector.load %arg31[%c32_55, %c0_56] : memref<96x128xbf16, #tpu.memory_space<vmem>>, vector<32x128xbf16>
    tpu.vector_store %arg31[%c32_55, %c0_56], %73 {strides = array<i32>} : memref<96x128xbf16, #tpu.memory_space<vmem>>, vector<32x128xbf16>,
    %c23 = arith.constant 23 : index
    %c0_57 = arith.constant 0 : index
    %75 = vector.load %arg31[%c23, %c0_57] : memref<96x128xbf16, #tpu.memory_space<vmem>>, vector<32x128xbf16>
    %c32_58 = arith.constant 32 : index
    %c0_59 = arith.constant 0 : index
    %76 = vector.load %arg31[%c32_58, %c0_59] : memref<96x128xbf16, #tpu.memory_space<vmem>>, vector<32x128xbf16>
    %c41 = arith.constant 41 : index
    %c0_60 = arith.constant 0 : index
    %77 = vector.load %arg31[%c41, %c0_60] : memref<96x128xbf16, #tpu.memory_space<vmem>>, vector<32x128xbf16>
    %78 = tpu.concatenate %75, %76, %77 in 1 : vector<32x128xbf16>, vector<32x128xbf16>, vector<32x128xbf16> -> vector<32x384xbf16>
    %c0_61 = arith.constant 0 : index
    %c0_62 = arith.constant 0 : index
    %79 = vector.load %arg10[%c0_61, %c0_62] : memref<384x256xbf16, #tpu.memory_space<vmem>>, vector<384x256xbf16>
    %cst_63 = arith.constant dense<0.000000e+00> : vector<32x256xf32>
    %80 = tpu.matmul %78, %79, %cst_63 {dimension_numbers = #tpu.dot_dimension_numbers<[1], [0], [0], [1], [0, 0, 1, 1], [], []>} : vector<32x384xbf16>, vector<384x256xbf16>, vector<32x256xf32> -> vector<32x256xf32>
    %c0_64 = arith.constant 0 : index
    %c0_65 = arith.constant 0 : index
    %81 = vector.load %arg11[%c0_64, %c0_65] : memref<1x256xf32, #tpu.memory_space<vmem>>, vector<1x256xf32>
    %82 = vector.broadcast %81 : vector<1x256xf32> to vector<32x256xf32>
    %83 = arith.addf %80, %82 : vector<32x256xf32>
    %84 = vector.extract_strided_slice %83 {offsets = [0, 0], sizes = [32, 128], strides = [1, 1]} : vector<32x256xf32> to vector<32x128xf32>
    %85 = arith.negf %84 : vector<32x128xf32>
    %86 = math.exp %85 : vector<32x128xf32>
    %cst_66 = arith.constant 1.000000e+00 : f32
    %87 = vector.broadcast %cst_66 : f32 to vector<32x128xf32>
    %88 = arith.addf %87, %86 : vector<32x128xf32>
    %89 = arith.divf %87, %88 : vector<32x128xf32>
    %90 = vector.extract_strided_slice %83 {offsets = [0, 128], sizes = [32, 128], strides = [1, 1]} : vector<32x256xf32> to vector<32x128xf32>
    %c32_67 = arith.constant 32 : index
    %c0_68 = arith.constant 0 : index
    %91 = vector.load %arg31[%c32_67, %c0_68] : memref<96x128xbf16, #tpu.memory_space<vmem>>, vector<32x128xbf16>
    %92 = arith.extf %91 : vector<32x128xbf16> to vector<32x128xf32>
    %93 = arith.mulf %90, %89 : vector<32x128xf32>
    %cst_69 = arith.constant 1.000000e+00 : f32
    %94 = vector.broadcast %cst_69 : f32 to vector<32x128xf32>
    %95 = arith.subf %94, %89 : vector<32x128xf32>
    %96 = arith.mulf %92, %95 : vector<32x128xf32>
    %97 = arith.addf %93, %96 : vector<32x128xf32>
    %98 = arith.truncf %97 : vector<32x128xf32> to vector<32x128xbf16>
    %c32_70 = arith.constant 32 : index
    %c0_71 = arith.constant 0 : index
    %99 = vector.load %arg32[%c32_70, %c0_71] : memref<96x128xbf16, #tpu.memory_space<vmem>>, vector<32x128xbf16>
    tpu.vector_store %arg32[%c32_70, %c0_71], %98 {strides = array<i32>} : memref<96x128xbf16, #tpu.memory_space<vmem>>, vector<32x128xbf16>,
    %c5 = arith.constant 5 : index
    %c0_72 = arith.constant 0 : index
    %100 = vector.load %arg32[%c5, %c0_72] : memref<96x128xbf16, #tpu.memory_space<vmem>>, vector<32x128xbf16>
    %c32_73 = arith.constant 32 : index
    %c0_74 = arith.constant 0 : index
    %101 = vector.load %arg32[%c32_73, %c0_74] : memref<96x128xbf16, #tpu.memory_space<vmem>>, vector<32x128xbf16>
    %c59 = arith.constant 59 : index
    %c0_75 = arith.constant 0 : index
    %102 = vector.load %arg32[%c59, %c0_75] : memref<96x128xbf16, #tpu.memory_space<vmem>>, vector<32x128xbf16>
    %103 = tpu.concatenate %100, %101, %102 in 1 : vector<32x128xbf16>, vector<32x128xbf16>, vector<32x128xbf16> -> vector<32x384xbf16>
    %c0_76 = arith.constant 0 : index
    %c0_77 = arith.constant 0 : index
    %104 = vector.load %arg12[%c0_76, %c0_77] : memref<384x256xbf16, #tpu.memory_space<vmem>>, vector<384x256xbf16>
    %cst_78 = arith.constant dense<0.000000e+00> : vector<32x256xf32>
    %105 = tpu.matmul %103, %104, %cst_78 {dimension_numbers = #tpu.dot_dimension_numbers<[1], [0], [0], [1], [0, 0, 1, 1], [], []>} : vector<32x384xbf16>, vector<384x256xbf16>, vector<32x256xf32> -> vector<32x256xf32>
    %c0_79 = arith.constant 0 : index
    %c0_80 = arith.constant 0 : index
    %106 = vector.load %arg13[%c0_79, %c0_80] : memref<1x256xf32, #tpu.memory_space<vmem>>, vector<1x256xf32>
    %107 = vector.broadcast %106 : vector<1x256xf32> to vector<32x256xf32>
    %108 = arith.addf %105, %107 : vector<32x256xf32>
    %109 = vector.extract_strided_slice %108 {offsets = [0, 0], sizes = [32, 128], strides = [1, 1]} : vector<32x256xf32> to vector<32x128xf32>
    %110 = arith.negf %109 : vector<32x128xf32>
    %111 = math.exp %110 : vector<32x128xf32>
    %cst_81 = arith.constant 1.000000e+00 : f32
    %112 = vector.broadcast %cst_81 : f32 to vector<32x128xf32>
    %113 = arith.addf %112, %111 : vector<32x128xf32>
    %114 = arith.divf %112, %113 : vector<32x128xf32>
    %115 = vector.extract_strided_slice %108 {offsets = [0, 128], sizes = [32, 128], strides = [1, 1]} : vector<32x256xf32> to vector<32x128xf32>
    %c32_82 = arith.constant 32 : index
    %c0_83 = arith.constant 0 : index
    %116 = vector.load %arg32[%c32_82, %c0_83] : memref<96x128xbf16, #tpu.memory_space<vmem>>, vector<32x128xbf16>
    %117 = arith.extf %116 : vector<32x128xbf16> to vector<32x128xf32>
    %118 = arith.mulf %115, %114 : vector<32x128xf32>
    %cst_84 = arith.constant 1.000000e+00 : f32
    %119 = vector.broadcast %cst_84 : f32 to vector<32x128xf32>
    %120 = arith.subf %119, %114 : vector<32x128xf32>
    %121 = arith.mulf %117, %120 : vector<32x128xf32>
    %122 = arith.addf %118, %121 : vector<32x128xf32>
    %123 = arith.truncf %122 : vector<32x128xf32> to vector<32x128xbf16>
    %c32_85 = arith.constant 32 : index
    %c0_86 = arith.constant 0 : index
    %124 = vector.load %arg31[%c32_85, %c0_86] : memref<96x128xbf16, #tpu.memory_space<vmem>>, vector<32x128xbf16>
    tpu.vector_store %arg31[%c32_85, %c0_86], %123 {strides = array<i32>} : memref<96x128xbf16, #tpu.memory_space<vmem>>, vector<32x128xbf16>,
    %c31_87 = arith.constant 31 : index
    %c0_88 = arith.constant 0 : index
    %125 = vector.load %arg31[%c31_87, %c0_88] : memref<96x128xbf16, #tpu.memory_space<vmem>>, vector<32x128xbf16>
    %c32_89 = arith.constant 32 : index
    %c0_90 = arith.constant 0 : index
    %126 = vector.load %arg31[%c32_89, %c0_90] : memref<96x128xbf16, #tpu.memory_space<vmem>>, vector<32x128xbf16>
    %c33_91 = arith.constant 33 : index
    %c0_92 = arith.constant 0 : index
    %127 = vector.load %arg31[%c33_91, %c0_92] : memref<96x128xbf16, #tpu.memory_space<vmem>>, vector<32x128xbf16>
    %128 = tpu.concatenate %125, %126, %127 in 1 : vector<32x128xbf16>, vector<32x128xbf16>, vector<32x128xbf16> -> vector<32x384xbf16>
    %c0_93 = arith.constant 0 : index
    %c0_94 = arith.constant 0 : index
    %129 = vector.load %arg14[%c0_93, %c0_94] : memref<384x256xbf16, #tpu.memory_space<vmem>>, vector<384x256xbf16>
    %cst_95 = arith.constant dense<0.000000e+00> : vector<32x256xf32>
    %130 = tpu.matmul %128, %129, %cst_95 {dimension_numbers = #tpu.dot_dimension_numbers<[1], [0], [0], [1], [0, 0, 1, 1], [], []>} : vector<32x384xbf16>, vector<384x256xbf16>, vector<32x256xf32> -> vector<32x256xf32>
    %c0_96 = arith.constant 0 : index
    %c0_97 = arith.constant 0 : index
    %131 = vector.load %arg15[%c0_96, %c0_97] : memref<1x256xf32, #tpu.memory_space<vmem>>, vector<1x256xf32>
    %132 = vector.broadcast %131 : vector<1x256xf32> to vector<32x256xf32>
    %133 = arith.addf %130, %132 : vector<32x256xf32>
    %134 = vector.extract_strided_slice %133 {offsets = [0, 0], sizes = [32, 128], strides = [1, 1]} : vector<32x256xf32> to vector<32x128xf32>
    %135 = arith.negf %134 : vector<32x128xf32>
    %136 = math.exp %135 : vector<32x128xf32>
    %cst_98 = arith.constant 1.000000e+00 : f32
    %137 = vector.broadcast %cst_98 : f32 to vector<32x128xf32>
    %138 = arith.addf %137, %136 : vector<32x128xf32>
    %139 = arith.divf %137, %138 : vector<32x128xf32>
    %140 = vector.extract_strided_slice %133 {offsets = [0, 128], sizes = [32, 128], strides = [1, 1]} : vector<32x256xf32> to vector<32x128xf32>
    %c32_99 = arith.constant 32 : index
    %c0_100 = arith.constant 0 : index
    %141 = vector.load %arg31[%c32_99, %c0_100] : memref<96x128xbf16, #tpu.memory_space<vmem>>, vector<32x128xbf16>
    %142 = arith.extf %141 : vector<32x128xbf16> to vector<32x128xf32>
    %143 = arith.mulf %140, %139 : vector<32x128xf32>
    %cst_101 = arith.constant 1.000000e+00 : f32
    %144 = vector.broadcast %cst_101 : f32 to vector<32x128xf32>
    %145 = arith.subf %144, %139 : vector<32x128xf32>
    %146 = arith.mulf %142, %145 : vector<32x128xf32>
    %147 = arith.addf %143, %146 : vector<32x128xf32>
    %148 = arith.truncf %147 : vector<32x128xf32> to vector<32x128xbf16>
    %c32_102 = arith.constant 32 : index
    %c0_103 = arith.constant 0 : index
    %149 = vector.load %arg32[%c32_102, %c0_103] : memref<96x128xbf16, #tpu.memory_space<vmem>>, vector<32x128xbf16>
    tpu.vector_store %arg32[%c32_102, %c0_103], %148 {strides = array<i32>} : memref<96x128xbf16, #tpu.memory_space<vmem>>, vector<32x128xbf16>,
    %c29_104 = arith.constant 29 : index
    %c0_105 = arith.constant 0 : index
    %150 = vector.load %arg32[%c29_104, %c0_105] : memref<96x128xbf16, #tpu.memory_space<vmem>>, vector<32x128xbf16>
    %c32_106 = arith.constant 32 : index
    %c0_107 = arith.constant 0 : index
    %151 = vector.load %arg32[%c32_106, %c0_107] : memref<96x128xbf16, #tpu.memory_space<vmem>>, vector<32x128xbf16>
    %c35_108 = arith.constant 35 : index
    %c0_109 = arith.constant 0 : index
    %152 = vector.load %arg32[%c35_108, %c0_109] : memref<96x128xbf16, #tpu.memory_space<vmem>>, vector<32x128xbf16>
    %153 = tpu.concatenate %150, %151, %152 in 1 : vector<32x128xbf16>, vector<32x128xbf16>, vector<32x128xbf16> -> vector<32x384xbf16>
    %c0_110 = arith.constant 0 : index
    %c0_111 = arith.constant 0 : index
    %154 = vector.load %arg16[%c0_110, %c0_111] : memref<384x256xbf16, #tpu.memory_space<vmem>>, vector<384x256xbf16>
    %cst_112 = arith.constant dense<0.000000e+00> : vector<32x256xf32>
    %155 = tpu.matmul %153, %154, %cst_112 {dimension_numbers = #tpu.dot_dimension_numbers<[1], [0], [0], [1], [0, 0, 1, 1], [], []>} : vector<32x384xbf16>, vector<384x256xbf16>, vector<32x256xf32> -> vector<32x256xf32>
    %c0_113 = arith.constant 0 : index
    %c0_114 = arith.constant 0 : index
    %156 = vector.load %arg17[%c0_113, %c0_114] : memref<1x256xf32, #tpu.memory_space<vmem>>, vector<1x256xf32>
    %157 = vector.broadcast %156 : vector<1x256xf32> to vector<32x256xf32>
    %158 = arith.addf %155, %157 : vector<32x256xf32>
    %159 = vector.extract_strided_slice %158 {offsets = [0, 0], sizes = [32, 128], strides = [1, 1]} : vector<32x256xf32> to vector<32x128xf32>
    %160 = arith.negf %159 : vector<32x128xf32>
    %161 = math.exp %160 : vector<32x128xf32>
    %cst_115 = arith.constant 1.000000e+00 : f32
    %162 = vector.broadcast %cst_115 : f32 to vector<32x128xf32>
    %163 = arith.addf %162, %161 : vector<32x128xf32>
    %164 = arith.divf %162, %163 : vector<32x128xf32>
    %165 = vector.extract_strided_slice %158 {offsets = [0, 128], sizes = [32, 128], strides = [1, 1]} : vector<32x256xf32> to vector<32x128xf32>
    %c32_116 = arith.constant 32 : index
    %c0_117 = arith.constant 0 : index
    %166 = vector.load %arg32[%c32_116, %c0_117] : memref<96x128xbf16, #tpu.memory_space<vmem>>, vector<32x128xbf16>
    %167 = arith.extf %166 : vector<32x128xbf16> to vector<32x128xf32>
    %168 = arith.mulf %165, %164 : vector<32x128xf32>
    %cst_118 = arith.constant 1.000000e+00 : f32
    %169 = vector.broadcast %cst_118 : f32 to vector<32x128xf32>
    %170 = arith.subf %169, %164 : vector<32x128xf32>
    %171 = arith.mulf %167, %170 : vector<32x128xf32>
    %172 = arith.addf %168, %171 : vector<32x128xf32>
    %173 = arith.truncf %172 : vector<32x128xf32> to vector<32x128xbf16>
    %c32_119 = arith.constant 32 : index
    %c0_120 = arith.constant 0 : index
    %174 = vector.load %arg31[%c32_119, %c0_120] : memref<96x128xbf16, #tpu.memory_space<vmem>>, vector<32x128xbf16>
    tpu.vector_store %arg31[%c32_119, %c0_120], %173 {strides = array<i32>} : memref<96x128xbf16, #tpu.memory_space<vmem>>, vector<32x128xbf16>,
    %c23_121 = arith.constant 23 : index
    %c0_122 = arith.constant 0 : index
    %175 = vector.load %arg31[%c23_121, %c0_122] : memref<96x128xbf16, #tpu.memory_space<vmem>>, vector<32x128xbf16>
    %c32_123 = arith.constant 32 : index
    %c0_124 = arith.constant 0 : index
    %176 = vector.load %arg31[%c32_123, %c0_124] : memref<96x128xbf16, #tpu.memory_space<vmem>>, vector<32x128xbf16>
    %c41_125 = arith.constant 41 : index
    %c0_126 = arith.constant 0 : index
    %177 = vector.load %arg31[%c41_125, %c0_126] : memref<96x128xbf16, #tpu.memory_space<vmem>>, vector<32x128xbf16>
    %178 = tpu.concatenate %175, %176, %177 in 1 : vector<32x128xbf16>, vector<32x128xbf16>, vector<32x128xbf16> -> vector<32x384xbf16>
    %c0_127 = arith.constant 0 : index
    %c0_128 = arith.constant 0 : index
    %179 = vector.load %arg18[%c0_127, %c0_128] : memref<384x256xbf16, #tpu.memory_space<vmem>>, vector<384x256xbf16>
    %cst_129 = arith.constant dense<0.000000e+00> : vector<32x256xf32>
    %180 = tpu.matmul %178, %179, %cst_129 {dimension_numbers = #tpu.dot_dimension_numbers<[1], [0], [0], [1], [0, 0, 1, 1], [], []>} : vector<32x384xbf16>, vector<384x256xbf16>, vector<32x256xf32> -> vector<32x256xf32>
    %c0_130 = arith.constant 0 : index
    %c0_131 = arith.constant 0 : index
    %181 = vector.load %arg19[%c0_130, %c0_131] : memref<1x256xf32, #tpu.memory_space<vmem>>, vector<1x256xf32>
    %182 = vector.broadcast %181 : vector<1x256xf32> to vector<32x256xf32>
    %183 = arith.addf %180, %182 : vector<32x256xf32>
    %184 = vector.extract_strided_slice %183 {offsets = [0, 0], sizes = [32, 128], strides = [1, 1]} : vector<32x256xf32> to vector<32x128xf32>
    %185 = arith.negf %184 : vector<32x128xf32>
    %186 = math.exp %185 : vector<32x128xf32>
    %cst_132 = arith.constant 1.000000e+00 : f32
    %187 = vector.broadcast %cst_132 : f32 to vector<32x128xf32>
    %188 = arith.addf %187, %186 : vector<32x128xf32>
    %189 = arith.divf %187, %188 : vector<32x128xf32>
    %190 = vector.extract_strided_slice %183 {offsets = [0, 128], sizes = [32, 128], strides = [1, 1]} : vector<32x256xf32> to vector<32x128xf32>
    %c32_133 = arith.constant 32 : index
    %c0_134 = arith.constant 0 : index
    %191 = vector.load %arg31[%c32_133, %c0_134] : memref<96x128xbf16, #tpu.memory_space<vmem>>, vector<32x128xbf16>
    %192 = arith.extf %191 : vector<32x128xbf16> to vector<32x128xf32>
    %193 = arith.mulf %190, %189 : vector<32x128xf32>
    %cst_135 = arith.constant 1.000000e+00 : f32
    %194 = vector.broadcast %cst_135 : f32 to vector<32x128xf32>
    %195 = arith.subf %194, %189 : vector<32x128xf32>
    %196 = arith.mulf %192, %195 : vector<32x128xf32>
    %197 = arith.addf %193, %196 : vector<32x128xf32>
    %198 = arith.truncf %197 : vector<32x128xf32> to vector<32x128xbf16>
    %c32_136 = arith.constant 32 : index
    %c0_137 = arith.constant 0 : index
    %199 = vector.load %arg32[%c32_136, %c0_137] : memref<96x128xbf16, #tpu.memory_space<vmem>>, vector<32x128xbf16>
    tpu.vector_store %arg32[%c32_136, %c0_137], %198 {strides = array<i32>} : memref<96x128xbf16, #tpu.memory_space<vmem>>, vector<32x128xbf16>,
    %c5_138 = arith.constant 5 : index
    %c0_139 = arith.constant 0 : index
    %200 = vector.load %arg32[%c5_138, %c0_139] : memref<96x128xbf16, #tpu.memory_space<vmem>>, vector<32x128xbf16>
    %c32_140 = arith.constant 32 : index
    %c0_141 = arith.constant 0 : index
    %201 = vector.load %arg32[%c32_140, %c0_141] : memref<96x128xbf16, #tpu.memory_space<vmem>>, vector<32x128xbf16>
    %c59_142 = arith.constant 59 : index
    %c0_143 = arith.constant 0 : index
    %202 = vector.load %arg32[%c59_142, %c0_143] : memref<96x128xbf16, #tpu.memory_space<vmem>>, vector<32x128xbf16>
    %203 = tpu.concatenate %200, %201, %202 in 1 : vector<32x128xbf16>, vector<32x128xbf16>, vector<32x128xbf16> -> vector<32x384xbf16>
    %c0_144 = arith.constant 0 : index
    %c0_145 = arith.constant 0 : index
    %204 = vector.load %arg20[%c0_144, %c0_145] : memref<384x256xbf16, #tpu.memory_space<vmem>>, vector<384x256xbf16>
    %cst_146 = arith.constant dense<0.000000e+00> : vector<32x256xf32>
    %205 = tpu.matmul %203, %204, %cst_146 {dimension_numbers = #tpu.dot_dimension_numbers<[1], [0], [0], [1], [0, 0, 1, 1], [], []>} : vector<32x384xbf16>, vector<384x256xbf16>, vector<32x256xf32> -> vector<32x256xf32>
    %c0_147 = arith.constant 0 : index
    %c0_148 = arith.constant 0 : index
    %206 = vector.load %arg21[%c0_147, %c0_148] : memref<1x256xf32, #tpu.memory_space<vmem>>, vector<1x256xf32>
    %207 = vector.broadcast %206 : vector<1x256xf32> to vector<32x256xf32>
    %208 = arith.addf %205, %207 : vector<32x256xf32>
    %209 = vector.extract_strided_slice %208 {offsets = [0, 0], sizes = [32, 128], strides = [1, 1]} : vector<32x256xf32> to vector<32x128xf32>
    %210 = arith.negf %209 : vector<32x128xf32>
    %211 = math.exp %210 : vector<32x128xf32>
    %cst_149 = arith.constant 1.000000e+00 : f32
    %212 = vector.broadcast %cst_149 : f32 to vector<32x128xf32>
    %213 = arith.addf %212, %211 : vector<32x128xf32>
    %214 = arith.divf %212, %213 : vector<32x128xf32>
    %215 = vector.extract_strided_slice %208 {offsets = [0, 128], sizes = [32, 128], strides = [1, 1]} : vector<32x256xf32> to vector<32x128xf32>
    %c32_150 = arith.constant 32 : index
    %c0_151 = arith.constant 0 : index
    %216 = vector.load %arg32[%c32_150, %c0_151] : memref<96x128xbf16, #tpu.memory_space<vmem>>, vector<32x128xbf16>
    %217 = arith.extf %216 : vector<32x128xbf16> to vector<32x128xf32>
    %218 = arith.mulf %215, %214 : vector<32x128xf32>
    %cst_152 = arith.constant 1.000000e+00 : f32
    %219 = vector.broadcast %cst_152 : f32 to vector<32x128xf32>
    %220 = arith.subf %219, %214 : vector<32x128xf32>
    %221 = arith.mulf %217, %220 : vector<32x128xf32>
    %222 = arith.addf %218, %221 : vector<32x128xf32>
    %223 = arith.truncf %222 : vector<32x128xf32> to vector<32x128xbf16>
    %c32_153 = arith.constant 32 : index
    %c0_154 = arith.constant 0 : index
    %224 = vector.load %arg31[%c32_153, %c0_154] : memref<96x128xbf16, #tpu.memory_space<vmem>>, vector<32x128xbf16>
    tpu.vector_store %arg31[%c32_153, %c0_154], %223 {strides = array<i32>} : memref<96x128xbf16, #tpu.memory_space<vmem>>, vector<32x128xbf16>,
    %c31_155 = arith.constant 31 : index
    %c0_156 = arith.constant 0 : index
    %225 = vector.load %arg31[%c31_155, %c0_156] : memref<96x128xbf16, #tpu.memory_space<vmem>>, vector<32x128xbf16>
    %c32_157 = arith.constant 32 : index
    %c0_158 = arith.constant 0 : index
    %226 = vector.load %arg31[%c32_157, %c0_158] : memref<96x128xbf16, #tpu.memory_space<vmem>>, vector<32x128xbf16>
    %c33_159 = arith.constant 33 : index
    %c0_160 = arith.constant 0 : index
    %227 = vector.load %arg31[%c33_159, %c0_160] : memref<96x128xbf16, #tpu.memory_space<vmem>>, vector<32x128xbf16>
    %228 = tpu.concatenate %225, %226, %227 in 1 : vector<32x128xbf16>, vector<32x128xbf16>, vector<32x128xbf16> -> vector<32x384xbf16>
    %c0_161 = arith.constant 0 : index
    %c0_162 = arith.constant 0 : index
    %229 = vector.load %arg22[%c0_161, %c0_162] : memref<384x256xbf16, #tpu.memory_space<vmem>>, vector<384x256xbf16>
    %cst_163 = arith.constant dense<0.000000e+00> : vector<32x256xf32>
    %230 = tpu.matmul %228, %229, %cst_163 {dimension_numbers = #tpu.dot_dimension_numbers<[1], [0], [0], [1], [0, 0, 1, 1], [], []>} : vector<32x384xbf16>, vector<384x256xbf16>, vector<32x256xf32> -> vector<32x256xf32>
    %c0_164 = arith.constant 0 : index
    %c0_165 = arith.constant 0 : index
    %231 = vector.load %arg23[%c0_164, %c0_165] : memref<1x256xf32, #tpu.memory_space<vmem>>, vector<1x256xf32>
    %232 = vector.broadcast %231 : vector<1x256xf32> to vector<32x256xf32>
    %233 = arith.addf %230, %232 : vector<32x256xf32>
    %234 = vector.extract_strided_slice %233 {offsets = [0, 0], sizes = [32, 128], strides = [1, 1]} : vector<32x256xf32> to vector<32x128xf32>
    %235 = arith.negf %234 : vector<32x128xf32>
    %236 = math.exp %235 : vector<32x128xf32>
    %cst_166 = arith.constant 1.000000e+00 : f32
    %237 = vector.broadcast %cst_166 : f32 to vector<32x128xf32>
    %238 = arith.addf %237, %236 : vector<32x128xf32>
    %239 = arith.divf %237, %238 : vector<32x128xf32>
    %240 = vector.extract_strided_slice %233 {offsets = [0, 128], sizes = [32, 128], strides = [1, 1]} : vector<32x256xf32> to vector<32x128xf32>
    %c32_167 = arith.constant 32 : index
    %c0_168 = arith.constant 0 : index
    %241 = vector.load %arg31[%c32_167, %c0_168] : memref<96x128xbf16, #tpu.memory_space<vmem>>, vector<32x128xbf16>
    %242 = arith.extf %241 : vector<32x128xbf16> to vector<32x128xf32>
    %243 = arith.mulf %240, %239 : vector<32x128xf32>
    %cst_169 = arith.constant 1.000000e+00 : f32
    %244 = vector.broadcast %cst_169 : f32 to vector<32x128xf32>
    %245 = arith.subf %244, %239 : vector<32x128xf32>
    %246 = arith.mulf %242, %245 : vector<32x128xf32>
    %247 = arith.addf %243, %246 : vector<32x128xf32>
    %248 = arith.truncf %247 : vector<32x128xf32> to vector<32x128xbf16>
    %c32_170 = arith.constant 32 : index
    %c0_171 = arith.constant 0 : index
    %249 = vector.load %arg32[%c32_170, %c0_171] : memref<96x128xbf16, #tpu.memory_space<vmem>>, vector<32x128xbf16>
    tpu.vector_store %arg32[%c32_170, %c0_171], %248 {strides = array<i32>} : memref<96x128xbf16, #tpu.memory_space<vmem>>, vector<32x128xbf16>,
    %c31_172 = arith.constant 31 : index
    %c0_173 = arith.constant 0 : index
    %250 = vector.load %arg32[%c31_172, %c0_173] : memref<96x128xbf16, #tpu.memory_space<vmem>>, vector<32x128xbf16>
    %c32_174 = arith.constant 32 : index
    %c0_175 = arith.constant 0 : index
    %251 = vector.load %arg32[%c32_174, %c0_175] : memref<96x128xbf16, #tpu.memory_space<vmem>>, vector<32x128xbf16>
    %c33_176 = arith.constant 33 : index
    %c0_177 = arith.constant 0 : index
    %252 = vector.load %arg32[%c33_176, %c0_177] : memref<96x128xbf16, #tpu.memory_space<vmem>>, vector<32x128xbf16>
    %253 = tpu.concatenate %250, %251, %252 in 1 : vector<32x128xbf16>, vector<32x128xbf16>, vector<32x128xbf16> -> vector<32x384xbf16>
    %c0_178 = arith.constant 0 : index
    %c0_179 = arith.constant 0 : index
    %254 = vector.load %arg24[%c0_178, %c0_179] : memref<384x256xbf16, #tpu.memory_space<vmem>>, vector<384x256xbf16>
    %cst_180 = arith.constant dense<0.000000e+00> : vector<32x256xf32>
    %255 = tpu.matmul %253, %254, %cst_180 {dimension_numbers = #tpu.dot_dimension_numbers<[1], [0], [0], [1], [0, 0, 1, 1], [], []>} : vector<32x384xbf16>, vector<384x256xbf16>, vector<32x256xf32> -> vector<32x256xf32>
    %c0_181 = arith.constant 0 : index
    %c0_182 = arith.constant 0 : index
    %256 = vector.load %arg25[%c0_181, %c0_182] : memref<1x256xf32, #tpu.memory_space<vmem>>, vector<1x256xf32>
    %257 = vector.broadcast %256 : vector<1x256xf32> to vector<32x256xf32>
    %258 = arith.addf %255, %257 : vector<32x256xf32>
    %259 = vector.extract_strided_slice %258 {offsets = [0, 0], sizes = [32, 128], strides = [1, 1]} : vector<32x256xf32> to vector<32x128xf32>
    %260 = arith.negf %259 : vector<32x128xf32>
    %261 = math.exp %260 : vector<32x128xf32>
    %cst_183 = arith.constant 1.000000e+00 : f32
    %262 = vector.broadcast %cst_183 : f32 to vector<32x128xf32>
    %263 = arith.addf %262, %261 : vector<32x128xf32>
    %264 = arith.divf %262, %263 : vector<32x128xf32>
    %265 = vector.extract_strided_slice %258 {offsets = [0, 128], sizes = [32, 128], strides = [1, 1]} : vector<32x256xf32> to vector<32x128xf32>
    %c32_184 = arith.constant 32 : index
    %c0_185 = arith.constant 0 : index
    %266 = vector.load %arg32[%c32_184, %c0_185] : memref<96x128xbf16, #tpu.memory_space<vmem>>, vector<32x128xbf16>
    %267 = arith.extf %266 : vector<32x128xbf16> to vector<32x128xf32>
    %268 = arith.mulf %265, %264 : vector<32x128xf32>
    %cst_186 = arith.constant 1.000000e+00 : f32
    %269 = vector.broadcast %cst_186 : f32 to vector<32x128xf32>
    %270 = arith.subf %269, %264 : vector<32x128xf32>
    %271 = arith.mulf %267, %270 : vector<32x128xf32>
    %272 = arith.addf %268, %271 : vector<32x128xf32>
    %273 = arith.truncf %272 : vector<32x128xf32> to vector<32x128xbf16>
    %c32_187 = arith.constant 32 : index
    %c0_188 = arith.constant 0 : index
    %274 = vector.load %arg31[%c32_187, %c0_188] : memref<96x128xbf16, #tpu.memory_space<vmem>>, vector<32x128xbf16>
    tpu.vector_store %arg31[%c32_187, %c0_188], %273 {strides = array<i32>} : memref<96x128xbf16, #tpu.memory_space<vmem>>, vector<32x128xbf16>,
    %c32_189 = arith.constant 32 : index
    %c0_190 = arith.constant 0 : index
    %275 = vector.load %arg31[%c32_189, %c0_190] : memref<96x128xbf16, #tpu.memory_space<vmem>>, vector<32x128xbf16>
    %c0_191 = arith.constant 0 : index
    %c0_192 = arith.constant 0 : index
    %276 = vector.load %arg26[%c0_191, %c0_192] : memref<128x256xbf16, #tpu.memory_space<vmem>>, vector<128x256xbf16>
    %cst_193 = arith.constant dense<0.000000e+00> : vector<32x256xf32>
    %277 = tpu.matmul %275, %276, %cst_193 {dimension_numbers = #tpu.dot_dimension_numbers<[1], [0], [0], [1], [0, 0, 1, 1], [], []>} : vector<32x128xbf16>, vector<128x256xbf16>, vector<32x256xf32> -> vector<32x256xf32>
    %c0_194 = arith.constant 0 : index
    %c0_195 = arith.constant 0 : index
    %278 = vector.load %arg27[%c0_194, %c0_195] : memref<1x256xf32, #tpu.memory_space<vmem>>, vector<1x256xf32>
    %279 = vector.broadcast %278 : vector<1x256xf32> to vector<32x256xf32>
    %280 = arith.addf %277, %279 : vector<32x256xf32>
    %281 = vector.extract_strided_slice %280 {offsets = [0, 0], sizes = [32, 128], strides = [1, 1]} : vector<32x256xf32> to vector<32x128xf32>
    %282 = arith.negf %281 : vector<32x128xf32>
    %283 = math.exp %282 : vector<32x128xf32>
    %cst_196 = arith.constant 1.000000e+00 : f32
    %284 = vector.broadcast %cst_196 : f32 to vector<32x128xf32>
    %285 = arith.addf %284, %283 : vector<32x128xf32>
    %286 = arith.divf %284, %285 : vector<32x128xf32>
    %287 = vector.extract_strided_slice %280 {offsets = [0, 128], sizes = [32, 128], strides = [1, 1]} : vector<32x256xf32> to vector<32x128xf32>
    %c32_197 = arith.constant 32 : index
    %c0_198 = arith.constant 0 : index
    %288 = vector.load %arg31[%c32_197, %c0_198] : memref<96x128xbf16, #tpu.memory_space<vmem>>, vector<32x128xbf16>
    %289 = arith.extf %288 : vector<32x128xbf16> to vector<32x128xf32>
    %290 = arith.mulf %287, %286 : vector<32x128xf32>
    %cst_199 = arith.constant 1.000000e+00 : f32
    %291 = vector.broadcast %cst_199 : f32 to vector<32x128xf32>
    %292 = arith.subf %291, %286 : vector<32x128xf32>
    %293 = arith.mulf %289, %292 : vector<32x128xf32>
    %294 = arith.addf %290, %293 : vector<32x128xf32>
    %295 = arith.truncf %294 : vector<32x128xf32> to vector<32x128xbf16>
    %c32_200 = arith.constant 32 : index
    %c0_201 = arith.constant 0 : index
    %296 = vector.load %arg32[%c32_200, %c0_201] : memref<96x128xbf16, #tpu.memory_space<vmem>>, vector<32x128xbf16>
    tpu.vector_store %arg32[%c32_200, %c0_201], %295 {strides = array<i32>} : memref<96x128xbf16, #tpu.memory_space<vmem>>, vector<32x128xbf16>,
    %c32_202 = arith.constant 32 : index
    %c0_203 = arith.constant 0 : index
    %297 = vector.load %arg32[%c32_202, %c0_203] : memref<96x128xbf16, #tpu.memory_space<vmem>>, vector<32x128xbf16>
    %c0_204 = arith.constant 0 : index
    %c0_205 = arith.constant 0 : index
    %298 = vector.load %arg28[%c0_204, %c0_205] : memref<128x256xbf16, #tpu.memory_space<vmem>>, vector<128x256xbf16>
    %cst_206 = arith.constant dense<0.000000e+00> : vector<32x256xf32>
    %299 = tpu.matmul %297, %298, %cst_206 {dimension_numbers = #tpu.dot_dimension_numbers<[1], [0], [0], [1], [0, 0, 1, 1], [], []>} : vector<32x128xbf16>, vector<128x256xbf16>, vector<32x256xf32> -> vector<32x256xf32>
    %c0_207 = arith.constant 0 : index
    %c0_208 = arith.constant 0 : index
    %300 = vector.load %arg29[%c0_207, %c0_208] : memref<1x256xf32, #tpu.memory_space<vmem>>, vector<1x256xf32>
    %301 = vector.broadcast %300 : vector<1x256xf32> to vector<32x256xf32>
    %302 = arith.addf %299, %301 : vector<32x256xf32>
    %303 = vector.extract_strided_slice %302 {offsets = [0, 0], sizes = [32, 128], strides = [1, 1]} : vector<32x256xf32> to vector<32x128xf32>
    %304 = arith.negf %303 : vector<32x128xf32>
    %305 = math.exp %304 : vector<32x128xf32>
    %cst_209 = arith.constant 1.000000e+00 : f32
    %306 = vector.broadcast %cst_209 : f32 to vector<32x128xf32>
    %307 = arith.addf %306, %305 : vector<32x128xf32>
    %308 = arith.divf %306, %307 : vector<32x128xf32>
    %309 = vector.extract_strided_slice %302 {offsets = [0, 128], sizes = [32, 128], strides = [1, 1]} : vector<32x256xf32> to vector<32x128xf32>
    %c32_210 = arith.constant 32 : index
    %c0_211 = arith.constant 0 : index
    %310 = vector.load %arg32[%c32_210, %c0_211] : memref<96x128xbf16, #tpu.memory_space<vmem>>, vector<32x128xbf16>
    %311 = arith.extf %310 : vector<32x128xbf16> to vector<32x128xf32>
    %312 = arith.mulf %309, %308 : vector<32x128xf32>
    %cst_212 = arith.constant 1.000000e+00 : f32
    %313 = vector.broadcast %cst_212 : f32 to vector<32x128xf32>
    %314 = arith.subf %313, %308 : vector<32x128xf32>
    %315 = arith.mulf %311, %314 : vector<32x128xf32>
    %316 = arith.addf %312, %315 : vector<32x128xf32>
    %c0_213 = arith.constant 0 : index
    %c0_214 = arith.constant 0 : index
    %c0_215 = arith.constant 0 : index
    %317 = vector.load %arg30[%c0_213, %c0_214, %c0_215] : memref<1x32x128xf32, #tpu.memory_space<vmem>>, vector<1x32x128xf32>
    %318 = vector.shape_cast %317 : vector<1x32x128xf32> to vector<32x128xf32>
    %319 = vector.shape_cast %316 : vector<32x128xf32> to vector<1x32x128xf32>
    tpu.vector_store %arg30[%c0_213, %c0_214, %c0_215], %319 {strides = array<i32>} : memref<1x32x128xf32, #tpu.memory_space<vmem>>, vector<1x32x128xf32>,
    return
  }
  func.func @transform_0(%arg0: i32) -> (i32, i32, i32) {
    %c0_i32 = arith.constant 0 : i32
    %c0_i32_0 = arith.constant 0 : i32
    %c0_i32_1 = arith.constant 0 : i32
    return %arg0, %c0_i32, %c0_i32_0 : i32, i32, i32
  }
  func.func @transform_1(%arg0: i32) -> (i32, i32) {
    %c0_i32 = arith.constant 0 : i32
    %c0_i32_0 = arith.constant 0 : i32
    %c0_i32_1 = arith.constant 0 : i32
    return %c0_i32, %c0_i32_0 : i32, i32
  }
  func.func @transform_2(%arg0: i32) -> (i32, i32) {
    %c0_i32 = arith.constant 0 : i32
    %c0_i32_0 = arith.constant 0 : i32
    %c0_i32_1 = arith.constant 0 : i32
    return %c0_i32, %c0_i32_0 : i32, i32
  }
  func.func @transform_3(%arg0: i32) -> (i32, i32) {
    %c0_i32 = arith.constant 0 : i32
    %c0_i32_0 = arith.constant 0 : i32
    %c0_i32_1 = arith.constant 0 : i32
    return %c0_i32, %c0_i32_0 : i32, i32
  }
  func.func @transform_4(%arg0: i32) -> (i32, i32) {
    %c0_i32 = arith.constant 0 : i32
    %c0_i32_0 = arith.constant 0 : i32
    %c0_i32_1 = arith.constant 0 : i32
    return %c0_i32, %c0_i32_0 : i32, i32
  }
  func.func @transform_5(%arg0: i32) -> (i32, i32) {
    %c0_i32 = arith.constant 0 : i32
    %c0_i32_0 = arith.constant 0 : i32
    %c0_i32_1 = arith.constant 0 : i32
    return %c0_i32, %c0_i32_0 : i32, i32
  }
  func.func @transform_6(%arg0: i32) -> (i32, i32) {
    %c0_i32 = arith.constant 0 : i32
    %c0_i32_0 = arith.constant 0 : i32
    %c0_i32_1 = arith.constant 0 : i32
    return %c0_i32, %c0_i32_0 : i32, i32
  }
  func.func @transform_7(%arg0: i32) -> (i32, i32) {
    %c0_i32 = arith.constant 0 : i32
    %c0_i32_0 = arith.constant 0 : i32
    %c0_i32_1 = arith.constant 0 : i32
    return %c0_i32, %c0_i32_0 : i32, i32
  }
  func.func @transform_8(%arg0: i32) -> (i32, i32) {
    %c0_i32 = arith.constant 0 : i32
    %c0_i32_0 = arith.constant 0 : i32
    %c0_i32_1 = arith.constant 0 : i32
    return %c0_i32, %c0_i32_0 : i32, i32
  }
  func.func @transform_9(%arg0: i32) -> (i32, i32) {
    %c0_i32 = arith.constant 0 : i32
    %c0_i32_0 = arith.constant 0 : i32
    %c0_i32_1 = arith.constant 0 : i32
    return %c0_i32, %c0_i32_0 : i32, i32
  }
  func.func @transform_10(%arg0: i32) -> (i32, i32) {
    %c0_i32 = arith.constant 0 : i32
    %c0_i32_0 = arith.constant 0 : i32
    %c0_i32_1 = arith.constant 0 : i32
    return %c0_i32, %c0_i32_0 : i32, i32
  }
  func.func @transform_11(%arg0: i32) -> (i32, i32) {
    %c0_i32 = arith.constant 0 : i32
    %c0_i32_0 = arith.constant 0 : i32
    %c0_i32_1 = arith.constant 0 : i32
    return %c0_i32, %c0_i32_0 : i32, i32
  }
  func.func @transform_12(%arg0: i32) -> (i32, i32) {
    %c0_i32 = arith.constant 0 : i32
    %c0_i32_0 = arith.constant 0 : i32
    %c0_i32_1 = arith.constant 0 : i32
    return %c0_i32, %c0_i32_0 : i32, i32
  }
  func.func @transform_13(%arg0: i32) -> (i32, i32) {
    %c0_i32 = arith.constant 0 : i32
    %c0_i32_0 = arith.constant 0 : i32
    %c0_i32_1 = arith.constant 0 : i32
    return %c0_i32, %c0_i32_0 : i32, i32
  }
  func.func @transform_14(%arg0: i32) -> (i32, i32) {
    %c0_i32 = arith.constant 0 : i32
    %c0_i32_0 = arith.constant 0 : i32
    %c0_i32_1 = arith.constant 0 : i32
    return %c0_i32, %c0_i32_0 : i32, i32
  }
  func.func @transform_15(%arg0: i32) -> (i32, i32) {
    %c0_i32 = arith.constant 0 : i32
    %c0_i32_0 = arith.constant 0 : i32
    %c0_i32_1 = arith.constant 0 : i32
    return %c0_i32, %c0_i32_0 : i32, i32
  }
  func.func @transform_16(%arg0: i32) -> (i32, i32) {
    %c0_i32 = arith.constant 0 : i32
    %c0_i32_0 = arith.constant 0 : i32
    %c0_i32_1 = arith.constant 0 : i32
    return %c0_i32, %c0_i32_0 : i32, i32
  }
  func.func @transform_17(%arg0: i32) -> (i32, i32) {
    %c0_i32 = arith.constant 0 : i32
    %c0_i32_0 = arith.constant 0 : i32
    %c0_i32_1 = arith.constant 0 : i32
    return %c0_i32, %c0_i32_0 : i32, i32
  }
  func.func @transform_18(%arg0: i32) -> (i32, i32) {
    %c0_i32 = arith.constant 0 : i32
    %c0_i32_0 = arith.constant 0 : i32
    %c0_i32_1 = arith.constant 0 : i32
    return %c0_i32, %c0_i32_0 : i32, i32
  }
  func.func @transform_19(%arg0: i32) -> (i32, i32) {
    %c0_i32 = arith.constant 0 : i32
    %c0_i32_0 = arith.constant 0 : i32
    %c0_i32_1 = arith.constant 0 : i32
    return %c0_i32, %c0_i32_0 : i32, i32
  }
  func.func @transform_20(%arg0: i32) -> (i32, i32) {
    %c0_i32 = arith.constant 0 : i32
    %c0_i32_0 = arith.constant 0 : i32
    %c0_i32_1 = arith.constant 0 : i32
    return %c0_i32, %c0_i32_0 : i32, i32
  }
  func.func @transform_21(%arg0: i32) -> (i32, i32) {
    %c0_i32 = arith.constant 0 : i32
    %c0_i32_0 = arith.constant 0 : i32
    %c0_i32_1 = arith.constant 0 : i32
    return %c0_i32, %c0_i32_0 : i32, i32
  }
  func.func @transform_22(%arg0: i32) -> (i32, i32) {
    %c0_i32 = arith.constant 0 : i32
    %c0_i32_0 = arith.constant 0 : i32
    %c0_i32_1 = arith.constant 0 : i32
    return %c0_i32, %c0_i32_0 : i32, i32
  }
  func.func @transform_23(%arg0: i32) -> (i32, i32) {
    %c0_i32 = arith.constant 0 : i32
    %c0_i32_0 = arith.constant 0 : i32
    %c0_i32_1 = arith.constant 0 : i32
    return %c0_i32, %c0_i32_0 : i32, i32
  }
  func.func @transform_24(%arg0: i32) -> (i32, i32) {
    %c0_i32 = arith.constant 0 : i32
    %c0_i32_0 = arith.constant 0 : i32
    %c0_i32_1 = arith.constant 0 : i32
    return %c0_i32, %c0_i32_0 : i32, i32
  }
  func.func @transform_25(%arg0: i32) -> (i32, i32) {
    %c0_i32 = arith.constant 0 : i32
    %c0_i32_0 = arith.constant 0 : i32
    %c0_i32_1 = arith.constant 0 : i32
    return %c0_i32, %c0_i32_0 : i32, i32
  }
  func.func @transform_26(%arg0: i32) -> (i32, i32) {
    %c0_i32 = arith.constant 0 : i32
    %c0_i32_0 = arith.constant 0 : i32
    %c0_i32_1 = arith.constant 0 : i32
    return %c0_i32, %c0_i32_0 : i32, i32
  }
  func.func @transform_27(%arg0: i32) -> (i32, i32) {
    %c0_i32 = arith.constant 0 : i32
    %c0_i32_0 = arith.constant 0 : i32
    %c0_i32_1 = arith.constant 0 : i32
    return %c0_i32, %c0_i32_0 : i32, i32
  }
  func.func @transform_28(%arg0: i32) -> (i32, i32) {
    %c0_i32 = arith.constant 0 : i32
    %c0_i32_0 = arith.constant 0 : i32
    %c0_i32_1 = arith.constant 0 : i32
    return %c0_i32, %c0_i32_0 : i32, i32
  }
  func.func @transform_29(%arg0: i32) -> (i32, i32, i32) {
    %c0_i32 = arith.constant 0 : i32
    %c0_i32_0 = arith.constant 0 : i32
    %c0_i32_1 = arith.constant 0 : i32
    return %arg0, %c0_i32, %c0_i32_0 : i32, i32, i32
  }
}

</mosaic_0001>

<llo_original>
// kernel: _lambda_.1
$region0: #{_lambda_.1}
  #allocation0 [shape = 'u32[]', space=smem, size = 0x4, offset = 0x4, fixed_abs, tag = 'smem constant byte address 0x4 - core index']
  #allocation1 [shape = 'u32[144,128]{1,0:T(1,128)}', space=vmem, size = 0x12000, scoped, tag = 'internal scratch']
  #allocation2 [shape = 'bf16[96,128]{1,0:T(8,128)(2,1)}', space=vmem, size = 0x6000, scoped, tag = 'scratch operand']
  #allocation3 [shape = 'bf16[96,128]{1,0:T(8,128)(2,1)}', space=vmem, size = 0x6000, scoped, tag = 'scratch operand']
  %s0 = inlined_call_operand.smem [shape: u32[30], index: -1, kind: input, shape index: {}]
  %s1 = sld [smem:[%s0]]
  %s2 = scalar_lea.smem %s0, 1
  %s3 = sld [smem:[%s2]]
  %s4 = scalar_lea.smem %s0, 2
  %s5 = sld [smem:[%s4]]
  %s6 = scalar_lea.smem %s0, 3
  %s7 = sld [smem:[%s6]]
  %s8 = scalar_lea.smem %s0, 4
  %s9 = sld [smem:[%s8]]
  %s10 = scalar_lea.smem %s0, 5
  %s11 = sld [smem:[%s10]]
  %s12 = scalar_lea.smem %s0, 6
  %s13 = sld [smem:[%s12]]
  %s14 = scalar_lea.smem %s0, 7
  %s15 = sld [smem:[%s14]]
  %s16 = scalar_lea.smem %s0, 8
  %s17 = sld [smem:[%s16]]
  %s18 = scalar_lea.smem %s0, 9
  %s19 = sld [smem:[%s18]]
  %s20 = scalar_lea.smem %s0, 10
  %s21 = sld [smem:[%s20]]
  %s22 = scalar_lea.smem %s0, 11
  %s23 = sld [smem:[%s22]]
  %s24 = scalar_lea.smem %s0, 12
  %s25 = sld [smem:[%s24]]
  %s26 = scalar_lea.smem %s0, 13
  %s27 = sld [smem:[%s26]]
  %s28 = scalar_lea.smem %s0, 14
  %s29 = sld [smem:[%s28]]
  %s30 = scalar_lea.smem %s0, 15
  %s31 = sld [smem:[%s30]]
  %s32 = scalar_lea.smem %s0, 16
  %s33 = sld [smem:[%s32]]
  %s34 = scalar_lea.smem %s0, 17
  %s35 = sld [smem:[%s34]]
  %s36 = scalar_lea.smem %s0, 18
  %s37 = sld [smem:[%s36]]
  %s38 = scalar_lea.smem %s0, 19
  %s39 = sld [smem:[%s38]]
  %s40 = scalar_lea.smem %s0, 20
  %s41 = sld [smem:[%s40]]
  %s42 = scalar_lea.smem %s0, 21
  %s43 = sld [smem:[%s42]]
  %s44 = scalar_lea.smem %s0, 22
  %s45 = sld [smem:[%s44]]
  %s46 = scalar_lea.smem %s0, 23
  %s47 = sld [smem:[%s46]]
  %s48 = scalar_lea.smem %s0, 24
  %s49 = sld [smem:[%s48]]
  %s50 = scalar_lea.smem %s0, 25
  %s51 = sld [smem:[%s50]]
  %s52 = scalar_lea.smem %s0, 26
  %s53 = sld [smem:[%s52]]
  %s54 = scalar_lea.smem %s0, 27
  %s55 = sld [smem:[%s54]]
  %s56 = scalar_lea.smem %s0, 28
  %s57 = sld [smem:[%s56]]
  %s58 = scalar_lea.smem %s0, 29
  %s59 = sld [smem:[%s58]]
  %s60 = sld [smem:[#allocation0]]
  $region217: #{_lambda_.1} parent=0
    _
  %s62 = ssub.s32 1, %s60
  %s63 = scalar_select 0, %s62, %s60
  $region1: #{_lambda_.1} parent=0
    #allocation4 [shape = 'u8[32768]{0}', space=vmem, size = 0x8000, scoped, tag = 'input window, operand 1, single buffered']
    #allocation5 [shape = 's32[2]{0}', space=sflag, size = 0x8, scoped, tag = 'scoped memory for _lambda_.1']
    #allocation6 [shape = 's32[2]{0}', space=sflag, size = 0x8, scoped, tag = 'scoped memory for _lambda_.1']
    #allocation7 [shape = 'u8[512]{0}', space=vmem, size = 0x400, scoped, tag = 'input window, operand 2, single buffered']
    #allocation8 [shape = 's32[1]{0}', space=sflag, size = 0x4, scoped, tag = 'scoped memory for _lambda_.1']
    #allocation9 [shape = 'u8[512]{0}', space=vmem, size = 0x400, scoped, tag = 'input window, operand 4, single buffered']
    #allocation10 [shape = 'u8[196608]{0}', space=vmem, size = 0x30000, scoped, tag = 'input window, operand 5, single buffered']
    #allocation11 [shape = 's32[1]{0}', space=sflag, size = 0x4, scoped, tag = 'scoped memory for _lambda_.1']
    #allocation12 [shape = 'u8[1024]{0}', space=vmem, size = 0x400, scoped, tag = 'input window, operand 6, single buffered']
    #allocation13 [shape = 'u8[196608]{0}', space=vmem, size = 0x30000, scoped, tag = 'input window, operand 7, single buffered']
    #allocation14 [shape = 's32[1]{0}', space=sflag, size = 0x4, scoped, tag = 'scoped memory for _lambda_.1']
    #allocation15 [shape = 'u8[1024]{0}', space=vmem, size = 0x400, scoped, tag = 'input window, operand 8, single buffered']
    #allocation16 [shape = 'u8[196608]{0}', space=vmem, size = 0x30000, scoped, tag = 'input window, operand 9, single buffered']
    #allocation17 [shape = 's32[1]{0}', space=sflag, size = 0x4, scoped, tag = 'scoped memory for _lambda_.1']
    #allocation18 [shape = 'u8[1024]{0}', space=vmem, size = 0x400, scoped, tag = 'input window, operand 10, single buffered']
    #allocation19 [shape = 'u8[196608]{0}', space=vmem, size = 0x30000, scoped, tag = 'input window, operand 11, single buffered']
    #allocation20 [shape = 's32[1]{0}', space=sflag, size = 0x4, scoped, tag = 'scoped memory for _lambda_.1']
    #allocation21 [shape = 'u8[196608]{0}', space=vmem, size = 0x30000, scoped, tag = 'input window, operand 13, single buffered']
    #allocation22 [shape = 'u8[196608]{0}', space=vmem, size = 0x30000, scoped, tag = 'input window, operand 15, single buffered']
    #allocation23 [shape = 's32[1]{0}', space=sflag, size = 0x4, scoped, tag = 'scoped memory for _lambda_.1']
    #allocation24 [shape = 'u8[196608]{0}', space=vmem, size = 0x30000, scoped, tag = 'input window, operand 17, single buffered']
    #allocation25 [shape = 'u8[196608]{0}', space=vmem, size = 0x30000, scoped, tag = 'input window, operand 19, single buffered']
    #allocation26 [shape = 's32[1]{0}', space=sflag, size = 0x4, scoped, tag = 'scoped memory for _lambda_.1']
    #allocation27 [shape = 'u8[196608]{0}', space=vmem, size = 0x30000, scoped, tag = 'input window, operand 21, single buffered']
    #allocation28 [shape = 'u8[196608]{0}', space=vmem, size = 0x30000, scoped, tag = 'input window, operand 23, single buffered']
    #allocation29 [shape = 's32[1]{0}', space=sflag, size = 0x4, scoped, tag = 'scoped memory for _lambda_.1']
    #allocation30 [shape = 'u8[65536]{0}', space=vmem, size = 0x10000, scoped, tag = 'input window, operand 25, single buffered']
    #allocation31 [shape = 'u8[32768]{0}', space=vmem, size = 0x8000, scoped, tag = 'output window, operand 0']
    %64 = vsyncpa [#allocation5], 0
    %65 = vsyncpa [#allocation8], 0
    %66 = vsyncpa [#allocation11], 0
    %67 = vsyncpa [#allocation14], 0
    %68 = vsyncpa [#allocation17], 0
    %69 = vsyncpa [#allocation20], 0
    %70 = vsyncpa [#allocation23], 0
    %71 = vsyncpa [#allocation26], 0
    %72 = vsyncpa [#allocation29], 0
    %73 = vsyncpa [#allocation6], 0
    %s74 = scalar_lea.sflag [#allocation6], 1
    %75 = vsyncpa %s74, 0
    loop: start=0, step=1, limit=4
    $region2: #{_lambda_.1} parent=1 // loop_pre_header
      _
    $region3: #{_lambda_.1} parent=1 // loop_header
      %s77 = sphi 0, %s81
      %p78 = scmp.ge.s32.totalorder %s77, 4
      %s87 = sphi 0, %s89
      %s90 = sphi 0, %s87
      %s91 = sphi 0, %s90
      %s107 = sphi 0, %s91
      %s111 = sphi 0, %s111
      %s113 = sphi 0, %s111
      %s114 = sphi 0, %s113
      %s128 = sphi 0, %s114
      %s132 = sphi 0, %s132
      %s134 = sphi 0, %s132
      %s135 = sphi 0, %s134
      %s149 = sphi 0, %s135
      %s153 = sphi 0, %s153
      %s155 = sphi 0, %s153
      %s156 = sphi 0, %s155
      %s170 = sphi 0, %s156
      %s174 = sphi 0, %s174
      %s176 = sphi 0, %s174
      %s177 = sphi 0, %s176
      %s191 = sphi 0, %s177
      %s195 = sphi 0, %s195
      %s197 = sphi 0, %s195
      %s198 = sphi 0, %s197
      %s212 = sphi 0, %s198
      %s216 = sphi 0, %s216
      %s218 = sphi 0, %s216
      %s219 = sphi 0, %s218
      %s233 = sphi 0, %s219
      %s237 = sphi 0, %s237
      %s239 = sphi 0, %s237
      %s240 = sphi 0, %s239
      %s254 = sphi 0, %s240
      %s258 = sphi 0, %s258
      %s260 = sphi 0, %s258
      %s261 = sphi 0, %s260
      %s275 = sphi 0, %s261
      %s279 = sphi 0, %s279
      %s281 = sphi 0, %s279
      %s282 = sphi 0, %s281
      %s296 = sphi 0, %s282
      %s300 = sphi 0, %s300
      %s302 = sphi 0, %s300
      %s303 = sphi 0, %s302
      %s317 = sphi 0, %s303
      %s321 = sphi 0, %s321
      %s323 = sphi 0, %s321
      %s324 = sphi 0, %s323
      %s338 = sphi 0, %s324
      %s342 = sphi 0, %s342
      %s344 = sphi 0, %s342
      %s345 = sphi 0, %s344
      %s359 = sphi 0, %s345
      %s363 = sphi 0, %s363
      %s365 = sphi 0, %s363
      %s366 = sphi 0, %s365
      %s380 = sphi 0, %s366
      %s384 = sphi 0, %s384
      %s386 = sphi 0, %s384
      %s387 = sphi 0, %s386
      %s401 = sphi 0, %s387
      %s405 = sphi 0, %s405
      %s407 = sphi 0, %s405
      %s408 = sphi 0, %s407
      %s422 = sphi 0, %s408
      %s426 = sphi 0, %s426
      %s428 = sphi 0, %s426
      %s429 = sphi 0, %s428
      %s443 = sphi 0, %s429
      %s447 = sphi 0, %s447
      %s449 = sphi 0, %s447
      %s450 = sphi 0, %s449
      %s464 = sphi 0, %s450
      %s468 = sphi 0, %s468
      %s470 = sphi 0, %s468
      %s471 = sphi 0, %s470
      %s485 = sphi 0, %s471
      %s489 = sphi 0, %s489
      %s491 = sphi 0, %s489
      %s492 = sphi 0, %s491
      %s506 = sphi 0, %s492
      %s510 = sphi 0, %s510
      %s512 = sphi 0, %s510
      %s513 = sphi 0, %s512
      %s527 = sphi 0, %s513
      %s531 = sphi 0, %s531
      %s533 = sphi 0, %s531
      %s534 = sphi 0, %s533
      %s548 = sphi 0, %s534
      %s552 = sphi 0, %s552
      %s554 = sphi 0, %s552
      %s555 = sphi 0, %s554
      %s569 = sphi 0, %s555
      %s573 = sphi 0, %s573
      %s575 = sphi 0, %s573
      %s576 = sphi 0, %s575
      %s590 = sphi 0, %s576
      %s594 = sphi 0, %s594
      %s596 = sphi 0, %s594
      %s597 = sphi 0, %s596
      %s611 = sphi 0, %s597
      %s615 = sphi 0, %s615
      %s617 = sphi 0, %s615
      %s618 = sphi 0, %s617
      %s632 = sphi 0, %s618
      %s636 = sphi 0, %s636
      %s638 = sphi 0, %s636
      %s639 = sphi 0, %s638
      %s653 = sphi 0, %s639
      %s657 = sphi 0, %s657
      %s659 = sphi 0, %s657
      %s660 = sphi 0, %s659
      %s674 = sphi 0, %s660
      %s678 = sphi 0, %s678
      %s680 = sphi 0, %s678
      %s681 = sphi 0, %s680
      %s695 = sphi 0, %s681
      %s701 = sphi 0, %s703
      %s704 = sphi 0, %s701
      %s705 = sphi 0, %s704
      %s721 = sphi 0, %s705
    $region4: #{_lambda_.1} parent=1 // loop_header_branch
      %80 = sbr.rel (%p78) target = $region8
    $region5: #{_lambda_.1} parent=1 // loop_body
      %s82 = ssub.s32 %s77, 1
      %s83 = ssub.s32 %s77, 2
      %s84 = sadd.s32 %s77, 1
      %s85 = ssub.s32 %s77, %s84
      %p86 = scmp.eq.s32.totalorder %s85, 0
      %s88 = sadd.s32 %s87, 1
      %s89 = scalar_select %p86, %s87, %s88
      %p92 = pneg %p86
      %p93 = scmp.eq.s32.totalorder %s77, 1
      %p94 = por %p92, %p93
      %p95 = scmp.ne.s32.totalorder %s87, %s90
      %p96 = scmp.eq.s32.totalorder %s77, 0
      %p97 = por %p95, %p96
      %p98 = scmp.ne.s32.totalorder %s87, %s90
      %p99 = scmp.eq.s32.totalorder %s82, 1
      %p100 = por %p98, %p99
      %p101 = scmp.ne.s32.totalorder %s90, %s91
      %p102 = scmp.eq.s32.totalorder %s82, 0
      %p103 = por %p101, %p102
      %p104 = scmp.ne.s32.totalorder %s90, %s91
      %p105 = scmp.eq.s32.totalorder %s83, 1
      %p106 = por %p104, %p105
      %p108 = scmp.ne.s32.totalorder %s91, %s107
      %p109 = scmp.eq.s32.totalorder %s83, 0
      %p110 = por %p108, %p109
      %s112 = sadd.s32 %s111, 1
      %p115 = scmp.eq.s32.totalorder %s77, 1
      %p116 = scmp.ne.s32.totalorder %s111, %s113
      %p117 = scmp.eq.s32.totalorder %s77, 0
      %p118 = por %p116, %p117
      %p119 = scmp.ne.s32.totalorder %s111, %s113
      %p120 = scmp.eq.s32.totalorder %s82, 1
      %p121 = por %p119, %p120
      %p122 = scmp.ne.s32.totalorder %s113, %s114
      %p123 = scmp.eq.s32.totalorder %s82, 0
      %p124 = por %p122, %p123
      %p125 = scmp.ne.s32.totalorder %s113, %s114
      %p126 = scmp.eq.s32.totalorder %s83, 1
      %p127 = por %p125, %p126
      %p129 = scmp.ne.s32.totalorder %s114, %s128
      %p130 = scmp.eq.s32.totalorder %s83, 0
      %p131 = por %p129, %p130
      %s133 = sadd.s32 %s132, 1
      %p136 = scmp.eq.s32.totalorder %s77, 1
      %p137 = scmp.ne.s32.totalorder %s132, %s134
      %p138 = scmp.eq.s32.totalorder %s77, 0
      %p139 = por %p137, %p138
      %p140 = scmp.ne.s32.totalorder %s132, %s134
      %p141 = scmp.eq.s32.totalorder %s82, 1
      %p142 = por %p140, %p141
      %p143 = scmp.ne.s32.totalorder %s134, %s135
      %p144 = scmp.eq.s32.totalorder %s82, 0
      %p145 = por %p143, %p144
      %p146 = scmp.ne.s32.totalorder %s134, %s135
      %p147 = scmp.eq.s32.totalorder %s83, 1
      %p148 = por %p146, %p147
      %p150 = scmp.ne.s32.totalorder %s135, %s149
      %p151 = scmp.eq.s32.totalorder %s83, 0
      %p152 = por %p150, %p151
      %s154 = sadd.s32 %s153, 1
      %p157 = scmp.eq.s32.totalorder %s77, 1
      %p158 = scmp.ne.s32.totalorder %s153, %s155
      %p159 = scmp.eq.s32.totalorder %s77, 0
      %p160 = por %p158, %p159
      %p161 = scmp.ne.s32.totalorder %s153, %s155
      %p162 = scmp.eq.s32.totalorder %s82, 1
      %p163 = por %p161, %p162
      %p164 = scmp.ne.s32.totalorder %s155, %s156
      %p165 = scmp.eq.s32.totalorder %s82, 0
      %p166 = por %p164, %p165
      %p167 = scmp.ne.s32.totalorder %s155, %s156
      %p168 = scmp.eq.s32.totalorder %s83, 1
      %p169 = por %p167, %p168
      %p171 = scmp.ne.s32.totalorder %s156, %s170
      %p172 = scmp.eq.s32.totalorder %s83, 0
      %p173 = por %p171, %p172
      %s175 = sadd.s32 %s174, 1
      %p178 = scmp.eq.s32.totalorder %s77, 1
      %p179 = scmp.ne.s32.totalorder %s174, %s176
      %p180 = scmp.eq.s32.totalorder %s77, 0
      %p181 = por %p179, %p180
      %p182 = scmp.ne.s32.totalorder %s174, %s176
      %p183 = scmp.eq.s32.totalorder %s82, 1
      %p184 = por %p182, %p183
      %p185 = scmp.ne.s32.totalorder %s176, %s177
      %p186 = scmp.eq.s32.totalorder %s82, 0
      %p187 = por %p185, %p186
      %p188 = scmp.ne.s32.totalorder %s176, %s177
      %p189 = scmp.eq.s32.totalorder %s83, 1
      %p190 = por %p188, %p189
      %p192 = scmp.ne.s32.totalorder %s177, %s191
      %p193 = scmp.eq.s32.totalorder %s83, 0
      %p194 = por %p192, %p193
      %s196 = sadd.s32 %s195, 1
      %p199 = scmp.eq.s32.totalorder %s77, 1
      %p200 = scmp.ne.s32.totalorder %s195, %s197
      %p201 = scmp.eq.s32.totalorder %s77, 0
      %p202 = por %p200, %p201
      %p203 = scmp.ne.s32.totalorder %s195, %s197
      %p204 = scmp.eq.s32.totalorder %s82, 1
      %p205 = por %p203, %p204
      %p206 = scmp.ne.s32.totalorder %s197, %s198
      %p207 = scmp.eq.s32.totalorder %s82, 0
      %p208 = por %p206, %p207
      %p209 = scmp.ne.s32.totalorder %s197, %s198
      %p210 = scmp.eq.s32.totalorder %s83, 1
      %p211 = por %p209, %p210
      %p213 = scmp.ne.s32.totalorder %s198, %s212
      %p214 = scmp.eq.s32.totalorder %s83, 0
      %p215 = por %p213, %p214
      %s217 = sadd.s32 %s216, 1
      %p220 = scmp.eq.s32.totalorder %s77, 1
      %p221 = scmp.ne.s32.totalorder %s216, %s218
      %p222 = scmp.eq.s32.totalorder %s77, 0
      %p223 = por %p221, %p222
      %p224 = scmp.ne.s32.totalorder %s216, %s218
      %p225 = scmp.eq.s32.totalorder %s82, 1
      %p226 = por %p224, %p225
      %p227 = scmp.ne.s32.totalorder %s218, %s219
      %p228 = scmp.eq.s32.totalorder %s82, 0
      %p229 = por %p227, %p228
      %p230 = scmp.ne.s32.totalorder %s218, %s219
      %p231 = scmp.eq.s32.totalorder %s83, 1
      %p232 = por %p230, %p231
      %p234 = scmp.ne.s32.totalorder %s219, %s233
      %p235 = scmp.eq.s32.totalorder %s83, 0
      %p236 = por %p234, %p235
      %s238 = sadd.s32 %s237, 1
      %p241 = scmp.eq.s32.totalorder %s77, 1
      %p242 = scmp.ne.s32.totalorder %s237, %s239
      %p243 = scmp.eq.s32.totalorder %s77, 0
      %p244 = por %p242, %p243
      %p245 = scmp.ne.s32.totalorder %s237, %s239
      %p246 = scmp.eq.s32.totalorder %s82, 1
      %p247 = por %p245, %p246
      %p248 = scmp.ne.s32.totalorder %s239, %s240
      %p249 = scmp.eq.s32.totalorder %s82, 0
      %p250 = por %p248, %p249
      %p251 = scmp.ne.s32.totalorder %s239, %s240
      %p252 = scmp.eq.s32.totalorder %s83, 1
      %p253 = por %p251, %p252
      %p255 = scmp.ne.s32.totalorder %s240, %s254
      %p256 = scmp.eq.s32.totalorder %s83, 0
      %p257 = por %p255, %p256
      %s259 = sadd.s32 %s258, 1
      %p262 = scmp.eq.s32.totalorder %s77, 1
      %p263 = scmp.ne.s32.totalorder %s258, %s260
      %p264 = scmp.eq.s32.totalorder %s77, 0
      %p265 = por %p263, %p264
      %p266 = scmp.ne.s32.totalorder %s258, %s260
      %p267 = scmp.eq.s32.totalorder %s82, 1
      %p268 = por %p266, %p267
      %p269 = scmp.ne.s32.totalorder %s260, %s261
      %p270 = scmp.eq.s32.totalorder %s82, 0
      %p271 = por %p269, %p270
      %p272 = scmp.ne.s32.totalorder %s260, %s261
      %p273 = scmp.eq.s32.totalorder %s83, 1
      %p274 = por %p272, %p273
      %p276 = scmp.ne.s32.totalorder %s261, %s275
      %p277 = scmp.eq.s32.totalorder %s83, 0
      %p278 = por %p276, %p277
      %s280 = sadd.s32 %s279, 1
      %p283 = scmp.eq.s32.totalorder %s77, 1
      %p284 = scmp.ne.s32.totalorder %s279, %s281
      %p285 = scmp.eq.s32.totalorder %s77, 0
      %p286 = por %p284, %p285
      %p287 = scmp.ne.s32.totalorder %s279, %s281
      %p288 = scmp.eq.s32.totalorder %s82, 1
      %p289 = por %p287, %p288
      %p290 = scmp.ne.s32.totalorder %s281, %s282
      %p291 = scmp.eq.s32.totalorder %s82, 0
      %p292 = por %p290, %p291
      %p293 = scmp.ne.s32.totalorder %s281, %s282
      %p294 = scmp.eq.s32.totalorder %s83, 1
      %p295 = por %p293, %p294
      %p297 = scmp.ne.s32.totalorder %s282, %s296
      %p298 = scmp.eq.s32.totalorder %s83, 0
      %p299 = por %p297, %p298
      %s301 = sadd.s32 %s300, 1
      %p304 = scmp.eq.s32.totalorder %s77, 1
      %p305 = scmp.ne.s32.totalorder %s300, %s302
      %p306 = scmp.eq.s32.totalorder %s77, 0
      %p307 = por %p305, %p306
      %p308 = scmp.ne.s32.totalorder %s300, %s302
      %p309 = scmp.eq.s32.totalorder %s82, 1
      %p310 = por %p308, %p309
      %p311 = scmp.ne.s32.totalorder %s302, %s303
      %p312 = scmp.eq.s32.totalorder %s82, 0
      %p313 = por %p311, %p312
      %p314 = scmp.ne.s32.totalorder %s302, %s303
      %p315 = scmp.eq.s32.totalorder %s83, 1
      %p316 = por %p314, %p315
      %p318 = scmp.ne.s32.totalorder %s303, %s317
      %p319 = scmp.eq.s32.totalorder %s83, 0
      %p320 = por %p318, %p319
      %s322 = sadd.s32 %s321, 1
      %p325 = scmp.eq.s32.totalorder %s77, 1
      %p326 = scmp.ne.s32.totalorder %s321, %s323
      %p327 = scmp.eq.s32.totalorder %s77, 0
      %p328 = por %p326, %p327
      %p329 = scmp.ne.s32.totalorder %s321, %s323
      %p330 = scmp.eq.s32.totalorder %s82, 1
      %p331 = por %p329, %p330
      %p332 = scmp.ne.s32.totalorder %s323, %s324
      %p333 = scmp.eq.s32.totalorder %s82, 0
      %p334 = por %p332, %p333
      %p335 = scmp.ne.s32.totalorder %s323, %s324
      %p336 = scmp.eq.s32.totalorder %s83, 1
      %p337 = por %p335, %p336
      %p339 = scmp.ne.s32.totalorder %s324, %s338
      %p340 = scmp.eq.s32.totalorder %s83, 0
      %p341 = por %p339, %p340
      %s343 = sadd.s32 %s342, 1
      %p346 = scmp.eq.s32.totalorder %s77, 1
      %p347 = scmp.ne.s32.totalorder %s342, %s344
      %p348 = scmp.eq.s32.totalorder %s77, 0
      %p349 = por %p347, %p348
      %p350 = scmp.ne.s32.totalorder %s342, %s344
      %p351 = scmp.eq.s32.totalorder %s82, 1
      %p352 = por %p350, %p351
      %p353 = scmp.ne.s32.totalorder %s344, %s345
      %p354 = scmp.eq.s32.totalorder %s82, 0
      %p355 = por %p353, %p354
      %p356 = scmp.ne.s32.totalorder %s344, %s345
      %p357 = scmp.eq.s32.totalorder %s83, 1
      %p358 = por %p356, %p357
      %p360 = scmp.ne.s32.totalorder %s345, %s359
      %p361 = scmp.eq.s32.totalorder %s83, 0
      %p362 = por %p360, %p361
      %s364 = sadd.s32 %s363, 1
      %p367 = scmp.eq.s32.totalorder %s77, 1
      %p368 = scmp.ne.s32.totalorder %s363, %s365
      %p369 = scmp.eq.s32.totalorder %s77, 0
      %p370 = por %p368, %p369
      %p371 = scmp.ne.s32.totalorder %s363, %s365
      %p372 = scmp.eq.s32.totalorder %s82, 1
      %p373 = por %p371, %p372
      %p374 = scmp.ne.s32.totalorder %s365, %s366
      %p375 = scmp.eq.s32.totalorder %s82, 0
      %p376 = por %p374, %p375
      %p377 = scmp.ne.s32.totalorder %s365, %s366
      %p378 = scmp.eq.s32.totalorder %s83, 1
      %p379 = por %p377, %p378
      %p381 = scmp.ne.s32.totalorder %s366, %s380
      %p382 = scmp.eq.s32.totalorder %s83, 0
      %p383 = por %p381, %p382
      %s385 = sadd.s32 %s384, 1
      %p388 = scmp.eq.s32.totalorder %s77, 1
      %p389 = scmp.ne.s32.totalorder %s384, %s386
      %p390 = scmp.eq.s32.totalorder %s77, 0
      %p391 = por %p389, %p390
      %p392 = scmp.ne.s32.totalorder %s384, %s386
      %p393 = scmp.eq.s32.totalorder %s82, 1
      %p394 = por %p392, %p393
      %p395 = scmp.ne.s32.totalorder %s386, %s387
      %p396 = scmp.eq.s32.totalorder %s82, 0
      %p397 = por %p395, %p396
      %p398 = scmp.ne.s32.totalorder %s386, %s387
      %p399 = scmp.eq.s32.totalorder %s83, 1
      %p400 = por %p398, %p399
      %p402 = scmp.ne.s32.totalorder %s387, %s401
      %p403 = scmp.eq.s32.totalorder %s83, 0
      %p404 = por %p402, %p403
      %s406 = sadd.s32 %s405, 1
      %p409 = scmp.eq.s32.totalorder %s77, 1
      %p410 = scmp.ne.s32.totalorder %s405, %s407
      %p411 = scmp.eq.s32.totalorder %s77, 0
      %p412 = por %p410, %p411
      %p413 = scmp.ne.s32.totalorder %s405, %s407
      %p414 = scmp.eq.s32.totalorder %s82, 1
      %p415 = por %p413, %p414
      %p416 = scmp.ne.s32.totalorder %s407, %s408
      %p417 = scmp.eq.s32.totalorder %s82, 0
      %p418 = por %p416, %p417
      %p419 = scmp.ne.s32.totalorder %s407, %s408
      %p420 = scmp.eq.s32.totalorder %s83, 1
      %p421 = por %p419, %p420
      %p423 = scmp.ne.s32.totalorder %s408, %s422
      %p424 = scmp.eq.s32.totalorder %s83, 0
      %p425 = por %p423, %p424
      %s427 = sadd.s32 %s426, 1
      %p430 = scmp.eq.s32.totalorder %s77, 1
      %p431 = scmp.ne.s32.totalorder %s426, %s428
      %p432 = scmp.eq.s32.totalorder %s77, 0
      %p433 = por %p431, %p432
      %p434 = scmp.ne.s32.totalorder %s426, %s428
      %p435 = scmp.eq.s32.totalorder %s82, 1
      %p436 = por %p434, %p435
      %p437 = scmp.ne.s32.totalorder %s428, %s429
      %p438 = scmp.eq.s32.totalorder %s82, 0
      %p439 = por %p437, %p438
      %p440 = scmp.ne.s32.totalorder %s428, %s429
      %p441 = scmp.eq.s32.totalorder %s83, 1
      %p442 = por %p440, %p441
      %p444 = scmp.ne.s32.totalorder %s429, %s443
      %p445 = scmp.eq.s32.totalorder %s83, 0
      %p446 = por %p444, %p445
      %s448 = sadd.s32 %s447, 1
      %p451 = scmp.eq.s32.totalorder %s77, 1
      %p452 = scmp.ne.s32.totalorder %s447, %s449
      %p453 = scmp.eq.s32.totalorder %s77, 0
      %p454 = por %p452, %p453
      %p455 = scmp.ne.s32.totalorder %s447, %s449
      %p456 = scmp.eq.s32.totalorder %s82, 1
      %p457 = por %p455, %p456
      %p458 = scmp.ne.s32.totalorder %s449, %s450
      %p459 = scmp.eq.s32.totalorder %s82, 0
      %p460 = por %p458, %p459
      %p461 = scmp.ne.s32.totalorder %s449, %s450
      %p462 = scmp.eq.s32.totalorder %s83, 1
      %p463 = por %p461, %p462
      %p465 = scmp.ne.s32.totalorder %s450, %s464
      %p466 = scmp.eq.s32.totalorder %s83, 0
      %p467 = por %p465, %p466
      %s469 = sadd.s32 %s468, 1
      %p472 = scmp.eq.s32.totalorder %s77, 1
      %p473 = scmp.ne.s32.totalorder %s468, %s470
      %p474 = scmp.eq.s32.totalorder %s77, 0
      %p475 = por %p473, %p474
      %p476 = scmp.ne.s32.totalorder %s468, %s470
      %p477 = scmp.eq.s32.totalorder %s82, 1
      %p478 = por %p476, %p477
      %p479 = scmp.ne.s32.totalorder %s470, %s471
      %p480 = scmp.eq.s32.totalorder %s82, 0
      %p481 = por %p479, %p480
      %p482 = scmp.ne.s32.totalorder %s470, %s471
      %p483 = scmp.eq.s32.totalorder %s83, 1
      %p484 = por %p482, %p483
      %p486 = scmp.ne.s32.totalorder %s471, %s485
      %p487 = scmp.eq.s32.totalorder %s83, 0
      %p488 = por %p486, %p487
      %s490 = sadd.s32 %s489, 1
      %p493 = scmp.eq.s32.totalorder %s77, 1
      %p494 = scmp.ne.s32.totalorder %s489, %s491
      %p495 = scmp.eq.s32.totalorder %s77, 0
      %p496 = por %p494, %p495
      %p497 = scmp.ne.s32.totalorder %s489, %s491
      %p498 = scmp.eq.s32.totalorder %s82, 1
      %p499 = por %p497, %p498
      %p500 = scmp.ne.s32.totalorder %s491, %s492
      %p501 = scmp.eq.s32.totalorder %s82, 0
      %p502 = por %p500, %p501
      %p503 = scmp.ne.s32.totalorder %s491, %s492
      %p504 = scmp.eq.s32.totalorder %s83, 1
      %p505 = por %p503, %p504
      %p507 = scmp.ne.s32.totalorder %s492, %s506
      %p508 = scmp.eq.s32.totalorder %s83, 0
      %p509 = por %p507, %p508
      %s511 = sadd.s32 %s510, 1
      %p514 = scmp.eq.s32.totalorder %s77, 1
      %p515 = scmp.ne.s32.totalorder %s510, %s512
      %p516 = scmp.eq.s32.totalorder %s77, 0
      %p517 = por %p515, %p516
      %p518 = scmp.ne.s32.totalorder %s510, %s512
      %p519 = scmp.eq.s32.totalorder %s82, 1
      %p520 = por %p518, %p519
      %p521 = scmp.ne.s32.totalorder %s512, %s513
      %p522 = scmp.eq.s32.totalorder %s82, 0
      %p523 = por %p521, %p522
      %p524 = scmp.ne.s32.totalorder %s512, %s513
      %p525 = scmp.eq.s32.totalorder %s83, 1
      %p526 = por %p524, %p525
      %p528 = scmp.ne.s32.totalorder %s513, %s527
      %p529 = scmp.eq.s32.totalorder %s83, 0
      %p530 = por %p528, %p529
      %s532 = sadd.s32 %s531, 1
      %p535 = scmp.eq.s32.totalorder %s77, 1
      %p536 = scmp.ne.s32.totalorder %s531, %s533
      %p537 = scmp.eq.s32.totalorder %s77, 0
      %p538 = por %p536, %p537
      %p539 = scmp.ne.s32.totalorder %s531, %s533
      %p540 = scmp.eq.s32.totalorder %s82, 1
      %p541 = por %p539, %p540
      %p542 = scmp.ne.s32.totalorder %s533, %s534
      %p543 = scmp.eq.s32.totalorder %s82, 0
      %p544 = por %p542, %p543
      %p545 = scmp.ne.s32.totalorder %s533, %s534
      %p546 = scmp.eq.s32.totalorder %s83, 1
      %p547 = por %p545, %p546
      %p549 = scmp.ne.s32.totalorder %s534, %s548
      %p550 = scmp.eq.s32.totalorder %s83, 0
      %p551 = por %p549, %p550
      %s553 = sadd.s32 %s552, 1
      %p556 = scmp.eq.s32.totalorder %s77, 1
      %p557 = scmp.ne.s32.totalorder %s552, %s554
      %p558 = scmp.eq.s32.totalorder %s77, 0
      %p559 = por %p557, %p558
      %p560 = scmp.ne.s32.totalorder %s552, %s554
      %p561 = scmp.eq.s32.totalorder %s82, 1
      %p562 = por %p560, %p561
      %p563 = scmp.ne.s32.totalorder %s554, %s555
      %p564 = scmp.eq.s32.totalorder %s82, 0
      %p565 = por %p563, %p564
      %p566 = scmp.ne.s32.totalorder %s554, %s555
      %p567 = scmp.eq.s32.totalorder %s83, 1
      %p568 = por %p566, %p567
      %p570 = scmp.ne.s32.totalorder %s555, %s569
      %p571 = scmp.eq.s32.totalorder %s83, 0
      %p572 = por %p570, %p571
      %s574 = sadd.s32 %s573, 1
      %p577 = scmp.eq.s32.totalorder %s77, 1
      %p578 = scmp.ne.s32.totalorder %s573, %s575
      %p579 = scmp.eq.s32.totalorder %s77, 0
      %p580 = por %p578, %p579
      %p581 = scmp.ne.s32.totalorder %s573, %s575
      %p582 = scmp.eq.s32.totalorder %s82, 1
      %p583 = por %p581, %p582
      %p584 = scmp.ne.s32.totalorder %s575, %s576
      %p585 = scmp.eq.s32.totalorder %s82, 0
      %p586 = por %p584, %p585
      %p587 = scmp.ne.s32.totalorder %s575, %s576
      %p588 = scmp.eq.s32.totalorder %s83, 1
      %p589 = por %p587, %p588
      %p591 = scmp.ne.s32.totalorder %s576, %s590
      %p592 = scmp.eq.s32.totalorder %s83, 0
      %p593 = por %p591, %p592
      %s595 = sadd.s32 %s594, 1
      %p598 = scmp.eq.s32.totalorder %s77, 1
      %p599 = scmp.ne.s32.totalorder %s594, %s596
      %p600 = scmp.eq.s32.totalorder %s77, 0
      %p601 = por %p599, %p600
      %p602 = scmp.ne.s32.totalorder %s594, %s596
      %p603 = scmp.eq.s32.totalorder %s82, 1
      %p604 = por %p602, %p603
      %p605 = scmp.ne.s32.totalorder %s596, %s597
      %p606 = scmp.eq.s32.totalorder %s82, 0
      %p607 = por %p605, %p606
      %p608 = scmp.ne.s32.totalorder %s596, %s597
      %p609 = scmp.eq.s32.totalorder %s83, 1
      %p610 = por %p608, %p609
      %p612 = scmp.ne.s32.totalorder %s597, %s611
      %p613 = scmp.eq.s32.totalorder %s83, 0
      %p614 = por %p612, %p613
      %s616 = sadd.s32 %s615, 1
      %p619 = scmp.eq.s32.totalorder %s77, 1
      %p620 = scmp.ne.s32.totalorder %s615, %s617
      %p621 = scmp.eq.s32.totalorder %s77, 0
      %p622 = por %p620, %p621
      %p623 = scmp.ne.s32.totalorder %s615, %s617
      %p624 = scmp.eq.s32.totalorder %s82, 1
      %p625 = por %p623, %p624
      %p626 = scmp.ne.s32.totalorder %s617, %s618
      %p627 = scmp.eq.s32.totalorder %s82, 0
      %p628 = por %p626, %p627
      %p629 = scmp.ne.s32.totalorder %s617, %s618
      %p630 = scmp.eq.s32.totalorder %s83, 1
      %p631 = por %p629, %p630
      %p633 = scmp.ne.s32.totalorder %s618, %s632
      %p634 = scmp.eq.s32.totalorder %s83, 0
      %p635 = por %p633, %p634
      %s637 = sadd.s32 %s636, 1
      %p640 = scmp.eq.s32.totalorder %s77, 1
      %p641 = scmp.ne.s32.totalorder %s636, %s638
      %p642 = scmp.eq.s32.totalorder %s77, 0
      %p643 = por %p641, %p642
      %p644 = scmp.ne.s32.totalorder %s636, %s638
      %p645 = scmp.eq.s32.totalorder %s82, 1
      %p646 = por %p644, %p645
      %p647 = scmp.ne.s32.totalorder %s638, %s639
      %p648 = scmp.eq.s32.totalorder %s82, 0
      %p649 = por %p647, %p648
      %p650 = scmp.ne.s32.totalorder %s638, %s639
      %p651 = scmp.eq.s32.totalorder %s83, 1
      %p652 = por %p650, %p651
      %p654 = scmp.ne.s32.totalorder %s639, %s653
      %p655 = scmp.eq.s32.totalorder %s83, 0
      %p656 = por %p654, %p655
      %s658 = sadd.s32 %s657, 1
      %p661 = scmp.eq.s32.totalorder %s77, 1
      %p662 = scmp.ne.s32.totalorder %s657, %s659
      %p663 = scmp.eq.s32.totalorder %s77, 0
      %p664 = por %p662, %p663
      %p665 = scmp.ne.s32.totalorder %s657, %s659
      %p666 = scmp.eq.s32.totalorder %s82, 1
      %p667 = por %p665, %p666
      %p668 = scmp.ne.s32.totalorder %s659, %s660
      %p669 = scmp.eq.s32.totalorder %s82, 0
      %p670 = por %p668, %p669
      %p671 = scmp.ne.s32.totalorder %s659, %s660
      %p672 = scmp.eq.s32.totalorder %s83, 1
      %p673 = por %p671, %p672
      %p675 = scmp.ne.s32.totalorder %s660, %s674
      %p676 = scmp.eq.s32.totalorder %s83, 0
      %p677 = por %p675, %p676
      %s679 = sadd.s32 %s678, 1
      %p682 = scmp.eq.s32.totalorder %s77, 1
      %p683 = scmp.ne.s32.totalorder %s678, %s680
      %p684 = scmp.eq.s32.totalorder %s77, 0
      %p685 = por %p683, %p684
      %p686 = scmp.ne.s32.totalorder %s678, %s680
      %p687 = scmp.eq.s32.totalorder %s82, 1
      %p688 = por %p686, %p687
      %p689 = scmp.ne.s32.totalorder %s680, %s681
      %p690 = scmp.eq.s32.totalorder %s82, 0
      %p691 = por %p689, %p690
      %p692 = scmp.ne.s32.totalorder %s680, %s681
      %p693 = scmp.eq.s32.totalorder %s83, 1
      %p694 = por %p692, %p693
      %p696 = scmp.ne.s32.totalorder %s681, %s695
      %p697 = scmp.eq.s32.totalorder %s83, 0
      %p698 = por %p696, %p697
      %s699 = ssub.s32 %s77, %s84
      %p700 = scmp.eq.s32.totalorder %s699, 0
      %s702 = sadd.s32 %s701, 1
      %s703 = scalar_select %p700, %s701, %s702
      %p706 = pneg %p700
      %p707 = scmp.eq.s32.totalorder %s77, 1
      %p708 = por %p706, %p707
      %p709 = scmp.ne.s32.totalorder %s701, %s704
      %p710 = scmp.eq.s32.totalorder %s77, 0
      %p711 = por %p709, %p710
      %p712 = scmp.ne.s32.totalorder %s701, %s704
      %p713 = scmp.eq.s32.totalorder %s82, 1
      %p714 = por %p712, %p713
      %p715 = scmp.ne.s32.totalorder %s704, %s705
      %p716 = scmp.eq.s32.totalorder %s82, 0
      %p717 = por %p715, %p716
      %p718 = scmp.ne.s32.totalorder %s704, %s705
      %p719 = scmp.eq.s32.totalorder %s83, 1
      %p720 = por %p718, %p719
      %p722 = scmp.ne.s32.totalorder %s705, %s721
      %p723 = scmp.eq.s32.totalorder %s83, 0
      %p724 = por %p722, %p723
      %p725 = scmp.le.s32.totalorder 1, %s77
      %p726 = scmp.lt.s32.totalorder %s77, 3
      %p727 = pnand %p725, %p726
      %p728 = pneg %p727
      // Predicated region
      $region9: #{_lambda_.1} parent=5 // pred_check
        _
      $region10: #{_lambda_.1} parent=5 // pred_check_branch
        %730 = sbr.rel (%p727) target = $region12
      $region11: #{_lambda_.1} parent=5 // pred_region
        %s731 = ssub.s32 %s77, 1
        // Predicated region
        $region13: #{_lambda_.1} parent=11 // pred_check
          %p732 = pneg %p124
        $region14: #{_lambda_.1} parent=11 // pred_check_branch
          %734 = sbr.rel (%p732) target = $region16
        $region15: #{_lambda_.1} parent=11 // pred_region
          %s736 = ssub.s32 1024, 1024
          %737 = vsyncadd [#allocation5], %s736
          %s738 = sshll.u32 [#allocation4], 4
          %s739 = int_to_ptr.vmem [resolvable:$true] %s738
          %744 = dma.hbm_to_vmem [thread:$0]  %s3, 1024, %s739, [#allocation5], 64, 64, 4
        $region16: #{_lambda_.1} parent=11 // pred_fallthru
          _
        // Predicated region
        $region17: #{_lambda_.1} parent=11 // pred_check
          %p745 = pneg %p145
        $region18: #{_lambda_.1} parent=11 // pred_check_branch
          %747 = sbr.rel (%p745) target = $region20
        $region19: #{_lambda_.1} parent=11 // pred_region
          %s749 = ssub.s32 16, 16
          %750 = vsyncadd [#allocation8], %s749
          %s752 = sshll.u32 [#allocation7], 4
          %s753 = int_to_ptr.vmem [resolvable:$true] %s752
          %755 = dma.hbm_to_vmem [thread:$0]  %s5, 16, %s753, [#allocation8]
        $region20: #{_lambda_.1} parent=11 // pred_fallthru
          _
        // Predicated region
        $region21: #{_lambda_.1} parent=11 // pred_check
          %p756 = pneg %p166
        $region22: #{_lambda_.1} parent=11 // pred_check_branch
          %758 = sbr.rel (%p756) target = $region24
        $region23: #{_lambda_.1} parent=11 // pred_region
          _
        $region24: #{_lambda_.1} parent=11 // pred_fallthru
          _
        // Predicated region
        $region25: #{_lambda_.1} parent=11 // pred_check
          %p759 = pneg %p187
        $region26: #{_lambda_.1} parent=11 // pred_check_branch
          %761 = sbr.rel (%p759) target = $region28
        $region27: #{_lambda_.1} parent=11 // pred_region
          %s763 = ssub.s32 16, 16
          %764 = vsyncadd [#allocation8], %s763
          %s766 = sshll.u32 [#allocation9], 4
          %s767 = int_to_ptr.vmem [resolvable:$true] %s766
          %769 = dma.hbm_to_vmem [thread:$0]  %s9, 16, %s767, [#allocation8]
        $region28: #{_lambda_.1} parent=11 // pred_fallthru
          _
        // Predicated region
        $region29: #{_lambda_.1} parent=11 // pred_check
          %p770 = pneg %p208
        $region30: #{_lambda_.1} parent=11 // pred_check_branch
          %772 = sbr.rel (%p770) target = $region32
        $region31: #{_lambda_.1} parent=11 // pred_region
          %s774 = ssub.s32 6144, 6144
          %775 = vsyncadd [#allocation11], %s774
          %s776 = sshll.u32 [#allocation10], 4
          %s777 = int_to_ptr.vmem [resolvable:$true] %s776
          %782 = dma.hbm_to_vmem [thread:$0]  %s11, 6144, %s777, [#allocation11], 128, 128, 8
        $region32: #{_lambda_.1} parent=11 // pred_fallthru
          _
        // Predicated region
        $region33: #{_lambda_.1} parent=11 // pred_check
          %p783 = pneg %p229
        $region34: #{_lambda_.1} parent=11 // pred_check_branch
          %785 = sbr.rel (%p783) target = $region36
        $region35: #{_lambda_.1} parent=11 // pred_region
          %s787 = ssub.s32 32, 32
          %788 = vsyncadd [#allocation11], %s787
          %s790 = sshll.u32 [#allocation12], 4
          %s791 = int_to_ptr.vmem [resolvable:$true] %s790
          %793 = dma.hbm_to_vmem [thread:$0]  %s13, 32, %s791, [#allocation11]
        $region36: #{_lambda_.1} parent=11 // pred_fallthru
          _
        // Predicated region
        $region37: #{_lambda_.1} parent=11 // pred_check
          %p794 = pneg %p250
        $region38: #{_lambda_.1} parent=11 // pred_check_branch
          %796 = sbr.rel (%p794) target = $region40
        $region39: #{_lambda_.1} parent=11 // pred_region
          %s798 = ssub.s32 6144, 6144
          %799 = vsyncadd [#allocation14], %s798
          %s800 = sshll.u32 [#allocation13], 4
          %s801 = int_to_ptr.vmem [resolvable:$true] %s800
          %806 = dma.hbm_to_vmem [thread:$0]  %s15, 6144, %s801, [#allocation14], 128, 128, 8
        $region40: #{_lambda_.1} parent=11 // pred_fallthru
          _
        // Predicated region
        $region41: #{_lambda_.1} parent=11 // pred_check
          %p807 = pneg %p271
        $region42: #{_lambda_.1} parent=11 // pred_check_branch
          %809 = sbr.rel (%p807) target = $region44
        $region43: #{_lambda_.1} parent=11 // pred_region
          %s811 = ssub.s32 32, 32
          %812 = vsyncadd [#allocation14], %s811
          %s814 = sshll.u32 [#allocation15], 4
          %s815 = int_to_ptr.vmem [resolvable:$true] %s814
          %817 = dma.hbm_to_vmem [thread:$0]  %s17, 32, %s815, [#allocation14]
        $region44: #{_lambda_.1} parent=11 // pred_fallthru
          _
        // Predicated region
        $region45: #{_lambda_.1} parent=11 // pred_check
          %p818 = pneg %p292
        $region46: #{_lambda_.1} parent=11 // pred_check_branch
          %820 = sbr.rel (%p818) target = $region48
        $region47: #{_lambda_.1} parent=11 // pred_region
          %s822 = ssub.s32 6144, 6144
          %823 = vsyncadd [#allocation17], %s822
          %s824 = sshll.u32 [#allocation16], 4
          %s825 = int_to_ptr.vmem [resolvable:$true] %s824
          %830 = dma.hbm_to_vmem [thread:$0]  %s19, 6144, %s825, [#allocation17], 128, 128, 8
        $region48: #{_lambda_.1} parent=11 // pred_fallthru
          _
        // Predicated region
        $region49: #{_lambda_.1} parent=11 // pred_check
          %p831 = pneg %p313
        $region50: #{_lambda_.1} parent=11 // pred_check_branch
          %833 = sbr.rel (%p831) target = $region52
        $region51: #{_lambda_.1} parent=11 // pred_region
          %s835 = ssub.s32 32, 32
          %836 = vsyncadd [#allocation17], %s835
          %s838 = sshll.u32 [#allocation18], 4
          %s839 = int_to_ptr.vmem [resolvable:$true] %s838
          %841 = dma.hbm_to_vmem [thread:$0]  %s21, 32, %s839, [#allocation17]
        $region52: #{_lambda_.1} parent=11 // pred_fallthru
          _
        // Predicated region
        $region53: #{_lambda_.1} parent=11 // pred_check
          %p842 = pneg %p334
        $region54: #{_lambda_.1} parent=11 // pred_check_branch
          %844 = sbr.rel (%p842) target = $region56
        $region55: #{_lambda_.1} parent=11 // pred_region
          %s846 = ssub.s32 6144, 6144
          %847 = vsyncadd [#allocation20], %s846
          %s848 = sshll.u32 [#allocation19], 4
          %s849 = int_to_ptr.vmem [resolvable:$true] %s848
          %854 = dma.hbm_to_vmem [thread:$0]  %s23, 6144, %s849, [#allocation20], 128, 128, 8
        $region56: #{_lambda_.1} parent=11 // pred_fallthru
          _
        // Predicated region
        $region57: #{_lambda_.1} parent=11 // pred_check
          %p855 = pneg %p355
        $region58: #{_lambda_.1} parent=11 // pred_check_branch
          %857 = sbr.rel (%p855) target = $region60
        $region59: #{_lambda_.1} parent=11 // pred_region
          _
        $region60: #{_lambda_.1} parent=11 // pred_fallthru
          _
        // Predicated region
        $region61: #{_lambda_.1} parent=11 // pred_check
          %p858 = pneg %p376
        $region62: #{_lambda_.1} parent=11 // pred_check_branch
          %860 = sbr.rel (%p858) target = $region64
        $region63: #{_lambda_.1} parent=11 // pred_region
          %s862 = ssub.s32 6144, 6144
          %863 = vsyncadd [#allocation20], %s862
          %s864 = sshll.u32 [#allocation21], 4
          %s865 = int_to_ptr.vmem [resolvable:$true] %s864
          %870 = dma.hbm_to_vmem [thread:$0]  %s27, 6144, %s865, [#allocation20], 128, 128, 8
        $region64: #{_lambda_.1} parent=11 // pred_fallthru
          _
        // Predicated region
        $region65: #{_lambda_.1} parent=11 // pred_check
          %p871 = pneg %p397
        $region66: #{_lambda_.1} parent=11 // pred_check_branch
          %873 = sbr.rel (%p871) target = $region68
        $region67: #{_lambda_.1} parent=11 // pred_region
          _
        $region68: #{_lambda_.1} parent=11 // pred_fallthru
          _
        // Predicated region
        $region69: #{_lambda_.1} parent=11 // pred_check
          %p874 = pneg %p418
        $region70: #{_lambda_.1} parent=11 // pred_check_branch
          %876 = sbr.rel (%p874) target = $region72
        $region71: #{_lambda_.1} parent=11 // pred_region
          %s878 = ssub.s32 6144, 6144
          %879 = vsyncadd [#allocation23], %s878
          %s880 = sshll.u32 [#allocation22], 4
          %s881 = int_to_ptr.vmem [resolvable:$true] %s880
          %886 = dma.hbm_to_vmem [thread:$0]  %s31, 6144, %s881, [#allocation23], 128, 128, 8
        $region72: #{_lambda_.1} parent=11 // pred_fallthru
          _
        // Predicated region
        $region73: #{_lambda_.1} parent=11 // pred_check
          %p887 = pneg %p439
        $region74: #{_lambda_.1} parent=11 // pred_check_branch
          %889 = sbr.rel (%p887) target = $region76
        $region75: #{_lambda_.1} parent=11 // pred_region
          _
        $region76: #{_lambda_.1} parent=11 // pred_fallthru
          _
        // Predicated region
        $region77: #{_lambda_.1} parent=11 // pred_check
          %p890 = pneg %p460
        $region78: #{_lambda_.1} parent=11 // pred_check_branch
          %892 = sbr.rel (%p890) target = $region80
        $region79: #{_lambda_.1} parent=11 // pred_region
          %s894 = ssub.s32 6144, 6144
          %895 = vsyncadd [#allocation23], %s894
          %s896 = sshll.u32 [#allocation24], 4
          %s897 = int_to_ptr.vmem [resolvable:$true] %s896
          %902 = dma.hbm_to_vmem [thread:$0]  %s35, 6144, %s897, [#allocation23], 128, 128, 8
        $region80: #{_lambda_.1} parent=11 // pred_fallthru
          _
        // Predicated region
        $region81: #{_lambda_.1} parent=11 // pred_check
          %p903 = pneg %p481
        $region82: #{_lambda_.1} parent=11 // pred_check_branch
          %905 = sbr.rel (%p903) target = $region84
        $region83: #{_lambda_.1} parent=11 // pred_region
          _
        $region84: #{_lambda_.1} parent=11 // pred_fallthru
          _
        // Predicated region
        $region85: #{_lambda_.1} parent=11 // pred_check
          %p906 = pneg %p502
        $region86: #{_lambda_.1} parent=11 // pred_check_branch
          %908 = sbr.rel (%p906) target = $region88
        $region87: #{_lambda_.1} parent=11 // pred_region
          %s910 = ssub.s32 6144, 6144
          %911 = vsyncadd [#allocation26], %s910
          %s912 = sshll.u32 [#allocation25], 4
          %s913 = int_to_ptr.vmem [resolvable:$true] %s912
          %918 = dma.hbm_to_vmem [thread:$0]  %s39, 6144, %s913, [#allocation26], 128, 128, 8
        $region88: #{_lambda_.1} parent=11 // pred_fallthru
          _
        // Predicated region
        $region89: #{_lambda_.1} parent=11 // pred_check
          %p919 = pneg %p523
        $region90: #{_lambda_.1} parent=11 // pred_check_branch
          %921 = sbr.rel (%p919) target = $region92
        $region91: #{_lambda_.1} parent=11 // pred_region
          _
        $region92: #{_lambda_.1} parent=11 // pred_fallthru
          _
        // Predicated region
        $region93: #{_lambda_.1} parent=11 // pred_check
          %p922 = pneg %p544
        $region94: #{_lambda_.1} parent=11 // pred_check_branch
          %924 = sbr.rel (%p922) target = $region96
        $region95: #{_lambda_.1} parent=11 // pred_region
          %s926 = ssub.s32 6144, 6144
          %927 = vsyncadd [#allocation26], %s926
          %s928 = sshll.u32 [#allocation27], 4
          %s929 = int_to_ptr.vmem [resolvable:$true] %s928
          %934 = dma.hbm_to_vmem [thread:$0]  %s43, 6144, %s929, [#allocation26], 128, 128, 8
        $region96: #{_lambda_.1} parent=11 // pred_fallthru
          _
        // Predicated region
        $region97: #{_lambda_.1} parent=11 // pred_check
          %p935 = pneg %p565
        $region98: #{_lambda_.1} parent=11 // pred_check_branch
          %937 = sbr.rel (%p935) target = $region100
        $region99: #{_lambda_.1} parent=11 // pred_region
          _
        $region100: #{_lambda_.1} parent=11 // pred_fallthru
          _
        // Predicated region
        $region101: #{_lambda_.1} parent=11 // pred_check
          %p938 = pneg %p586
        $region102: #{_lambda_.1} parent=11 // pred_check_branch
          %940 = sbr.rel (%p938) target = $region104
        $region103: #{_lambda_.1} parent=11 // pred_region
          %s942 = ssub.s32 6144, 6144
          %943 = vsyncadd [#allocation29], %s942
          %s944 = sshll.u32 [#allocation28], 4
          %s945 = int_to_ptr.vmem [resolvable:$true] %s944
          %950 = dma.hbm_to_vmem [thread:$0]  %s47, 6144, %s945, [#allocation29], 128, 128, 8
        $region104: #{_lambda_.1} parent=11 // pred_fallthru
          _
        // Predicated region
        $region105: #{_lambda_.1} parent=11 // pred_check
          %p951 = pneg %p607
        $region106: #{_lambda_.1} parent=11 // pred_check_branch
          %953 = sbr.rel (%p951) target = $region108
        $region107: #{_lambda_.1} parent=11 // pred_region
          _
        $region108: #{_lambda_.1} parent=11 // pred_fallthru
          _
        // Predicated region
        $region109: #{_lambda_.1} parent=11 // pred_check
          %p954 = pneg %p628
        $region110: #{_lambda_.1} parent=11 // pred_check_branch
          %956 = sbr.rel (%p954) target = $region112
        $region111: #{_lambda_.1} parent=11 // pred_region
          %s958 = ssub.s32 2048, 2048
          %959 = vsyncadd [#allocation29], %s958
          %s960 = sshll.u32 [#allocation30], 4
          %s961 = int_to_ptr.vmem [resolvable:$true] %s960
          %966 = dma.hbm_to_vmem [thread:$0]  %s51, 2048, %s961, [#allocation29], 128, 128, 8
        $region112: #{_lambda_.1} parent=11 // pred_fallthru
          _
        // Predicated region
        $region113: #{_lambda_.1} parent=11 // pred_check
          %p967 = pneg %p649
        $region114: #{_lambda_.1} parent=11 // pred_check_branch
          %969 = sbr.rel (%p967) target = $region116
        $region115: #{_lambda_.1} parent=11 // pred_region
          _
        $region116: #{_lambda_.1} parent=11 // pred_fallthru
          _
        // Predicated region
        $region117: #{_lambda_.1} parent=11 // pred_check
          %p970 = pneg %p670
        $region118: #{_lambda_.1} parent=11 // pred_check_branch
          %972 = sbr.rel (%p970) target = $region120
        $region119: #{_lambda_.1} parent=11 // pred_region
          _
        $region120: #{_lambda_.1} parent=11 // pred_fallthru
          _
        // Predicated region
        $region121: #{_lambda_.1} parent=11 // pred_check
          %p973 = pneg %p691
        $region122: #{_lambda_.1} parent=11 // pred_check_branch
          %975 = sbr.rel (%p973) target = $region124
        $region123: #{_lambda_.1} parent=11 // pred_region
          _
        $region124: #{_lambda_.1} parent=11 // pred_fallthru
          _
      $region12: #{_lambda_.1} parent=5 // pred_fallthru
        _
      %p976 = scmp.lt.s32.totalorder %s77, 2
      // Predicated region
      $region125: #{_lambda_.1} parent=5 // pred_check
        %p977 = pneg %p976
      $region126: #{_lambda_.1} parent=5 // pred_check_branch
        %979 = sbr.rel (%p977) target = $region128
      $region127: #{_lambda_.1} parent=5 // pred_region
        // Predicated region
        $region129: #{_lambda_.1} parent=127 // pred_check
          %p980 = pneg %p97
        $region130: #{_lambda_.1} parent=127 // pred_check_branch
          %982 = sbr.rel (%p980) target = $region132
        $region131: #{_lambda_.1} parent=127 // pred_region
          %p983 = scmp.lt.s32.totalorder %s77, 1
          %s984 = scalar_select %p983, %s77, 1
          %s985 = smul.addr %s984, 4
          %s986 = smul.addr %s985, 4
          %s987 = scalar_lea.vmem %s1, %s986
        $region132: #{_lambda_.1} parent=127 // pred_fallthru
          _
      $region128: #{_lambda_.1} parent=5 // pred_fallthru
        _
      %p988 = scmp.le.s32.totalorder 1, %s77
      %p989 = scmp.lt.s32.totalorder %s77, 3
      %p990 = pnand %p988, %p989
      %p991 = pneg %p990
      // Predicated region
      $region133: #{_lambda_.1} parent=5 // pred_check
        _
      $region134: #{_lambda_.1} parent=5 // pred_check_branch
        %993 = sbr.rel (%p990) target = $region136
      $region135: #{_lambda_.1} parent=5 // pred_region
        %s994 = ssub.s32 %s77, 1
        // Predicated region
        $region137: #{_lambda_.1} parent=135 // pred_check
          %p995 = pneg %p124
        $region138: #{_lambda_.1} parent=135 // pred_check_branch
          %997 = sbr.rel (%p995) target = $region140
        $region139: #{_lambda_.1} parent=135 // pred_region
          %998 = dma.done [#allocation5], 1024
        $region140: #{_lambda_.1} parent=135 // pred_fallthru
          _
        // Predicated region
        $region141: #{_lambda_.1} parent=135 // pred_check
          %p999 = pneg %p145
        $region142: #{_lambda_.1} parent=135 // pred_check_branch
          %1001 = sbr.rel (%p999) target = $region144
        $region143: #{_lambda_.1} parent=135 // pred_region
          %1002 = dma.done [#allocation8], 16
        $region144: #{_lambda_.1} parent=135 // pred_fallthru
          _
        // Predicated region
        $region145: #{_lambda_.1} parent=135 // pred_check
          %p1003 = pneg %p187
        $region146: #{_lambda_.1} parent=135 // pred_check_branch
          %1005 = sbr.rel (%p1003) target = $region148
        $region147: #{_lambda_.1} parent=135 // pred_region
          %1006 = dma.done [#allocation8], 16
        $region148: #{_lambda_.1} parent=135 // pred_fallthru
          _
        // Predicated region
        $region149: #{_lambda_.1} parent=135 // pred_check
          %p1007 = pneg %p208
        $region150: #{_lambda_.1} parent=135 // pred_check_branch
          %1009 = sbr.rel (%p1007) target = $region152
        $region151: #{_lambda_.1} parent=135 // pred_region
          %1010 = dma.done [#allocation11], 6144
        $region152: #{_lambda_.1} parent=135 // pred_fallthru
          _
        // Predicated region
        $region153: #{_lambda_.1} parent=135 // pred_check
          %p1011 = pneg %p229
        $region154: #{_lambda_.1} parent=135 // pred_check_branch
          %1013 = sbr.rel (%p1011) target = $region156
        $region155: #{_lambda_.1} parent=135 // pred_region
          %1014 = dma.done [#allocation11], 32
        $region156: #{_lambda_.1} parent=135 // pred_fallthru
          _
        // Predicated region
        $region157: #{_lambda_.1} parent=135 // pred_check
          %p1015 = pneg %p250
        $region158: #{_lambda_.1} parent=135 // pred_check_branch
          %1017 = sbr.rel (%p1015) target = $region160
        $region159: #{_lambda_.1} parent=135 // pred_region
          %1018 = dma.done [#allocation14], 6144
        $region160: #{_lambda_.1} parent=135 // pred_fallthru
          _
        // Predicated region
        $region161: #{_lambda_.1} parent=135 // pred_check
          %p1019 = pneg %p271
        $region162: #{_lambda_.1} parent=135 // pred_check_branch
          %1021 = sbr.rel (%p1019) target = $region164
        $region163: #{_lambda_.1} parent=135 // pred_region
          %1022 = dma.done [#allocation14], 32
        $region164: #{_lambda_.1} parent=135 // pred_fallthru
          _
        // Predicated region
        $region165: #{_lambda_.1} parent=135 // pred_check
          %p1023 = pneg %p292
        $region166: #{_lambda_.1} parent=135 // pred_check_branch
          %1025 = sbr.rel (%p1023) target = $region168
        $region167: #{_lambda_.1} parent=135 // pred_region
          %1026 = dma.done [#allocation17], 6144
        $region168: #{_lambda_.1} parent=135 // pred_fallthru
          _
        // Predicated region
        $region169: #{_lambda_.1} parent=135 // pred_check
          %p1027 = pneg %p313
        $region170: #{_lambda_.1} parent=135 // pred_check_branch
          %1029 = sbr.rel (%p1027) target = $region172
        $region171: #{_lambda_.1} parent=135 // pred_region
          %1030 = dma.done [#allocation17], 32
        $region172: #{_lambda_.1} parent=135 // pred_fallthru
          _
        // Predicated region
        $region173: #{_lambda_.1} parent=135 // pred_check
          %p1031 = pneg %p334
        $region174: #{_lambda_.1} parent=135 // pred_check_branch
          %1033 = sbr.rel (%p1031) target = $region176
        $region175: #{_lambda_.1} parent=135 // pred_region
          %1034 = dma.done [#allocation20], 6144
        $region176: #{_lambda_.1} parent=135 // pred_fallthru
          _
        // Predicated region
        $region177: #{_lambda_.1} parent=135 // pred_check
          %p1035 = pneg %p376
        $region178: #{_lambda_.1} parent=135 // pred_check_branch
          %1037 = sbr.rel (%p1035) target = $region180
        $region179: #{_lambda_.1} parent=135 // pred_region
          %1038 = dma.done [#allocation20], 6144
        $region180: #{_lambda_.1} parent=135 // pred_fallthru
          _
        // Predicated region
        $region181: #{_lambda_.1} parent=135 // pred_check
          %p1039 = pneg %p418
        $region182: #{_lambda_.1} parent=135 // pred_check_branch
          %1041 = sbr.rel (%p1039) target = $region184
        $region183: #{_lambda_.1} parent=135 // pred_region
          %1042 = dma.done [#allocation23], 6144
        $region184: #{_lambda_.1} parent=135 // pred_fallthru
          _
        // Predicated region
        $region185: #{_lambda_.1} parent=135 // pred_check
          %p1043 = pneg %p460
        $region186: #{_lambda_.1} parent=135 // pred_check_branch
          %1045 = sbr.rel (%p1043) target = $region188
        $region187: #{_lambda_.1} parent=135 // pred_region
          %1046 = dma.done [#allocation23], 6144
        $region188: #{_lambda_.1} parent=135 // pred_fallthru
          _
        // Predicated region
        $region189: #{_lambda_.1} parent=135 // pred_check
          %p1047 = pneg %p502
        $region190: #{_lambda_.1} parent=135 // pred_check_branch
          %1049 = sbr.rel (%p1047) target = $region192
        $region191: #{_lambda_.1} parent=135 // pred_region
          %1050 = dma.done [#allocation26], 6144
        $region192: #{_lambda_.1} parent=135 // pred_fallthru
          _
        // Predicated region
        $region193: #{_lambda_.1} parent=135 // pred_check
          %p1051 = pneg %p544
        $region194: #{_lambda_.1} parent=135 // pred_check_branch
          %1053 = sbr.rel (%p1051) target = $region196
        $region195: #{_lambda_.1} parent=135 // pred_region
          %1054 = dma.done [#allocation26], 6144
        $region196: #{_lambda_.1} parent=135 // pred_fallthru
          _
        // Predicated region
        $region197: #{_lambda_.1} parent=135 // pred_check
          %p1055 = pneg %p586
        $region198: #{_lambda_.1} parent=135 // pred_check_branch
          %1057 = sbr.rel (%p1055) target = $region200
        $region199: #{_lambda_.1} parent=135 // pred_region
          %1058 = dma.done [#allocation29], 6144
        $region200: #{_lambda_.1} parent=135 // pred_fallthru
          _
        // Predicated region
        $region201: #{_lambda_.1} parent=135 // pred_check
          %p1059 = pneg %p628
        $region202: #{_lambda_.1} parent=135 // pred_check_branch
          %1061 = sbr.rel (%p1059) target = $region204
        $region203: #{_lambda_.1} parent=135 // pred_region
          %1062 = dma.done [#allocation29], 2048
        $region204: #{_lambda_.1} parent=135 // pred_fallthru
          _
        %p1063 = scmp.lt.s32.totalorder %s82, 1
        %s1064 = scalar_select %p1063, %s82, 1
        %s1065 = smul.addr %s1064, 4
        %s1066 = smul.addr %s1065, 4
        %s1067 = scalar_lea.vmem %s1, %s1066
        %p1068 = pneg %p103
        %p1069 = pneg %p100
        %p1070 = pneg %p124
        %p1071 = pneg %p121
        %p1072 = pneg %p145
        %p1073 = pneg %p142
        %p1074 = pneg %p166
        %p1075 = pneg %p163
        %p1076 = pneg %p187
        %p1077 = pneg %p184
        %p1078 = pneg %p208
        %p1079 = pneg %p205
        %p1080 = pneg %p229
        %p1081 = pneg %p226
        %p1082 = pneg %p250
        %p1083 = pneg %p247
        %p1084 = pneg %p271
        %p1085 = pneg %p268
        %p1086 = pneg %p292
        %p1087 = pneg %p289
        %p1088 = pneg %p313
        %p1089 = pneg %p310
        %p1090 = pneg %p334
        %p1091 = pneg %p331
        %p1092 = pneg %p355
        %p1093 = pneg %p352
        %p1094 = pneg %p376
        %p1095 = pneg %p373
        %p1096 = pneg %p397
        %p1097 = pneg %p394
        %p1098 = pneg %p418
        %p1099 = pneg %p415
        %p1100 = pneg %p439
        %p1101 = pneg %p436
        %p1102 = pneg %p460
        %p1103 = pneg %p457
        %p1104 = pneg %p481
        %p1105 = pneg %p478
        %p1106 = pneg %p502
        %p1107 = pneg %p499
        %p1108 = pneg %p523
        %p1109 = pneg %p520
        %p1110 = pneg %p544
        %p1111 = pneg %p541
        %p1112 = pneg %p565
        %p1113 = pneg %p562
        %p1114 = pneg %p586
        %p1115 = pneg %p583
        %p1116 = pneg %p607
        %p1117 = pneg %p604
        %p1118 = pneg %p628
        %p1119 = pneg %p625
        %p1120 = pneg %p649
        %p1121 = pneg %p646
        %p1122 = pneg %p670
        %p1123 = pneg %p667
        %p1124 = pneg %p691
        %p1125 = pneg %p688
        %p1126 = pneg %p717
        %p1127 = pneg %p714
        %s1128 = sand.u32 %s704, 1
        %s1129 = scalar_lea.sflag [#allocation6], %s1128
        %s1130 = sand.u32 %s704, 1
        %s1131 = smul.addr %s1130, 32
        %s1132 = scalar_lea.vmem [#allocation31], %s1131
        %p1133 = scmp.lt.s32.totalorder %s82, 1
        %s1134 = scalar_select %p1133, %s82, 1
        %s1135 = smul.addr %s1134, 4
        %s1136 = smul.addr %s1135, 4
        %s1137 = scalar_lea.vmem %s1, %s1136
        %1139 = vst [vmem:[#allocation2] sm:$0xf] 0
        %1140 = vst [vmem:[#allocation2 + $0x4] sm:$0xf] 0
        %1141 = vst [vmem:[#allocation2 + $0x8] sm:$0xf] 0
        %1142 = vst [vmem:[#allocation2 + $0xc] sm:$0xf] 0
        %1143 = vst [vmem:[#allocation2 + $0x10] sm:$0xf] 0
        %1144 = vst [vmem:[#allocation2 + $0x14] sm:$0xf] 0
        %1145 = vst [vmem:[#allocation2 + $0x18] sm:$0xf] 0
        %1146 = vst [vmem:[#allocation2 + $0x1c] sm:$0xf] 0
        %1147 = vst [vmem:[#allocation2 + $0x20] sm:$0xf] 0
        %1148 = vst [vmem:[#allocation2 + $0x24] sm:$0xf] 0
        %1149 = vst [vmem:[#allocation2 + $0x28] sm:$0xf] 0
        %1150 = vst [vmem:[#allocation2 + $0x2c] sm:$0xf] 0
        %1151 = vst [vmem:[#allocation3] sm:$0xf] 0
        %1152 = vst [vmem:[#allocation3 + $0x4] sm:$0xf] 0
        %1153 = vst [vmem:[#allocation3 + $0x8] sm:$0xf] 0
        %1154 = vst [vmem:[#allocation3 + $0xc] sm:$0xf] 0
        %1155 = vst [vmem:[#allocation3 + $0x10] sm:$0xf] 0
        %1156 = vst [vmem:[#allocation3 + $0x14] sm:$0xf] 0
        %1157 = vst [vmem:[#allocation3 + $0x18] sm:$0xf] 0
        %1158 = vst [vmem:[#allocation3 + $0x1c] sm:$0xf] 0
        %1159 = vst [vmem:[#allocation3 + $0x20] sm:$0xf] 0
        %1160 = vst [vmem:[#allocation3 + $0x24] sm:$0xf] 0
        %1161 = vst [vmem:[#allocation3 + $0x28] sm:$0xf] 0
        %1162 = vst [vmem:[#allocation3 + $0x2c] sm:$0xf] 0
        %v1163 = vld [vmem:[%s1137] sm:$0xf]
        %v1164 = vld [vmem:[%s1137 + $0x4] sm:$0xf]
        %v1165 = vld [vmem:[%s1137 + $0x8] sm:$0xf]
        %v1166 = vld [vmem:[%s1137 + $0xc] sm:$0xf]
        %1167 = vst [vmem:[#allocation2 + $0x10] sm:$0xf] %v1163
        %1168 = vst [vmem:[#allocation2 + $0x14] sm:$0xf] %v1164
        %1169 = vst [vmem:[#allocation2 + $0x18] sm:$0xf] %v1165
        %1170 = vst [vmem:[#allocation2 + $0x1c] sm:$0xf] %v1166
        %v1171 = vld [vmem:[#allocation2 + $0x10] sm:$0xf]
        %v1172 = vld [vmem:[#allocation2 + $0x14] sm:$0xf]
        %v1173 = vld [vmem:[#allocation2 + $0x18] sm:$0xf]
        %v1174 = vld [vmem:[#allocation2 + $0x1c] sm:$0xf]
        %v1175 = vld [vmem:[#allocation4] sm:$0xf]
        %v1176 = vld [vmem:[#allocation4 + $0x4] sm:$0xf]
        %v1177 = vld [vmem:[#allocation4 + $0x8] sm:$0xf]
        %v1178 = vld [vmem:[#allocation4 + $0xc] sm:$0xf]
        %v1179 = vld [vmem:[#allocation4 + $0x10] sm:$0xf]
        %v1180 = vld [vmem:[#allocation4 + $0x14] sm:$0xf]
        %v1181 = vld [vmem:[#allocation4 + $0x18] sm:$0xf]
        %v1182 = vld [vmem:[#allocation4 + $0x1c] sm:$0xf]
        %v1183 = vld [vmem:[#allocation4 + $0x20] sm:$0xf]
        %v1184 = vld [vmem:[#allocation4 + $0x24] sm:$0xf]
        %v1185 = vld [vmem:[#allocation4 + $0x28] sm:$0xf]
        %v1186 = vld [vmem:[#allocation4 + $0x2c] sm:$0xf]
        %v1187 = vld [vmem:[#allocation4 + $0x30] sm:$0xf]
        %v1188 = vld [vmem:[#allocation4 + $0x34] sm:$0xf]
        %v1189 = vld [vmem:[#allocation4 + $0x38] sm:$0xf]
        %v1190 = vld [vmem:[#allocation4 + $0x3c] sm:$0xf]
        %v1191 = vld [vmem:[#allocation7] sm:$0x1]
        %v1193 = vlaneseq
        %v1194 = vshrl.u32 %v1193, 7
        %v1195 = vsub.s32 0, %v1194
        %v1196 = vrot.slane %v1191, %v1195
        %v1202 = vunpack.c.l.b16 %v1171
        %v1203 = vunpack.c.l.b16 %v1172
        %v1204 = vunpack.c.l.b16 %v1173
        %v1205 = vunpack.c.l.b16 %v1174
        %v1206 = vpack.c.b16 %v1203, %v1202
        %v1207 = vpack.c.b16 %v1205, %v1204
        %v1226 = vunpack.c.l.b16 %v1175
        %v1227 = vunpack.c.l.b16 %v1176
        %v1228 = vunpack.c.l.b16 %v1177
        %v1229 = vunpack.c.l.b16 %v1178
        %v1230 = vunpack.c.l.b16 %v1179
        %v1231 = vunpack.c.l.b16 %v1180
        %v1232 = vunpack.c.l.b16 %v1181
        %v1233 = vunpack.c.l.b16 %v1182
        %v1234 = vunpack.c.l.b16 %v1183
        %v1235 = vunpack.c.l.b16 %v1184
        %v1236 = vunpack.c.l.b16 %v1185
        %v1237 = vunpack.c.l.b16 %v1186
        %v1238 = vunpack.c.l.b16 %v1187
        %v1239 = vunpack.c.l.b16 %v1188
        %v1240 = vunpack.c.l.b16 %v1189
        %v1241 = vunpack.c.l.b16 %v1190
        %v1242 = vpack.c.b16 %v1227, %v1226
        %v1243 = vpack.c.b16 %v1229, %v1228
        %v1244 = vpack.c.b16 %v1231, %v1230
        %v1245 = vpack.c.b16 %v1233, %v1232
        %v1246 = vpack.c.b16 %v1235, %v1234
        %v1247 = vpack.c.b16 %v1237, %v1236
        %v1248 = vpack.c.b16 %v1239, %v1238
        %v1249 = vpack.c.b16 %v1241, %v1240
        %1258 = vmatprep.subr.bf16.mxu0 0
        %1259 = vmatpush1.bf16.msra.mxu0 %v1249
        %1260 = vmatprep.subr.bf16.mxu0 0
        %1261 = vmatpush1.bf16.msra.mxu0 %v1248
        %1262 = vmatprep.subr.bf16.mxu0 0
        %1263 = vmatpush1.bf16.msra.mxu0 %v1247
        %1264 = vmatprep.subr.bf16.mxu0 0
        %1265 = vmatpush1.bf16.msra.mxu0 %v1246
        %1266 = vmatprep.subr.bf16.mxu0 0
        %1267 = vmatpush1.bf16.msra.mxu0 %v1245
        %1268 = vmatprep.subr.bf16.mxu0 0
        %1269 = vmatpush1.bf16.msra.mxu0 %v1244
        %1270 = vmatprep.subr.bf16.mxu0 0
        %1271 = vmatpush1.bf16.msra.mxu0 %v1243
        %1272 = vmatprep.subr.bf16.mxu0 0
        %1273 = vmatpush1.bf16.msra.mxu0 %v1242
        %1274 = vmatprep.subr.bf16.mxu0 0
        %1275 = vmatpush2.bf16.msra.mxu0 0
        %1276 = vmatprep.subr.bf16.mxu0 0
        %1277 = vmatpush2.bf16.msra.mxu0 0
        %1278 = vmatprep.subr.bf16.mxu0 0
        %1279 = vmatpush2.bf16.msra.mxu0 0
        %1280 = vmatprep.subr.bf16.mxu0 0
        %1281 = vmatpush2.bf16.msra.mxu0 0
        %1282 = vmatprep.subr.bf16.mxu0 0
        %1283 = vmatpush2.bf16.msra.mxu0 0
        %1284 = vmatprep.subr.bf16.mxu0 0
        %1285 = vmatpush2.bf16.msra.mxu0 0
        %1286 = vmatprep.subr.bf16.mxu0 0
        %1287 = vmatpush2.bf16.msra.mxu0 0
        %1288 = vmatprep.subr.bf16.mxu0 0
        %1289 = vmatpush2.bf16.msra.mxu0 0
        %1290 = vmatprep.mubr.bf16.mxu0 0
        %1291 = vmatmul.mubr.bf16.gmra.mxu0 %v1206
        %v1292 = vpop.f32.mrf.mxu0
        %v1293 = vadd.f32 %v1196, %v1292
        %v1294 = vpop.f32.mrf.mxu0
        %v1295 = vpop.f32.mrf.mxu0
        %v1296 = vadd.f32 %v1196, %v1295
        %v1297 = vpop.f32.mrf.mxu0
        %1298 = vmatprep.mubr.bf16.mxu0 0
        %1299 = vmatmul.mubr.bf16.gmra.mxu0 %v1207
        %v1300 = vpop.f32.mrf.mxu0
        %v1301 = vadd.f32 %v1196, %v1300
        %v1302 = vpop.f32.mrf.mxu0
        %v1303 = vpop.f32.mrf.mxu0
        %v1304 = vadd.f32 %v1196, %v1303
        %v1305 = vpop.f32.mrf.mxu0
        %1306 = vdwg.mxu0
        %v1307 = vmax.f32 %v1293, 0.0
        %v1308 = vmax.f32 %v1296, 0.0
        %v1309 = vmax.f32 %v1301, 0.0
        %v1310 = vmax.f32 %v1304, 0.0
        %v1311 = vpack.c.bf16 %v1308, %v1307
        %v1312 = vpack.c.bf16 %v1310, %v1309
        %v1315 = vunpack.c.l.b16 %v1311
        %v1316 = vunpack.c.h.b16 %v1311
        %v1317 = vunpack.c.l.b16 %v1312
        %v1318 = vunpack.c.h.b16 %v1312
        %v1319 = vpack.c.b16 %v1315, %v1315
        %v1320 = vpack.c.b16 %v1316, %v1316
        %v1321 = vpack.c.b16 %v1317, %v1317
        %v1322 = vpack.c.b16 %v1318, %v1318
        %1327 = vst [vmem:[#allocation3 + $0x10] sm:$0xf] %v1319
        %1328 = vst [vmem:[#allocation3 + $0x14] sm:$0xf] %v1320
        %1329 = vst [vmem:[#allocation3 + $0x18] sm:$0xf] %v1321
        %1330 = vst [vmem:[#allocation3 + $0x1c] sm:$0xf] %v1322
        %v1331 = vld [vmem:[#allocation3 + $0x10] sm:$0xf]
        %v1332 = vld [vmem:[#allocation3 + $0x14] sm:$0xf]
        %v1333 = vld [vmem:[#allocation3 + $0x18] sm:$0xf]
        %v1334 = vld [vmem:[#allocation3 + $0x1c] sm:$0xf]
        %v1335 = vld [vmem:[%s7] sm:$0xf]
        %v1336 = vld [vmem:[%s7 + $0x4] sm:$0xf]
        %v1337 = vld [vmem:[%s7 + $0x8] sm:$0xf]
        %v1338 = vld [vmem:[%s7 + $0xc] sm:$0xf]
        %v1339 = vld [vmem:[%s7 + $0x10] sm:$0xf]
        %v1340 = vld [vmem:[%s7 + $0x14] sm:$0xf]
        %v1341 = vld [vmem:[%s7 + $0x18] sm:$0xf]
        %v1342 = vld [vmem:[%s7 + $0x1c] sm:$0xf]
        %v1343 = vld [vmem:[%s7 + $0x20] sm:$0xf]
        %v1344 = vld [vmem:[%s7 + $0x24] sm:$0xf]
        %v1345 = vld [vmem:[%s7 + $0x28] sm:$0xf]
        %v1346 = vld [vmem:[%s7 + $0x2c] sm:$0xf]
        %v1347 = vld [vmem:[%s7 + $0x30] sm:$0xf]
        %v1348 = vld [vmem:[%s7 + $0x34] sm:$0xf]
        %v1349 = vld [vmem:[%s7 + $0x38] sm:$0xf]
        %v1350 = vld [vmem:[%s7 + $0x3c] sm:$0xf]
        %v1351 = vld [vmem:[#allocation9] sm:$0x1]
        %v1353 = vlaneseq
        %v1354 = vshrl.u32 %v1353, 7
        %v1355 = vsub.s32 0, %v1354
        %v1356 = vrot.slane %v1351, %v1355
        %v1362 = vunpack.c.l.b16 %v1331
        %v1363 = vunpack.c.l.b16 %v1332
        %v1364 = vunpack.c.l.b16 %v1333
        %v1365 = vunpack.c.l.b16 %v1334
        %v1366 = vpack.c.b16 %v1363, %v1362
        %v1367 = vpack.c.b16 %v1365, %v1364
        %v1386 = vunpack.c.l.b16 %v1335
        %v1387 = vunpack.c.l.b16 %v1336
        %v1388 = vunpack.c.l.b16 %v1337
        %v1389 = vunpack.c.l.b16 %v1338
        %v1390 = vunpack.c.l.b16 %v1339
        %v1391 = vunpack.c.l.b16 %v1340
        %v1392 = vunpack.c.l.b16 %v1341
        %v1393 = vunpack.c.l.b16 %v1342
        %v1394 = vunpack.c.l.b16 %v1343
        %v1395 = vunpack.c.l.b16 %v1344
        %v1396 = vunpack.c.l.b16 %v1345
        %v1397 = vunpack.c.l.b16 %v1346
        %v1398 = vunpack.c.l.b16 %v1347
        %v1399 = vunpack.c.l.b16 %v1348
        %v1400 = vunpack.c.l.b16 %v1349
        %v1401 = vunpack.c.l.b16 %v1350
        %v1402 = vpack.c.b16 %v1387, %v1386
        %v1403 = vpack.c.b16 %v1389, %v1388
        %v1404 = vpack.c.b16 %v1391, %v1390
        %v1405 = vpack.c.b16 %v1393, %v1392
        %v1406 = vpack.c.b16 %v1395, %v1394
        %v1407 = vpack.c.b16 %v1397, %v1396
        %v1408 = vpack.c.b16 %v1399, %v1398
        %v1409 = vpack.c.b16 %v1401, %v1400
        %1418 = vmatprep.subr.bf16.mxu0 0
        %1419 = vmatpush1.bf16.msra.mxu0 %v1409
        %1420 = vmatprep.subr.bf16.mxu0 0
        %1421 = vmatpush1.bf16.msra.mxu0 %v1408
        %1422 = vmatprep.subr.bf16.mxu0 0
        %1423 = vmatpush1.bf16.msra.mxu0 %v1407
        %1424 = vmatprep.subr.bf16.mxu0 0
        %1425 = vmatpush1.bf16.msra.mxu0 %v1406
        %1426 = vmatprep.subr.bf16.mxu0 0
        %1427 = vmatpush1.bf16.msra.mxu0 %v1405
        %1428 = vmatprep.subr.bf16.mxu0 0
        %1429 = vmatpush1.bf16.msra.mxu0 %v1404
        %1430 = vmatprep.subr.bf16.mxu0 0
        %1431 = vmatpush1.bf16.msra.mxu0 %v1403
        %1432 = vmatprep.subr.bf16.mxu0 0
        %1433 = vmatpush1.bf16.msra.mxu0 %v1402
        %1434 = vmatprep.subr.bf16.mxu0 0
        %1435 = vmatpush2.bf16.msra.mxu0 0
        %1436 = vmatprep.subr.bf16.mxu0 0
        %1437 = vmatpush2.bf16.msra.mxu0 0
        %1438 = vmatprep.subr.bf16.mxu0 0
        %1439 = vmatpush2.bf16.msra.mxu0 0
        %1440 = vmatprep.subr.bf16.mxu0 0
        %1441 = vmatpush2.bf16.msra.mxu0 0
        %1442 = vmatprep.subr.bf16.mxu0 0
        %1443 = vmatpush2.bf16.msra.mxu0 0
        %1444 = vmatprep.subr.bf16.mxu0 0
        %1445 = vmatpush2.bf16.msra.mxu0 0
        %1446 = vmatprep.subr.bf16.mxu0 0
        %1447 = vmatpush2.bf16.msra.mxu0 0
        %1448 = vmatprep.subr.bf16.mxu0 0
        %1449 = vmatpush2.bf16.msra.mxu0 0
        %1450 = vmatprep.mubr.bf16.mxu0 0
        %1451 = vmatmul.mubr.bf16.gmra.mxu0 %v1366
        %v1452 = vpop.f32.mrf.mxu0
        %v1453 = vadd.f32 %v1356, %v1452
        %v1454 = vpop.f32.mrf.mxu0
        %v1455 = vpop.f32.mrf.mxu0
        %v1456 = vadd.f32 %v1356, %v1455
        %v1457 = vpop.f32.mrf.mxu0
        %1458 = vmatprep.mubr.bf16.mxu0 0
        %1459 = vmatmul.mubr.bf16.gmra.mxu0 %v1367
        %v1460 = vpop.f32.mrf.mxu0
        %v1461 = vadd.f32 %v1356, %v1460
        %v1462 = vpop.f32.mrf.mxu0
        %v1463 = vpop.f32.mrf.mxu0
        %v1464 = vadd.f32 %v1356, %v1463
        %v1465 = vpop.f32.mrf.mxu0
        %1466 = vdwg.mxu0
        %v1467 = vpack.c.bf16 %v1456, %v1453
        %v1468 = vpack.c.bf16 %v1464, %v1461
        %v1471 = vunpack.c.l.b16 %v1467
        %v1472 = vunpack.c.h.b16 %v1467
        %v1473 = vunpack.c.l.b16 %v1468
        %v1474 = vunpack.c.h.b16 %v1468
        %v1475 = vpack.c.b16 %v1471, %v1471
        %v1476 = vpack.c.b16 %v1472, %v1472
        %v1477 = vpack.c.b16 %v1473, %v1473
        %v1478 = vpack.c.b16 %v1474, %v1474
        %1483 = vst [vmem:[#allocation2 + $0x10] sm:$0xf] %v1475
        %1484 = vst [vmem:[#allocation2 + $0x14] sm:$0xf] %v1476
        %1485 = vst [vmem:[#allocation2 + $0x18] sm:$0xf] %v1477
        %1486 = vst [vmem:[#allocation2 + $0x1c] sm:$0xf] %v1478
        %v1487 = vld [vmem:[#allocation2 + $0xc] sm:$0x8]
        %v1488 = vld [vmem:[#allocation2 + $0x10] sm:$0xf]
        %v1489 = vld [vmem:[#allocation2 + $0x14] sm:$0xf]
        %v1490 = vld [vmem:[#allocation2 + $0x18] sm:$0xf]
        %v1491 = vld [vmem:[#allocation2 + $0x1c] sm:$0xf]
        %v1492 = vld [vmem:[#allocation2 + $0x20] sm:$0x1]
        %v1498 = vunpack.c.l.b16 %v1487
        %v1499 = vunpack.c.l.b16 %v1488
        %v1500 = vunpack.c.l.b16 %v1489
        %v1501 = vunpack.c.l.b16 %v1490
        %v1502 = vunpack.c.l.b16 %v1491
        %v1503 = vpack.c.b16 %v1499, %v1498
        %v1504 = vpack.c.b16 %v1501, %v1500
        %v1505 = vpack.c.b16 %v1502, %v1502
        %v1506 = vpack.c.b16 %v1500, %v1499
        %v1507 = vpack.c.b16 %v1502, %v1501
        %vm1508 = vsmask.f32 3328
        %v1510 = vshrl.u32 %v1506, 16
        %v1512 = vrot.slane %v1510, 4
        %v1513 = vshll.u32 %v1506, 16
        %v1515 = vrot.slane %v1513, 5
        %v1516 = vor.u32 %v1512, %v1515
        %v1518 = vshrl.u32 %v1507, 16
        %v1520 = vrot.slane %v1518, 4
        %v1521 = vshll.u32 %v1507, 16
        %v1523 = vrot.slane %v1521, 5
        %v1524 = vor.u32 %v1520, %v1523
        %v1525 = vsel %vm1508, %v1516, %v1524
        %v1527 = vunpack.c.l.b16 %v1492
        %v1528 = vpack.c.b16 %v1527, %v1527
        %vm1529 = vcmask 1042432
        %v1530 = vrot.slane %v1506, 5
        %v1531 = vrot.slane %v1507, 5
        %v1532 = vsel %vm1529, %v1530, %v1531
        %v1533 = vrot.slane %v1528, 5
        %v1534 = vsel %vm1529, %v1531, %v1533
        %v1535 = vld [vmem:[#allocation10] sm:$0xff]
        %v1536 = vld [vmem:[#allocation10 + $0x8] sm:$0xff]
        %v1537 = vld [vmem:[#allocation10 + $0x10] sm:$0xff]
        %v1538 = vld [vmem:[#allocation10 + $0x18] sm:$0xff]
        %v1539 = vld [vmem:[#allocation10 + $0x20] sm:$0xff]
        %v1540 = vld [vmem:[#allocation10 + $0x28] sm:$0xff]
        %v1541 = vld [vmem:[#allocation10 + $0x30] sm:$0xff]
        %v1542 = vld [vmem:[#allocation10 + $0x38] sm:$0xff]
        %v1543 = vld [vmem:[#allocation10 + $0x40] sm:$0xff]
        %v1544 = vld [vmem:[#allocation10 + $0x48] sm:$0xff]
        %v1545 = vld [vmem:[#allocation10 + $0x50] sm:$0xff]
        %v1546 = vld [vmem:[#allocation10 + $0x58] sm:$0xff]
        %v1547 = vld [vmem:[#allocation10 + $0x60] sm:$0xff]
        %v1548 = vld [vmem:[#allocation10 + $0x68] sm:$0xff]
        %v1549 = vld [vmem:[#allocation10 + $0x70] sm:$0xff]
        %v1550 = vld [vmem:[#allocation10 + $0x78] sm:$0xff]
        %v1551 = vld [vmem:[#allocation10 + $0x80] sm:$0xff]
        %v1552 = vld [vmem:[#allocation10 + $0x88] sm:$0xff]
        %v1553 = vld [vmem:[#allocation10 + $0x90] sm:$0xff]
        %v1554 = vld [vmem:[#allocation10 + $0x98] sm:$0xff]
        %v1555 = vld [vmem:[#allocation10 + $0xa0] sm:$0xff]
        %v1556 = vld [vmem:[#allocation10 + $0xa8] sm:$0xff]
        %v1557 = vld [vmem:[#allocation10 + $0xb0] sm:$0xff]
        %v1558 = vld [vmem:[#allocation10 + $0xb8] sm:$0xff]
        %v1559 = vld [vmem:[#allocation10 + $0xc0] sm:$0xff]
        %v1560 = vld [vmem:[#allocation10 + $0xc8] sm:$0xff]
        %v1561 = vld [vmem:[#allocation10 + $0xd0] sm:$0xff]
        %v1562 = vld [vmem:[#allocation10 + $0xd8] sm:$0xff]
        %v1563 = vld [vmem:[#allocation10 + $0xe0] sm:$0xff]
        %v1564 = vld [vmem:[#allocation10 + $0xe8] sm:$0xff]
        %v1565 = vld [vmem:[#allocation10 + $0xf0] sm:$0xff]
        %v1566 = vld [vmem:[#allocation10 + $0xf8] sm:$0xff]
        %v1567 = vld [vmem:[#allocation10 + $0x100] sm:$0xff]
        %v1568 = vld [vmem:[#allocation10 + $0x108] sm:$0xff]
        %v1569 = vld [vmem:[#allocation10 + $0x110] sm:$0xff]
        %v1570 = vld [vmem:[#allocation10 + $0x118] sm:$0xff]
        %v1571 = vld [vmem:[#allocation10 + $0x120] sm:$0xff]
        %v1572 = vld [vmem:[#allocation10 + $0x128] sm:$0xff]
        %v1573 = vld [vmem:[#allocation10 + $0x130] sm:$0xff]
        %v1574 = vld [vmem:[#allocation10 + $0x138] sm:$0xff]
        %v1575 = vld [vmem:[#allocation10 + $0x140] sm:$0xff]
        %v1576 = vld [vmem:[#allocation10 + $0x148] sm:$0xff]
        %v1577 = vld [vmem:[#allocation10 + $0x150] sm:$0xff]
        %v1578 = vld [vmem:[#allocation10 + $0x158] sm:$0xff]
        %v1579 = vld [vmem:[#allocation10 + $0x160] sm:$0xff]
        %v1580 = vld [vmem:[#allocation10 + $0x168] sm:$0xff]
        %v1581 = vld [vmem:[#allocation10 + $0x170] sm:$0xff]
        %v1582 = vld [vmem:[#allocation10 + $0x178] sm:$0xff]
        %v1583 = vld [vmem:[#allocation12] sm:$0x3]
        %v1585 = vlaneseq
        %v1586 = vshrl.u32 %v1585, 7
        %v1587 = vsub.s32 0, %v1586
        %v1588 = vrot.slane %v1583, %v1587
        %v1589 = vlaneseq
        %v1590 = vshrl.u32 %v1589, 7
        %v1591 = vsub.s32 1, %v1590
        %v1592 = vrot.slane %v1583, %v1591
        %vm1595 = vsmask.f32 4352
        %v1597 = vshrl.u32 %v1503, 16
        %v1599 = vrot.slane %v1597, 3
        %v1600 = vshll.u32 %v1503, 16
        %v1602 = vrot.slane %v1600, 4
        %v1603 = vor.u32 %v1599, %v1602
        %v1605 = vshrl.u32 %v1504, 16
        %v1607 = vrot.slane %v1605, 3
        %v1608 = vshll.u32 %v1504, 16
        %v1610 = vrot.slane %v1608, 4
        %v1611 = vor.u32 %v1607, %v1610
        %v1612 = vsel %vm1595, %v1603, %v1611
        %v1614 = vshrl.u32 %v1516, 16
        %v1616 = vrot.slane %v1614, 3
        %v1617 = vshll.u32 %v1516, 16
        %v1619 = vrot.slane %v1617, 4
        %v1620 = vor.u32 %v1616, %v1619
        %v1622 = vshrl.u32 %v1525, 16
        %v1624 = vrot.slane %v1622, 3
        %v1625 = vshll.u32 %v1525, 16
        %v1627 = vrot.slane %v1625, 4
        %v1628 = vor.u32 %v1624, %v1627
        %v1629 = vsel %vm1595, %v1620, %v1628
        %v1631 = vshrl.u32 %v1530, 16
        %v1633 = vrot.slane %v1631, 3
        %v1634 = vshll.u32 %v1530, 16
        %v1636 = vrot.slane %v1634, 4
        %v1637 = vor.u32 %v1633, %v1636
        %v1639 = vshrl.u32 %v1532, 16
        %v1641 = vrot.slane %v1639, 3
        %v1642 = vshll.u32 %v1532, 16
        %v1644 = vrot.slane %v1642, 4
        %v1645 = vor.u32 %v1641, %v1644
        %v1646 = vsel %vm1595, %v1637, %v1645
        %v1648 = vshrl.u32 %v1505, 16
        %v1650 = vrot.slane %v1648, 3
        %v1651 = vshll.u32 %v1505, 16
        %v1653 = vrot.slane %v1651, 4
        %v1654 = vor.u32 %v1650, %v1653
        %v1655 = vsel %vm1595, %v1611, %v1654
        %v1657 = vshrl.u32 %v1524, 16
        %v1659 = vrot.slane %v1657, 3
        %v1660 = vshll.u32 %v1524, 16
        %v1662 = vrot.slane %v1660, 4
        %v1663 = vor.u32 %v1659, %v1662
        %v1664 = vsel %vm1595, %v1628, %v1663
        %v1666 = vshrl.u32 %v1534, 16
        %v1668 = vrot.slane %v1666, 3
        %v1669 = vshll.u32 %v1534, 16
        %v1671 = vrot.slane %v1669, 4
        %v1672 = vor.u32 %v1668, %v1671
        %v1673 = vsel %vm1595, %v1645, %v1672
        %v1728 = vunpack.c.l.b16 %v1535
        %v1729 = vunpack.c.h.b16 %v1535
        %v1730 = vunpack.c.l.b16 %v1536
        %v1731 = vunpack.c.h.b16 %v1536
        %v1732 = vunpack.c.l.b16 %v1537
        %v1733 = vunpack.c.h.b16 %v1537
        %v1734 = vunpack.c.l.b16 %v1538
        %v1735 = vunpack.c.h.b16 %v1538
        %v1736 = vunpack.c.l.b16 %v1539
        %v1737 = vunpack.c.h.b16 %v1539
        %v1738 = vunpack.c.l.b16 %v1540
        %v1739 = vunpack.c.h.b16 %v1540
        %v1740 = vunpack.c.l.b16 %v1541
        %v1741 = vunpack.c.h.b16 %v1541
        %v1742 = vunpack.c.l.b16 %v1542
        %v1743 = vunpack.c.h.b16 %v1542
        %v1744 = vunpack.c.l.b16 %v1543
        %v1745 = vunpack.c.h.b16 %v1543
        %v1746 = vunpack.c.l.b16 %v1544
        %v1747 = vunpack.c.h.b16 %v1544
        %v1748 = vunpack.c.l.b16 %v1545
        %v1749 = vunpack.c.h.b16 %v1545
        %v1750 = vunpack.c.l.b16 %v1546
        %v1751 = vunpack.c.h.b16 %v1546
        %v1752 = vunpack.c.l.b16 %v1547
        %v1753 = vunpack.c.h.b16 %v1547
        %v1754 = vunpack.c.l.b16 %v1548
        %v1755 = vunpack.c.h.b16 %v1548
        %v1756 = vunpack.c.l.b16 %v1549
        %v1757 = vunpack.c.h.b16 %v1549
        %v1758 = vunpack.c.l.b16 %v1550
        %v1759 = vunpack.c.h.b16 %v1550
        %v1760 = vunpack.c.l.b16 %v1551
        %v1761 = vunpack.c.h.b16 %v1551
        %v1762 = vunpack.c.l.b16 %v1552
        %v1763 = vunpack.c.h.b16 %v1552
        %v1764 = vunpack.c.l.b16 %v1553
        %v1765 = vunpack.c.h.b16 %v1553
        %v1766 = vunpack.c.l.b16 %v1554
        %v1767 = vunpack.c.h.b16 %v1554
        %v1768 = vunpack.c.l.b16 %v1555
        %v1769 = vunpack.c.h.b16 %v1555
        %v1770 = vunpack.c.l.b16 %v1556
        %v1771 = vunpack.c.h.b16 %v1556
        %v1772 = vunpack.c.l.b16 %v1557
        %v1773 = vunpack.c.h.b16 %v1557
        %v1774 = vunpack.c.l.b16 %v1558
        %v1775 = vunpack.c.h.b16 %v1558
        %v1776 = vunpack.c.l.b16 %v1559
        %v1777 = vunpack.c.h.b16 %v1559
        %v1778 = vunpack.c.l.b16 %v1560
        %v1779 = vunpack.c.h.b16 %v1560
        %v1780 = vunpack.c.l.b16 %v1561
        %v1781 = vunpack.c.h.b16 %v1561
        %v1782 = vunpack.c.l.b16 %v1562
        %v1783 = vunpack.c.h.b16 %v1562
        %v1784 = vunpack.c.l.b16 %v1563
        %v1785 = vunpack.c.h.b16 %v1563
        %v1786 = vunpack.c.l.b16 %v1564
        %v1787 = vunpack.c.h.b16 %v1564
        %v1788 = vunpack.c.l.b16 %v1565
        %v1789 = vunpack.c.h.b16 %v1565
        %v1790 = vunpack.c.l.b16 %v1566
        %v1791 = vunpack.c.h.b16 %v1566
        %v1792 = vunpack.c.l.b16 %v1567
        %v1793 = vunpack.c.h.b16 %v1567
        %v1794 = vunpack.c.l.b16 %v1568
        %v1795 = vunpack.c.h.b16 %v1568
        %v1796 = vunpack.c.l.b16 %v1569
        %v1797 = vunpack.c.h.b16 %v1569
        %v1798 = vunpack.c.l.b16 %v1570
        %v1799 = vunpack.c.h.b16 %v1570
        %v1800 = vunpack.c.l.b16 %v1571
        %v1801 = vunpack.c.h.b16 %v1571
        %v1802 = vunpack.c.l.b16 %v1572
        %v1803 = vunpack.c.h.b16 %v1572
        %v1804 = vunpack.c.l.b16 %v1573
        %v1805 = vunpack.c.h.b16 %v1573
        %v1806 = vunpack.c.l.b16 %v1574
        %v1807 = vunpack.c.h.b16 %v1574
        %v1808 = vunpack.c.l.b16 %v1575
        %v1809 = vunpack.c.h.b16 %v1575
        %v1810 = vunpack.c.l.b16 %v1576
        %v1811 = vunpack.c.h.b16 %v1576
        %v1812 = vunpack.c.l.b16 %v1577
        %v1813 = vunpack.c.h.b16 %v1577
        %v1814 = vunpack.c.l.b16 %v1578
        %v1815 = vunpack.c.h.b16 %v1578
        %v1816 = vunpack.c.l.b16 %v1579
        %v1817 = vunpack.c.h.b16 %v1579
        %v1818 = vunpack.c.l.b16 %v1580
        %v1819 = vunpack.c.h.b16 %v1580
        %v1820 = vunpack.c.l.b16 %v1581
        %v1821 = vunpack.c.h.b16 %v1581
        %v1822 = vunpack.c.l.b16 %v1582
        %v1823 = vunpack.c.h.b16 %v1582
        %v1824 = vpack.c.b16 %v1730, %v1728
        %v1825 = vpack.c.b16 %v1731, %v1729
        %v1826 = vpack.c.b16 %v1734, %v1732
        %v1827 = vpack.c.b16 %v1735, %v1733
        %v1828 = vpack.c.b16 %v1738, %v1736
        %v1829 = vpack.c.b16 %v1739, %v1737
        %v1830 = vpack.c.b16 %v1742, %v1740
        %v1831 = vpack.c.b16 %v1743, %v1741
        %v1832 = vpack.c.b16 %v1746, %v1744
        %v1833 = vpack.c.b16 %v1747, %v1745
        %v1834 = vpack.c.b16 %v1750, %v1748
        %v1835 = vpack.c.b16 %v1751, %v1749
        %v1836 = vpack.c.b16 %v1754, %v1752
        %v1837 = vpack.c.b16 %v1755, %v1753
        %v1838 = vpack.c.b16 %v1758, %v1756
        %v1839 = vpack.c.b16 %v1759, %v1757
        %v1840 = vpack.c.b16 %v1762, %v1760
        %v1841 = vpack.c.b16 %v1763, %v1761
        %v1842 = vpack.c.b16 %v1766, %v1764
        %v1843 = vpack.c.b16 %v1767, %v1765
        %v1844 = vpack.c.b16 %v1770, %v1768
        %v1845 = vpack.c.b16 %v1771, %v1769
        %v1846 = vpack.c.b16 %v1774, %v1772
        %v1847 = vpack.c.b16 %v1775, %v1773
        %v1848 = vpack.c.b16 %v1778, %v1776
        %v1849 = vpack.c.b16 %v1779, %v1777
        %v1850 = vpack.c.b16 %v1782, %v1780
        %v1851 = vpack.c.b16 %v1783, %v1781
        %v1852 = vpack.c.b16 %v1786, %v1784
        %v1853 = vpack.c.b16 %v1787, %v1785
        %v1854 = vpack.c.b16 %v1790, %v1788
        %v1855 = vpack.c.b16 %v1791, %v1789
        %v1856 = vpack.c.b16 %v1794, %v1792
        %v1857 = vpack.c.b16 %v1795, %v1793
        %v1858 = vpack.c.b16 %v1798, %v1796
        %v1859 = vpack.c.b16 %v1799, %v1797
        %v1860 = vpack.c.b16 %v1802, %v1800
        %v1861 = vpack.c.b16 %v1803, %v1801
        %v1862 = vpack.c.b16 %v1806, %v1804
        %v1863 = vpack.c.b16 %v1807, %v1805
        %v1864 = vpack.c.b16 %v1810, %v1808
        %v1865 = vpack.c.b16 %v1811, %v1809
        %v1866 = vpack.c.b16 %v1814, %v1812
        %v1867 = vpack.c.b16 %v1815, %v1813
        %v1868 = vpack.c.b16 %v1818, %v1816
        %v1869 = vpack.c.b16 %v1819, %v1817
        %v1870 = vpack.c.b16 %v1822, %v1820
        %v1871 = vpack.c.b16 %v1823, %v1821
        %1920 = vmatprep.subr.bf16.mxu0 %v1839
        %1921 = vmatpush1.bf16.msra.mxu0 %v1838
        %1922 = vmatprep.subr.bf16.mxu0 %v1837
        %1923 = vmatpush1.bf16.msra.mxu0 %v1836
        %1924 = vmatprep.subr.bf16.mxu0 %v1835
        %1925 = vmatpush1.bf16.msra.mxu0 %v1834
        %1926 = vmatprep.subr.bf16.mxu0 %v1833
        %1927 = vmatpush1.bf16.msra.mxu0 %v1832
        %1928 = vmatprep.subr.bf16.mxu0 %v1831
        %1929 = vmatpush1.bf16.msra.mxu0 %v1830
        %1930 = vmatprep.subr.bf16.mxu0 %v1829
        %1931 = vmatpush1.bf16.msra.mxu0 %v1828
        %1932 = vmatprep.subr.bf16.mxu0 %v1827
        %1933 = vmatpush1.bf16.msra.mxu0 %v1826
        %1934 = vmatprep.subr.bf16.mxu0 %v1825
        %1935 = vmatpush1.bf16.msra.mxu0 %v1824
        %1936 = vmatprep.subr.bf16.mxu0 %v1855
        %1937 = vmatpush2.bf16.msra.mxu0 %v1854
        %1938 = vmatprep.subr.bf16.mxu0 %v1853
        %1939 = vmatpush2.bf16.msra.mxu0 %v1852
        %1940 = vmatprep.subr.bf16.mxu0 %v1851
        %1941 = vmatpush2.bf16.msra.mxu0 %v1850
        %1942 = vmatprep.subr.bf16.mxu0 %v1849
        %1943 = vmatpush2.bf16.msra.mxu0 %v1848
        %1944 = vmatprep.subr.bf16.mxu0 %v1847
        %1945 = vmatpush2.bf16.msra.mxu0 %v1846
        %1946 = vmatprep.subr.bf16.mxu0 %v1845
        %1947 = vmatpush2.bf16.msra.mxu0 %v1844
        %1948 = vmatprep.subr.bf16.mxu0 %v1843
        %1949 = vmatpush2.bf16.msra.mxu0 %v1842
        %1950 = vmatprep.subr.bf16.mxu0 %v1841
        %1951 = vmatpush2.bf16.msra.mxu0 %v1840
        %1952 = vmatprep.mubr.bf16.mxu0 %v1629
        %1953 = vmatmul.mubr.bf16.gmra.mxu0 %v1612
        %v1954 = vpop.f32.mrf.mxu0
        %v1955 = vadd.f32 %v1588, %v1954
        %v1956 = vpop.f32.mrf.mxu0
        %v1957 = vadd.f32 %v1592, %v1956
        %v1958 = vpop.f32.mrf.mxu0
        %v1959 = vadd.f32 %v1588, %v1958
        %v1960 = vpop.f32.mrf.mxu0
        %v1961 = vadd.f32 %v1592, %v1960
        %1962 = vmatprep.mubr.bf16.mxu0 %v1664
        %1963 = vmatmul.mubr.bf16.gmra.mxu0 %v1655
        %v1964 = vpop.f32.mrf.mxu0
        %v1965 = vadd.f32 %v1588, %v1964
        %v1966 = vpop.f32.mrf.mxu0
        %v1967 = vadd.f32 %v1592, %v1966
        %v1968 = vpop.f32.mrf.mxu0
        %v1969 = vadd.f32 %v1588, %v1968
        %v1970 = vpop.f32.mrf.mxu0
        %v1971 = vadd.f32 %v1592, %v1970
        %1972 = vdwg.mxu0
        %1973 = vmatprep.subr.bf16.mxu0 %v1871
        %1974 = vmatpush1.bf16.msra.mxu0 %v1870
        %1975 = vmatprep.subr.bf16.mxu0 %v1869
        %1976 = vmatpush1.bf16.msra.mxu0 %v1868
        %1977 = vmatprep.subr.bf16.mxu0 %v1867
        %1978 = vmatpush1.bf16.msra.mxu0 %v1866
        %1979 = vmatprep.subr.bf16.mxu0 %v1865
        %1980 = vmatpush1.bf16.msra.mxu0 %v1864
        %1981 = vmatprep.subr.bf16.mxu0 %v1863
        %1982 = vmatpush1.bf16.msra.mxu0 %v1862
        %1983 = vmatprep.subr.bf16.mxu0 %v1861
        %1984 = vmatpush1.bf16.msra.mxu0 %v1860
        %1985 = vmatprep.subr.bf16.mxu0 %v1859
        %1986 = vmatpush1.bf16.msra.mxu0 %v1858
        %1987 = vmatprep.subr.bf16.mxu0 %v1857
        %1988 = vmatpush1.bf16.msra.mxu0 %v1856
        %1989 = vmatprep.subr.bf16.mxu0 0
        %1990 = vmatpush2.bf16.msra.mxu0 0
        %1991 = vmatprep.subr.bf16.mxu0 0
        %1992 = vmatpush2.bf16.msra.mxu0 0
        %1993 = vmatprep.subr.bf16.mxu0 0
        %1994 = vmatpush2.bf16.msra.mxu0 0
        %1995 = vmatprep.subr.bf16.mxu0 0
        %1996 = vmatpush2.bf16.msra.mxu0 0
        %1997 = vmatprep.subr.bf16.mxu0 0
        %1998 = vmatpush2.bf16.msra.mxu0 0
        %1999 = vmatprep.subr.bf16.mxu0 0
        %2000 = vmatpush2.bf16.msra.mxu0 0
        %2001 = vmatprep.subr.bf16.mxu0 0
        %2002 = vmatpush2.bf16.msra.mxu0 0
        %2003 = vmatprep.subr.bf16.mxu0 0
        %2004 = vmatpush2.bf16.msra.mxu0 0
        %2005 = vmatprep.mubr.bf16.mxu0 0
        %2006 = vmatmul.mubr.bf16.gmra.mxu0 %v1646
        %v2007 = vpop.f32.mrf.mxu0
        %v2008 = vadd.f32 %v1955, %v2007
        %v2009 = vpop.f32.mrf.mxu0
        %v2010 = vadd.f32 %v1957, %v2009
        %v2011 = vpop.f32.mrf.mxu0
        %v2012 = vadd.f32 %v1959, %v2011
        %v2013 = vpop.f32.mrf.mxu0
        %v2014 = vadd.f32 %v1961, %v2013
        %2015 = vmatprep.mubr.bf16.mxu0 0
        %2016 = vmatmul.mubr.bf16.gmra.mxu0 %v1673
        %v2017 = vpop.f32.mrf.mxu0
        %v2018 = vadd.f32 %v1965, %v2017
        %v2019 = vpop.f32.mrf.mxu0
        %v2020 = vadd.f32 %v1967, %v2019
        %v2021 = vpop.f32.mrf.mxu0
        %v2022 = vadd.f32 %v1969, %v2021
        %v2023 = vpop.f32.mrf.mxu0
        %v2024 = vadd.f32 %v1971, %v2023
        %2025 = vdwg.mxu0
        %v2026 = vxor.u32 %v2008, 2147483648
        %v2027 = vxor.u32 %v2012, 2147483648
        %v2028 = vxor.u32 %v2018, 2147483648
        %v2029 = vxor.u32 %v2022, 2147483648
        %v2030 = vmul.f32 %v2026, 1.442695
        %v2031 = vpow.pop %v2030
        %v2032 = vmul.f32 %v2027, 1.442695
        %v2033 = vpow.pop %v2032
        %v2034 = vmul.f32 %v2028, 1.442695
        %v2035 = vpow.pop %v2034
        %v2036 = vmul.f32 %v2029, 1.442695
        %v2037 = vpow.pop %v2036
        %v2038 = vadd.f32 %v2031, 1.0
        %v2039 = vadd.f32 %v2033, 1.0
        %v2040 = vadd.f32 %v2035, 1.0
        %v2041 = vadd.f32 %v2037, 1.0
        %v2042 = vrcp.pop %v2038
        %v2043 = vmul.f32 1.0, %v2042
        %v2044 = vrcp.pop %v2039
        %v2045 = vmul.f32 1.0, %v2044
        %v2046 = vrcp.pop %v2040
        %v2047 = vmul.f32 1.0, %v2046
        %v2048 = vrcp.pop %v2041
        %v2049 = vmul.f32 1.0, %v2048
        %v2050 = vunpack.c.l.bf16 %v1488
        %v2051 = vunpack.c.l.bf16 %v1489
        %v2052 = vunpack.c.l.bf16 %v1490
        %v2053 = vunpack.c.l.bf16 %v1491
        %v2054 = vmul.f32 %v2010, %v2043
        %v2055 = vmul.f32 %v2014, %v2045
        %v2056 = vmul.f32 %v2020, %v2047
        %v2057 = vmul.f32 %v2024, %v2049
        %v2058 = vsub.f32 1.0, %v2043
        %v2059 = vsub.f32 1.0, %v2045
        %v2060 = vsub.f32 1.0, %v2047
        %v2061 = vsub.f32 1.0, %v2049
        %v2062 = vmul.f32 %v2050, %v2058
        %v2063 = vmul.f32 %v2051, %v2059
        %v2064 = vmul.f32 %v2052, %v2060
        %v2065 = vmul.f32 %v2053, %v2061
        %v2066 = vadd.f32 %v2054, %v2062
        %v2067 = vadd.f32 %v2055, %v2063
        %v2068 = vadd.f32 %v2056, %v2064
        %v2069 = vadd.f32 %v2057, %v2065
        %v2070 = vpack.c.bf16 %v2067, %v2066
        %v2071 = vpack.c.bf16 %v2069, %v2068
        %v2074 = vunpack.c.l.b16 %v2070
        %v2075 = vunpack.c.h.b16 %v2070
        %v2076 = vunpack.c.l.b16 %v2071
        %v2077 = vunpack.c.h.b16 %v2071
        %v2078 = vpack.c.b16 %v2074, %v2074
        %v2079 = vpack.c.b16 %v2075, %v2075
        %v2080 = vpack.c.b16 %v2076, %v2076
        %v2081 = vpack.c.b16 %v2077, %v2077
        %2086 = vst [vmem:[#allocation3 + $0x10] sm:$0xf] %v2078
        %2087 = vst [vmem:[#allocation3 + $0x14] sm:$0xf] %v2079
        %2088 = vst [vmem:[#allocation3 + $0x18] sm:$0xf] %v2080
        %2089 = vst [vmem:[#allocation3 + $0x1c] sm:$0xf] %v2081
        %v2090 = vld [vmem:[#allocation3 + $0xc] sm:$0xc]
        %v2091 = vld [vmem:[#allocation3 + $0x10] sm:$0xf]
        %v2092 = vld [vmem:[#allocation3 + $0x14] sm:$0xf]
        %v2093 = vld [vmem:[#allocation3 + $0x18] sm:$0xf]
        %v2094 = vld [vmem:[#allocation3 + $0x1c] sm:$0x7]
        %v2095 = vld [vmem:[#allocation3 + $0x1c] sm:$0xf]
        %v2096 = vld [vmem:[#allocation3 + $0x10] sm:$0xe]
        %v2097 = vld [vmem:[#allocation3 + $0x20] sm:$0x3]
        %v2103 = vunpack.c.l.b16 %v2090
        %v2104 = vunpack.c.l.b16 %v2091
        %v2105 = vunpack.c.l.b16 %v2092
        %v2106 = vunpack.c.l.b16 %v2093
        %v2107 = vunpack.c.l.b16 %v2094
        %v2108 = vpack.c.b16 %v2104, %v2103
        %v2109 = vpack.c.b16 %v2106, %v2105
        %v2110 = vpack.c.b16 %v2107, %v2107
        %v2112 = vunpack.c.l.b16 %v2095
        %v2113 = vpack.c.b16 %v2105, %v2104
        %v2114 = vpack.c.b16 %v2112, %v2106
        %vm2115 = vsmask.f32 2304
        %v2117 = vshrl.u32 %v2113, 16
        %v2119 = vrot.slane %v2117, 5
        %v2120 = vshll.u32 %v2113, 16
        %v2122 = vrot.slane %v2120, 6
        %v2123 = vor.u32 %v2119, %v2122
        %v2125 = vshrl.u32 %v2114, 16
        %v2127 = vrot.slane %v2125, 5
        %v2128 = vshll.u32 %v2114, 16
        %v2130 = vrot.slane %v2128, 6
        %v2131 = vor.u32 %v2127, %v2130
        %v2132 = vsel %vm2115, %v2123, %v2131
        %v2135 = vunpack.c.l.b16 %v2096
        %v2136 = vunpack.c.l.b16 %v2097
        %v2137 = vpack.c.b16 %v2105, %v2135
        %v2138 = vpack.c.b16 %v2136, %v2136
        %vm2139 = vcmask 1040384
        %v2140 = vrot.slane %v2137, 7
        %v2141 = vrot.slane %v2114, 7
        %v2142 = vsel %vm2139, %v2140, %v2141
        %v2143 = vrot.slane %v2138, 7
        %v2144 = vsel %vm2139, %v2141, %v2143
        %v2145 = vld [vmem:[#allocation13] sm:$0xff]
        %v2146 = vld [vmem:[#allocation13 + $0x8] sm:$0xff]
        %v2147 = vld [vmem:[#allocation13 + $0x10] sm:$0xff]
        %v2148 = vld [vmem:[#allocation13 + $0x18] sm:$0xff]
        %v2149 = vld [vmem:[#allocation13 + $0x20] sm:$0xff]
        %v2150 = vld [vmem:[#allocation13 + $0x28] sm:$0xff]
        %v2151 = vld [vmem:[#allocation13 + $0x30] sm:$0xff]
        %v2152 = vld [vmem:[#allocation13 + $0x38] sm:$0xff]
        %v2153 = vld [vmem:[#allocation13 + $0x40] sm:$0xff]
        %v2154 = vld [vmem:[#allocation13 + $0x48] sm:$0xff]
        %v2155 = vld [vmem:[#allocation13 + $0x50] sm:$0xff]
        %v2156 = vld [vmem:[#allocation13 + $0x58] sm:$0xff]
        %v2157 = vld [vmem:[#allocation13 + $0x60] sm:$0xff]
        %v2158 = vld [vmem:[#allocation13 + $0x68] sm:$0xff]
        %v2159 = vld [vmem:[#allocation13 + $0x70] sm:$0xff]
        %v2160 = vld [vmem:[#allocation13 + $0x78] sm:$0xff]
        %v2161 = vld [vmem:[#allocation13 + $0x80] sm:$0xff]
        %v2162 = vld [vmem:[#allocation13 + $0x88] sm:$0xff]
        %v2163 = vld [vmem:[#allocation13 + $0x90] sm:$0xff]
        %v2164 = vld [vmem:[#allocation13 + $0x98] sm:$0xff]
        %v2165 = vld [vmem:[#allocation13 + $0xa0] sm:$0xff]
        %v2166 = vld [vmem:[#allocation13 + $0xa8] sm:$0xff]
        %v2167 = vld [vmem:[#allocation13 + $0xb0] sm:$0xff]
        %v2168 = vld [vmem:[#allocation13 + $0xb8] sm:$0xff]
        %v2169 = vld [vmem:[#allocation13 + $0xc0] sm:$0xff]
        %v2170 = vld [vmem:[#allocation13 + $0xc8] sm:$0xff]
        %v2171 = vld [vmem:[#allocation13 + $0xd0] sm:$0xff]
        %v2172 = vld [vmem:[#allocation13 + $0xd8] sm:$0xff]
        %v2173 = vld [vmem:[#allocation13 + $0xe0] sm:$0xff]
        %v2174 = vld [vmem:[#allocation13 + $0xe8] sm:$0xff]
        %v2175 = vld [vmem:[#allocation13 + $0xf0] sm:$0xff]
        %v2176 = vld [vmem:[#allocation13 + $0xf8] sm:$0xff]
        %v2177 = vld [vmem:[#allocation13 + $0x100] sm:$0xff]
        %v2178 = vld [vmem:[#allocation13 + $0x108] sm:$0xff]
        %v2179 = vld [vmem:[#allocation13 + $0x110] sm:$0xff]
        %v2180 = vld [vmem:[#allocation13 + $0x118] sm:$0xff]
        %v2181 = vld [vmem:[#allocation13 + $0x120] sm:$0xff]
        %v2182 = vld [vmem:[#allocation13 + $0x128] sm:$0xff]
        %v2183 = vld [vmem:[#allocation13 + $0x130] sm:$0xff]
        %v2184 = vld [vmem:[#allocation13 + $0x138] sm:$0xff]
        %v2185 = vld [vmem:[#allocation13 + $0x140] sm:$0xff]
        %v2186 = vld [vmem:[#allocation13 + $0x148] sm:$0xff]
        %v2187 = vld [vmem:[#allocation13 + $0x150] sm:$0xff]
        %v2188 = vld [vmem:[#allocation13 + $0x158] sm:$0xff]
        %v2189 = vld [vmem:[#allocation13 + $0x160] sm:$0xff]
        %v2190 = vld [vmem:[#allocation13 + $0x168] sm:$0xff]
        %v2191 = vld [vmem:[#allocation13 + $0x170] sm:$0xff]
        %v2192 = vld [vmem:[#allocation13 + $0x178] sm:$0xff]
        %v2193 = vld [vmem:[#allocation15] sm:$0x3]
        %v2195 = vlaneseq
        %v2196 = vshrl.u32 %v2195, 7
        %v2197 = vsub.s32 0, %v2196
        %v2198 = vrot.slane %v2193, %v2197
        %v2199 = vlaneseq
        %v2200 = vshrl.u32 %v2199, 7
        %v2201 = vsub.s32 1, %v2200
        %v2202 = vrot.slane %v2193, %v2201
        %vm2205 = vsmask.f32 5376
        %v2207 = vshrl.u32 %v2108, 16
        %v2209 = vrot.slane %v2207, 2
        %v2210 = vshll.u32 %v2108, 16
        %v2212 = vrot.slane %v2210, 3
        %v2213 = vor.u32 %v2209, %v2212
        %v2215 = vshrl.u32 %v2109, 16
        %v2217 = vrot.slane %v2215, 2
        %v2218 = vshll.u32 %v2109, 16
        %v2220 = vrot.slane %v2218, 3
        %v2221 = vor.u32 %v2217, %v2220
        %v2222 = vsel %vm2205, %v2213, %v2221
        %v2224 = vshrl.u32 %v2123, 16
        %v2226 = vrot.slane %v2224, 2
        %v2227 = vshll.u32 %v2123, 16
        %v2229 = vrot.slane %v2227, 3
        %v2230 = vor.u32 %v2226, %v2229
        %v2232 = vshrl.u32 %v2132, 16
        %v2234 = vrot.slane %v2232, 2
        %v2235 = vshll.u32 %v2132, 16
        %v2237 = vrot.slane %v2235, 3
        %v2238 = vor.u32 %v2234, %v2237
        %v2239 = vsel %vm2205, %v2230, %v2238
        %v2241 = vshrl.u32 %v2140, 16
        %v2243 = vrot.slane %v2241, 2
        %v2244 = vshll.u32 %v2140, 16
        %v2246 = vrot.slane %v2244, 3
        %v2247 = vor.u32 %v2243, %v2246
        %v2249 = vshrl.u32 %v2142, 16
        %v2251 = vrot.slane %v2249, 2
        %v2252 = vshll.u32 %v2142, 16
        %v2254 = vrot.slane %v2252, 3
        %v2255 = vor.u32 %v2251, %v2254
        %v2256 = vsel %vm2205, %v2247, %v2255
        %v2258 = vshrl.u32 %v2110, 16
        %v2260 = vrot.slane %v2258, 2
        %v2261 = vshll.u32 %v2110, 16
        %v2263 = vrot.slane %v2261, 3
        %v2264 = vor.u32 %v2260, %v2263
        %v2265 = vsel %vm2205, %v2221, %v2264
        %v2267 = vshrl.u32 %v2131, 16
        %v2269 = vrot.slane %v2267, 2
        %v2270 = vshll.u32 %v2131, 16
        %v2272 = vrot.slane %v2270, 3
        %v2273 = vor.u32 %v2269, %v2272
        %v2274 = vsel %vm2205, %v2238, %v2273
        %v2276 = vshrl.u32 %v2144, 16
        %v2278 = vrot.slane %v2276, 2
        %v2279 = vshll.u32 %v2144, 16
        %v2281 = vrot.slane %v2279, 3
        %v2282 = vor.u32 %v2278, %v2281
        %v2283 = vsel %vm2205, %v2255, %v2282
        %v2338 = vunpack.c.l.b16 %v2145
        %v2339 = vunpack.c.h.b16 %v2145
        %v2340 = vunpack.c.l.b16 %v2146
        %v2341 = vunpack.c.h.b16 %v2146
        %v2342 = vunpack.c.l.b16 %v2147
        %v2343 = vunpack.c.h.b16 %v2147
        %v2344 = vunpack.c.l.b16 %v2148
        %v2345 = vunpack.c.h.b16 %v2148
        %v2346 = vunpack.c.l.b16 %v2149
        %v2347 = vunpack.c.h.b16 %v2149
        %v2348 = vunpack.c.l.b16 %v2150
        %v2349 = vunpack.c.h.b16 %v2150
        %v2350 = vunpack.c.l.b16 %v2151
        %v2351 = vunpack.c.h.b16 %v2151
        %v2352 = vunpack.c.l.b16 %v2152
        %v2353 = vunpack.c.h.b16 %v2152
        %v2354 = vunpack.c.l.b16 %v2153
        %v2355 = vunpack.c.h.b16 %v2153
        %v2356 = vunpack.c.l.b16 %v2154
        %v2357 = vunpack.c.h.b16 %v2154
        %v2358 = vunpack.c.l.b16 %v2155
        %v2359 = vunpack.c.h.b16 %v2155
        %v2360 = vunpack.c.l.b16 %v2156
        %v2361 = vunpack.c.h.b16 %v2156
        %v2362 = vunpack.c.l.b16 %v2157
        %v2363 = vunpack.c.h.b16 %v2157
        %v2364 = vunpack.c.l.b16 %v2158
        %v2365 = vunpack.c.h.b16 %v2158
        %v2366 = vunpack.c.l.b16 %v2159
        %v2367 = vunpack.c.h.b16 %v2159
        %v2368 = vunpack.c.l.b16 %v2160
        %v2369 = vunpack.c.h.b16 %v2160
        %v2370 = vunpack.c.l.b16 %v2161
        %v2371 = vunpack.c.h.b16 %v2161
        %v2372 = vunpack.c.l.b16 %v2162
        %v2373 = vunpack.c.h.b16 %v2162
        %v2374 = vunpack.c.l.b16 %v2163
        %v2375 = vunpack.c.h.b16 %v2163
        %v2376 = vunpack.c.l.b16 %v2164
        %v2377 = vunpack.c.h.b16 %v2164
        %v2378 = vunpack.c.l.b16 %v2165
        %v2379 = vunpack.c.h.b16 %v2165
        %v2380 = vunpack.c.l.b16 %v2166
        %v2381 = vunpack.c.h.b16 %v2166
        %v2382 = vunpack.c.l.b16 %v2167
        %v2383 = vunpack.c.h.b16 %v2167
        %v2384 = vunpack.c.l.b16 %v2168
        %v2385 = vunpack.c.h.b16 %v2168
        %v2386 = vunpack.c.l.b16 %v2169
        %v2387 = vunpack.c.h.b16 %v2169
        %v2388 = vunpack.c.l.b16 %v2170
        %v2389 = vunpack.c.h.b16 %v2170
        %v2390 = vunpack.c.l.b16 %v2171
        %v2391 = vunpack.c.h.b16 %v2171
        %v2392 = vunpack.c.l.b16 %v2172
        %v2393 = vunpack.c.h.b16 %v2172
        %v2394 = vunpack.c.l.b16 %v2173
        %v2395 = vunpack.c.h.b16 %v2173
        %v2396 = vunpack.c.l.b16 %v2174
        %v2397 = vunpack.c.h.b16 %v2174
        %v2398 = vunpack.c.l.b16 %v2175
        %v2399 = vunpack.c.h.b16 %v2175
        %v2400 = vunpack.c.l.b16 %v2176
        %v2401 = vunpack.c.h.b16 %v2176
        %v2402 = vunpack.c.l.b16 %v2177
        %v2403 = vunpack.c.h.b16 %v2177
        %v2404 = vunpack.c.l.b16 %v2178
        %v2405 = vunpack.c.h.b16 %v2178
        %v2406 = vunpack.c.l.b16 %v2179
        %v2407 = vunpack.c.h.b16 %v2179
        %v2408 = vunpack.c.l.b16 %v2180
        %v2409 = vunpack.c.h.b16 %v2180
        %v2410 = vunpack.c.l.b16 %v2181
        %v2411 = vunpack.c.h.b16 %v2181
        %v2412 = vunpack.c.l.b16 %v2182
        %v2413 = vunpack.c.h.b16 %v2182
        %v2414 = vunpack.c.l.b16 %v2183
        %v2415 = vunpack.c.h.b16 %v2183
        %v2416 = vunpack.c.l.b16 %v2184
        %v2417 = vunpack.c.h.b16 %v2184
        %v2418 = vunpack.c.l.b16 %v2185
        %v2419 = vunpack.c.h.b16 %v2185
        %v2420 = vunpack.c.l.b16 %v2186
        %v2421 = vunpack.c.h.b16 %v2186
        %v2422 = vunpack.c.l.b16 %v2187
        %v2423 = vunpack.c.h.b16 %v2187
        %v2424 = vunpack.c.l.b16 %v2188
        %v2425 = vunpack.c.h.b16 %v2188
        %v2426 = vunpack.c.l.b16 %v2189
        %v2427 = vunpack.c.h.b16 %v2189
        %v2428 = vunpack.c.l.b16 %v2190
        %v2429 = vunpack.c.h.b16 %v2190
        %v2430 = vunpack.c.l.b16 %v2191
        %v2431 = vunpack.c.h.b16 %v2191
        %v2432 = vunpack.c.l.b16 %v2192
        %v2433 = vunpack.c.h.b16 %v2192
        %v2434 = vpack.c.b16 %v2340, %v2338
        %v2435 = vpack.c.b16 %v2341, %v2339
        %v2436 = vpack.c.b16 %v2344, %v2342
        %v2437 = vpack.c.b16 %v2345, %v2343
        %v2438 = vpack.c.b16 %v2348, %v2346
        %v2439 = vpack.c.b16 %v2349, %v2347
        %v2440 = vpack.c.b16 %v2352, %v2350
        %v2441 = vpack.c.b16 %v2353, %v2351
        %v2442 = vpack.c.b16 %v2356, %v2354
        %v2443 = vpack.c.b16 %v2357, %v2355
        %v2444 = vpack.c.b16 %v2360, %v2358
        %v2445 = vpack.c.b16 %v2361, %v2359
        %v2446 = vpack.c.b16 %v2364, %v2362
        %v2447 = vpack.c.b16 %v2365, %v2363
        %v2448 = vpack.c.b16 %v2368, %v2366
        %v2449 = vpack.c.b16 %v2369, %v2367
        %v2450 = vpack.c.b16 %v2372, %v2370
        %v2451 = vpack.c.b16 %v2373, %v2371
        %v2452 = vpack.c.b16 %v2376, %v2374
        %v2453 = vpack.c.b16 %v2377, %v2375
        %v2454 = vpack.c.b16 %v2380, %v2378
        %v2455 = vpack.c.b16 %v2381, %v2379
        %v2456 = vpack.c.b16 %v2384, %v2382
        %v2457 = vpack.c.b16 %v2385, %v2383
        %v2458 = vpack.c.b16 %v2388, %v2386
        %v2459 = vpack.c.b16 %v2389, %v2387
        %v2460 = vpack.c.b16 %v2392, %v2390
        %v2461 = vpack.c.b16 %v2393, %v2391
        %v2462 = vpack.c.b16 %v2396, %v2394
        %v2463 = vpack.c.b16 %v2397, %v2395
        %v2464 = vpack.c.b16 %v2400, %v2398
        %v2465 = vpack.c.b16 %v2401, %v2399
        %v2466 = vpack.c.b16 %v2404, %v2402
        %v2467 = vpack.c.b16 %v2405, %v2403
        %v2468 = vpack.c.b16 %v2408, %v2406
        %v2469 = vpack.c.b16 %v2409, %v2407
        %v2470 = vpack.c.b16 %v2412, %v2410
        %v2471 = vpack.c.b16 %v2413, %v2411
        %v2472 = vpack.c.b16 %v2416, %v2414
        %v2473 = vpack.c.b16 %v2417, %v2415
        %v2474 = vpack.c.b16 %v2420, %v2418
        %v2475 = vpack.c.b16 %v2421, %v2419
        %v2476 = vpack.c.b16 %v2424, %v2422
        %v2477 = vpack.c.b16 %v2425, %v2423
        %v2478 = vpack.c.b16 %v2428, %v2426
        %v2479 = vpack.c.b16 %v2429, %v2427
        %v2480 = vpack.c.b16 %v2432, %v2430
        %v2481 = vpack.c.b16 %v2433, %v2431
        %2530 = vmatprep.subr.bf16.mxu0 %v2449
        %2531 = vmatpush1.bf16.msra.mxu0 %v2448
        %2532 = vmatprep.subr.bf16.mxu0 %v2447
        %2533 = vmatpush1.bf16.msra.mxu0 %v2446
        %2534 = vmatprep.subr.bf16.mxu0 %v2445
        %2535 = vmatpush1.bf16.msra.mxu0 %v2444
        %2536 = vmatprep.subr.bf16.mxu0 %v2443
        %2537 = vmatpush1.bf16.msra.mxu0 %v2442
        %2538 = vmatprep.subr.bf16.mxu0 %v2441
        %2539 = vmatpush1.bf16.msra.mxu0 %v2440
        %2540 = vmatprep.subr.bf16.mxu0 %v2439
        %2541 = vmatpush1.bf16.msra.mxu0 %v2438
        %2542 = vmatprep.subr.bf16.mxu0 %v2437
        %2543 = vmatpush1.bf16.msra.mxu0 %v2436
        %2544 = vmatprep.subr.bf16.mxu0 %v2435
        %2545 = vmatpush1.bf16.msra.mxu0 %v2434
        %2546 = vmatprep.subr.bf16.mxu0 %v2465
        %2547 = vmatpush2.bf16.msra.mxu0 %v2464
        %2548 = vmatprep.subr.bf16.mxu0 %v2463
        %2549 = vmatpush2.bf16.msra.mxu0 %v2462
        %2550 = vmatprep.subr.bf16.mxu0 %v2461
        %2551 = vmatpush2.bf16.msra.mxu0 %v2460
        %2552 = vmatprep.subr.bf16.mxu0 %v2459
        %2553 = vmatpush2.bf16.msra.mxu0 %v2458
        %2554 = vmatprep.subr.bf16.mxu0 %v2457
        %2555 = vmatpush2.bf16.msra.mxu0 %v2456
        %2556 = vmatprep.subr.bf16.mxu0 %v2455
        %2557 = vmatpush2.bf16.msra.mxu0 %v2454
        %2558 = vmatprep.subr.bf16.mxu0 %v2453
        %2559 = vmatpush2.bf16.msra.mxu0 %v2452
        %2560 = vmatprep.subr.bf16.mxu0 %v2451
        %2561 = vmatpush2.bf16.msra.mxu0 %v2450
        %2562 = vmatprep.mubr.bf16.mxu0 %v2239
        %2563 = vmatmul.mubr.bf16.gmra.mxu0 %v2222
        %v2564 = vpop.f32.mrf.mxu0
        %v2565 = vadd.f32 %v2198, %v2564
        %v2566 = vpop.f32.mrf.mxu0
        %v2567 = vadd.f32 %v2202, %v2566
        %v2568 = vpop.f32.mrf.mxu0
        %v2569 = vadd.f32 %v2198, %v2568
        %v2570 = vpop.f32.mrf.mxu0
        %v2571 = vadd.f32 %v2202, %v2570
        %2572 = vmatprep.mubr.bf16.mxu0 %v2274
        %2573 = vmatmul.mubr.bf16.gmra.mxu0 %v2265
        %v2574 = vpop.f32.mrf.mxu0
        %v2575 = vadd.f32 %v2198, %v2574
        %v2576 = vpop.f32.mrf.mxu0
        %v2577 = vadd.f32 %v2202, %v2576
        %v2578 = vpop.f32.mrf.mxu0
        %v2579 = vadd.f32 %v2198, %v2578
        %v2580 = vpop.f32.mrf.mxu0
        %v2581 = vadd.f32 %v2202, %v2580
        %2582 = vdwg.mxu0
        %2583 = vmatprep.subr.bf16.mxu0 %v2481
        %2584 = vmatpush1.bf16.msra.mxu0 %v2480
        %2585 = vmatprep.subr.bf16.mxu0 %v2479
        %2586 = vmatpush1.bf16.msra.mxu0 %v2478
        %2587 = vmatprep.subr.bf16.mxu0 %v2477
        %2588 = vmatpush1.bf16.msra.mxu0 %v2476
        %2589 = vmatprep.subr.bf16.mxu0 %v2475
        %2590 = vmatpush1.bf16.msra.mxu0 %v2474
        %2591 = vmatprep.subr.bf16.mxu0 %v2473
        %2592 = vmatpush1.bf16.msra.mxu0 %v2472
        %2593 = vmatprep.subr.bf16.mxu0 %v2471
        %2594 = vmatpush1.bf16.msra.mxu0 %v2470
        %2595 = vmatprep.subr.bf16.mxu0 %v2469
        %2596 = vmatpush1.bf16.msra.mxu0 %v2468
        %2597 = vmatprep.subr.bf16.mxu0 %v2467
        %2598 = vmatpush1.bf16.msra.mxu0 %v2466
        %2599 = vmatprep.subr.bf16.mxu0 0
        %2600 = vmatpush2.bf16.msra.mxu0 0
        %2601 = vmatprep.subr.bf16.mxu0 0
        %2602 = vmatpush2.bf16.msra.mxu0 0
        %2603 = vmatprep.subr.bf16.mxu0 0
        %2604 = vmatpush2.bf16.msra.mxu0 0
        %2605 = vmatprep.subr.bf16.mxu0 0
        %2606 = vmatpush2.bf16.msra.mxu0 0
        %2607 = vmatprep.subr.bf16.mxu0 0
        %2608 = vmatpush2.bf16.msra.mxu0 0
        %2609 = vmatprep.subr.bf16.mxu0 0
        %2610 = vmatpush2.bf16.msra.mxu0 0
        %2611 = vmatprep.subr.bf16.mxu0 0
        %2612 = vmatpush2.bf16.msra.mxu0 0
        %2613 = vmatprep.subr.bf16.mxu0 0
        %2614 = vmatpush2.bf16.msra.mxu0 0
        %2615 = vmatprep.mubr.bf16.mxu0 0
        %2616 = vmatmul.mubr.bf16.gmra.mxu0 %v2256
        %v2617 = vpop.f32.mrf.mxu0
        %v2618 = vadd.f32 %v2565, %v2617
        %v2619 = vpop.f32.mrf.mxu0
        %v2620 = vadd.f32 %v2567, %v2619
        %v2621 = vpop.f32.mrf.mxu0
        %v2622 = vadd.f32 %v2569, %v2621
        %v2623 = vpop.f32.mrf.mxu0
        %v2624 = vadd.f32 %v2571, %v2623
        %2625 = vmatprep.mubr.bf16.mxu0 0
        %2626 = vmatmul.mubr.bf16.gmra.mxu0 %v2283
        %v2627 = vpop.f32.mrf.mxu0
        %v2628 = vadd.f32 %v2575, %v2627
        %v2629 = vpop.f32.mrf.mxu0
        %v2630 = vadd.f32 %v2577, %v2629
        %v2631 = vpop.f32.mrf.mxu0
        %v2632 = vadd.f32 %v2579, %v2631
        %v2633 = vpop.f32.mrf.mxu0
        %v2634 = vadd.f32 %v2581, %v2633
        %2635 = vdwg.mxu0
        %v2636 = vxor.u32 %v2618, 2147483648
        %v2637 = vxor.u32 %v2622, 2147483648
        %v2638 = vxor.u32 %v2628, 2147483648
        %v2639 = vxor.u32 %v2632, 2147483648
        %v2640 = vmul.f32 %v2636, 1.442695
        %v2641 = vpow.pop %v2640
        %v2642 = vmul.f32 %v2637, 1.442695
        %v2643 = vpow.pop %v2642
        %v2644 = vmul.f32 %v2638, 1.442695
        %v2645 = vpow.pop %v2644
        %v2646 = vmul.f32 %v2639, 1.442695
        %v2647 = vpow.pop %v2646
        %v2648 = vadd.f32 %v2641, 1.0
        %v2649 = vadd.f32 %v2643, 1.0
        %v2650 = vadd.f32 %v2645, 1.0
        %v2651 = vadd.f32 %v2647, 1.0
        %v2652 = vrcp.pop %v2648
        %v2653 = vmul.f32 1.0, %v2652
        %v2654 = vrcp.pop %v2649
        %v2655 = vmul.f32 1.0, %v2654
        %v2656 = vrcp.pop %v2650
        %v2657 = vmul.f32 1.0, %v2656
        %v2658 = vrcp.pop %v2651
        %v2659 = vmul.f32 1.0, %v2658
        %v2660 = vunpack.c.l.bf16 %v2091
        %v2661 = vunpack.c.l.bf16 %v2092
        %v2662 = vunpack.c.l.bf16 %v2093
        %v2663 = vunpack.c.l.bf16 %v2095
        %v2664 = vmul.f32 %v2620, %v2653
        %v2665 = vmul.f32 %v2624, %v2655
        %v2666 = vmul.f32 %v2630, %v2657
        %v2667 = vmul.f32 %v2634, %v2659
        %v2668 = vsub.f32 1.0, %v2653
        %v2669 = vsub.f32 1.0, %v2655
        %v2670 = vsub.f32 1.0, %v2657
        %v2671 = vsub.f32 1.0, %v2659
        %v2672 = vmul.f32 %v2660, %v2668
        %v2673 = vmul.f32 %v2661, %v2669
        %v2674 = vmul.f32 %v2662, %v2670
        %v2675 = vmul.f32 %v2663, %v2671
        %v2676 = vadd.f32 %v2664, %v2672
        %v2677 = vadd.f32 %v2665, %v2673
        %v2678 = vadd.f32 %v2666, %v2674
        %v2679 = vadd.f32 %v2667, %v2675
        %v2680 = vpack.c.bf16 %v2677, %v2676
        %v2681 = vpack.c.bf16 %v2679, %v2678
        %v2684 = vunpack.c.l.b16 %v2680
        %v2685 = vunpack.c.h.b16 %v2680
        %v2686 = vunpack.c.l.b16 %v2681
        %v2687 = vunpack.c.h.b16 %v2681
        %v2688 = vpack.c.b16 %v2684, %v2684
        %v2689 = vpack.c.b16 %v2685, %v2685
        %v2690 = vpack.c.b16 %v2686, %v2686
        %v2691 = vpack.c.b16 %v2687, %v2687
        %2696 = vst [vmem:[#allocation2 + $0x10] sm:$0xf] %v2688
        %2697 = vst [vmem:[#allocation2 + $0x14] sm:$0xf] %v2689
        %2698 = vst [vmem:[#allocation2 + $0x18] sm:$0xf] %v2690
        %2699 = vst [vmem:[#allocation2 + $0x1c] sm:$0xf] %v2691
        %v2700 = vld [vmem:[#allocation2 + $0x8] sm:$0x8]
        %v2701 = vld [vmem:[#allocation2 + $0xc] sm:$0xf]
        %v2702 = vld [vmem:[#allocation2 + $0x10] sm:$0xf]
        %v2703 = vld [vmem:[#allocation2 + $0x14] sm:$0xf]
        %v2704 = vld [vmem:[#allocation2 + $0x18] sm:$0xf]
        %v2705 = vld [vmem:[#allocation2 + $0x1c] sm:$0xf]
        %v2706 = vld [vmem:[#allocation2 + $0x20] sm:$0xf]
        %v2707 = vld [vmem:[#allocation2 + $0x24] sm:$0x1]
        %v2713 = vunpack.c.l.b16 %v2700
        %v2714 = vunpack.c.l.b16 %v2701
        %v2715 = vunpack.c.l.b16 %v2702
        %v2716 = vunpack.c.l.b16 %v2703
        %v2717 = vunpack.c.l.b16 %v2704
        %v2718 = vpack.c.b16 %v2714, %v2713
        %v2719 = vpack.c.b16 %v2716, %v2715
        %v2720 = vpack.c.b16 %v2717, %v2717
        %v2722 = vunpack.c.l.b16 %v2705
        %v2723 = vpack.c.b16 %v2722, %v2717
        %v2725 = vshrl.u32 %v2719, 16
        %v2727 = vrot.slane %v2725, 4
        %v2728 = vshll.u32 %v2719, 16
        %v2730 = vrot.slane %v2728, 5
        %v2731 = vor.u32 %v2727, %v2730
        %v2733 = vshrl.u32 %v2723, 16
        %v2735 = vrot.slane %v2733, 4
        %v2736 = vshll.u32 %v2723, 16
        %v2738 = vrot.slane %v2736, 5
        %v2739 = vor.u32 %v2735, %v2738
        %v2740 = vsel %vm1508, %v2731, %v2739
        %v2743 = vunpack.c.l.b16 %v2706
        %v2744 = vunpack.c.l.b16 %v2707
        %v2745 = vpack.c.b16 %v2717, %v2716
        %v2746 = vpack.c.b16 %v2743, %v2722
        %v2747 = vpack.c.b16 %v2744, %v2744
        %v2748 = vrot.slane %v2745, 5
        %v2749 = vrot.slane %v2746, 5
        %v2750 = vsel %vm1529, %v2748, %v2749
        %v2751 = vrot.slane %v2747, 5
        %v2752 = vsel %vm1529, %v2749, %v2751
        %v2753 = vld [vmem:[#allocation16] sm:$0xff]
        %v2754 = vld [vmem:[#allocation16 + $0x8] sm:$0xff]
        %v2755 = vld [vmem:[#allocation16 + $0x10] sm:$0xff]
        %v2756 = vld [vmem:[#allocation16 + $0x18] sm:$0xff]
        %v2757 = vld [vmem:[#allocation16 + $0x20] sm:$0xff]
        %v2758 = vld [vmem:[#allocation16 + $0x28] sm:$0xff]
        %v2759 = vld [vmem:[#allocation16 + $0x30] sm:$0xff]
        %v2760 = vld [vmem:[#allocation16 + $0x38] sm:$0xff]
        %v2761 = vld [vmem:[#allocation16 + $0x40] sm:$0xff]
        %v2762 = vld [vmem:[#allocation16 + $0x48] sm:$0xff]
        %v2763 = vld [vmem:[#allocation16 + $0x50] sm:$0xff]
        %v2764 = vld [vmem:[#allocation16 + $0x58] sm:$0xff]
        %v2765 = vld [vmem:[#allocation16 + $0x60] sm:$0xff]
        %v2766 = vld [vmem:[#allocation16 + $0x68] sm:$0xff]
        %v2767 = vld [vmem:[#allocation16 + $0x70] sm:$0xff]
        %v2768 = vld [vmem:[#allocation16 + $0x78] sm:$0xff]
        %v2769 = vld [vmem:[#allocation16 + $0x80] sm:$0xff]
        %v2770 = vld [vmem:[#allocation16 + $0x88] sm:$0xff]
        %v2771 = vld [vmem:[#allocation16 + $0x90] sm:$0xff]
        %v2772 = vld [vmem:[#allocation16 + $0x98] sm:$0xff]
        %v2773 = vld [vmem:[#allocation16 + $0xa0] sm:$0xff]
        %v2774 = vld [vmem:[#allocation16 + $0xa8] sm:$0xff]
        %v2775 = vld [vmem:[#allocation16 + $0xb0] sm:$0xff]
        %v2776 = vld [vmem:[#allocation16 + $0xb8] sm:$0xff]
        %v2777 = vld [vmem:[#allocation16 + $0xc0] sm:$0xff]
        %v2778 = vld [vmem:[#allocation16 + $0xc8] sm:$0xff]
        %v2779 = vld [vmem:[#allocation16 + $0xd0] sm:$0xff]
        %v2780 = vld [vmem:[#allocation16 + $0xd8] sm:$0xff]
        %v2781 = vld [vmem:[#allocation16 + $0xe0] sm:$0xff]
        %v2782 = vld [vmem:[#allocation16 + $0xe8] sm:$0xff]
        %v2783 = vld [vmem:[#allocation16 + $0xf0] sm:$0xff]
        %v2784 = vld [vmem:[#allocation16 + $0xf8] sm:$0xff]
        %v2785 = vld [vmem:[#allocation16 + $0x100] sm:$0xff]
        %v2786 = vld [vmem:[#allocation16 + $0x108] sm:$0xff]
        %v2787 = vld [vmem:[#allocation16 + $0x110] sm:$0xff]
        %v2788 = vld [vmem:[#allocation16 + $0x118] sm:$0xff]
        %v2789 = vld [vmem:[#allocation16 + $0x120] sm:$0xff]
        %v2790 = vld [vmem:[#allocation16 + $0x128] sm:$0xff]
        %v2791 = vld [vmem:[#allocation16 + $0x130] sm:$0xff]
        %v2792 = vld [vmem:[#allocation16 + $0x138] sm:$0xff]
        %v2793 = vld [vmem:[#allocation16 + $0x140] sm:$0xff]
        %v2794 = vld [vmem:[#allocation16 + $0x148] sm:$0xff]
        %v2795 = vld [vmem:[#allocation16 + $0x150] sm:$0xff]
        %v2796 = vld [vmem:[#allocation16 + $0x158] sm:$0xff]
        %v2797 = vld [vmem:[#allocation16 + $0x160] sm:$0xff]
        %v2798 = vld [vmem:[#allocation16 + $0x168] sm:$0xff]
        %v2799 = vld [vmem:[#allocation16 + $0x170] sm:$0xff]
        %v2800 = vld [vmem:[#allocation16 + $0x178] sm:$0xff]
        %v2801 = vld [vmem:[#allocation18] sm:$0x3]
        %v2803 = vlaneseq
        %v2804 = vshrl.u32 %v2803, 7
        %v2805 = vsub.s32 0, %v2804
        %v2806 = vrot.slane %v2801, %v2805
        %v2807 = vlaneseq
        %v2808 = vshrl.u32 %v2807, 7
        %v2809 = vsub.s32 1, %v2808
        %v2810 = vrot.slane %v2801, %v2809
        %v2814 = vshrl.u32 %v2718, 16
        %v2816 = vrot.slane %v2814, 3
        %v2817 = vshll.u32 %v2718, 16
        %v2819 = vrot.slane %v2817, 4
        %v2820 = vor.u32 %v2816, %v2819
        %v2821 = vrot.slane %v2725, 3
        %v2822 = vrot.slane %v2728, 4
        %v2823 = vor.u32 %v2821, %v2822
        %v2824 = vsel %vm1595, %v2820, %v2823
        %v2826 = vshrl.u32 %v2731, 16
        %v2828 = vrot.slane %v2826, 3
        %v2829 = vshll.u32 %v2731, 16
        %v2831 = vrot.slane %v2829, 4
        %v2832 = vor.u32 %v2828, %v2831
        %v2834 = vshrl.u32 %v2740, 16
        %v2836 = vrot.slane %v2834, 3
        %v2837 = vshll.u32 %v2740, 16
        %v2839 = vrot.slane %v2837, 4
        %v2840 = vor.u32 %v2836, %v2839
        %v2841 = vsel %vm1595, %v2832, %v2840
        %v2843 = vshrl.u32 %v2748, 16
        %v2845 = vrot.slane %v2843, 3
        %v2846 = vshll.u32 %v2748, 16
        %v2848 = vrot.slane %v2846, 4
        %v2849 = vor.u32 %v2845, %v2848
        %v2851 = vshrl.u32 %v2750, 16
        %v2853 = vrot.slane %v2851, 3
        %v2854 = vshll.u32 %v2750, 16
        %v2856 = vrot.slane %v2854, 4
        %v2857 = vor.u32 %v2853, %v2856
        %v2858 = vsel %vm1595, %v2849, %v2857
        %v2860 = vshrl.u32 %v2720, 16
        %v2862 = vrot.slane %v2860, 3
        %v2863 = vshll.u32 %v2720, 16
        %v2865 = vrot.slane %v2863, 4
        %v2866 = vor.u32 %v2862, %v2865
        %v2867 = vsel %vm1595, %v2823, %v2866
        %v2869 = vshrl.u32 %v2739, 16
        %v2871 = vrot.slane %v2869, 3
        %v2872 = vshll.u32 %v2739, 16
        %v2874 = vrot.slane %v2872, 4
        %v2875 = vor.u32 %v2871, %v2874
        %v2876 = vsel %vm1595, %v2840, %v2875
        %v2878 = vshrl.u32 %v2752, 16
        %v2880 = vrot.slane %v2878, 3
        %v2881 = vshll.u32 %v2752, 16
        %v2883 = vrot.slane %v2881, 4
        %v2884 = vor.u32 %v2880, %v2883
        %v2885 = vsel %vm1595, %v2857, %v2884
        %v2940 = vunpack.c.l.b16 %v2753
        %v2941 = vunpack.c.h.b16 %v2753
        %v2942 = vunpack.c.l.b16 %v2754
        %v2943 = vunpack.c.h.b16 %v2754
        %v2944 = vunpack.c.l.b16 %v2755
        %v2945 = vunpack.c.h.b16 %v2755
        %v2946 = vunpack.c.l.b16 %v2756
        %v2947 = vunpack.c.h.b16 %v2756
        %v2948 = vunpack.c.l.b16 %v2757
        %v2949 = vunpack.c.h.b16 %v2757
        %v2950 = vunpack.c.l.b16 %v2758
        %v2951 = vunpack.c.h.b16 %v2758
        %v2952 = vunpack.c.l.b16 %v2759
        %v2953 = vunpack.c.h.b16 %v2759
        %v2954 = vunpack.c.l.b16 %v2760
        %v2955 = vunpack.c.h.b16 %v2760
        %v2956 = vunpack.c.l.b16 %v2761
        %v2957 = vunpack.c.h.b16 %v2761
        %v2958 = vunpack.c.l.b16 %v2762
        %v2959 = vunpack.c.h.b16 %v2762
        %v2960 = vunpack.c.l.b16 %v2763
        %v2961 = vunpack.c.h.b16 %v2763
        %v2962 = vunpack.c.l.b16 %v2764
        %v2963 = vunpack.c.h.b16 %v2764
        %v2964 = vunpack.c.l.b16 %v2765
        %v2965 = vunpack.c.h.b16 %v2765
        %v2966 = vunpack.c.l.b16 %v2766
        %v2967 = vunpack.c.h.b16 %v2766
        %v2968 = vunpack.c.l.b16 %v2767
        %v2969 = vunpack.c.h.b16 %v2767
        %v2970 = vunpack.c.l.b16 %v2768
        %v2971 = vunpack.c.h.b16 %v2768
        %v2972 = vunpack.c.l.b16 %v2769
        %v2973 = vunpack.c.h.b16 %v2769
        %v2974 = vunpack.c.l.b16 %v2770
        %v2975 = vunpack.c.h.b16 %v2770
        %v2976 = vunpack.c.l.b16 %v2771
        %v2977 = vunpack.c.h.b16 %v2771
        %v2978 = vunpack.c.l.b16 %v2772
        %v2979 = vunpack.c.h.b16 %v2772
        %v2980 = vunpack.c.l.b16 %v2773
        %v2981 = vunpack.c.h.b16 %v2773
        %v2982 = vunpack.c.l.b16 %v2774
        %v2983 = vunpack.c.h.b16 %v2774
        %v2984 = vunpack.c.l.b16 %v2775
        %v2985 = vunpack.c.h.b16 %v2775
        %v2986 = vunpack.c.l.b16 %v2776
        %v2987 = vunpack.c.h.b16 %v2776
        %v2988 = vunpack.c.l.b16 %v2777
        %v2989 = vunpack.c.h.b16 %v2777
        %v2990 = vunpack.c.l.b16 %v2778
        %v2991 = vunpack.c.h.b16 %v2778
        %v2992 = vunpack.c.l.b16 %v2779
        %v2993 = vunpack.c.h.b16 %v2779
        %v2994 = vunpack.c.l.b16 %v2780
        %v2995 = vunpack.c.h.b16 %v2780
        %v2996 = vunpack.c.l.b16 %v2781
        %v2997 = vunpack.c.h.b16 %v2781
        %v2998 = vunpack.c.l.b16 %v2782
        %v2999 = vunpack.c.h.b16 %v2782
        %v3000 = vunpack.c.l.b16 %v2783
        %v3001 = vunpack.c.h.b16 %v2783
        %v3002 = vunpack.c.l.b16 %v2784
        %v3003 = vunpack.c.h.b16 %v2784
        %v3004 = vunpack.c.l.b16 %v2785
        %v3005 = vunpack.c.h.b16 %v2785
        %v3006 = vunpack.c.l.b16 %v2786
        %v3007 = vunpack.c.h.b16 %v2786
        %v3008 = vunpack.c.l.b16 %v2787
        %v3009 = vunpack.c.h.b16 %v2787
        %v3010 = vunpack.c.l.b16 %v2788
        %v3011 = vunpack.c.h.b16 %v2788
        %v3012 = vunpack.c.l.b16 %v2789
        %v3013 = vunpack.c.h.b16 %v2789
        %v3014 = vunpack.c.l.b16 %v2790
        %v3015 = vunpack.c.h.b16 %v2790
        %v3016 = vunpack.c.l.b16 %v2791
        %v3017 = vunpack.c.h.b16 %v2791
        %v3018 = vunpack.c.l.b16 %v2792
        %v3019 = vunpack.c.h.b16 %v2792
        %v3020 = vunpack.c.l.b16 %v2793
        %v3021 = vunpack.c.h.b16 %v2793
        %v3022 = vunpack.c.l.b16 %v2794
        %v3023 = vunpack.c.h.b16 %v2794
        %v3024 = vunpack.c.l.b16 %v2795
        %v3025 = vunpack.c.h.b16 %v2795
        %v3026 = vunpack.c.l.b16 %v2796
        %v3027 = vunpack.c.h.b16 %v2796
        %v3028 = vunpack.c.l.b16 %v2797
        %v3029 = vunpack.c.h.b16 %v2797
        %v3030 = vunpack.c.l.b16 %v2798
        %v3031 = vunpack.c.h.b16 %v2798
        %v3032 = vunpack.c.l.b16 %v2799
        %v3033 = vunpack.c.h.b16 %v2799
        %v3034 = vunpack.c.l.b16 %v2800
        %v3035 = vunpack.c.h.b16 %v2800
        %v3036 = vpack.c.b16 %v2942, %v2940
        %v3037 = vpack.c.b16 %v2943, %v2941
        %v3038 = vpack.c.b16 %v2946, %v2944
        %v3039 = vpack.c.b16 %v2947, %v2945
        %v3040 = vpack.c.b16 %v2950, %v2948
        %v3041 = vpack.c.b16 %v2951, %v2949
        %v3042 = vpack.c.b16 %v2954, %v2952
        %v3043 = vpack.c.b16 %v2955, %v2953
        %v3044 = vpack.c.b16 %v2958, %v2956
        %v3045 = vpack.c.b16 %v2959, %v2957
        %v3046 = vpack.c.b16 %v2962, %v2960
        %v3047 = vpack.c.b16 %v2963, %v2961
        %v3048 = vpack.c.b16 %v2966, %v2964
        %v3049 = vpack.c.b16 %v2967, %v2965
        %v3050 = vpack.c.b16 %v2970, %v2968
        %v3051 = vpack.c.b16 %v2971, %v2969
        %v3052 = vpack.c.b16 %v2974, %v2972
        %v3053 = vpack.c.b16 %v2975, %v2973
        %v3054 = vpack.c.b16 %v2978, %v2976
        %v3055 = vpack.c.b16 %v2979, %v2977
        %v3056 = vpack.c.b16 %v2982, %v2980
        %v3057 = vpack.c.b16 %v2983, %v2981
        %v3058 = vpack.c.b16 %v2986, %v2984
        %v3059 = vpack.c.b16 %v2987, %v2985
        %v3060 = vpack.c.b16 %v2990, %v2988
        %v3061 = vpack.c.b16 %v2991, %v2989
        %v3062 = vpack.c.b16 %v2994, %v2992
        %v3063 = vpack.c.b16 %v2995, %v2993
        %v3064 = vpack.c.b16 %v2998, %v2996
        %v3065 = vpack.c.b16 %v2999, %v2997
        %v3066 = vpack.c.b16 %v3002, %v3000
        %v3067 = vpack.c.b16 %v3003, %v3001
        %v3068 = vpack.c.b16 %v3006, %v3004
        %v3069 = vpack.c.b16 %v3007, %v3005
        %v3070 = vpack.c.b16 %v3010, %v3008
        %v3071 = vpack.c.b16 %v3011, %v3009
        %v3072 = vpack.c.b16 %v3014, %v3012
        %v3073 = vpack.c.b16 %v3015, %v3013
        %v3074 = vpack.c.b16 %v3018, %v3016
        %v3075 = vpack.c.b16 %v3019, %v3017
        %v3076 = vpack.c.b16 %v3022, %v3020
        %v3077 = vpack.c.b16 %v3023, %v3021
        %v3078 = vpack.c.b16 %v3026, %v3024
        %v3079 = vpack.c.b16 %v3027, %v3025
        %v3080 = vpack.c.b16 %v3030, %v3028
        %v3081 = vpack.c.b16 %v3031, %v3029
        %v3082 = vpack.c.b16 %v3034, %v3032
        %v3083 = vpack.c.b16 %v3035, %v3033
        %3132 = vmatprep.subr.bf16.mxu0 %v3051
        %3133 = vmatpush1.bf16.msra.mxu0 %v3050
        %3134 = vmatprep.subr.bf16.mxu0 %v3049
        %3135 = vmatpush1.bf16.msra.mxu0 %v3048
        %3136 = vmatprep.subr.bf16.mxu0 %v3047
        %3137 = vmatpush1.bf16.msra.mxu0 %v3046
        %3138 = vmatprep.subr.bf16.mxu0 %v3045
        %3139 = vmatpush1.bf16.msra.mxu0 %v3044
        %3140 = vmatprep.subr.bf16.mxu0 %v3043
        %3141 = vmatpush1.bf16.msra.mxu0 %v3042
        %3142 = vmatprep.subr.bf16.mxu0 %v3041
        %3143 = vmatpush1.bf16.msra.mxu0 %v3040
        %3144 = vmatprep.subr.bf16.mxu0 %v3039
        %3145 = vmatpush1.bf16.msra.mxu0 %v3038
        %3146 = vmatprep.subr.bf16.mxu0 %v3037
        %3147 = vmatpush1.bf16.msra.mxu0 %v3036
        %3148 = vmatprep.subr.bf16.mxu0 %v3067
        %3149 = vmatpush2.bf16.msra.mxu0 %v3066
        %3150 = vmatprep.subr.bf16.mxu0 %v3065
        %3151 = vmatpush2.bf16.msra.mxu0 %v3064
        %3152 = vmatprep.subr.bf16.mxu0 %v3063
        %3153 = vmatpush2.bf16.msra.mxu0 %v3062
        %3154 = vmatprep.subr.bf16.mxu0 %v3061
        %3155 = vmatpush2.bf16.msra.mxu0 %v3060
        %3156 = vmatprep.subr.bf16.mxu0 %v3059
        %3157 = vmatpush2.bf16.msra.mxu0 %v3058
        %3158 = vmatprep.subr.bf16.mxu0 %v3057
        %3159 = vmatpush2.bf16.msra.mxu0 %v3056
        %3160 = vmatprep.subr.bf16.mxu0 %v3055
        %3161 = vmatpush2.bf16.msra.mxu0 %v3054
        %3162 = vmatprep.subr.bf16.mxu0 %v3053
        %3163 = vmatpush2.bf16.msra.mxu0 %v3052
        %3164 = vmatprep.mubr.bf16.mxu0 %v2841
        %3165 = vmatmul.mubr.bf16.gmra.mxu0 %v2824
        %v3166 = vpop.f32.mrf.mxu0
        %v3167 = vadd.f32 %v2806, %v3166
        %v3168 = vpop.f32.mrf.mxu0
        %v3169 = vadd.f32 %v2810, %v3168
        %v3170 = vpop.f32.mrf.mxu0
        %v3171 = vadd.f32 %v2806, %v3170
        %v3172 = vpop.f32.mrf.mxu0
        %v3173 = vadd.f32 %v2810, %v3172
        %3174 = vmatprep.mubr.bf16.mxu0 %v2876
        %3175 = vmatmul.mubr.bf16.gmra.mxu0 %v2867
        %v3176 = vpop.f32.mrf.mxu0
        %v3177 = vadd.f32 %v2806, %v3176
        %v3178 = vpop.f32.mrf.mxu0
        %v3179 = vadd.f32 %v2810, %v3178
        %v3180 = vpop.f32.mrf.mxu0
        %v3181 = vadd.f32 %v2806, %v3180
        %v3182 = vpop.f32.mrf.mxu0
        %v3183 = vadd.f32 %v2810, %v3182
        %3184 = vdwg.mxu0
        %3185 = vmatprep.subr.bf16.mxu0 %v3083
        %3186 = vmatpush1.bf16.msra.mxu0 %v3082
        %3187 = vmatprep.subr.bf16.mxu0 %v3081
        %3188 = vmatpush1.bf16.msra.mxu0 %v3080
        %3189 = vmatprep.subr.bf16.mxu0 %v3079
        %3190 = vmatpush1.bf16.msra.mxu0 %v3078
        %3191 = vmatprep.subr.bf16.mxu0 %v3077
        %3192 = vmatpush1.bf16.msra.mxu0 %v3076
        %3193 = vmatprep.subr.bf16.mxu0 %v3075
        %3194 = vmatpush1.bf16.msra.mxu0 %v3074
        %3195 = vmatprep.subr.bf16.mxu0 %v3073
        %3196 = vmatpush1.bf16.msra.mxu0 %v3072
        %3197 = vmatprep.subr.bf16.mxu0 %v3071
        %3198 = vmatpush1.bf16.msra.mxu0 %v3070
        %3199 = vmatprep.subr.bf16.mxu0 %v3069
        %3200 = vmatpush1.bf16.msra.mxu0 %v3068
        %3201 = vmatprep.subr.bf16.mxu0 0
        %3202 = vmatpush2.bf16.msra.mxu0 0
        %3203 = vmatprep.subr.bf16.mxu0 0
        %3204 = vmatpush2.bf16.msra.mxu0 0
        %3205 = vmatprep.subr.bf16.mxu0 0
        %3206 = vmatpush2.bf16.msra.mxu0 0
        %3207 = vmatprep.subr.bf16.mxu0 0
        %3208 = vmatpush2.bf16.msra.mxu0 0
        %3209 = vmatprep.subr.bf16.mxu0 0
        %3210 = vmatpush2.bf16.msra.mxu0 0
        %3211 = vmatprep.subr.bf16.mxu0 0
        %3212 = vmatpush2.bf16.msra.mxu0 0
        %3213 = vmatprep.subr.bf16.mxu0 0
        %3214 = vmatpush2.bf16.msra.mxu0 0
        %3215 = vmatprep.subr.bf16.mxu0 0
        %3216 = vmatpush2.bf16.msra.mxu0 0
        %3217 = vmatprep.mubr.bf16.mxu0 0
        %3218 = vmatmul.mubr.bf16.gmra.mxu0 %v2858
        %v3219 = vpop.f32.mrf.mxu0
        %v3220 = vadd.f32 %v3167, %v3219
        %v3221 = vpop.f32.mrf.mxu0
        %v3222 = vadd.f32 %v3169, %v3221
        %v3223 = vpop.f32.mrf.mxu0
        %v3224 = vadd.f32 %v3171, %v3223
        %v3225 = vpop.f32.mrf.mxu0
        %v3226 = vadd.f32 %v3173, %v3225
        %3227 = vmatprep.mubr.bf16.mxu0 0
        %3228 = vmatmul.mubr.bf16.gmra.mxu0 %v2885
        %v3229 = vpop.f32.mrf.mxu0
        %v3230 = vadd.f32 %v3177, %v3229
        %v3231 = vpop.f32.mrf.mxu0
        %v3232 = vadd.f32 %v3179, %v3231
        %v3233 = vpop.f32.mrf.mxu0
        %v3234 = vadd.f32 %v3181, %v3233
        %v3235 = vpop.f32.mrf.mxu0
        %v3236 = vadd.f32 %v3183, %v3235
        %3237 = vdwg.mxu0
        %v3238 = vxor.u32 %v3220, 2147483648
        %v3239 = vxor.u32 %v3224, 2147483648
        %v3240 = vxor.u32 %v3230, 2147483648
        %v3241 = vxor.u32 %v3234, 2147483648
        %v3242 = vmul.f32 %v3238, 1.442695
        %v3243 = vpow.pop %v3242
        %v3244 = vmul.f32 %v3239, 1.442695
        %v3245 = vpow.pop %v3244
        %v3246 = vmul.f32 %v3240, 1.442695
        %v3247 = vpow.pop %v3246
        %v3248 = vmul.f32 %v3241, 1.442695
        %v3249 = vpow.pop %v3248
        %v3250 = vadd.f32 %v3243, 1.0
        %v3251 = vadd.f32 %v3245, 1.0
        %v3252 = vadd.f32 %v3247, 1.0
        %v3253 = vadd.f32 %v3249, 1.0
        %v3254 = vrcp.pop %v3250
        %v3255 = vmul.f32 1.0, %v3254
        %v3256 = vrcp.pop %v3251
        %v3257 = vmul.f32 1.0, %v3256
        %v3258 = vrcp.pop %v3252
        %v3259 = vmul.f32 1.0, %v3258
        %v3260 = vrcp.pop %v3253
        %v3261 = vmul.f32 1.0, %v3260
        %v3262 = vunpack.c.l.bf16 %v2702
        %v3263 = vunpack.c.l.bf16 %v2703
        %v3264 = vunpack.c.l.bf16 %v2704
        %v3265 = vunpack.c.l.bf16 %v2705
        %v3266 = vmul.f32 %v3222, %v3255
        %v3267 = vmul.f32 %v3226, %v3257
        %v3268 = vmul.f32 %v3232, %v3259
        %v3269 = vmul.f32 %v3236, %v3261
        %v3270 = vsub.f32 1.0, %v3255
        %v3271 = vsub.f32 1.0, %v3257
        %v3272 = vsub.f32 1.0, %v3259
        %v3273 = vsub.f32 1.0, %v3261
        %v3274 = vmul.f32 %v3262, %v3270
        %v3275 = vmul.f32 %v3263, %v3271
        %v3276 = vmul.f32 %v3264, %v3272
        %v3277 = vmul.f32 %v3265, %v3273
        %v3278 = vadd.f32 %v3266, %v3274
        %v3279 = vadd.f32 %v3267, %v3275
        %v3280 = vadd.f32 %v3268, %v3276
        %v3281 = vadd.f32 %v3269, %v3277
        %v3282 = vpack.c.bf16 %v3279, %v3278
        %v3283 = vpack.c.bf16 %v3281, %v3280
        %v3286 = vunpack.c.l.b16 %v3282
        %v3287 = vunpack.c.h.b16 %v3282
        %v3288 = vunpack.c.l.b16 %v3283
        %v3289 = vunpack.c.h.b16 %v3283
        %v3290 = vpack.c.b16 %v3286, %v3286
        %v3291 = vpack.c.b16 %v3287, %v3287
        %v3292 = vpack.c.b16 %v3288, %v3288
        %v3293 = vpack.c.b16 %v3289, %v3289
        %3298 = vst [vmem:[#allocation3 + $0x10] sm:$0xf] %v3290
        %3299 = vst [vmem:[#allocation3 + $0x14] sm:$0xf] %v3291
        %3300 = vst [vmem:[#allocation3 + $0x18] sm:$0xf] %v3292
        %3301 = vst [vmem:[#allocation3 + $0x1c] sm:$0xf] %v3293
        %v3302 = vld [vmem:[#allocation3] sm:$0xc]
        %v3303 = vld [vmem:[#allocation3 + $0x4] sm:$0xf]
        %v3304 = vld [vmem:[#allocation3 + $0x8] sm:$0xf]
        %v3305 = vld [vmem:[#allocation3 + $0xc] sm:$0xf]
        %v3306 = vld [vmem:[#allocation3 + $0x10] sm:$0x7]
        %v3307 = vld [vmem:[#allocation3 + $0x10] sm:$0xf]
        %v3308 = vld [vmem:[#allocation3 + $0x14] sm:$0xf]
        %v3309 = vld [vmem:[#allocation3 + $0x18] sm:$0xf]
        %v3310 = vld [vmem:[#allocation3 + $0x1c] sm:$0xf]
        %v3311 = vld [vmem:[#allocation3 + $0x1c] sm:$0xe]
        %v3312 = vld [vmem:[#allocation3 + $0x20] sm:$0xf]
        %v3313 = vld [vmem:[#allocation3 + $0x24] sm:$0xf]
        %v3314 = vld [vmem:[#allocation3 + $0x28] sm:$0xf]
        %v3315 = vld [vmem:[#allocation3 + $0x2c] sm:$0x3]
        %v3321 = vunpack.c.l.b16 %v3302
        %v3322 = vunpack.c.l.b16 %v3303
        %v3323 = vunpack.c.l.b16 %v3304
        %v3324 = vunpack.c.l.b16 %v3305
        %v3325 = vunpack.c.l.b16 %v3306
        %v3326 = vpack.c.b16 %v3322, %v3321
        %v3327 = vpack.c.b16 %v3324, %v3323
        %v3328 = vpack.c.b16 %v3325, %v3325
        %v3333 = vunpack.c.l.b16 %v3307
        %v3334 = vunpack.c.l.b16 %v3308
        %v3335 = vunpack.c.l.b16 %v3309
        %v3336 = vunpack.c.l.b16 %v3310
        %v3337 = vpack.c.b16 %v3334, %v3333
        %v3338 = vpack.c.b16 %v3336, %v3335
        %v3340 = vshrl.u32 %v3337, 16
        %v3342 = vrot.slane %v3340, 5
        %v3343 = vshll.u32 %v3337, 16
        %v3345 = vrot.slane %v3343, 6
        %v3346 = vor.u32 %v3342, %v3345
        %v3348 = vshrl.u32 %v3338, 16
        %v3350 = vrot.slane %v3348, 5
        %v3351 = vshll.u32 %v3338, 16
        %v3353 = vrot.slane %v3351, 6
        %v3354 = vor.u32 %v3350, %v3353
        %v3355 = vsel %vm2115, %v3346, %v3354
        %v3361 = vunpack.c.l.b16 %v3311
        %v3362 = vunpack.c.l.b16 %v3312
        %v3363 = vunpack.c.l.b16 %v3313
        %v3364 = vunpack.c.l.b16 %v3314
        %v3365 = vunpack.c.l.b16 %v3315
        %v3366 = vpack.c.b16 %v3362, %v3361
        %v3367 = vpack.c.b16 %v3364, %v3363
        %v3368 = vpack.c.b16 %v3365, %v3365
        %v3369 = vrot.slane %v3366, 7
        %v3370 = vrot.slane %v3367, 7
        %v3371 = vsel %vm2139, %v3369, %v3370
        %v3372 = vrot.slane %v3368, 7
        %v3373 = vsel %vm2139, %v3370, %v3372
        %v3374 = vld [vmem:[#allocation19] sm:$0xff]
        %v3375 = vld [vmem:[#allocation19 + $0x8] sm:$0xff]
        %v3376 = vld [vmem:[#allocation19 + $0x10] sm:$0xff]
        %v3377 = vld [vmem:[#allocation19 + $0x18] sm:$0xff]
        %v3378 = vld [vmem:[#allocation19 + $0x20] sm:$0xff]
        %v3379 = vld [vmem:[#allocation19 + $0x28] sm:$0xff]
        %v3380 = vld [vmem:[#allocation19 + $0x30] sm:$0xff]
        %v3381 = vld [vmem:[#allocation19 + $0x38] sm:$0xff]
        %v3382 = vld [vmem:[#allocation19 + $0x40] sm:$0xff]
        %v3383 = vld [vmem:[#allocation19 + $0x48] sm:$0xff]
        %v3384 = vld [vmem:[#allocation19 + $0x50] sm:$0xff]
        %v3385 = vld [vmem:[#allocation19 + $0x58] sm:$0xff]
        %v3386 = vld [vmem:[#allocation19 + $0x60] sm:$0xff]
        %v3387 = vld [vmem:[#allocation19 + $0x68] sm:$0xff]
        %v3388 = vld [vmem:[#allocation19 + $0x70] sm:$0xff]
        %v3389 = vld [vmem:[#allocation19 + $0x78] sm:$0xff]
        %v3390 = vld [vmem:[#allocation19 + $0x80] sm:$0xff]
        %v3391 = vld [vmem:[#allocation19 + $0x88] sm:$0xff]
        %v3392 = vld [vmem:[#allocation19 + $0x90] sm:$0xff]
        %v3393 = vld [vmem:[#allocation19 + $0x98] sm:$0xff]
        %v3394 = vld [vmem:[#allocation19 + $0xa0] sm:$0xff]
        %v3395 = vld [vmem:[#allocation19 + $0xa8] sm:$0xff]
        %v3396 = vld [vmem:[#allocation19 + $0xb0] sm:$0xff]
        %v3397 = vld [vmem:[#allocation19 + $0xb8] sm:$0xff]
        %v3398 = vld [vmem:[#allocation19 + $0xc0] sm:$0xff]
        %v3399 = vld [vmem:[#allocation19 + $0xc8] sm:$0xff]
        %v3400 = vld [vmem:[#allocation19 + $0xd0] sm:$0xff]
        %v3401 = vld [vmem:[#allocation19 + $0xd8] sm:$0xff]
        %v3402 = vld [vmem:[#allocation19 + $0xe0] sm:$0xff]
        %v3403 = vld [vmem:[#allocation19 + $0xe8] sm:$0xff]
        %v3404 = vld [vmem:[#allocation19 + $0xf0] sm:$0xff]
        %v3405 = vld [vmem:[#allocation19 + $0xf8] sm:$0xff]
        %v3406 = vld [vmem:[#allocation19 + $0x100] sm:$0xff]
        %v3407 = vld [vmem:[#allocation19 + $0x108] sm:$0xff]
        %v3408 = vld [vmem:[#allocation19 + $0x110] sm:$0xff]
        %v3409 = vld [vmem:[#allocation19 + $0x118] sm:$0xff]
        %v3410 = vld [vmem:[#allocation19 + $0x120] sm:$0xff]
        %v3411 = vld [vmem:[#allocation19 + $0x128] sm:$0xff]
        %v3412 = vld [vmem:[#allocation19 + $0x130] sm:$0xff]
        %v3413 = vld [vmem:[#allocation19 + $0x138] sm:$0xff]
        %v3414 = vld [vmem:[#allocation19 + $0x140] sm:$0xff]
        %v3415 = vld [vmem:[#allocation19 + $0x148] sm:$0xff]
        %v3416 = vld [vmem:[#allocation19 + $0x150] sm:$0xff]
        %v3417 = vld [vmem:[#allocation19 + $0x158] sm:$0xff]
        %v3418 = vld [vmem:[#allocation19 + $0x160] sm:$0xff]
        %v3419 = vld [vmem:[#allocation19 + $0x168] sm:$0xff]
        %v3420 = vld [vmem:[#allocation19 + $0x170] sm:$0xff]
        %v3421 = vld [vmem:[#allocation19 + $0x178] sm:$0xff]
        %v3422 = vld [vmem:[%s25] sm:$0x3]
        %v3424 = vlaneseq
        %v3425 = vshrl.u32 %v3424, 7
        %v3426 = vsub.s32 0, %v3425
        %v3427 = vrot.slane %v3422, %v3426
        %v3428 = vlaneseq
        %v3429 = vshrl.u32 %v3428, 7
        %v3430 = vsub.s32 1, %v3429
        %v3431 = vrot.slane %v3422, %v3430
        %v3435 = vshrl.u32 %v3326, 16
        %v3437 = vrot.slane %v3435, 2
        %v3438 = vshll.u32 %v3326, 16
        %v3440 = vrot.slane %v3438, 3
        %v3441 = vor.u32 %v3437, %v3440
        %v3443 = vshrl.u32 %v3327, 16
        %v3445 = vrot.slane %v3443, 2
        %v3446 = vshll.u32 %v3327, 16
        %v3448 = vrot.slane %v3446, 3
        %v3449 = vor.u32 %v3445, %v3448
        %v3450 = vsel %vm2205, %v3441, %v3449
        %v3452 = vshrl.u32 %v3346, 16
        %v3454 = vrot.slane %v3452, 2
        %v3455 = vshll.u32 %v3346, 16
        %v3457 = vrot.slane %v3455, 3
        %v3458 = vor.u32 %v3454, %v3457
        %v3460 = vshrl.u32 %v3355, 16
        %v3462 = vrot.slane %v3460, 2
        %v3463 = vshll.u32 %v3355, 16
        %v3465 = vrot.slane %v3463, 3
        %v3466 = vor.u32 %v3462, %v3465
        %v3467 = vsel %vm2205, %v3458, %v3466
        %v3469 = vshrl.u32 %v3369, 16
        %v3471 = vrot.slane %v3469, 2
        %v3472 = vshll.u32 %v3369, 16
        %v3474 = vrot.slane %v3472, 3
        %v3475 = vor.u32 %v3471, %v3474
        %v3477 = vshrl.u32 %v3371, 16
        %v3479 = vrot.slane %v3477, 2
        %v3480 = vshll.u32 %v3371, 16
        %v3482 = vrot.slane %v3480, 3
        %v3483 = vor.u32 %v3479, %v3482
        %v3484 = vsel %vm2205, %v3475, %v3483
        %v3486 = vshrl.u32 %v3328, 16
        %v3488 = vrot.slane %v3486, 2
        %v3489 = vshll.u32 %v3328, 16
        %v3491 = vrot.slane %v3489, 3
        %v3492 = vor.u32 %v3488, %v3491
        %v3493 = vsel %vm2205, %v3449, %v3492
        %v3495 = vshrl.u32 %v3354, 16
        %v3497 = vrot.slane %v3495, 2
        %v3498 = vshll.u32 %v3354, 16
        %v3500 = vrot.slane %v3498, 3
        %v3501 = vor.u32 %v3497, %v3500
        %v3502 = vsel %vm2205, %v3466, %v3501
        %v3504 = vshrl.u32 %v3373, 16
        %v3506 = vrot.slane %v3504, 2
        %v3507 = vshll.u32 %v3373, 16
        %v3509 = vrot.slane %v3507, 3
        %v3510 = vor.u32 %v3506, %v3509
        %v3511 = vsel %vm2205, %v3483, %v3510
        %v3566 = vunpack.c.l.b16 %v3374
        %v3567 = vunpack.c.h.b16 %v3374
        %v3568 = vunpack.c.l.b16 %v3375
        %v3569 = vunpack.c.h.b16 %v3375
        %v3570 = vunpack.c.l.b16 %v3376
        %v3571 = vunpack.c.h.b16 %v3376
        %v3572 = vunpack.c.l.b16 %v3377
        %v3573 = vunpack.c.h.b16 %v3377
        %v3574 = vunpack.c.l.b16 %v3378
        %v3575 = vunpack.c.h.b16 %v3378
        %v3576 = vunpack.c.l.b16 %v3379
        %v3577 = vunpack.c.h.b16 %v3379
        %v3578 = vunpack.c.l.b16 %v3380
        %v3579 = vunpack.c.h.b16 %v3380
        %v3580 = vunpack.c.l.b16 %v3381
        %v3581 = vunpack.c.h.b16 %v3381
        %v3582 = vunpack.c.l.b16 %v3382
        %v3583 = vunpack.c.h.b16 %v3382
        %v3584 = vunpack.c.l.b16 %v3383
        %v3585 = vunpack.c.h.b16 %v3383
        %v3586 = vunpack.c.l.b16 %v3384
        %v3587 = vunpack.c.h.b16 %v3384
        %v3588 = vunpack.c.l.b16 %v3385
        %v3589 = vunpack.c.h.b16 %v3385
        %v3590 = vunpack.c.l.b16 %v3386
        %v3591 = vunpack.c.h.b16 %v3386
        %v3592 = vunpack.c.l.b16 %v3387
        %v3593 = vunpack.c.h.b16 %v3387
        %v3594 = vunpack.c.l.b16 %v3388
        %v3595 = vunpack.c.h.b16 %v3388
        %v3596 = vunpack.c.l.b16 %v3389
        %v3597 = vunpack.c.h.b16 %v3389
        %v3598 = vunpack.c.l.b16 %v3390
        %v3599 = vunpack.c.h.b16 %v3390
        %v3600 = vunpack.c.l.b16 %v3391
        %v3601 = vunpack.c.h.b16 %v3391
        %v3602 = vunpack.c.l.b16 %v3392
        %v3603 = vunpack.c.h.b16 %v3392
        %v3604 = vunpack.c.l.b16 %v3393
        %v3605 = vunpack.c.h.b16 %v3393
        %v3606 = vunpack.c.l.b16 %v3394
        %v3607 = vunpack.c.h.b16 %v3394
        %v3608 = vunpack.c.l.b16 %v3395
        %v3609 = vunpack.c.h.b16 %v3395
        %v3610 = vunpack.c.l.b16 %v3396
        %v3611 = vunpack.c.h.b16 %v3396
        %v3612 = vunpack.c.l.b16 %v3397
        %v3613 = vunpack.c.h.b16 %v3397
        %v3614 = vunpack.c.l.b16 %v3398
        %v3615 = vunpack.c.h.b16 %v3398
        %v3616 = vunpack.c.l.b16 %v3399
        %v3617 = vunpack.c.h.b16 %v3399
        %v3618 = vunpack.c.l.b16 %v3400
        %v3619 = vunpack.c.h.b16 %v3400
        %v3620 = vunpack.c.l.b16 %v3401
        %v3621 = vunpack.c.h.b16 %v3401
        %v3622 = vunpack.c.l.b16 %v3402
        %v3623 = vunpack.c.h.b16 %v3402
        %v3624 = vunpack.c.l.b16 %v3403
        %v3625 = vunpack.c.h.b16 %v3403
        %v3626 = vunpack.c.l.b16 %v3404
        %v3627 = vunpack.c.h.b16 %v3404
        %v3628 = vunpack.c.l.b16 %v3405
        %v3629 = vunpack.c.h.b16 %v3405
        %v3630 = vunpack.c.l.b16 %v3406
        %v3631 = vunpack.c.h.b16 %v3406
        %v3632 = vunpack.c.l.b16 %v3407
        %v3633 = vunpack.c.h.b16 %v3407
        %v3634 = vunpack.c.l.b16 %v3408
        %v3635 = vunpack.c.h.b16 %v3408
        %v3636 = vunpack.c.l.b16 %v3409
        %v3637 = vunpack.c.h.b16 %v3409
        %v3638 = vunpack.c.l.b16 %v3410
        %v3639 = vunpack.c.h.b16 %v3410
        %v3640 = vunpack.c.l.b16 %v3411
        %v3641 = vunpack.c.h.b16 %v3411
        %v3642 = vunpack.c.l.b16 %v3412
        %v3643 = vunpack.c.h.b16 %v3412
        %v3644 = vunpack.c.l.b16 %v3413
        %v3645 = vunpack.c.h.b16 %v3413
        %v3646 = vunpack.c.l.b16 %v3414
        %v3647 = vunpack.c.h.b16 %v3414
        %v3648 = vunpack.c.l.b16 %v3415
        %v3649 = vunpack.c.h.b16 %v3415
        %v3650 = vunpack.c.l.b16 %v3416
        %v3651 = vunpack.c.h.b16 %v3416
        %v3652 = vunpack.c.l.b16 %v3417
        %v3653 = vunpack.c.h.b16 %v3417
        %v3654 = vunpack.c.l.b16 %v3418
        %v3655 = vunpack.c.h.b16 %v3418
        %v3656 = vunpack.c.l.b16 %v3419
        %v3657 = vunpack.c.h.b16 %v3419
        %v3658 = vunpack.c.l.b16 %v3420
        %v3659 = vunpack.c.h.b16 %v3420
        %v3660 = vunpack.c.l.b16 %v3421
        %v3661 = vunpack.c.h.b16 %v3421
        %v3662 = vpack.c.b16 %v3568, %v3566
        %v3663 = vpack.c.b16 %v3569, %v3567
        %v3664 = vpack.c.b16 %v3572, %v3570
        %v3665 = vpack.c.b16 %v3573, %v3571
        %v3666 = vpack.c.b16 %v3576, %v3574
        %v3667 = vpack.c.b16 %v3577, %v3575
        %v3668 = vpack.c.b16 %v3580, %v3578
        %v3669 = vpack.c.b16 %v3581, %v3579
        %v3670 = vpack.c.b16 %v3584, %v3582
        %v3671 = vpack.c.b16 %v3585, %v3583
        %v3672 = vpack.c.b16 %v3588, %v3586
        %v3673 = vpack.c.b16 %v3589, %v3587
        %v3674 = vpack.c.b16 %v3592, %v3590
        %v3675 = vpack.c.b16 %v3593, %v3591
        %v3676 = vpack.c.b16 %v3596, %v3594
        %v3677 = vpack.c.b16 %v3597, %v3595
        %v3678 = vpack.c.b16 %v3600, %v3598
        %v3679 = vpack.c.b16 %v3601, %v3599
        %v3680 = vpack.c.b16 %v3604, %v3602
        %v3681 = vpack.c.b16 %v3605, %v3603
        %v3682 = vpack.c.b16 %v3608, %v3606
        %v3683 = vpack.c.b16 %v3609, %v3607
        %v3684 = vpack.c.b16 %v3612, %v3610
        %v3685 = vpack.c.b16 %v3613, %v3611
        %v3686 = vpack.c.b16 %v3616, %v3614
        %v3687 = vpack.c.b16 %v3617, %v3615
        %v3688 = vpack.c.b16 %v3620, %v3618
        %v3689 = vpack.c.b16 %v3621, %v3619
        %v3690 = vpack.c.b16 %v3624, %v3622
        %v3691 = vpack.c.b16 %v3625, %v3623
        %v3692 = vpack.c.b16 %v3628, %v3626
        %v3693 = vpack.c.b16 %v3629, %v3627
        %v3694 = vpack.c.b16 %v3632, %v3630
        %v3695 = vpack.c.b16 %v3633, %v3631
        %v3696 = vpack.c.b16 %v3636, %v3634
        %v3697 = vpack.c.b16 %v3637, %v3635
        %v3698 = vpack.c.b16 %v3640, %v3638
        %v3699 = vpack.c.b16 %v3641, %v3639
        %v3700 = vpack.c.b16 %v3644, %v3642
        %v3701 = vpack.c.b16 %v3645, %v3643
        %v3702 = vpack.c.b16 %v3648, %v3646
        %v3703 = vpack.c.b16 %v3649, %v3647
        %v3704 = vpack.c.b16 %v3652, %v3650
        %v3705 = vpack.c.b16 %v3653, %v3651
        %v3706 = vpack.c.b16 %v3656, %v3654
        %v3707 = vpack.c.b16 %v3657, %v3655
        %v3708 = vpack.c.b16 %v3660, %v3658
        %v3709 = vpack.c.b16 %v3661, %v3659
        %3758 = vmatprep.subr.bf16.mxu0 %v3677
        %3759 = vmatpush1.bf16.msra.mxu0 %v3676
        %3760 = vmatprep.subr.bf16.mxu0 %v3675
        %3761 = vmatpush1.bf16.msra.mxu0 %v3674
        %3762 = vmatprep.subr.bf16.mxu0 %v3673
        %3763 = vmatpush1.bf16.msra.mxu0 %v3672
        %3764 = vmatprep.subr.bf16.mxu0 %v3671
        %3765 = vmatpush1.bf16.msra.mxu0 %v3670
        %3766 = vmatprep.subr.bf16.mxu0 %v3669
        %3767 = vmatpush1.bf16.msra.mxu0 %v3668
        %3768 = vmatprep.subr.bf16.mxu0 %v3667
        %3769 = vmatpush1.bf16.msra.mxu0 %v3666
        %3770 = vmatprep.subr.bf16.mxu0 %v3665
        %3771 = vmatpush1.bf16.msra.mxu0 %v3664
        %3772 = vmatprep.subr.bf16.mxu0 %v3663
        %3773 = vmatpush1.bf16.msra.mxu0 %v3662
        %3774 = vmatprep.subr.bf16.mxu0 %v3693
        %3775 = vmatpush2.bf16.msra.mxu0 %v3692
        %3776 = vmatprep.subr.bf16.mxu0 %v3691
        %3777 = vmatpush2.bf16.msra.mxu0 %v3690
        %3778 = vmatprep.subr.bf16.mxu0 %v3689
        %3779 = vmatpush2.bf16.msra.mxu0 %v3688
        %3780 = vmatprep.subr.bf16.mxu0 %v3687
        %3781 = vmatpush2.bf16.msra.mxu0 %v3686
        %3782 = vmatprep.subr.bf16.mxu0 %v3685
        %3783 = vmatpush2.bf16.msra.mxu0 %v3684
        %3784 = vmatprep.subr.bf16.mxu0 %v3683
        %3785 = vmatpush2.bf16.msra.mxu0 %v3682
        %3786 = vmatprep.subr.bf16.mxu0 %v3681
        %3787 = vmatpush2.bf16.msra.mxu0 %v3680
        %3788 = vmatprep.subr.bf16.mxu0 %v3679
        %3789 = vmatpush2.bf16.msra.mxu0 %v3678
        %3790 = vmatprep.mubr.bf16.mxu0 %v3467
        %3791 = vmatmul.mubr.bf16.gmra.mxu0 %v3450
        %v3792 = vpop.f32.mrf.mxu0
        %v3793 = vadd.f32 %v3427, %v3792
        %v3794 = vpop.f32.mrf.mxu0
        %v3795 = vadd.f32 %v3431, %v3794
        %v3796 = vpop.f32.mrf.mxu0
        %v3797 = vadd.f32 %v3427, %v3796
        %v3798 = vpop.f32.mrf.mxu0
        %v3799 = vadd.f32 %v3431, %v3798
        %3800 = vmatprep.mubr.bf16.mxu0 %v3502
        %3801 = vmatmul.mubr.bf16.gmra.mxu0 %v3493
        %v3802 = vpop.f32.mrf.mxu0
        %v3803 = vadd.f32 %v3427, %v3802
        %v3804 = vpop.f32.mrf.mxu0
        %v3805 = vadd.f32 %v3431, %v3804
        %v3806 = vpop.f32.mrf.mxu0
        %v3807 = vadd.f32 %v3427, %v3806
        %v3808 = vpop.f32.mrf.mxu0
        %v3809 = vadd.f32 %v3431, %v3808
        %3810 = vdwg.mxu0
        %3811 = vmatprep.subr.bf16.mxu0 %v3709
        %3812 = vmatpush1.bf16.msra.mxu0 %v3708
        %3813 = vmatprep.subr.bf16.mxu0 %v3707
        %3814 = vmatpush1.bf16.msra.mxu0 %v3706
        %3815 = vmatprep.subr.bf16.mxu0 %v3705
        %3816 = vmatpush1.bf16.msra.mxu0 %v3704
        %3817 = vmatprep.subr.bf16.mxu0 %v3703
        %3818 = vmatpush1.bf16.msra.mxu0 %v3702
        %3819 = vmatprep.subr.bf16.mxu0 %v3701
        %3820 = vmatpush1.bf16.msra.mxu0 %v3700
        %3821 = vmatprep.subr.bf16.mxu0 %v3699
        %3822 = vmatpush1.bf16.msra.mxu0 %v3698
        %3823 = vmatprep.subr.bf16.mxu0 %v3697
        %3824 = vmatpush1.bf16.msra.mxu0 %v3696
        %3825 = vmatprep.subr.bf16.mxu0 %v3695
        %3826 = vmatpush1.bf16.msra.mxu0 %v3694
        %3827 = vmatprep.subr.bf16.mxu0 0
        %3828 = vmatpush2.bf16.msra.mxu0 0
        %3829 = vmatprep.subr.bf16.mxu0 0
        %3830 = vmatpush2.bf16.msra.mxu0 0
        %3831 = vmatprep.subr.bf16.mxu0 0
        %3832 = vmatpush2.bf16.msra.mxu0 0
        %3833 = vmatprep.subr.bf16.mxu0 0
        %3834 = vmatpush2.bf16.msra.mxu0 0
        %3835 = vmatprep.subr.bf16.mxu0 0
        %3836 = vmatpush2.bf16.msra.mxu0 0
        %3837 = vmatprep.subr.bf16.mxu0 0
        %3838 = vmatpush2.bf16.msra.mxu0 0
        %3839 = vmatprep.subr.bf16.mxu0 0
        %3840 = vmatpush2.bf16.msra.mxu0 0
        %3841 = vmatprep.subr.bf16.mxu0 0
        %3842 = vmatpush2.bf16.msra.mxu0 0
        %3843 = vmatprep.mubr.bf16.mxu0 0
        %3844 = vmatmul.mubr.bf16.gmra.mxu0 %v3484
        %v3845 = vpop.f32.mrf.mxu0
        %v3846 = vadd.f32 %v3793, %v3845
        %v3847 = vpop.f32.mrf.mxu0
        %v3848 = vadd.f32 %v3795, %v3847
        %v3849 = vpop.f32.mrf.mxu0
        %v3850 = vadd.f32 %v3797, %v3849
        %v3851 = vpop.f32.mrf.mxu0
        %v3852 = vadd.f32 %v3799, %v3851
        %3853 = vmatprep.mubr.bf16.mxu0 0
        %3854 = vmatmul.mubr.bf16.gmra.mxu0 %v3511
        %v3855 = vpop.f32.mrf.mxu0
        %v3856 = vadd.f32 %v3803, %v3855
        %v3857 = vpop.f32.mrf.mxu0
        %v3858 = vadd.f32 %v3805, %v3857
        %v3859 = vpop.f32.mrf.mxu0
        %v3860 = vadd.f32 %v3807, %v3859
        %v3861 = vpop.f32.mrf.mxu0
        %v3862 = vadd.f32 %v3809, %v3861
        %3863 = vdwg.mxu0
        %v3864 = vxor.u32 %v3846, 2147483648
        %v3865 = vxor.u32 %v3850, 2147483648
        %v3866 = vxor.u32 %v3856, 2147483648
        %v3867 = vxor.u32 %v3860, 2147483648
        %v3868 = vmul.f32 %v3864, 1.442695
        %v3869 = vpow.pop %v3868
        %v3870 = vmul.f32 %v3865, 1.442695
        %v3871 = vpow.pop %v3870
        %v3872 = vmul.f32 %v3866, 1.442695
        %v3873 = vpow.pop %v3872
        %v3874 = vmul.f32 %v3867, 1.442695
        %v3875 = vpow.pop %v3874
        %v3876 = vadd.f32 %v3869, 1.0
        %v3877 = vadd.f32 %v3871, 1.0
        %v3878 = vadd.f32 %v3873, 1.0
        %v3879 = vadd.f32 %v3875, 1.0
        %v3880 = vrcp.pop %v3876
        %v3881 = vmul.f32 1.0, %v3880
        %v3882 = vrcp.pop %v3877
        %v3883 = vmul.f32 1.0, %v3882
        %v3884 = vrcp.pop %v3878
        %v3885 = vmul.f32 1.0, %v3884
        %v3886 = vrcp.pop %v3879
        %v3887 = vmul.f32 1.0, %v3886
        %v3888 = vunpack.c.l.bf16 %v3307
        %v3889 = vunpack.c.l.bf16 %v3308
        %v3890 = vunpack.c.l.bf16 %v3309
        %v3891 = vunpack.c.l.bf16 %v3310
        %v3892 = vmul.f32 %v3848, %v3881
        %v3893 = vmul.f32 %v3852, %v3883
        %v3894 = vmul.f32 %v3858, %v3885
        %v3895 = vmul.f32 %v3862, %v3887
        %v3896 = vsub.f32 1.0, %v3881
        %v3897 = vsub.f32 1.0, %v3883
        %v3898 = vsub.f32 1.0, %v3885
        %v3899 = vsub.f32 1.0, %v3887
        %v3900 = vmul.f32 %v3888, %v3896
        %v3901 = vmul.f32 %v3889, %v3897
        %v3902 = vmul.f32 %v3890, %v3898
        %v3903 = vmul.f32 %v3891, %v3899
        %v3904 = vadd.f32 %v3892, %v3900
        %v3905 = vadd.f32 %v3893, %v3901
        %v3906 = vadd.f32 %v3894, %v3902
        %v3907 = vadd.f32 %v3895, %v3903
        %v3908 = vpack.c.bf16 %v3905, %v3904
        %v3909 = vpack.c.bf16 %v3907, %v3906
        %v3912 = vunpack.c.l.b16 %v3908
        %v3913 = vunpack.c.h.b16 %v3908
        %v3914 = vunpack.c.l.b16 %v3909
        %v3915 = vunpack.c.h.b16 %v3909
        %v3916 = vpack.c.b16 %v3912, %v3912
        %v3917 = vpack.c.b16 %v3913, %v3913
        %v3918 = vpack.c.b16 %v3914, %v3914
        %v3919 = vpack.c.b16 %v3915, %v3915
        %3924 = vst [vmem:[#allocation2 + $0x10] sm:$0xf] %v3916
        %3925 = vst [vmem:[#allocation2 + $0x14] sm:$0xf] %v3917
        %3926 = vst [vmem:[#allocation2 + $0x18] sm:$0xf] %v3918
        %3927 = vst [vmem:[#allocation2 + $0x1c] sm:$0xf] %v3919
        %v3928 = vld [vmem:[#allocation2 + $0xc] sm:$0x8]
        %v3929 = vld [vmem:[#allocation2 + $0x10] sm:$0xf]
        %v3930 = vld [vmem:[#allocation2 + $0x14] sm:$0xf]
        %v3931 = vld [vmem:[#allocation2 + $0x18] sm:$0xf]
        %v3932 = vld [vmem:[#allocation2 + $0x1c] sm:$0xf]
        %v3933 = vld [vmem:[#allocation2 + $0x20] sm:$0x1]
        %v3939 = vunpack.c.l.b16 %v3928
        %v3940 = vunpack.c.l.b16 %v3929
        %v3941 = vunpack.c.l.b16 %v3930
        %v3942 = vunpack.c.l.b16 %v3931
        %v3943 = vunpack.c.l.b16 %v3932
        %v3944 = vpack.c.b16 %v3940, %v3939
        %v3945 = vpack.c.b16 %v3942, %v3941
        %v3946 = vpack.c.b16 %v3943, %v3943
        %v3947 = vpack.c.b16 %v3941, %v3940
        %v3948 = vpack.c.b16 %v3943, %v3942
        %v3950 = vshrl.u32 %v3947, 16
        %v3952 = vrot.slane %v3950, 4
        %v3953 = vshll.u32 %v3947, 16
        %v3955 = vrot.slane %v3953, 5
        %v3956 = vor.u32 %v3952, %v3955
        %v3958 = vshrl.u32 %v3948, 16
        %v3960 = vrot.slane %v3958, 4
        %v3961 = vshll.u32 %v3948, 16
        %v3963 = vrot.slane %v3961, 5
        %v3964 = vor.u32 %v3960, %v3963
        %v3965 = vsel %vm1508, %v3956, %v3964
        %v3967 = vunpack.c.l.b16 %v3933
        %v3968 = vpack.c.b16 %v3967, %v3967
        %v3969 = vrot.slane %v3947, 5
        %v3970 = vrot.slane %v3948, 5
        %v3971 = vsel %vm1529, %v3969, %v3970
        %v3972 = vrot.slane %v3968, 5
        %v3973 = vsel %vm1529, %v3970, %v3972
        %v3974 = vld [vmem:[#allocation21] sm:$0xff]
        %v3975 = vld [vmem:[#allocation21 + $0x8] sm:$0xff]
        %v3976 = vld [vmem:[#allocation21 + $0x10] sm:$0xff]
        %v3977 = vld [vmem:[#allocation21 + $0x18] sm:$0xff]
        %v3978 = vld [vmem:[#allocation21 + $0x20] sm:$0xff]
        %v3979 = vld [vmem:[#allocation21 + $0x28] sm:$0xff]
        %v3980 = vld [vmem:[#allocation21 + $0x30] sm:$0xff]
        %v3981 = vld [vmem:[#allocation21 + $0x38] sm:$0xff]
        %v3982 = vld [vmem:[#allocation21 + $0x40] sm:$0xff]
        %v3983 = vld [vmem:[#allocation21 + $0x48] sm:$0xff]
        %v3984 = vld [vmem:[#allocation21 + $0x50] sm:$0xff]
        %v3985 = vld [vmem:[#allocation21 + $0x58] sm:$0xff]
        %v3986 = vld [vmem:[#allocation21 + $0x60] sm:$0xff]
        %v3987 = vld [vmem:[#allocation21 + $0x68] sm:$0xff]
        %v3988 = vld [vmem:[#allocation21 + $0x70] sm:$0xff]
        %v3989 = vld [vmem:[#allocation21 + $0x78] sm:$0xff]
        %v3990 = vld [vmem:[#allocation21 + $0x80] sm:$0xff]
        %v3991 = vld [vmem:[#allocation21 + $0x88] sm:$0xff]
        %v3992 = vld [vmem:[#allocation21 + $0x90] sm:$0xff]
        %v3993 = vld [vmem:[#allocation21 + $0x98] sm:$0xff]
        %v3994 = vld [vmem:[#allocation21 + $0xa0] sm:$0xff]
        %v3995 = vld [vmem:[#allocation21 + $0xa8] sm:$0xff]
        %v3996 = vld [vmem:[#allocation21 + $0xb0] sm:$0xff]
        %v3997 = vld [vmem:[#allocation21 + $0xb8] sm:$0xff]
        %v3998 = vld [vmem:[#allocation21 + $0xc0] sm:$0xff]
        %v3999 = vld [vmem:[#allocation21 + $0xc8] sm:$0xff]
        %v4000 = vld [vmem:[#allocation21 + $0xd0] sm:$0xff]
        %v4001 = vld [vmem:[#allocation21 + $0xd8] sm:$0xff]
        %v4002 = vld [vmem:[#allocation21 + $0xe0] sm:$0xff]
        %v4003 = vld [vmem:[#allocation21 + $0xe8] sm:$0xff]
        %v4004 = vld [vmem:[#allocation21 + $0xf0] sm:$0xff]
        %v4005 = vld [vmem:[#allocation21 + $0xf8] sm:$0xff]
        %v4006 = vld [vmem:[#allocation21 + $0x100] sm:$0xff]
        %v4007 = vld [vmem:[#allocation21 + $0x108] sm:$0xff]
        %v4008 = vld [vmem:[#allocation21 + $0x110] sm:$0xff]
        %v4009 = vld [vmem:[#allocation21 + $0x118] sm:$0xff]
        %v4010 = vld [vmem:[#allocation21 + $0x120] sm:$0xff]
        %v4011 = vld [vmem:[#allocation21 + $0x128] sm:$0xff]
        %v4012 = vld [vmem:[#allocation21 + $0x130] sm:$0xff]
        %v4013 = vld [vmem:[#allocation21 + $0x138] sm:$0xff]
        %v4014 = vld [vmem:[#allocation21 + $0x140] sm:$0xff]
        %v4015 = vld [vmem:[#allocation21 + $0x148] sm:$0xff]
        %v4016 = vld [vmem:[#allocation21 + $0x150] sm:$0xff]
        %v4017 = vld [vmem:[#allocation21 + $0x158] sm:$0xff]
        %v4018 = vld [vmem:[#allocation21 + $0x160] sm:$0xff]
        %v4019 = vld [vmem:[#allocation21 + $0x168] sm:$0xff]
        %v4020 = vld [vmem:[#allocation21 + $0x170] sm:$0xff]
        %v4021 = vld [vmem:[#allocation21 + $0x178] sm:$0xff]
        %v4022 = vld [vmem:[%s29] sm:$0x3]
        %v4024 = vlaneseq
        %v4025 = vshrl.u32 %v4024, 7
        %v4026 = vsub.s32 0, %v4025
        %v4027 = vrot.slane %v4022, %v4026
        %v4028 = vlaneseq
        %v4029 = vshrl.u32 %v4028, 7
        %v4030 = vsub.s32 1, %v4029
        %v4031 = vrot.slane %v4022, %v4030
        %v4035 = vshrl.u32 %v3944, 16
        %v4037 = vrot.slane %v4035, 3
        %v4038 = vshll.u32 %v3944, 16
        %v4040 = vrot.slane %v4038, 4
        %v4041 = vor.u32 %v4037, %v4040
        %v4043 = vshrl.u32 %v3945, 16
        %v4045 = vrot.slane %v4043, 3
        %v4046 = vshll.u32 %v3945, 16
        %v4048 = vrot.slane %v4046, 4
        %v4049 = vor.u32 %v4045, %v4048
        %v4050 = vsel %vm1595, %v4041, %v4049
        %v4052 = vshrl.u32 %v3956, 16
        %v4054 = vrot.slane %v4052, 3
        %v4055 = vshll.u32 %v3956, 16
        %v4057 = vrot.slane %v4055, 4
        %v4058 = vor.u32 %v4054, %v4057
        %v4060 = vshrl.u32 %v3965, 16
        %v4062 = vrot.slane %v4060, 3
        %v4063 = vshll.u32 %v3965, 16
        %v4065 = vrot.slane %v4063, 4
        %v4066 = vor.u32 %v4062, %v4065
        %v4067 = vsel %vm1595, %v4058, %v4066
        %v4069 = vshrl.u32 %v3969, 16
        %v4071 = vrot.slane %v4069, 3
        %v4072 = vshll.u32 %v3969, 16
        %v4074 = vrot.slane %v4072, 4
        %v4075 = vor.u32 %v4071, %v4074
        %v4077 = vshrl.u32 %v3971, 16
        %v4079 = vrot.slane %v4077, 3
        %v4080 = vshll.u32 %v3971, 16
        %v4082 = vrot.slane %v4080, 4
        %v4083 = vor.u32 %v4079, %v4082
        %v4084 = vsel %vm1595, %v4075, %v4083
        %v4086 = vshrl.u32 %v3946, 16
        %v4088 = vrot.slane %v4086, 3
        %v4089 = vshll.u32 %v3946, 16
        %v4091 = vrot.slane %v4089, 4
        %v4092 = vor.u32 %v4088, %v4091
        %v4093 = vsel %vm1595, %v4049, %v4092
        %v4095 = vshrl.u32 %v3964, 16
        %v4097 = vrot.slane %v4095, 3
        %v4098 = vshll.u32 %v3964, 16
        %v4100 = vrot.slane %v4098, 4
        %v4101 = vor.u32 %v4097, %v4100
        %v4102 = vsel %vm1595, %v4066, %v4101
        %v4104 = vshrl.u32 %v3973, 16
        %v4106 = vrot.slane %v4104, 3
        %v4107 = vshll.u32 %v3973, 16
        %v4109 = vrot.slane %v4107, 4
        %v4110 = vor.u32 %v4106, %v4109
        %v4111 = vsel %vm1595, %v4083, %v4110
        %v4166 = vunpack.c.l.b16 %v3974
        %v4167 = vunpack.c.h.b16 %v3974
        %v4168 = vunpack.c.l.b16 %v3975
        %v4169 = vunpack.c.h.b16 %v3975
        %v4170 = vunpack.c.l.b16 %v3976
        %v4171 = vunpack.c.h.b16 %v3976
        %v4172 = vunpack.c.l.b16 %v3977
        %v4173 = vunpack.c.h.b16 %v3977
        %v4174 = vunpack.c.l.b16 %v3978
        %v4175 = vunpack.c.h.b16 %v3978
        %v4176 = vunpack.c.l.b16 %v3979
        %v4177 = vunpack.c.h.b16 %v3979
        %v4178 = vunpack.c.l.b16 %v3980
        %v4179 = vunpack.c.h.b16 %v3980
        %v4180 = vunpack.c.l.b16 %v3981
        %v4181 = vunpack.c.h.b16 %v3981
        %v4182 = vunpack.c.l.b16 %v3982
        %v4183 = vunpack.c.h.b16 %v3982
        %v4184 = vunpack.c.l.b16 %v3983
        %v4185 = vunpack.c.h.b16 %v3983
        %v4186 = vunpack.c.l.b16 %v3984
        %v4187 = vunpack.c.h.b16 %v3984
        %v4188 = vunpack.c.l.b16 %v3985
        %v4189 = vunpack.c.h.b16 %v3985
        %v4190 = vunpack.c.l.b16 %v3986
        %v4191 = vunpack.c.h.b16 %v3986
        %v4192 = vunpack.c.l.b16 %v3987
        %v4193 = vunpack.c.h.b16 %v3987
        %v4194 = vunpack.c.l.b16 %v3988
        %v4195 = vunpack.c.h.b16 %v3988
        %v4196 = vunpack.c.l.b16 %v3989
        %v4197 = vunpack.c.h.b16 %v3989
        %v4198 = vunpack.c.l.b16 %v3990
        %v4199 = vunpack.c.h.b16 %v3990
        %v4200 = vunpack.c.l.b16 %v3991
        %v4201 = vunpack.c.h.b16 %v3991
        %v4202 = vunpack.c.l.b16 %v3992
        %v4203 = vunpack.c.h.b16 %v3992
        %v4204 = vunpack.c.l.b16 %v3993
        %v4205 = vunpack.c.h.b16 %v3993
        %v4206 = vunpack.c.l.b16 %v3994
        %v4207 = vunpack.c.h.b16 %v3994
        %v4208 = vunpack.c.l.b16 %v3995
        %v4209 = vunpack.c.h.b16 %v3995
        %v4210 = vunpack.c.l.b16 %v3996
        %v4211 = vunpack.c.h.b16 %v3996
        %v4212 = vunpack.c.l.b16 %v3997
        %v4213 = vunpack.c.h.b16 %v3997
        %v4214 = vunpack.c.l.b16 %v3998
        %v4215 = vunpack.c.h.b16 %v3998
        %v4216 = vunpack.c.l.b16 %v3999
        %v4217 = vunpack.c.h.b16 %v3999
        %v4218 = vunpack.c.l.b16 %v4000
        %v4219 = vunpack.c.h.b16 %v4000
        %v4220 = vunpack.c.l.b16 %v4001
        %v4221 = vunpack.c.h.b16 %v4001
        %v4222 = vunpack.c.l.b16 %v4002
        %v4223 = vunpack.c.h.b16 %v4002
        %v4224 = vunpack.c.l.b16 %v4003
        %v4225 = vunpack.c.h.b16 %v4003
        %v4226 = vunpack.c.l.b16 %v4004
        %v4227 = vunpack.c.h.b16 %v4004
        %v4228 = vunpack.c.l.b16 %v4005
        %v4229 = vunpack.c.h.b16 %v4005
        %v4230 = vunpack.c.l.b16 %v4006
        %v4231 = vunpack.c.h.b16 %v4006
        %v4232 = vunpack.c.l.b16 %v4007
        %v4233 = vunpack.c.h.b16 %v4007
        %v4234 = vunpack.c.l.b16 %v4008
        %v4235 = vunpack.c.h.b16 %v4008
        %v4236 = vunpack.c.l.b16 %v4009
        %v4237 = vunpack.c.h.b16 %v4009
        %v4238 = vunpack.c.l.b16 %v4010
        %v4239 = vunpack.c.h.b16 %v4010
        %v4240 = vunpack.c.l.b16 %v4011
        %v4241 = vunpack.c.h.b16 %v4011
        %v4242 = vunpack.c.l.b16 %v4012
        %v4243 = vunpack.c.h.b16 %v4012
        %v4244 = vunpack.c.l.b16 %v4013
        %v4245 = vunpack.c.h.b16 %v4013
        %v4246 = vunpack.c.l.b16 %v4014
        %v4247 = vunpack.c.h.b16 %v4014
        %v4248 = vunpack.c.l.b16 %v4015
        %v4249 = vunpack.c.h.b16 %v4015
        %v4250 = vunpack.c.l.b16 %v4016
        %v4251 = vunpack.c.h.b16 %v4016
        %v4252 = vunpack.c.l.b16 %v4017
        %v4253 = vunpack.c.h.b16 %v4017
        %v4254 = vunpack.c.l.b16 %v4018
        %v4255 = vunpack.c.h.b16 %v4018
        %v4256 = vunpack.c.l.b16 %v4019
        %v4257 = vunpack.c.h.b16 %v4019
        %v4258 = vunpack.c.l.b16 %v4020
        %v4259 = vunpack.c.h.b16 %v4020
        %v4260 = vunpack.c.l.b16 %v4021
        %v4261 = vunpack.c.h.b16 %v4021
        %v4262 = vpack.c.b16 %v4168, %v4166
        %v4263 = vpack.c.b16 %v4169, %v4167
        %v4264 = vpack.c.b16 %v4172, %v4170
        %v4265 = vpack.c.b16 %v4173, %v4171
        %v4266 = vpack.c.b16 %v4176, %v4174
        %v4267 = vpack.c.b16 %v4177, %v4175
        %v4268 = vpack.c.b16 %v4180, %v4178
        %v4269 = vpack.c.b16 %v4181, %v4179
        %v4270 = vpack.c.b16 %v4184, %v4182
        %v4271 = vpack.c.b16 %v4185, %v4183
        %v4272 = vpack.c.b16 %v4188, %v4186
        %v4273 = vpack.c.b16 %v4189, %v4187
        %v4274 = vpack.c.b16 %v4192, %v4190
        %v4275 = vpack.c.b16 %v4193, %v4191
        %v4276 = vpack.c.b16 %v4196, %v4194
        %v4277 = vpack.c.b16 %v4197, %v4195
        %v4278 = vpack.c.b16 %v4200, %v4198
        %v4279 = vpack.c.b16 %v4201, %v4199
        %v4280 = vpack.c.b16 %v4204, %v4202
        %v4281 = vpack.c.b16 %v4205, %v4203
        %v4282 = vpack.c.b16 %v4208, %v4206
        %v4283 = vpack.c.b16 %v4209, %v4207
        %v4284 = vpack.c.b16 %v4212, %v4210
        %v4285 = vpack.c.b16 %v4213, %v4211
        %v4286 = vpack.c.b16 %v4216, %v4214
        %v4287 = vpack.c.b16 %v4217, %v4215
        %v4288 = vpack.c.b16 %v4220, %v4218
        %v4289 = vpack.c.b16 %v4221, %v4219
        %v4290 = vpack.c.b16 %v4224, %v4222
        %v4291 = vpack.c.b16 %v4225, %v4223
        %v4292 = vpack.c.b16 %v4228, %v4226
        %v4293 = vpack.c.b16 %v4229, %v4227
        %v4294 = vpack.c.b16 %v4232, %v4230
        %v4295 = vpack.c.b16 %v4233, %v4231
        %v4296 = vpack.c.b16 %v4236, %v4234
        %v4297 = vpack.c.b16 %v4237, %v4235
        %v4298 = vpack.c.b16 %v4240, %v4238
        %v4299 = vpack.c.b16 %v4241, %v4239
        %v4300 = vpack.c.b16 %v4244, %v4242
        %v4301 = vpack.c.b16 %v4245, %v4243
        %v4302 = vpack.c.b16 %v4248, %v4246
        %v4303 = vpack.c.b16 %v4249, %v4247
        %v4304 = vpack.c.b16 %v4252, %v4250
        %v4305 = vpack.c.b16 %v4253, %v4251
        %v4306 = vpack.c.b16 %v4256, %v4254
        %v4307 = vpack.c.b16 %v4257, %v4255
        %v4308 = vpack.c.b16 %v4260, %v4258
        %v4309 = vpack.c.b16 %v4261, %v4259
        %4358 = vmatprep.subr.bf16.mxu0 %v4277
        %4359 = vmatpush1.bf16.msra.mxu0 %v4276
        %4360 = vmatprep.subr.bf16.mxu0 %v4275
        %4361 = vmatpush1.bf16.msra.mxu0 %v4274
        %4362 = vmatprep.subr.bf16.mxu0 %v4273
        %4363 = vmatpush1.bf16.msra.mxu0 %v4272
        %4364 = vmatprep.subr.bf16.mxu0 %v4271
        %4365 = vmatpush1.bf16.msra.mxu0 %v4270
        %4366 = vmatprep.subr.bf16.mxu0 %v4269
        %4367 = vmatpush1.bf16.msra.mxu0 %v4268
        %4368 = vmatprep.subr.bf16.mxu0 %v4267
        %4369 = vmatpush1.bf16.msra.mxu0 %v4266
        %4370 = vmatprep.subr.bf16.mxu0 %v4265
        %4371 = vmatpush1.bf16.msra.mxu0 %v4264
        %4372 = vmatprep.subr.bf16.mxu0 %v4263
        %4373 = vmatpush1.bf16.msra.mxu0 %v4262
        %4374 = vmatprep.subr.bf16.mxu0 %v4293
        %4375 = vmatpush2.bf16.msra.mxu0 %v4292
        %4376 = vmatprep.subr.bf16.mxu0 %v4291
        %4377 = vmatpush2.bf16.msra.mxu0 %v4290
        %4378 = vmatprep.subr.bf16.mxu0 %v4289
        %4379 = vmatpush2.bf16.msra.mxu0 %v4288
        %4380 = vmatprep.subr.bf16.mxu0 %v4287
        %4381 = vmatpush2.bf16.msra.mxu0 %v4286
        %4382 = vmatprep.subr.bf16.mxu0 %v4285
        %4383 = vmatpush2.bf16.msra.mxu0 %v4284
        %4384 = vmatprep.subr.bf16.mxu0 %v4283
        %4385 = vmatpush2.bf16.msra.mxu0 %v4282
        %4386 = vmatprep.subr.bf16.mxu0 %v4281
        %4387 = vmatpush2.bf16.msra.mxu0 %v4280
        %4388 = vmatprep.subr.bf16.mxu0 %v4279
        %4389 = vmatpush2.bf16.msra.mxu0 %v4278
        %4390 = vmatprep.mubr.bf16.mxu0 %v4067
        %4391 = vmatmul.mubr.bf16.gmra.mxu0 %v4050
        %v4392 = vpop.f32.mrf.mxu0
        %v4393 = vadd.f32 %v4027, %v4392
        %v4394 = vpop.f32.mrf.mxu0
        %v4395 = vadd.f32 %v4031, %v4394
        %v4396 = vpop.f32.mrf.mxu0
        %v4397 = vadd.f32 %v4027, %v4396
        %v4398 = vpop.f32.mrf.mxu0
        %v4399 = vadd.f32 %v4031, %v4398
        %4400 = vmatprep.mubr.bf16.mxu0 %v4102
        %4401 = vmatmul.mubr.bf16.gmra.mxu0 %v4093
        %v4402 = vpop.f32.mrf.mxu0
        %v4403 = vadd.f32 %v4027, %v4402
        %v4404 = vpop.f32.mrf.mxu0
        %v4405 = vadd.f32 %v4031, %v4404
        %v4406 = vpop.f32.mrf.mxu0
        %v4407 = vadd.f32 %v4027, %v4406
        %v4408 = vpop.f32.mrf.mxu0
        %v4409 = vadd.f32 %v4031, %v4408
        %4410 = vdwg.mxu0
        %4411 = vmatprep.subr.bf16.mxu0 %v4309
        %4412 = vmatpush1.bf16.msra.mxu0 %v4308
        %4413 = vmatprep.subr.bf16.mxu0 %v4307
        %4414 = vmatpush1.bf16.msra.mxu0 %v4306
        %4415 = vmatprep.subr.bf16.mxu0 %v4305
        %4416 = vmatpush1.bf16.msra.mxu0 %v4304
        %4417 = vmatprep.subr.bf16.mxu0 %v4303
        %4418 = vmatpush1.bf16.msra.mxu0 %v4302
        %4419 = vmatprep.subr.bf16.mxu0 %v4301
        %4420 = vmatpush1.bf16.msra.mxu0 %v4300
        %4421 = vmatprep.subr.bf16.mxu0 %v4299
        %4422 = vmatpush1.bf16.msra.mxu0 %v4298
        %4423 = vmatprep.subr.bf16.mxu0 %v4297
        %4424 = vmatpush1.bf16.msra.mxu0 %v4296
        %4425 = vmatprep.subr.bf16.mxu0 %v4295
        %4426 = vmatpush1.bf16.msra.mxu0 %v4294
        %4427 = vmatprep.subr.bf16.mxu0 0
        %4428 = vmatpush2.bf16.msra.mxu0 0
        %4429 = vmatprep.subr.bf16.mxu0 0
        %4430 = vmatpush2.bf16.msra.mxu0 0
        %4431 = vmatprep.subr.bf16.mxu0 0
        %4432 = vmatpush2.bf16.msra.mxu0 0
        %4433 = vmatprep.subr.bf16.mxu0 0
        %4434 = vmatpush2.bf16.msra.mxu0 0
        %4435 = vmatprep.subr.bf16.mxu0 0
        %4436 = vmatpush2.bf16.msra.mxu0 0
        %4437 = vmatprep.subr.bf16.mxu0 0
        %4438 = vmatpush2.bf16.msra.mxu0 0
        %4439 = vmatprep.subr.bf16.mxu0 0
        %4440 = vmatpush2.bf16.msra.mxu0 0
        %4441 = vmatprep.subr.bf16.mxu0 0
        %4442 = vmatpush2.bf16.msra.mxu0 0
        %4443 = vmatprep.mubr.bf16.mxu0 0
        %4444 = vmatmul.mubr.bf16.gmra.mxu0 %v4084
        %v4445 = vpop.f32.mrf.mxu0
        %v4446 = vadd.f32 %v4393, %v4445
        %v4447 = vpop.f32.mrf.mxu0
        %v4448 = vadd.f32 %v4395, %v4447
        %v4449 = vpop.f32.mrf.mxu0
        %v4450 = vadd.f32 %v4397, %v4449
        %v4451 = vpop.f32.mrf.mxu0
        %v4452 = vadd.f32 %v4399, %v4451
        %4453 = vmatprep.mubr.bf16.mxu0 0
        %4454 = vmatmul.mubr.bf16.gmra.mxu0 %v4111
        %v4455 = vpop.f32.mrf.mxu0
        %v4456 = vadd.f32 %v4403, %v4455
        %v4457 = vpop.f32.mrf.mxu0
        %v4458 = vadd.f32 %v4405, %v4457
        %v4459 = vpop.f32.mrf.mxu0
        %v4460 = vadd.f32 %v4407, %v4459
        %v4461 = vpop.f32.mrf.mxu0
        %v4462 = vadd.f32 %v4409, %v4461
        %4463 = vdwg.mxu0
        %v4464 = vxor.u32 %v4446, 2147483648
        %v4465 = vxor.u32 %v4450, 2147483648
        %v4466 = vxor.u32 %v4456, 2147483648
        %v4467 = vxor.u32 %v4460, 2147483648
        %v4468 = vmul.f32 %v4464, 1.442695
        %v4469 = vpow.pop %v4468
        %v4470 = vmul.f32 %v4465, 1.442695
        %v4471 = vpow.pop %v4470
        %v4472 = vmul.f32 %v4466, 1.442695
        %v4473 = vpow.pop %v4472
        %v4474 = vmul.f32 %v4467, 1.442695
        %v4475 = vpow.pop %v4474
        %v4476 = vadd.f32 %v4469, 1.0
        %v4477 = vadd.f32 %v4471, 1.0
        %v4478 = vadd.f32 %v4473, 1.0
        %v4479 = vadd.f32 %v4475, 1.0
        %v4480 = vrcp.pop %v4476
        %v4481 = vmul.f32 1.0, %v4480
        %v4482 = vrcp.pop %v4477
        %v4483 = vmul.f32 1.0, %v4482
        %v4484 = vrcp.pop %v4478
        %v4485 = vmul.f32 1.0, %v4484
        %v4486 = vrcp.pop %v4479
        %v4487 = vmul.f32 1.0, %v4486
        %v4488 = vunpack.c.l.bf16 %v3929
        %v4489 = vunpack.c.l.bf16 %v3930
        %v4490 = vunpack.c.l.bf16 %v3931
        %v4491 = vunpack.c.l.bf16 %v3932
        %v4492 = vmul.f32 %v4448, %v4481
        %v4493 = vmul.f32 %v4452, %v4483
        %v4494 = vmul.f32 %v4458, %v4485
        %v4495 = vmul.f32 %v4462, %v4487
        %v4496 = vsub.f32 1.0, %v4481
        %v4497 = vsub.f32 1.0, %v4483
        %v4498 = vsub.f32 1.0, %v4485
        %v4499 = vsub.f32 1.0, %v4487
        %v4500 = vmul.f32 %v4488, %v4496
        %v4501 = vmul.f32 %v4489, %v4497
        %v4502 = vmul.f32 %v4490, %v4498
        %v4503 = vmul.f32 %v4491, %v4499
        %v4504 = vadd.f32 %v4492, %v4500
        %v4505 = vadd.f32 %v4493, %v4501
        %v4506 = vadd.f32 %v4494, %v4502
        %v4507 = vadd.f32 %v4495, %v4503
        %v4508 = vpack.c.bf16 %v4505, %v4504
        %v4509 = vpack.c.bf16 %v4507, %v4506
        %v4512 = vunpack.c.l.b16 %v4508
        %v4513 = vunpack.c.h.b16 %v4508
        %v4514 = vunpack.c.l.b16 %v4509
        %v4515 = vunpack.c.h.b16 %v4509
        %v4516 = vpack.c.b16 %v4512, %v4512
        %v4517 = vpack.c.b16 %v4513, %v4513
        %v4518 = vpack.c.b16 %v4514, %v4514
        %v4519 = vpack.c.b16 %v4515, %v4515
        %4524 = vst [vmem:[#allocation3 + $0x10] sm:$0xf] %v4516
        %4525 = vst [vmem:[#allocation3 + $0x14] sm:$0xf] %v4517
        %4526 = vst [vmem:[#allocation3 + $0x18] sm:$0xf] %v4518
        %4527 = vst [vmem:[#allocation3 + $0x1c] sm:$0xf] %v4519
        %v4528 = vld [vmem:[#allocation3 + $0xc] sm:$0xc]
        %v4529 = vld [vmem:[#allocation3 + $0x10] sm:$0xf]
        %v4530 = vld [vmem:[#allocation3 + $0x14] sm:$0xf]
        %v4531 = vld [vmem:[#allocation3 + $0x18] sm:$0xf]
        %v4532 = vld [vmem:[#allocation3 + $0x1c] sm:$0x7]
        %v4533 = vld [vmem:[#allocation3 + $0x1c] sm:$0xf]
        %v4534 = vld [vmem:[#allocation3 + $0x10] sm:$0xe]
        %v4535 = vld [vmem:[#allocation3 + $0x20] sm:$0x3]
        %v4541 = vunpack.c.l.b16 %v4528
        %v4542 = vunpack.c.l.b16 %v4529
        %v4543 = vunpack.c.l.b16 %v4530
        %v4544 = vunpack.c.l.b16 %v4531
        %v4545 = vunpack.c.l.b16 %v4532
        %v4546 = vpack.c.b16 %v4542, %v4541
        %v4547 = vpack.c.b16 %v4544, %v4543
        %v4548 = vpack.c.b16 %v4545, %v4545
        %v4550 = vunpack.c.l.b16 %v4533
        %v4551 = vpack.c.b16 %v4543, %v4542
        %v4552 = vpack.c.b16 %v4550, %v4544
        %v4554 = vshrl.u32 %v4551, 16
        %v4556 = vrot.slane %v4554, 5
        %v4557 = vshll.u32 %v4551, 16
        %v4559 = vrot.slane %v4557, 6
        %v4560 = vor.u32 %v4556, %v4559
        %v4562 = vshrl.u32 %v4552, 16
        %v4564 = vrot.slane %v4562, 5
        %v4565 = vshll.u32 %v4552, 16
        %v4567 = vrot.slane %v4565, 6
        %v4568 = vor.u32 %v4564, %v4567
        %v4569 = vsel %vm2115, %v4560, %v4568
        %v4572 = vunpack.c.l.b16 %v4534
        %v4573 = vunpack.c.l.b16 %v4535
        %v4574 = vpack.c.b16 %v4543, %v4572
        %v4575 = vpack.c.b16 %v4573, %v4573
        %v4576 = vrot.slane %v4574, 7
        %v4577 = vrot.slane %v4552, 7
        %v4578 = vsel %vm2139, %v4576, %v4577
        %v4579 = vrot.slane %v4575, 7
        %v4580 = vsel %vm2139, %v4577, %v4579
        %v4581 = vld [vmem:[#allocation22] sm:$0xff]
        %v4582 = vld [vmem:[#allocation22 + $0x8] sm:$0xff]
        %v4583 = vld [vmem:[#allocation22 + $0x10] sm:$0xff]
        %v4584 = vld [vmem:[#allocation22 + $0x18] sm:$0xff]
        %v4585 = vld [vmem:[#allocation22 + $0x20] sm:$0xff]
        %v4586 = vld [vmem:[#allocation22 + $0x28] sm:$0xff]
        %v4587 = vld [vmem:[#allocation22 + $0x30] sm:$0xff]
        %v4588 = vld [vmem:[#allocation22 + $0x38] sm:$0xff]
        %v4589 = vld [vmem:[#allocation22 + $0x40] sm:$0xff]
        %v4590 = vld [vmem:[#allocation22 + $0x48] sm:$0xff]
        %v4591 = vld [vmem:[#allocation22 + $0x50] sm:$0xff]
        %v4592 = vld [vmem:[#allocation22 + $0x58] sm:$0xff]
        %v4593 = vld [vmem:[#allocation22 + $0x60] sm:$0xff]
        %v4594 = vld [vmem:[#allocation22 + $0x68] sm:$0xff]
        %v4595 = vld [vmem:[#allocation22 + $0x70] sm:$0xff]
        %v4596 = vld [vmem:[#allocation22 + $0x78] sm:$0xff]
        %v4597 = vld [vmem:[#allocation22 + $0x80] sm:$0xff]
        %v4598 = vld [vmem:[#allocation22 + $0x88] sm:$0xff]
        %v4599 = vld [vmem:[#allocation22 + $0x90] sm:$0xff]
        %v4600 = vld [vmem:[#allocation22 + $0x98] sm:$0xff]
        %v4601 = vld [vmem:[#allocation22 + $0xa0] sm:$0xff]
        %v4602 = vld [vmem:[#allocation22 + $0xa8] sm:$0xff]
        %v4603 = vld [vmem:[#allocation22 + $0xb0] sm:$0xff]
        %v4604 = vld [vmem:[#allocation22 + $0xb8] sm:$0xff]
        %v4605 = vld [vmem:[#allocation22 + $0xc0] sm:$0xff]
        %v4606 = vld [vmem:[#allocation22 + $0xc8] sm:$0xff]
        %v4607 = vld [vmem:[#allocation22 + $0xd0] sm:$0xff]
        %v4608 = vld [vmem:[#allocation22 + $0xd8] sm:$0xff]
        %v4609 = vld [vmem:[#allocation22 + $0xe0] sm:$0xff]
        %v4610 = vld [vmem:[#allocation22 + $0xe8] sm:$0xff]
        %v4611 = vld [vmem:[#allocation22 + $0xf0] sm:$0xff]
        %v4612 = vld [vmem:[#allocation22 + $0xf8] sm:$0xff]
        %v4613 = vld [vmem:[#allocation22 + $0x100] sm:$0xff]
        %v4614 = vld [vmem:[#allocation22 + $0x108] sm:$0xff]
        %v4615 = vld [vmem:[#allocation22 + $0x110] sm:$0xff]
        %v4616 = vld [vmem:[#allocation22 + $0x118] sm:$0xff]
        %v4617 = vld [vmem:[#allocation22 + $0x120] sm:$0xff]
        %v4618 = vld [vmem:[#allocation22 + $0x128] sm:$0xff]
        %v4619 = vld [vmem:[#allocation22 + $0x130] sm:$0xff]
        %v4620 = vld [vmem:[#allocation22 + $0x138] sm:$0xff]
        %v4621 = vld [vmem:[#allocation22 + $0x140] sm:$0xff]
        %v4622 = vld [vmem:[#allocation22 + $0x148] sm:$0xff]
        %v4623 = vld [vmem:[#allocation22 + $0x150] sm:$0xff]
        %v4624 = vld [vmem:[#allocation22 + $0x158] sm:$0xff]
        %v4625 = vld [vmem:[#allocation22 + $0x160] sm:$0xff]
        %v4626 = vld [vmem:[#allocation22 + $0x168] sm:$0xff]
        %v4627 = vld [vmem:[#allocation22 + $0x170] sm:$0xff]
        %v4628 = vld [vmem:[#allocation22 + $0x178] sm:$0xff]
        %v4629 = vld [vmem:[%s33] sm:$0x3]
        %v4631 = vlaneseq
        %v4632 = vshrl.u32 %v4631, 7
        %v4633 = vsub.s32 0, %v4632
        %v4634 = vrot.slane %v4629, %v4633
        %v4635 = vlaneseq
        %v4636 = vshrl.u32 %v4635, 7
        %v4637 = vsub.s32 1, %v4636
        %v4638 = vrot.slane %v4629, %v4637
        %v4642 = vshrl.u32 %v4546, 16
        %v4644 = vrot.slane %v4642, 2
        %v4645 = vshll.u32 %v4546, 16
        %v4647 = vrot.slane %v4645, 3
        %v4648 = vor.u32 %v4644, %v4647
        %v4650 = vshrl.u32 %v4547, 16
        %v4652 = vrot.slane %v4650, 2
        %v4653 = vshll.u32 %v4547, 16
        %v4655 = vrot.slane %v4653, 3
        %v4656 = vor.u32 %v4652, %v4655
        %v4657 = vsel %vm2205, %v4648, %v4656
        %v4659 = vshrl.u32 %v4560, 16
        %v4661 = vrot.slane %v4659, 2
        %v4662 = vshll.u32 %v4560, 16
        %v4664 = vrot.slane %v4662, 3
        %v4665 = vor.u32 %v4661, %v4664
        %v4667 = vshrl.u32 %v4569, 16
        %v4669 = vrot.slane %v4667, 2
        %v4670 = vshll.u32 %v4569, 16
        %v4672 = vrot.slane %v4670, 3
        %v4673 = vor.u32 %v4669, %v4672
        %v4674 = vsel %vm2205, %v4665, %v4673
        %v4676 = vshrl.u32 %v4576, 16
        %v4678 = vrot.slane %v4676, 2
        %v4679 = vshll.u32 %v4576, 16
        %v4681 = vrot.slane %v4679, 3
        %v4682 = vor.u32 %v4678, %v4681
        %v4684 = vshrl.u32 %v4578, 16
        %v4686 = vrot.slane %v4684, 2
        %v4687 = vshll.u32 %v4578, 16
        %v4689 = vrot.slane %v4687, 3
        %v4690 = vor.u32 %v4686, %v4689
        %v4691 = vsel %vm2205, %v4682, %v4690
        %v4693 = vshrl.u32 %v4548, 16
        %v4695 = vrot.slane %v4693, 2
        %v4696 = vshll.u32 %v4548, 16
        %v4698 = vrot.slane %v4696, 3
        %v4699 = vor.u32 %v4695, %v4698
        %v4700 = vsel %vm2205, %v4656, %v4699
        %v4702 = vshrl.u32 %v4568, 16
        %v4704 = vrot.slane %v4702, 2
        %v4705 = vshll.u32 %v4568, 16
        %v4707 = vrot.slane %v4705, 3
        %v4708 = vor.u32 %v4704, %v4707
        %v4709 = vsel %vm2205, %v4673, %v4708
        %v4711 = vshrl.u32 %v4580, 16
        %v4713 = vrot.slane %v4711, 2
        %v4714 = vshll.u32 %v4580, 16
        %v4716 = vrot.slane %v4714, 3
        %v4717 = vor.u32 %v4713, %v4716
        %v4718 = vsel %vm2205, %v4690, %v4717
        %v4773 = vunpack.c.l.b16 %v4581
        %v4774 = vunpack.c.h.b16 %v4581
        %v4775 = vunpack.c.l.b16 %v4582
        %v4776 = vunpack.c.h.b16 %v4582
        %v4777 = vunpack.c.l.b16 %v4583
        %v4778 = vunpack.c.h.b16 %v4583
        %v4779 = vunpack.c.l.b16 %v4584
        %v4780 = vunpack.c.h.b16 %v4584
        %v4781 = vunpack.c.l.b16 %v4585
        %v4782 = vunpack.c.h.b16 %v4585
        %v4783 = vunpack.c.l.b16 %v4586
        %v4784 = vunpack.c.h.b16 %v4586
        %v4785 = vunpack.c.l.b16 %v4587
        %v4786 = vunpack.c.h.b16 %v4587
        %v4787 = vunpack.c.l.b16 %v4588
        %v4788 = vunpack.c.h.b16 %v4588
        %v4789 = vunpack.c.l.b16 %v4589
        %v4790 = vunpack.c.h.b16 %v4589
        %v4791 = vunpack.c.l.b16 %v4590
        %v4792 = vunpack.c.h.b16 %v4590
        %v4793 = vunpack.c.l.b16 %v4591
        %v4794 = vunpack.c.h.b16 %v4591
        %v4795 = vunpack.c.l.b16 %v4592
        %v4796 = vunpack.c.h.b16 %v4592
        %v4797 = vunpack.c.l.b16 %v4593
        %v4798 = vunpack.c.h.b16 %v4593
        %v4799 = vunpack.c.l.b16 %v4594
        %v4800 = vunpack.c.h.b16 %v4594
        %v4801 = vunpack.c.l.b16 %v4595
        %v4802 = vunpack.c.h.b16 %v4595
        %v4803 = vunpack.c.l.b16 %v4596
        %v4804 = vunpack.c.h.b16 %v4596
        %v4805 = vunpack.c.l.b16 %v4597
        %v4806 = vunpack.c.h.b16 %v4597
        %v4807 = vunpack.c.l.b16 %v4598
        %v4808 = vunpack.c.h.b16 %v4598
        %v4809 = vunpack.c.l.b16 %v4599
        %v4810 = vunpack.c.h.b16 %v4599
        %v4811 = vunpack.c.l.b16 %v4600
        %v4812 = vunpack.c.h.b16 %v4600
        %v4813 = vunpack.c.l.b16 %v4601
        %v4814 = vunpack.c.h.b16 %v4601
        %v4815 = vunpack.c.l.b16 %v4602
        %v4816 = vunpack.c.h.b16 %v4602
        %v4817 = vunpack.c.l.b16 %v4603
        %v4818 = vunpack.c.h.b16 %v4603
        %v4819 = vunpack.c.l.b16 %v4604
        %v4820 = vunpack.c.h.b16 %v4604
        %v4821 = vunpack.c.l.b16 %v4605
        %v4822 = vunpack.c.h.b16 %v4605
        %v4823 = vunpack.c.l.b16 %v4606
        %v4824 = vunpack.c.h.b16 %v4606
        %v4825 = vunpack.c.l.b16 %v4607
        %v4826 = vunpack.c.h.b16 %v4607
        %v4827 = vunpack.c.l.b16 %v4608
        %v4828 = vunpack.c.h.b16 %v4608
        %v4829 = vunpack.c.l.b16 %v4609
        %v4830 = vunpack.c.h.b16 %v4609
        %v4831 = vunpack.c.l.b16 %v4610
        %v4832 = vunpack.c.h.b16 %v4610
        %v4833 = vunpack.c.l.b16 %v4611
        %v4834 = vunpack.c.h.b16 %v4611
        %v4835 = vunpack.c.l.b16 %v4612
        %v4836 = vunpack.c.h.b16 %v4612
        %v4837 = vunpack.c.l.b16 %v4613
        %v4838 = vunpack.c.h.b16 %v4613
        %v4839 = vunpack.c.l.b16 %v4614
        %v4840 = vunpack.c.h.b16 %v4614
        %v4841 = vunpack.c.l.b16 %v4615
        %v4842 = vunpack.c.h.b16 %v4615
        %v4843 = vunpack.c.l.b16 %v4616
        %v4844 = vunpack.c.h.b16 %v4616
        %v4845 = vunpack.c.l.b16 %v4617
        %v4846 = vunpack.c.h.b16 %v4617
        %v4847 = vunpack.c.l.b16 %v4618
        %v4848 = vunpack.c.h.b16 %v4618
        %v4849 = vunpack.c.l.b16 %v4619
        %v4850 = vunpack.c.h.b16 %v4619
        %v4851 = vunpack.c.l.b16 %v4620
        %v4852 = vunpack.c.h.b16 %v4620
        %v4853 = vunpack.c.l.b16 %v4621
        %v4854 = vunpack.c.h.b16 %v4621
        %v4855 = vunpack.c.l.b16 %v4622
        %v4856 = vunpack.c.h.b16 %v4622
        %v4857 = vunpack.c.l.b16 %v4623
        %v4858 = vunpack.c.h.b16 %v4623
        %v4859 = vunpack.c.l.b16 %v4624
        %v4860 = vunpack.c.h.b16 %v4624
        %v4861 = vunpack.c.l.b16 %v4625
        %v4862 = vunpack.c.h.b16 %v4625
        %v4863 = vunpack.c.l.b16 %v4626
        %v4864 = vunpack.c.h.b16 %v4626
        %v4865 = vunpack.c.l.b16 %v4627
        %v4866 = vunpack.c.h.b16 %v4627
        %v4867 = vunpack.c.l.b16 %v4628
        %v4868 = vunpack.c.h.b16 %v4628
        %v4869 = vpack.c.b16 %v4775, %v4773
        %v4870 = vpack.c.b16 %v4776, %v4774
        %v4871 = vpack.c.b16 %v4779, %v4777
        %v4872 = vpack.c.b16 %v4780, %v4778
        %v4873 = vpack.c.b16 %v4783, %v4781
        %v4874 = vpack.c.b16 %v4784, %v4782
        %v4875 = vpack.c.b16 %v4787, %v4785
        %v4876 = vpack.c.b16 %v4788, %v4786
        %v4877 = vpack.c.b16 %v4791, %v4789
        %v4878 = vpack.c.b16 %v4792, %v4790
        %v4879 = vpack.c.b16 %v4795, %v4793
        %v4880 = vpack.c.b16 %v4796, %v4794
        %v4881 = vpack.c.b16 %v4799, %v4797
        %v4882 = vpack.c.b16 %v4800, %v4798
        %v4883 = vpack.c.b16 %v4803, %v4801
        %v4884 = vpack.c.b16 %v4804, %v4802
        %v4885 = vpack.c.b16 %v4807, %v4805
        %v4886 = vpack.c.b16 %v4808, %v4806
        %v4887 = vpack.c.b16 %v4811, %v4809
        %v4888 = vpack.c.b16 %v4812, %v4810
        %v4889 = vpack.c.b16 %v4815, %v4813
        %v4890 = vpack.c.b16 %v4816, %v4814
        %v4891 = vpack.c.b16 %v4819, %v4817
        %v4892 = vpack.c.b16 %v4820, %v4818
        %v4893 = vpack.c.b16 %v4823, %v4821
        %v4894 = vpack.c.b16 %v4824, %v4822
        %v4895 = vpack.c.b16 %v4827, %v4825
        %v4896 = vpack.c.b16 %v4828, %v4826
        %v4897 = vpack.c.b16 %v4831, %v4829
        %v4898 = vpack.c.b16 %v4832, %v4830
        %v4899 = vpack.c.b16 %v4835, %v4833
        %v4900 = vpack.c.b16 %v4836, %v4834
        %v4901 = vpack.c.b16 %v4839, %v4837
        %v4902 = vpack.c.b16 %v4840, %v4838
        %v4903 = vpack.c.b16 %v4843, %v4841
        %v4904 = vpack.c.b16 %v4844, %v4842
        %v4905 = vpack.c.b16 %v4847, %v4845
        %v4906 = vpack.c.b16 %v4848, %v4846
        %v4907 = vpack.c.b16 %v4851, %v4849
        %v4908 = vpack.c.b16 %v4852, %v4850
        %v4909 = vpack.c.b16 %v4855, %v4853
        %v4910 = vpack.c.b16 %v4856, %v4854
        %v4911 = vpack.c.b16 %v4859, %v4857
        %v4912 = vpack.c.b16 %v4860, %v4858
        %v4913 = vpack.c.b16 %v4863, %v4861
        %v4914 = vpack.c.b16 %v4864, %v4862
        %v4915 = vpack.c.b16 %v4867, %v4865
        %v4916 = vpack.c.b16 %v4868, %v4866
        %4965 = vmatprep.subr.bf16.mxu0 %v4884
        %4966 = vmatpush1.bf16.msra.mxu0 %v4883
        %4967 = vmatprep.subr.bf16.mxu0 %v4882
        %4968 = vmatpush1.bf16.msra.mxu0 %v4881
        %4969 = vmatprep.subr.bf16.mxu0 %v4880
        %4970 = vmatpush1.bf16.msra.mxu0 %v4879
        %4971 = vmatprep.subr.bf16.mxu0 %v4878
        %4972 = vmatpush1.bf16.msra.mxu0 %v4877
        %4973 = vmatprep.subr.bf16.mxu0 %v4876
        %4974 = vmatpush1.bf16.msra.mxu0 %v4875
        %4975 = vmatprep.subr.bf16.mxu0 %v4874
        %4976 = vmatpush1.bf16.msra.mxu0 %v4873
        %4977 = vmatprep.subr.bf16.mxu0 %v4872
        %4978 = vmatpush1.bf16.msra.mxu0 %v4871
        %4979 = vmatprep.subr.bf16.mxu0 %v4870
        %4980 = vmatpush1.bf16.msra.mxu0 %v4869
        %4981 = vmatprep.subr.bf16.mxu0 %v4900
        %4982 = vmatpush2.bf16.msra.mxu0 %v4899
        %4983 = vmatprep.subr.bf16.mxu0 %v4898
        %4984 = vmatpush2.bf16.msra.mxu0 %v4897
        %4985 = vmatprep.subr.bf16.mxu0 %v4896
        %4986 = vmatpush2.bf16.msra.mxu0 %v4895
        %4987 = vmatprep.subr.bf16.mxu0 %v4894
        %4988 = vmatpush2.bf16.msra.mxu0 %v4893
        %4989 = vmatprep.subr.bf16.mxu0 %v4892
        %4990 = vmatpush2.bf16.msra.mxu0 %v4891
        %4991 = vmatprep.subr.bf16.mxu0 %v4890
        %4992 = vmatpush2.bf16.msra.mxu0 %v4889
        %4993 = vmatprep.subr.bf16.mxu0 %v4888
        %4994 = vmatpush2.bf16.msra.mxu0 %v4887
        %4995 = vmatprep.subr.bf16.mxu0 %v4886
        %4996 = vmatpush2.bf16.msra.mxu0 %v4885
        %4997 = vmatprep.mubr.bf16.mxu0 %v4674
        %4998 = vmatmul.mubr.bf16.gmra.mxu0 %v4657
        %v4999 = vpop.f32.mrf.mxu0
        %v5000 = vadd.f32 %v4634, %v4999
        %v5001 = vpop.f32.mrf.mxu0
        %v5002 = vadd.f32 %v4638, %v5001
        %v5003 = vpop.f32.mrf.mxu0
        %v5004 = vadd.f32 %v4634, %v5003
        %v5005 = vpop.f32.mrf.mxu0
        %v5006 = vadd.f32 %v4638, %v5005
        %5007 = vmatprep.mubr.bf16.mxu0 %v4709
        %5008 = vmatmul.mubr.bf16.gmra.mxu0 %v4700
        %v5009 = vpop.f32.mrf.mxu0
        %v5010 = vadd.f32 %v4634, %v5009
        %v5011 = vpop.f32.mrf.mxu0
        %v5012 = vadd.f32 %v4638, %v5011
        %v5013 = vpop.f32.mrf.mxu0
        %v5014 = vadd.f32 %v4634, %v5013
        %v5015 = vpop.f32.mrf.mxu0
        %v5016 = vadd.f32 %v4638, %v5015
        %5017 = vdwg.mxu0
        %5018 = vmatprep.subr.bf16.mxu0 %v4916
        %5019 = vmatpush1.bf16.msra.mxu0 %v4915
        %5020 = vmatprep.subr.bf16.mxu0 %v4914
        %5021 = vmatpush1.bf16.msra.mxu0 %v4913
        %5022 = vmatprep.subr.bf16.mxu0 %v4912
        %5023 = vmatpush1.bf16.msra.mxu0 %v4911
        %5024 = vmatprep.subr.bf16.mxu0 %v4910
        %5025 = vmatpush1.bf16.msra.mxu0 %v4909
        %5026 = vmatprep.subr.bf16.mxu0 %v4908
        %5027 = vmatpush1.bf16.msra.mxu0 %v4907
        %5028 = vmatprep.subr.bf16.mxu0 %v4906
        %5029 = vmatpush1.bf16.msra.mxu0 %v4905
        %5030 = vmatprep.subr.bf16.mxu0 %v4904
        %5031 = vmatpush1.bf16.msra.mxu0 %v4903
        %5032 = vmatprep.subr.bf16.mxu0 %v4902
        %5033 = vmatpush1.bf16.msra.mxu0 %v4901
        %5034 = vmatprep.subr.bf16.mxu0 0
        %5035 = vmatpush2.bf16.msra.mxu0 0
        %5036 = vmatprep.subr.bf16.mxu0 0
        %5037 = vmatpush2.bf16.msra.mxu0 0
        %5038 = vmatprep.subr.bf16.mxu0 0
        %5039 = vmatpush2.bf16.msra.mxu0 0
        %5040 = vmatprep.subr.bf16.mxu0 0
        %5041 = vmatpush2.bf16.msra.mxu0 0
        %5042 = vmatprep.subr.bf16.mxu0 0
        %5043 = vmatpush2.bf16.msra.mxu0 0
        %5044 = vmatprep.subr.bf16.mxu0 0
        %5045 = vmatpush2.bf16.msra.mxu0 0
        %5046 = vmatprep.subr.bf16.mxu0 0
        %5047 = vmatpush2.bf16.msra.mxu0 0
        %5048 = vmatprep.subr.bf16.mxu0 0
        %5049 = vmatpush2.bf16.msra.mxu0 0
        %5050 = vmatprep.mubr.bf16.mxu0 0
        %5051 = vmatmul.mubr.bf16.gmra.mxu0 %v4691
        %v5052 = vpop.f32.mrf.mxu0
        %v5053 = vadd.f32 %v5000, %v5052
        %v5054 = vpop.f32.mrf.mxu0
        %v5055 = vadd.f32 %v5002, %v5054
        %v5056 = vpop.f32.mrf.mxu0
        %v5057 = vadd.f32 %v5004, %v5056
        %v5058 = vpop.f32.mrf.mxu0
        %v5059 = vadd.f32 %v5006, %v5058
        %5060 = vmatprep.mubr.bf16.mxu0 0
        %5061 = vmatmul.mubr.bf16.gmra.mxu0 %v4718
        %v5062 = vpop.f32.mrf.mxu0
        %v5063 = vadd.f32 %v5010, %v5062
        %v5064 = vpop.f32.mrf.mxu0
        %v5065 = vadd.f32 %v5012, %v5064
        %v5066 = vpop.f32.mrf.mxu0
        %v5067 = vadd.f32 %v5014, %v5066
        %v5068 = vpop.f32.mrf.mxu0
        %v5069 = vadd.f32 %v5016, %v5068
        %5070 = vdwg.mxu0
        %v5071 = vxor.u32 %v5053, 2147483648
        %v5072 = vxor.u32 %v5057, 2147483648
        %v5073 = vxor.u32 %v5063, 2147483648
        %v5074 = vxor.u32 %v5067, 2147483648
        %v5075 = vmul.f32 %v5071, 1.442695
        %v5076 = vpow.pop %v5075
        %v5077 = vmul.f32 %v5072, 1.442695
        %v5078 = vpow.pop %v5077
        %v5079 = vmul.f32 %v5073, 1.442695
        %v5080 = vpow.pop %v5079
        %v5081 = vmul.f32 %v5074, 1.442695
        %v5082 = vpow.pop %v5081
        %v5083 = vadd.f32 %v5076, 1.0
        %v5084 = vadd.f32 %v5078, 1.0
        %v5085 = vadd.f32 %v5080, 1.0
        %v5086 = vadd.f32 %v5082, 1.0
        %v5087 = vrcp.pop %v5083
        %v5088 = vmul.f32 1.0, %v5087
        %v5089 = vrcp.pop %v5084
        %v5090 = vmul.f32 1.0, %v5089
        %v5091 = vrcp.pop %v5085
        %v5092 = vmul.f32 1.0, %v5091
        %v5093 = vrcp.pop %v5086
        %v5094 = vmul.f32 1.0, %v5093
        %v5095 = vunpack.c.l.bf16 %v4529
        %v5096 = vunpack.c.l.bf16 %v4530
        %v5097 = vunpack.c.l.bf16 %v4531
        %v5098 = vunpack.c.l.bf16 %v4533
        %v5099 = vmul.f32 %v5055, %v5088
        %v5100 = vmul.f32 %v5059, %v5090
        %v5101 = vmul.f32 %v5065, %v5092
        %v5102 = vmul.f32 %v5069, %v5094
        %v5103 = vsub.f32 1.0, %v5088
        %v5104 = vsub.f32 1.0, %v5090
        %v5105 = vsub.f32 1.0, %v5092
        %v5106 = vsub.f32 1.0, %v5094
        %v5107 = vmul.f32 %v5095, %v5103
        %v5108 = vmul.f32 %v5096, %v5104
        %v5109 = vmul.f32 %v5097, %v5105
        %v5110 = vmul.f32 %v5098, %v5106
        %v5111 = vadd.f32 %v5099, %v5107
        %v5112 = vadd.f32 %v5100, %v5108
        %v5113 = vadd.f32 %v5101, %v5109
        %v5114 = vadd.f32 %v5102, %v5110
        %v5115 = vpack.c.bf16 %v5112, %v5111
        %v5116 = vpack.c.bf16 %v5114, %v5113
        %v5119 = vunpack.c.l.b16 %v5115
        %v5120 = vunpack.c.h.b16 %v5115
        %v5121 = vunpack.c.l.b16 %v5116
        %v5122 = vunpack.c.h.b16 %v5116
        %v5123 = vpack.c.b16 %v5119, %v5119
        %v5124 = vpack.c.b16 %v5120, %v5120
        %v5125 = vpack.c.b16 %v5121, %v5121
        %v5126 = vpack.c.b16 %v5122, %v5122
        %5131 = vst [vmem:[#allocation2 + $0x10] sm:$0xf] %v5123
        %5132 = vst [vmem:[#allocation2 + $0x14] sm:$0xf] %v5124
        %5133 = vst [vmem:[#allocation2 + $0x18] sm:$0xf] %v5125
        %5134 = vst [vmem:[#allocation2 + $0x1c] sm:$0xf] %v5126
        %v5135 = vld [vmem:[#allocation2 + $0x8] sm:$0x8]
        %v5136 = vld [vmem:[#allocation2 + $0xc] sm:$0xf]
        %v5137 = vld [vmem:[#allocation2 + $0x10] sm:$0xf]
        %v5138 = vld [vmem:[#allocation2 + $0x14] sm:$0xf]
        %v5139 = vld [vmem:[#allocation2 + $0x18] sm:$0xf]
        %v5140 = vld [vmem:[#allocation2 + $0x1c] sm:$0xf]
        %v5141 = vld [vmem:[#allocation2 + $0x20] sm:$0xf]
        %v5142 = vld [vmem:[#allocation2 + $0x24] sm:$0x1]
        %v5148 = vunpack.c.l.b16 %v5135
        %v5149 = vunpack.c.l.b16 %v5136
        %v5150 = vunpack.c.l.b16 %v5137
        %v5151 = vunpack.c.l.b16 %v5138
        %v5152 = vunpack.c.l.b16 %v5139
        %v5153 = vpack.c.b16 %v5149, %v5148
        %v5154 = vpack.c.b16 %v5151, %v5150
        %v5155 = vpack.c.b16 %v5152, %v5152
        %v5157 = vunpack.c.l.b16 %v5140
        %v5158 = vpack.c.b16 %v5157, %v5152
        %v5160 = vshrl.u32 %v5154, 16
        %v5162 = vrot.slane %v5160, 4
        %v5163 = vshll.u32 %v5154, 16
        %v5165 = vrot.slane %v5163, 5
        %v5166 = vor.u32 %v5162, %v5165
        %v5168 = vshrl.u32 %v5158, 16
        %v5170 = vrot.slane %v5168, 4
        %v5171 = vshll.u32 %v5158, 16
        %v5173 = vrot.slane %v5171, 5
        %v5174 = vor.u32 %v5170, %v5173
        %v5175 = vsel %vm1508, %v5166, %v5174
        %v5178 = vunpack.c.l.b16 %v5141
        %v5179 = vunpack.c.l.b16 %v5142
        %v5180 = vpack.c.b16 %v5152, %v5151
        %v5181 = vpack.c.b16 %v5178, %v5157
        %v5182 = vpack.c.b16 %v5179, %v5179
        %v5183 = vrot.slane %v5180, 5
        %v5184 = vrot.slane %v5181, 5
        %v5185 = vsel %vm1529, %v5183, %v5184
        %v5186 = vrot.slane %v5182, 5
        %v5187 = vsel %vm1529, %v5184, %v5186
        %v5188 = vld [vmem:[#allocation24] sm:$0xff]
        %v5189 = vld [vmem:[#allocation24 + $0x8] sm:$0xff]
        %v5190 = vld [vmem:[#allocation24 + $0x10] sm:$0xff]
        %v5191 = vld [vmem:[#allocation24 + $0x18] sm:$0xff]
        %v5192 = vld [vmem:[#allocation24 + $0x20] sm:$0xff]
        %v5193 = vld [vmem:[#allocation24 + $0x28] sm:$0xff]
        %v5194 = vld [vmem:[#allocation24 + $0x30] sm:$0xff]
        %v5195 = vld [vmem:[#allocation24 + $0x38] sm:$0xff]
        %v5196 = vld [vmem:[#allocation24 + $0x40] sm:$0xff]
        %v5197 = vld [vmem:[#allocation24 + $0x48] sm:$0xff]
        %v5198 = vld [vmem:[#allocation24 + $0x50] sm:$0xff]
        %v5199 = vld [vmem:[#allocation24 + $0x58] sm:$0xff]
        %v5200 = vld [vmem:[#allocation24 + $0x60] sm:$0xff]
        %v5201 = vld [vmem:[#allocation24 + $0x68] sm:$0xff]
        %v5202 = vld [vmem:[#allocation24 + $0x70] sm:$0xff]
        %v5203 = vld [vmem:[#allocation24 + $0x78] sm:$0xff]
        %v5204 = vld [vmem:[#allocation24 + $0x80] sm:$0xff]
        %v5205 = vld [vmem:[#allocation24 + $0x88] sm:$0xff]
        %v5206 = vld [vmem:[#allocation24 + $0x90] sm:$0xff]
        %v5207 = vld [vmem:[#allocation24 + $0x98] sm:$0xff]
        %v5208 = vld [vmem:[#allocation24 + $0xa0] sm:$0xff]
        %v5209 = vld [vmem:[#allocation24 + $0xa8] sm:$0xff]
        %v5210 = vld [vmem:[#allocation24 + $0xb0] sm:$0xff]
        %v5211 = vld [vmem:[#allocation24 + $0xb8] sm:$0xff]
        %v5212 = vld [vmem:[#allocation24 + $0xc0] sm:$0xff]
        %v5213 = vld [vmem:[#allocation24 + $0xc8] sm:$0xff]
        %v5214 = vld [vmem:[#allocation24 + $0xd0] sm:$0xff]
        %v5215 = vld [vmem:[#allocation24 + $0xd8] sm:$0xff]
        %v5216 = vld [vmem:[#allocation24 + $0xe0] sm:$0xff]
        %v5217 = vld [vmem:[#allocation24 + $0xe8] sm:$0xff]
        %v5218 = vld [vmem:[#allocation24 + $0xf0] sm:$0xff]
        %v5219 = vld [vmem:[#allocation24 + $0xf8] sm:$0xff]
        %v5220 = vld [vmem:[#allocation24 + $0x100] sm:$0xff]
        %v5221 = vld [vmem:[#allocation24 + $0x108] sm:$0xff]
        %v5222 = vld [vmem:[#allocation24 + $0x110] sm:$0xff]
        %v5223 = vld [vmem:[#allocation24 + $0x118] sm:$0xff]
        %v5224 = vld [vmem:[#allocation24 + $0x120] sm:$0xff]
        %v5225 = vld [vmem:[#allocation24 + $0x128] sm:$0xff]
        %v5226 = vld [vmem:[#allocation24 + $0x130] sm:$0xff]
        %v5227 = vld [vmem:[#allocation24 + $0x138] sm:$0xff]
        %v5228 = vld [vmem:[#allocation24 + $0x140] sm:$0xff]
        %v5229 = vld [vmem:[#allocation24 + $0x148] sm:$0xff]
        %v5230 = vld [vmem:[#allocation24 + $0x150] sm:$0xff]
        %v5231 = vld [vmem:[#allocation24 + $0x158] sm:$0xff]
        %v5232 = vld [vmem:[#allocation24 + $0x160] sm:$0xff]
        %v5233 = vld [vmem:[#allocation24 + $0x168] sm:$0xff]
        %v5234 = vld [vmem:[#allocation24 + $0x170] sm:$0xff]
        %v5235 = vld [vmem:[#allocation24 + $0x178] sm:$0xff]
        %v5236 = vld [vmem:[%s37] sm:$0x3]
        %v5238 = vlaneseq
        %v5239 = vshrl.u32 %v5238, 7
        %v5240 = vsub.s32 0, %v5239
        %v5241 = vrot.slane %v5236, %v5240
        %v5242 = vlaneseq
        %v5243 = vshrl.u32 %v5242, 7
        %v5244 = vsub.s32 1, %v5243
        %v5245 = vrot.slane %v5236, %v5244
        %v5249 = vshrl.u32 %v5153, 16
        %v5251 = vrot.slane %v5249, 3
        %v5252 = vshll.u32 %v5153, 16
        %v5254 = vrot.slane %v5252, 4
        %v5255 = vor.u32 %v5251, %v5254
        %v5256 = vrot.slane %v5160, 3
        %v5257 = vrot.slane %v5163, 4
        %v5258 = vor.u32 %v5256, %v5257
        %v5259 = vsel %vm1595, %v5255, %v5258
        %v5261 = vshrl.u32 %v5166, 16
        %v5263 = vrot.slane %v5261, 3
        %v5264 = vshll.u32 %v5166, 16
        %v5266 = vrot.slane %v5264, 4
        %v5267 = vor.u32 %v5263, %v5266
        %v5269 = vshrl.u32 %v5175, 16
        %v5271 = vrot.slane %v5269, 3
        %v5272 = vshll.u32 %v5175, 16
        %v5274 = vrot.slane %v5272, 4
        %v5275 = vor.u32 %v5271, %v5274
        %v5276 = vsel %vm1595, %v5267, %v5275
        %v5278 = vshrl.u32 %v5183, 16
        %v5280 = vrot.slane %v5278, 3
        %v5281 = vshll.u32 %v5183, 16
        %v5283 = vrot.slane %v5281, 4
        %v5284 = vor.u32 %v5280, %v5283
        %v5286 = vshrl.u32 %v5185, 16
        %v5288 = vrot.slane %v5286, 3
        %v5289 = vshll.u32 %v5185, 16
        %v5291 = vrot.slane %v5289, 4
        %v5292 = vor.u32 %v5288, %v5291
        %v5293 = vsel %vm1595, %v5284, %v5292
        %v5295 = vshrl.u32 %v5155, 16
        %v5297 = vrot.slane %v5295, 3
        %v5298 = vshll.u32 %v5155, 16
        %v5300 = vrot.slane %v5298, 4
        %v5301 = vor.u32 %v5297, %v5300
        %v5302 = vsel %vm1595, %v5258, %v5301
        %v5304 = vshrl.u32 %v5174, 16
        %v5306 = vrot.slane %v5304, 3
        %v5307 = vshll.u32 %v5174, 16
        %v5309 = vrot.slane %v5307, 4
        %v5310 = vor.u32 %v5306, %v5309
        %v5311 = vsel %vm1595, %v5275, %v5310
        %v5313 = vshrl.u32 %v5187, 16
        %v5315 = vrot.slane %v5313, 3
        %v5316 = vshll.u32 %v5187, 16
        %v5318 = vrot.slane %v5316, 4
        %v5319 = vor.u32 %v5315, %v5318
        %v5320 = vsel %vm1595, %v5292, %v5319
        %v5375 = vunpack.c.l.b16 %v5188
        %v5376 = vunpack.c.h.b16 %v5188
        %v5377 = vunpack.c.l.b16 %v5189
        %v5378 = vunpack.c.h.b16 %v5189
        %v5379 = vunpack.c.l.b16 %v5190
        %v5380 = vunpack.c.h.b16 %v5190
        %v5381 = vunpack.c.l.b16 %v5191
        %v5382 = vunpack.c.h.b16 %v5191
        %v5383 = vunpack.c.l.b16 %v5192
        %v5384 = vunpack.c.h.b16 %v5192
        %v5385 = vunpack.c.l.b16 %v5193
        %v5386 = vunpack.c.h.b16 %v5193
        %v5387 = vunpack.c.l.b16 %v5194
        %v5388 = vunpack.c.h.b16 %v5194
        %v5389 = vunpack.c.l.b16 %v5195
        %v5390 = vunpack.c.h.b16 %v5195
        %v5391 = vunpack.c.l.b16 %v5196
        %v5392 = vunpack.c.h.b16 %v5196
        %v5393 = vunpack.c.l.b16 %v5197
        %v5394 = vunpack.c.h.b16 %v5197
        %v5395 = vunpack.c.l.b16 %v5198
        %v5396 = vunpack.c.h.b16 %v5198
        %v5397 = vunpack.c.l.b16 %v5199
        %v5398 = vunpack.c.h.b16 %v5199
        %v5399 = vunpack.c.l.b16 %v5200
        %v5400 = vunpack.c.h.b16 %v5200
        %v5401 = vunpack.c.l.b16 %v5201
        %v5402 = vunpack.c.h.b16 %v5201
        %v5403 = vunpack.c.l.b16 %v5202
        %v5404 = vunpack.c.h.b16 %v5202
        %v5405 = vunpack.c.l.b16 %v5203
        %v5406 = vunpack.c.h.b16 %v5203
        %v5407 = vunpack.c.l.b16 %v5204
        %v5408 = vunpack.c.h.b16 %v5204
        %v5409 = vunpack.c.l.b16 %v5205
        %v5410 = vunpack.c.h.b16 %v5205
        %v5411 = vunpack.c.l.b16 %v5206
        %v5412 = vunpack.c.h.b16 %v5206
        %v5413 = vunpack.c.l.b16 %v5207
        %v5414 = vunpack.c.h.b16 %v5207
        %v5415 = vunpack.c.l.b16 %v5208
        %v5416 = vunpack.c.h.b16 %v5208
        %v5417 = vunpack.c.l.b16 %v5209
        %v5418 = vunpack.c.h.b16 %v5209
        %v5419 = vunpack.c.l.b16 %v5210
        %v5420 = vunpack.c.h.b16 %v5210
        %v5421 = vunpack.c.l.b16 %v5211
        %v5422 = vunpack.c.h.b16 %v5211
        %v5423 = vunpack.c.l.b16 %v5212
        %v5424 = vunpack.c.h.b16 %v5212
        %v5425 = vunpack.c.l.b16 %v5213
        %v5426 = vunpack.c.h.b16 %v5213
        %v5427 = vunpack.c.l.b16 %v5214
        %v5428 = vunpack.c.h.b16 %v5214
        %v5429 = vunpack.c.l.b16 %v5215
        %v5430 = vunpack.c.h.b16 %v5215
        %v5431 = vunpack.c.l.b16 %v5216
        %v5432 = vunpack.c.h.b16 %v5216
        %v5433 = vunpack.c.l.b16 %v5217
        %v5434 = vunpack.c.h.b16 %v5217
        %v5435 = vunpack.c.l.b16 %v5218
        %v5436 = vunpack.c.h.b16 %v5218
        %v5437 = vunpack.c.l.b16 %v5219
        %v5438 = vunpack.c.h.b16 %v5219
        %v5439 = vunpack.c.l.b16 %v5220
        %v5440 = vunpack.c.h.b16 %v5220
        %v5441 = vunpack.c.l.b16 %v5221
        %v5442 = vunpack.c.h.b16 %v5221
        %v5443 = vunpack.c.l.b16 %v5222
        %v5444 = vunpack.c.h.b16 %v5222
        %v5445 = vunpack.c.l.b16 %v5223
        %v5446 = vunpack.c.h.b16 %v5223
        %v5447 = vunpack.c.l.b16 %v5224
        %v5448 = vunpack.c.h.b16 %v5224
        %v5449 = vunpack.c.l.b16 %v5225
        %v5450 = vunpack.c.h.b16 %v5225
        %v5451 = vunpack.c.l.b16 %v5226
        %v5452 = vunpack.c.h.b16 %v5226
        %v5453 = vunpack.c.l.b16 %v5227
        %v5454 = vunpack.c.h.b16 %v5227
        %v5455 = vunpack.c.l.b16 %v5228
        %v5456 = vunpack.c.h.b16 %v5228
        %v5457 = vunpack.c.l.b16 %v5229
        %v5458 = vunpack.c.h.b16 %v5229
        %v5459 = vunpack.c.l.b16 %v5230
        %v5460 = vunpack.c.h.b16 %v5230
        %v5461 = vunpack.c.l.b16 %v5231
        %v5462 = vunpack.c.h.b16 %v5231
        %v5463 = vunpack.c.l.b16 %v5232
        %v5464 = vunpack.c.h.b16 %v5232
        %v5465 = vunpack.c.l.b16 %v5233
        %v5466 = vunpack.c.h.b16 %v5233
        %v5467 = vunpack.c.l.b16 %v5234
        %v5468 = vunpack.c.h.b16 %v5234
        %v5469 = vunpack.c.l.b16 %v5235
        %v5470 = vunpack.c.h.b16 %v5235
        %v5471 = vpack.c.b16 %v5377, %v5375
        %v5472 = vpack.c.b16 %v5378, %v5376
        %v5473 = vpack.c.b16 %v5381, %v5379
        %v5474 = vpack.c.b16 %v5382, %v5380
        %v5475 = vpack.c.b16 %v5385, %v5383
        %v5476 = vpack.c.b16 %v5386, %v5384
        %v5477 = vpack.c.b16 %v5389, %v5387
        %v5478 = vpack.c.b16 %v5390, %v5388
        %v5479 = vpack.c.b16 %v5393, %v5391
        %v5480 = vpack.c.b16 %v5394, %v5392
        %v5481 = vpack.c.b16 %v5397, %v5395
        %v5482 = vpack.c.b16 %v5398, %v5396
        %v5483 = vpack.c.b16 %v5401, %v5399
        %v5484 = vpack.c.b16 %v5402, %v5400
        %v5485 = vpack.c.b16 %v5405, %v5403
        %v5486 = vpack.c.b16 %v5406, %v5404
        %v5487 = vpack.c.b16 %v5409, %v5407
        %v5488 = vpack.c.b16 %v5410, %v5408
        %v5489 = vpack.c.b16 %v5413, %v5411
        %v5490 = vpack.c.b16 %v5414, %v5412
        %v5491 = vpack.c.b16 %v5417, %v5415
        %v5492 = vpack.c.b16 %v5418, %v5416
        %v5493 = vpack.c.b16 %v5421, %v5419
        %v5494 = vpack.c.b16 %v5422, %v5420
        %v5495 = vpack.c.b16 %v5425, %v5423
        %v5496 = vpack.c.b16 %v5426, %v5424
        %v5497 = vpack.c.b16 %v5429, %v5427
        %v5498 = vpack.c.b16 %v5430, %v5428
        %v5499 = vpack.c.b16 %v5433, %v5431
        %v5500 = vpack.c.b16 %v5434, %v5432
        %v5501 = vpack.c.b16 %v5437, %v5435
        %v5502 = vpack.c.b16 %v5438, %v5436
        %v5503 = vpack.c.b16 %v5441, %v5439
        %v5504 = vpack.c.b16 %v5442, %v5440
        %v5505 = vpack.c.b16 %v5445, %v5443
        %v5506 = vpack.c.b16 %v5446, %v5444
        %v5507 = vpack.c.b16 %v5449, %v5447
        %v5508 = vpack.c.b16 %v5450, %v5448
        %v5509 = vpack.c.b16 %v5453, %v5451
        %v5510 = vpack.c.b16 %v5454, %v5452
        %v5511 = vpack.c.b16 %v5457, %v5455
        %v5512 = vpack.c.b16 %v5458, %v5456
        %v5513 = vpack.c.b16 %v5461, %v5459
        %v5514 = vpack.c.b16 %v5462, %v5460
        %v5515 = vpack.c.b16 %v5465, %v5463
        %v5516 = vpack.c.b16 %v5466, %v5464
        %v5517 = vpack.c.b16 %v5469, %v5467
        %v5518 = vpack.c.b16 %v5470, %v5468
        %5567 = vmatprep.subr.bf16.mxu0 %v5486
        %5568 = vmatpush1.bf16.msra.mxu0 %v5485
        %5569 = vmatprep.subr.bf16.mxu0 %v5484
        %5570 = vmatpush1.bf16.msra.mxu0 %v5483
        %5571 = vmatprep.subr.bf16.mxu0 %v5482
        %5572 = vmatpush1.bf16.msra.mxu0 %v5481
        %5573 = vmatprep.subr.bf16.mxu0 %v5480
        %5574 = vmatpush1.bf16.msra.mxu0 %v5479
        %5575 = vmatprep.subr.bf16.mxu0 %v5478
        %5576 = vmatpush1.bf16.msra.mxu0 %v5477
        %5577 = vmatprep.subr.bf16.mxu0 %v5476
        %5578 = vmatpush1.bf16.msra.mxu0 %v5475
        %5579 = vmatprep.subr.bf16.mxu0 %v5474
        %5580 = vmatpush1.bf16.msra.mxu0 %v5473
        %5581 = vmatprep.subr.bf16.mxu0 %v5472
        %5582 = vmatpush1.bf16.msra.mxu0 %v5471
        %5583 = vmatprep.subr.bf16.mxu0 %v5502
        %5584 = vmatpush2.bf16.msra.mxu0 %v5501
        %5585 = vmatprep.subr.bf16.mxu0 %v5500
        %5586 = vmatpush2.bf16.msra.mxu0 %v5499
        %5587 = vmatprep.subr.bf16.mxu0 %v5498
        %5588 = vmatpush2.bf16.msra.mxu0 %v5497
        %5589 = vmatprep.subr.bf16.mxu0 %v5496
        %5590 = vmatpush2.bf16.msra.mxu0 %v5495
        %5591 = vmatprep.subr.bf16.mxu0 %v5494
        %5592 = vmatpush2.bf16.msra.mxu0 %v5493
        %5593 = vmatprep.subr.bf16.mxu0 %v5492
        %5594 = vmatpush2.bf16.msra.mxu0 %v5491
        %5595 = vmatprep.subr.bf16.mxu0 %v5490
        %5596 = vmatpush2.bf16.msra.mxu0 %v5489
        %5597 = vmatprep.subr.bf16.mxu0 %v5488
        %5598 = vmatpush2.bf16.msra.mxu0 %v5487
        %5599 = vmatprep.mubr.bf16.mxu0 %v5276
        %5600 = vmatmul.mubr.bf16.gmra.mxu0 %v5259
        %v5601 = vpop.f32.mrf.mxu0
        %v5602 = vadd.f32 %v5241, %v5601
        %v5603 = vpop.f32.mrf.mxu0
        %v5604 = vadd.f32 %v5245, %v5603
        %v5605 = vpop.f32.mrf.mxu0
        %v5606 = vadd.f32 %v5241, %v5605
        %v5607 = vpop.f32.mrf.mxu0
        %v5608 = vadd.f32 %v5245, %v5607
        %5609 = vmatprep.mubr.bf16.mxu0 %v5311
        %5610 = vmatmul.mubr.bf16.gmra.mxu0 %v5302
        %v5611 = vpop.f32.mrf.mxu0
        %v5612 = vadd.f32 %v5241, %v5611
        %v5613 = vpop.f32.mrf.mxu0
        %v5614 = vadd.f32 %v5245, %v5613
        %v5615 = vpop.f32.mrf.mxu0
        %v5616 = vadd.f32 %v5241, %v5615
        %v5617 = vpop.f32.mrf.mxu0
        %v5618 = vadd.f32 %v5245, %v5617
        %5619 = vdwg.mxu0
        %5620 = vmatprep.subr.bf16.mxu0 %v5518
        %5621 = vmatpush1.bf16.msra.mxu0 %v5517
        %5622 = vmatprep.subr.bf16.mxu0 %v5516
        %5623 = vmatpush1.bf16.msra.mxu0 %v5515
        %5624 = vmatprep.subr.bf16.mxu0 %v5514
        %5625 = vmatpush1.bf16.msra.mxu0 %v5513
        %5626 = vmatprep.subr.bf16.mxu0 %v5512
        %5627 = vmatpush1.bf16.msra.mxu0 %v5511
        %5628 = vmatprep.subr.bf16.mxu0 %v5510
        %5629 = vmatpush1.bf16.msra.mxu0 %v5509
        %5630 = vmatprep.subr.bf16.mxu0 %v5508
        %5631 = vmatpush1.bf16.msra.mxu0 %v5507
        %5632 = vmatprep.subr.bf16.mxu0 %v5506
        %5633 = vmatpush1.bf16.msra.mxu0 %v5505
        %5634 = vmatprep.subr.bf16.mxu0 %v5504
        %5635 = vmatpush1.bf16.msra.mxu0 %v5503
        %5636 = vmatprep.subr.bf16.mxu0 0
        %5637 = vmatpush2.bf16.msra.mxu0 0
        %5638 = vmatprep.subr.bf16.mxu0 0
        %5639 = vmatpush2.bf16.msra.mxu0 0
        %5640 = vmatprep.subr.bf16.mxu0 0
        %5641 = vmatpush2.bf16.msra.mxu0 0
        %5642 = vmatprep.subr.bf16.mxu0 0
        %5643 = vmatpush2.bf16.msra.mxu0 0
        %5644 = vmatprep.subr.bf16.mxu0 0
        %5645 = vmatpush2.bf16.msra.mxu0 0
        %5646 = vmatprep.subr.bf16.mxu0 0
        %5647 = vmatpush2.bf16.msra.mxu0 0
        %5648 = vmatprep.subr.bf16.mxu0 0
        %5649 = vmatpush2.bf16.msra.mxu0 0
        %5650 = vmatprep.subr.bf16.mxu0 0
        %5651 = vmatpush2.bf16.msra.mxu0 0
        %5652 = vmatprep.mubr.bf16.mxu0 0
        %5653 = vmatmul.mubr.bf16.gmra.mxu0 %v5293
        %v5654 = vpop.f32.mrf.mxu0
        %v5655 = vadd.f32 %v5602, %v5654
        %v5656 = vpop.f32.mrf.mxu0
        %v5657 = vadd.f32 %v5604, %v5656
        %v5658 = vpop.f32.mrf.mxu0
        %v5659 = vadd.f32 %v5606, %v5658
        %v5660 = vpop.f32.mrf.mxu0
        %v5661 = vadd.f32 %v5608, %v5660
        %5662 = vmatprep.mubr.bf16.mxu0 0
        %5663 = vmatmul.mubr.bf16.gmra.mxu0 %v5320
        %v5664 = vpop.f32.mrf.mxu0
        %v5665 = vadd.f32 %v5612, %v5664
        %v5666 = vpop.f32.mrf.mxu0
        %v5667 = vadd.f32 %v5614, %v5666
        %v5668 = vpop.f32.mrf.mxu0
        %v5669 = vadd.f32 %v5616, %v5668
        %v5670 = vpop.f32.mrf.mxu0
        %v5671 = vadd.f32 %v5618, %v5670
        %5672 = vdwg.mxu0
        %v5673 = vxor.u32 %v5655, 2147483648
        %v5674 = vxor.u32 %v5659, 2147483648
        %v5675 = vxor.u32 %v5665, 2147483648
        %v5676 = vxor.u32 %v5669, 2147483648
        %v5677 = vmul.f32 %v5673, 1.442695
        %v5678 = vpow.pop %v5677
        %v5679 = vmul.f32 %v5674, 1.442695
        %v5680 = vpow.pop %v5679
        %v5681 = vmul.f32 %v5675, 1.442695
        %v5682 = vpow.pop %v5681
        %v5683 = vmul.f32 %v5676, 1.442695
        %v5684 = vpow.pop %v5683
        %v5685 = vadd.f32 %v5678, 1.0
        %v5686 = vadd.f32 %v5680, 1.0
        %v5687 = vadd.f32 %v5682, 1.0
        %v5688 = vadd.f32 %v5684, 1.0
        %v5689 = vrcp.pop %v5685
        %v5690 = vmul.f32 1.0, %v5689
        %v5691 = vrcp.pop %v5686
        %v5692 = vmul.f32 1.0, %v5691
        %v5693 = vrcp.pop %v5687
        %v5694 = vmul.f32 1.0, %v5693
        %v5695 = vrcp.pop %v5688
        %v5696 = vmul.f32 1.0, %v5695
        %v5697 = vunpack.c.l.bf16 %v5137
        %v5698 = vunpack.c.l.bf16 %v5138
        %v5699 = vunpack.c.l.bf16 %v5139
        %v5700 = vunpack.c.l.bf16 %v5140
        %v5701 = vmul.f32 %v5657, %v5690
        %v5702 = vmul.f32 %v5661, %v5692
        %v5703 = vmul.f32 %v5667, %v5694
        %v5704 = vmul.f32 %v5671, %v5696
        %v5705 = vsub.f32 1.0, %v5690
        %v5706 = vsub.f32 1.0, %v5692
        %v5707 = vsub.f32 1.0, %v5694
        %v5708 = vsub.f32 1.0, %v5696
        %v5709 = vmul.f32 %v5697, %v5705
        %v5710 = vmul.f32 %v5698, %v5706
        %v5711 = vmul.f32 %v5699, %v5707
        %v5712 = vmul.f32 %v5700, %v5708
        %v5713 = vadd.f32 %v5701, %v5709
        %v5714 = vadd.f32 %v5702, %v5710
        %v5715 = vadd.f32 %v5703, %v5711
        %v5716 = vadd.f32 %v5704, %v5712
        %v5717 = vpack.c.bf16 %v5714, %v5713
        %v5718 = vpack.c.bf16 %v5716, %v5715
        %v5721 = vunpack.c.l.b16 %v5717
        %v5722 = vunpack.c.h.b16 %v5717
        %v5723 = vunpack.c.l.b16 %v5718
        %v5724 = vunpack.c.h.b16 %v5718
        %v5725 = vpack.c.b16 %v5721, %v5721
        %v5726 = vpack.c.b16 %v5722, %v5722
        %v5727 = vpack.c.b16 %v5723, %v5723
        %v5728 = vpack.c.b16 %v5724, %v5724
        %5733 = vst [vmem:[#allocation3 + $0x10] sm:$0xf] %v5725
        %5734 = vst [vmem:[#allocation3 + $0x14] sm:$0xf] %v5726
        %5735 = vst [vmem:[#allocation3 + $0x18] sm:$0xf] %v5727
        %5736 = vst [vmem:[#allocation3 + $0x1c] sm:$0xf] %v5728
        %v5737 = vld [vmem:[#allocation3] sm:$0xc]
        %v5738 = vld [vmem:[#allocation3 + $0x4] sm:$0xf]
        %v5739 = vld [vmem:[#allocation3 + $0x8] sm:$0xf]
        %v5740 = vld [vmem:[#allocation3 + $0xc] sm:$0xf]
        %v5741 = vld [vmem:[#allocation3 + $0x10] sm:$0x7]
        %v5742 = vld [vmem:[#allocation3 + $0x10] sm:$0xf]
        %v5743 = vld [vmem:[#allocation3 + $0x14] sm:$0xf]
        %v5744 = vld [vmem:[#allocation3 + $0x18] sm:$0xf]
        %v5745 = vld [vmem:[#allocation3 + $0x1c] sm:$0xf]
        %v5746 = vld [vmem:[#allocation3 + $0x1c] sm:$0xe]
        %v5747 = vld [vmem:[#allocation3 + $0x20] sm:$0xf]
        %v5748 = vld [vmem:[#allocation3 + $0x24] sm:$0xf]
        %v5749 = vld [vmem:[#allocation3 + $0x28] sm:$0xf]
        %v5750 = vld [vmem:[#allocation3 + $0x2c] sm:$0x3]
        %v5756 = vunpack.c.l.b16 %v5737
        %v5757 = vunpack.c.l.b16 %v5738
        %v5758 = vunpack.c.l.b16 %v5739
        %v5759 = vunpack.c.l.b16 %v5740
        %v5760 = vunpack.c.l.b16 %v5741
        %v5761 = vpack.c.b16 %v5757, %v5756
        %v5762 = vpack.c.b16 %v5759, %v5758
        %v5763 = vpack.c.b16 %v5760, %v5760
        %v5768 = vunpack.c.l.b16 %v5742
        %v5769 = vunpack.c.l.b16 %v5743
        %v5770 = vunpack.c.l.b16 %v5744
        %v5771 = vunpack.c.l.b16 %v5745
        %v5772 = vpack.c.b16 %v5769, %v5768
        %v5773 = vpack.c.b16 %v5771, %v5770
        %v5775 = vshrl.u32 %v5772, 16
        %v5777 = vrot.slane %v5775, 5
        %v5778 = vshll.u32 %v5772, 16
        %v5780 = vrot.slane %v5778, 6
        %v5781 = vor.u32 %v5777, %v5780
        %v5783 = vshrl.u32 %v5773, 16
        %v5785 = vrot.slane %v5783, 5
        %v5786 = vshll.u32 %v5773, 16
        %v5788 = vrot.slane %v5786, 6
        %v5789 = vor.u32 %v5785, %v5788
        %v5790 = vsel %vm2115, %v5781, %v5789
        %v5796 = vunpack.c.l.b16 %v5746
        %v5797 = vunpack.c.l.b16 %v5747
        %v5798 = vunpack.c.l.b16 %v5748
        %v5799 = vunpack.c.l.b16 %v5749
        %v5800 = vunpack.c.l.b16 %v5750
        %v5801 = vpack.c.b16 %v5797, %v5796
        %v5802 = vpack.c.b16 %v5799, %v5798
        %v5803 = vpack.c.b16 %v5800, %v5800
        %v5804 = vrot.slane %v5801, 7
        %v5805 = vrot.slane %v5802, 7
        %v5806 = vsel %vm2139, %v5804, %v5805
        %v5807 = vrot.slane %v5803, 7
        %v5808 = vsel %vm2139, %v5805, %v5807
        %v5809 = vld [vmem:[#allocation25] sm:$0xff]
        %v5810 = vld [vmem:[#allocation25 + $0x8] sm:$0xff]
        %v5811 = vld [vmem:[#allocation25 + $0x10] sm:$0xff]
        %v5812 = vld [vmem:[#allocation25 + $0x18] sm:$0xff]
        %v5813 = vld [vmem:[#allocation25 + $0x20] sm:$0xff]
        %v5814 = vld [vmem:[#allocation25 + $0x28] sm:$0xff]
        %v5815 = vld [vmem:[#allocation25 + $0x30] sm:$0xff]
        %v5816 = vld [vmem:[#allocation25 + $0x38] sm:$0xff]
        %v5817 = vld [vmem:[#allocation25 + $0x40] sm:$0xff]
        %v5818 = vld [vmem:[#allocation25 + $0x48] sm:$0xff]
        %v5819 = vld [vmem:[#allocation25 + $0x50] sm:$0xff]
        %v5820 = vld [vmem:[#allocation25 + $0x58] sm:$0xff]
        %v5821 = vld [vmem:[#allocation25 + $0x60] sm:$0xff]
        %v5822 = vld [vmem:[#allocation25 + $0x68] sm:$0xff]
        %v5823 = vld [vmem:[#allocation25 + $0x70] sm:$0xff]
        %v5824 = vld [vmem:[#allocation25 + $0x78] sm:$0xff]
        %v5825 = vld [vmem:[#allocation25 + $0x80] sm:$0xff]
        %v5826 = vld [vmem:[#allocation25 + $0x88] sm:$0xff]
        %v5827 = vld [vmem:[#allocation25 + $0x90] sm:$0xff]
        %v5828 = vld [vmem:[#allocation25 + $0x98] sm:$0xff]
        %v5829 = vld [vmem:[#allocation25 + $0xa0] sm:$0xff]
        %v5830 = vld [vmem:[#allocation25 + $0xa8] sm:$0xff]
        %v5831 = vld [vmem:[#allocation25 + $0xb0] sm:$0xff]
        %v5832 = vld [vmem:[#allocation25 + $0xb8] sm:$0xff]
        %v5833 = vld [vmem:[#allocation25 + $0xc0] sm:$0xff]
        %v5834 = vld [vmem:[#allocation25 + $0xc8] sm:$0xff]
        %v5835 = vld [vmem:[#allocation25 + $0xd0] sm:$0xff]
        %v5836 = vld [vmem:[#allocation25 + $0xd8] sm:$0xff]
        %v5837 = vld [vmem:[#allocation25 + $0xe0] sm:$0xff]
        %v5838 = vld [vmem:[#allocation25 + $0xe8] sm:$0xff]
        %v5839 = vld [vmem:[#allocation25 + $0xf0] sm:$0xff]
        %v5840 = vld [vmem:[#allocation25 + $0xf8] sm:$0xff]
        %v5841 = vld [vmem:[#allocation25 + $0x100] sm:$0xff]
        %v5842 = vld [vmem:[#allocation25 + $0x108] sm:$0xff]
        %v5843 = vld [vmem:[#allocation25 + $0x110] sm:$0xff]
        %v5844 = vld [vmem:[#allocation25 + $0x118] sm:$0xff]
        %v5845 = vld [vmem:[#allocation25 + $0x120] sm:$0xff]
        %v5846 = vld [vmem:[#allocation25 + $0x128] sm:$0xff]
        %v5847 = vld [vmem:[#allocation25 + $0x130] sm:$0xff]
        %v5848 = vld [vmem:[#allocation25 + $0x138] sm:$0xff]
        %v5849 = vld [vmem:[#allocation25 + $0x140] sm:$0xff]
        %v5850 = vld [vmem:[#allocation25 + $0x148] sm:$0xff]
        %v5851 = vld [vmem:[#allocation25 + $0x150] sm:$0xff]
        %v5852 = vld [vmem:[#allocation25 + $0x158] sm:$0xff]
        %v5853 = vld [vmem:[#allocation25 + $0x160] sm:$0xff]
        %v5854 = vld [vmem:[#allocation25 + $0x168] sm:$0xff]
        %v5855 = vld [vmem:[#allocation25 + $0x170] sm:$0xff]
        %v5856 = vld [vmem:[#allocation25 + $0x178] sm:$0xff]
        %v5857 = vld [vmem:[%s41] sm:$0x3]
        %v5859 = vlaneseq
        %v5860 = vshrl.u32 %v5859, 7
        %v5861 = vsub.s32 0, %v5860
        %v5862 = vrot.slane %v5857, %v5861
        %v5863 = vlaneseq
        %v5864 = vshrl.u32 %v5863, 7
        %v5865 = vsub.s32 1, %v5864
        %v5866 = vrot.slane %v5857, %v5865
        %v5870 = vshrl.u32 %v5761, 16
        %v5872 = vrot.slane %v5870, 2
        %v5873 = vshll.u32 %v5761, 16
        %v5875 = vrot.slane %v5873, 3
        %v5876 = vor.u32 %v5872, %v5875
        %v5878 = vshrl.u32 %v5762, 16
        %v5880 = vrot.slane %v5878, 2
        %v5881 = vshll.u32 %v5762, 16
        %v5883 = vrot.slane %v5881, 3
        %v5884 = vor.u32 %v5880, %v5883
        %v5885 = vsel %vm2205, %v5876, %v5884
        %v5887 = vshrl.u32 %v5781, 16
        %v5889 = vrot.slane %v5887, 2
        %v5890 = vshll.u32 %v5781, 16
        %v5892 = vrot.slane %v5890, 3
        %v5893 = vor.u32 %v5889, %v5892
        %v5895 = vshrl.u32 %v5790, 16
        %v5897 = vrot.slane %v5895, 2
        %v5898 = vshll.u32 %v5790, 16
        %v5900 = vrot.slane %v5898, 3
        %v5901 = vor.u32 %v5897, %v5900
        %v5902 = vsel %vm2205, %v5893, %v5901
        %v5904 = vshrl.u32 %v5804, 16
        %v5906 = vrot.slane %v5904, 2
        %v5907 = vshll.u32 %v5804, 16
        %v5909 = vrot.slane %v5907, 3
        %v5910 = vor.u32 %v5906, %v5909
        %v5912 = vshrl.u32 %v5806, 16
        %v5914 = vrot.slane %v5912, 2
        %v5915 = vshll.u32 %v5806, 16
        %v5917 = vrot.slane %v5915, 3
        %v5918 = vor.u32 %v5914, %v5917
        %v5919 = vsel %vm2205, %v5910, %v5918
        %v5921 = vshrl.u32 %v5763, 16
        %v5923 = vrot.slane %v5921, 2
        %v5924 = vshll.u32 %v5763, 16
        %v5926 = vrot.slane %v5924, 3
        %v5927 = vor.u32 %v5923, %v5926
        %v5928 = vsel %vm2205, %v5884, %v5927
        %v5930 = vshrl.u32 %v5789, 16
        %v5932 = vrot.slane %v5930, 2
        %v5933 = vshll.u32 %v5789, 16
        %v5935 = vrot.slane %v5933, 3
        %v5936 = vor.u32 %v5932, %v5935
        %v5937 = vsel %vm2205, %v5901, %v5936
        %v5939 = vshrl.u32 %v5808, 16
        %v5941 = vrot.slane %v5939, 2
        %v5942 = vshll.u32 %v5808, 16
        %v5944 = vrot.slane %v5942, 3
        %v5945 = vor.u32 %v5941, %v5944
        %v5946 = vsel %vm2205, %v5918, %v5945
        %v6001 = vunpack.c.l.b16 %v5809
        %v6002 = vunpack.c.h.b16 %v5809
        %v6003 = vunpack.c.l.b16 %v5810
        %v6004 = vunpack.c.h.b16 %v5810
        %v6005 = vunpack.c.l.b16 %v5811
        %v6006 = vunpack.c.h.b16 %v5811
        %v6007 = vunpack.c.l.b16 %v5812
        %v6008 = vunpack.c.h.b16 %v5812
        %v6009 = vunpack.c.l.b16 %v5813
        %v6010 = vunpack.c.h.b16 %v5813
        %v6011 = vunpack.c.l.b16 %v5814
        %v6012 = vunpack.c.h.b16 %v5814
        %v6013 = vunpack.c.l.b16 %v5815
        %v6014 = vunpack.c.h.b16 %v5815
        %v6015 = vunpack.c.l.b16 %v5816
        %v6016 = vunpack.c.h.b16 %v5816
        %v6017 = vunpack.c.l.b16 %v5817
        %v6018 = vunpack.c.h.b16 %v5817
        %v6019 = vunpack.c.l.b16 %v5818
        %v6020 = vunpack.c.h.b16 %v5818
        %v6021 = vunpack.c.l.b16 %v5819
        %v6022 = vunpack.c.h.b16 %v5819
        %v6023 = vunpack.c.l.b16 %v5820
        %v6024 = vunpack.c.h.b16 %v5820
        %v6025 = vunpack.c.l.b16 %v5821
        %v6026 = vunpack.c.h.b16 %v5821
        %v6027 = vunpack.c.l.b16 %v5822
        %v6028 = vunpack.c.h.b16 %v5822
        %v6029 = vunpack.c.l.b16 %v5823
        %v6030 = vunpack.c.h.b16 %v5823
        %v6031 = vunpack.c.l.b16 %v5824
        %v6032 = vunpack.c.h.b16 %v5824
        %v6033 = vunpack.c.l.b16 %v5825
        %v6034 = vunpack.c.h.b16 %v5825
        %v6035 = vunpack.c.l.b16 %v5826
        %v6036 = vunpack.c.h.b16 %v5826
        %v6037 = vunpack.c.l.b16 %v5827
        %v6038 = vunpack.c.h.b16 %v5827
        %v6039 = vunpack.c.l.b16 %v5828
        %v6040 = vunpack.c.h.b16 %v5828
        %v6041 = vunpack.c.l.b16 %v5829
        %v6042 = vunpack.c.h.b16 %v5829
        %v6043 = vunpack.c.l.b16 %v5830
        %v6044 = vunpack.c.h.b16 %v5830
        %v6045 = vunpack.c.l.b16 %v5831
        %v6046 = vunpack.c.h.b16 %v5831
        %v6047 = vunpack.c.l.b16 %v5832
        %v6048 = vunpack.c.h.b16 %v5832
        %v6049 = vunpack.c.l.b16 %v5833
        %v6050 = vunpack.c.h.b16 %v5833
        %v6051 = vunpack.c.l.b16 %v5834
        %v6052 = vunpack.c.h.b16 %v5834
        %v6053 = vunpack.c.l.b16 %v5835
        %v6054 = vunpack.c.h.b16 %v5835
        %v6055 = vunpack.c.l.b16 %v5836
        %v6056 = vunpack.c.h.b16 %v5836
        %v6057 = vunpack.c.l.b16 %v5837
        %v6058 = vunpack.c.h.b16 %v5837
        %v6059 = vunpack.c.l.b16 %v5838
        %v6060 = vunpack.c.h.b16 %v5838
        %v6061 = vunpack.c.l.b16 %v5839
        %v6062 = vunpack.c.h.b16 %v5839
        %v6063 = vunpack.c.l.b16 %v5840
        %v6064 = vunpack.c.h.b16 %v5840
        %v6065 = vunpack.c.l.b16 %v5841
        %v6066 = vunpack.c.h.b16 %v5841
        %v6067 = vunpack.c.l.b16 %v5842
        %v6068 = vunpack.c.h.b16 %v5842
        %v6069 = vunpack.c.l.b16 %v5843
        %v6070 = vunpack.c.h.b16 %v5843
        %v6071 = vunpack.c.l.b16 %v5844
        %v6072 = vunpack.c.h.b16 %v5844
        %v6073 = vunpack.c.l.b16 %v5845
        %v6074 = vunpack.c.h.b16 %v5845
        %v6075 = vunpack.c.l.b16 %v5846
        %v6076 = vunpack.c.h.b16 %v5846
        %v6077 = vunpack.c.l.b16 %v5847
        %v6078 = vunpack.c.h.b16 %v5847
        %v6079 = vunpack.c.l.b16 %v5848
        %v6080 = vunpack.c.h.b16 %v5848
        %v6081 = vunpack.c.l.b16 %v5849
        %v6082 = vunpack.c.h.b16 %v5849
        %v6083 = vunpack.c.l.b16 %v5850
        %v6084 = vunpack.c.h.b16 %v5850
        %v6085 = vunpack.c.l.b16 %v5851
        %v6086 = vunpack.c.h.b16 %v5851
        %v6087 = vunpack.c.l.b16 %v5852
        %v6088 = vunpack.c.h.b16 %v5852
        %v6089 = vunpack.c.l.b16 %v5853
        %v6090 = vunpack.c.h.b16 %v5853
        %v6091 = vunpack.c.l.b16 %v5854
        %v6092 = vunpack.c.h.b16 %v5854
        %v6093 = vunpack.c.l.b16 %v5855
        %v6094 = vunpack.c.h.b16 %v5855
        %v6095 = vunpack.c.l.b16 %v5856
        %v6096 = vunpack.c.h.b16 %v5856
        %v6097 = vpack.c.b16 %v6003, %v6001
        %v6098 = vpack.c.b16 %v6004, %v6002
        %v6099 = vpack.c.b16 %v6007, %v6005
        %v6100 = vpack.c.b16 %v6008, %v6006
        %v6101 = vpack.c.b16 %v6011, %v6009
        %v6102 = vpack.c.b16 %v6012, %v6010
        %v6103 = vpack.c.b16 %v6015, %v6013
        %v6104 = vpack.c.b16 %v6016, %v6014
        %v6105 = vpack.c.b16 %v6019, %v6017
        %v6106 = vpack.c.b16 %v6020, %v6018
        %v6107 = vpack.c.b16 %v6023, %v6021
        %v6108 = vpack.c.b16 %v6024, %v6022
        %v6109 = vpack.c.b16 %v6027, %v6025
        %v6110 = vpack.c.b16 %v6028, %v6026
        %v6111 = vpack.c.b16 %v6031, %v6029
        %v6112 = vpack.c.b16 %v6032, %v6030
        %v6113 = vpack.c.b16 %v6035, %v6033
        %v6114 = vpack.c.b16 %v6036, %v6034
        %v6115 = vpack.c.b16 %v6039, %v6037
        %v6116 = vpack.c.b16 %v6040, %v6038
        %v6117 = vpack.c.b16 %v6043, %v6041
        %v6118 = vpack.c.b16 %v6044, %v6042
        %v6119 = vpack.c.b16 %v6047, %v6045
        %v6120 = vpack.c.b16 %v6048, %v6046
        %v6121 = vpack.c.b16 %v6051, %v6049
        %v6122 = vpack.c.b16 %v6052, %v6050
        %v6123 = vpack.c.b16 %v6055, %v6053
        %v6124 = vpack.c.b16 %v6056, %v6054
        %v6125 = vpack.c.b16 %v6059, %v6057
        %v6126 = vpack.c.b16 %v6060, %v6058
        %v6127 = vpack.c.b16 %v6063, %v6061
        %v6128 = vpack.c.b16 %v6064, %v6062
        %v6129 = vpack.c.b16 %v6067, %v6065
        %v6130 = vpack.c.b16 %v6068, %v6066
        %v6131 = vpack.c.b16 %v6071, %v6069
        %v6132 = vpack.c.b16 %v6072, %v6070
        %v6133 = vpack.c.b16 %v6075, %v6073
        %v6134 = vpack.c.b16 %v6076, %v6074
        %v6135 = vpack.c.b16 %v6079, %v6077
        %v6136 = vpack.c.b16 %v6080, %v6078
        %v6137 = vpack.c.b16 %v6083, %v6081
        %v6138 = vpack.c.b16 %v6084, %v6082
        %v6139 = vpack.c.b16 %v6087, %v6085
        %v6140 = vpack.c.b16 %v6088, %v6086
        %v6141 = vpack.c.b16 %v6091, %v6089
        %v6142 = vpack.c.b16 %v6092, %v6090
        %v6143 = vpack.c.b16 %v6095, %v6093
        %v6144 = vpack.c.b16 %v6096, %v6094
        %6193 = vmatprep.subr.bf16.mxu0 %v6112
        %6194 = vmatpush1.bf16.msra.mxu0 %v6111
        %6195 = vmatprep.subr.bf16.mxu0 %v6110
        %6196 = vmatpush1.bf16.msra.mxu0 %v6109
        %6197 = vmatprep.subr.bf16.mxu0 %v6108
        %6198 = vmatpush1.bf16.msra.mxu0 %v6107
        %6199 = vmatprep.subr.bf16.mxu0 %v6106
        %6200 = vmatpush1.bf16.msra.mxu0 %v6105
        %6201 = vmatprep.subr.bf16.mxu0 %v6104
        %6202 = vmatpush1.bf16.msra.mxu0 %v6103
        %6203 = vmatprep.subr.bf16.mxu0 %v6102
        %6204 = vmatpush1.bf16.msra.mxu0 %v6101
        %6205 = vmatprep.subr.bf16.mxu0 %v6100
        %6206 = vmatpush1.bf16.msra.mxu0 %v6099
        %6207 = vmatprep.subr.bf16.mxu0 %v6098
        %6208 = vmatpush1.bf16.msra.mxu0 %v6097
        %6209 = vmatprep.subr.bf16.mxu0 %v6128
        %6210 = vmatpush2.bf16.msra.mxu0 %v6127
        %6211 = vmatprep.subr.bf16.mxu0 %v6126
        %6212 = vmatpush2.bf16.msra.mxu0 %v6125
        %6213 = vmatprep.subr.bf16.mxu0 %v6124
        %6214 = vmatpush2.bf16.msra.mxu0 %v6123
        %6215 = vmatprep.subr.bf16.mxu0 %v6122
        %6216 = vmatpush2.bf16.msra.mxu0 %v6121
        %6217 = vmatprep.subr.bf16.mxu0 %v6120
        %6218 = vmatpush2.bf16.msra.mxu0 %v6119
        %6219 = vmatprep.subr.bf16.mxu0 %v6118
        %6220 = vmatpush2.bf16.msra.mxu0 %v6117
        %6221 = vmatprep.subr.bf16.mxu0 %v6116
        %6222 = vmatpush2.bf16.msra.mxu0 %v6115
        %6223 = vmatprep.subr.bf16.mxu0 %v6114
        %6224 = vmatpush2.bf16.msra.mxu0 %v6113
        %6225 = vmatprep.mubr.bf16.mxu0 %v5902
        %6226 = vmatmul.mubr.bf16.gmra.mxu0 %v5885
        %v6227 = vpop.f32.mrf.mxu0
        %v6228 = vadd.f32 %v5862, %v6227
        %v6229 = vpop.f32.mrf.mxu0
        %v6230 = vadd.f32 %v5866, %v6229
        %v6231 = vpop.f32.mrf.mxu0
        %v6232 = vadd.f32 %v5862, %v6231
        %v6233 = vpop.f32.mrf.mxu0
        %v6234 = vadd.f32 %v5866, %v6233
        %6235 = vmatprep.mubr.bf16.mxu0 %v5937
        %6236 = vmatmul.mubr.bf16.gmra.mxu0 %v5928
        %v6237 = vpop.f32.mrf.mxu0
        %v6238 = vadd.f32 %v5862, %v6237
        %v6239 = vpop.f32.mrf.mxu0
        %v6240 = vadd.f32 %v5866, %v6239
        %v6241 = vpop.f32.mrf.mxu0
        %v6242 = vadd.f32 %v5862, %v6241
        %v6243 = vpop.f32.mrf.mxu0
        %v6244 = vadd.f32 %v5866, %v6243
        %6245 = vdwg.mxu0
        %6246 = vmatprep.subr.bf16.mxu0 %v6144
        %6247 = vmatpush1.bf16.msra.mxu0 %v6143
        %6248 = vmatprep.subr.bf16.mxu0 %v6142
        %6249 = vmatpush1.bf16.msra.mxu0 %v6141
        %6250 = vmatprep.subr.bf16.mxu0 %v6140
        %6251 = vmatpush1.bf16.msra.mxu0 %v6139
        %6252 = vmatprep.subr.bf16.mxu0 %v6138
        %6253 = vmatpush1.bf16.msra.mxu0 %v6137
        %6254 = vmatprep.subr.bf16.mxu0 %v6136
        %6255 = vmatpush1.bf16.msra.mxu0 %v6135
        %6256 = vmatprep.subr.bf16.mxu0 %v6134
        %6257 = vmatpush1.bf16.msra.mxu0 %v6133
        %6258 = vmatprep.subr.bf16.mxu0 %v6132
        %6259 = vmatpush1.bf16.msra.mxu0 %v6131
        %6260 = vmatprep.subr.bf16.mxu0 %v6130
        %6261 = vmatpush1.bf16.msra.mxu0 %v6129
        %6262 = vmatprep.subr.bf16.mxu0 0
        %6263 = vmatpush2.bf16.msra.mxu0 0
        %6264 = vmatprep.subr.bf16.mxu0 0
        %6265 = vmatpush2.bf16.msra.mxu0 0
        %6266 = vmatprep.subr.bf16.mxu0 0
        %6267 = vmatpush2.bf16.msra.mxu0 0
        %6268 = vmatprep.subr.bf16.mxu0 0
        %6269 = vmatpush2.bf16.msra.mxu0 0
        %6270 = vmatprep.subr.bf16.mxu0 0
        %6271 = vmatpush2.bf16.msra.mxu0 0
        %6272 = vmatprep.subr.bf16.mxu0 0
        %6273 = vmatpush2.bf16.msra.mxu0 0
        %6274 = vmatprep.subr.bf16.mxu0 0
        %6275 = vmatpush2.bf16.msra.mxu0 0
        %6276 = vmatprep.subr.bf16.mxu0 0
        %6277 = vmatpush2.bf16.msra.mxu0 0
        %6278 = vmatprep.mubr.bf16.mxu0 0
        %6279 = vmatmul.mubr.bf16.gmra.mxu0 %v5919
        %v6280 = vpop.f32.mrf.mxu0
        %v6281 = vadd.f32 %v6228, %v6280
        %v6282 = vpop.f32.mrf.mxu0
        %v6283 = vadd.f32 %v6230, %v6282
        %v6284 = vpop.f32.mrf.mxu0
        %v6285 = vadd.f32 %v6232, %v6284
        %v6286 = vpop.f32.mrf.mxu0
        %v6287 = vadd.f32 %v6234, %v6286
        %6288 = vmatprep.mubr.bf16.mxu0 0
        %6289 = vmatmul.mubr.bf16.gmra.mxu0 %v5946
        %v6290 = vpop.f32.mrf.mxu0
        %v6291 = vadd.f32 %v6238, %v6290
        %v6292 = vpop.f32.mrf.mxu0
        %v6293 = vadd.f32 %v6240, %v6292
        %v6294 = vpop.f32.mrf.mxu0
        %v6295 = vadd.f32 %v6242, %v6294
        %v6296 = vpop.f32.mrf.mxu0
        %v6297 = vadd.f32 %v6244, %v6296
        %6298 = vdwg.mxu0
        %v6299 = vxor.u32 %v6281, 2147483648
        %v6300 = vxor.u32 %v6285, 2147483648
        %v6301 = vxor.u32 %v6291, 2147483648
        %v6302 = vxor.u32 %v6295, 2147483648
        %v6303 = vmul.f32 %v6299, 1.442695
        %v6304 = vpow.pop %v6303
        %v6305 = vmul.f32 %v6300, 1.442695
        %v6306 = vpow.pop %v6305
        %v6307 = vmul.f32 %v6301, 1.442695
        %v6308 = vpow.pop %v6307
        %v6309 = vmul.f32 %v6302, 1.442695
        %v6310 = vpow.pop %v6309
        %v6311 = vadd.f32 %v6304, 1.0
        %v6312 = vadd.f32 %v6306, 1.0
        %v6313 = vadd.f32 %v6308, 1.0
        %v6314 = vadd.f32 %v6310, 1.0
        %v6315 = vrcp.pop %v6311
        %v6316 = vmul.f32 1.0, %v6315
        %v6317 = vrcp.pop %v6312
        %v6318 = vmul.f32 1.0, %v6317
        %v6319 = vrcp.pop %v6313
        %v6320 = vmul.f32 1.0, %v6319
        %v6321 = vrcp.pop %v6314
        %v6322 = vmul.f32 1.0, %v6321
        %v6323 = vunpack.c.l.bf16 %v5742
        %v6324 = vunpack.c.l.bf16 %v5743
        %v6325 = vunpack.c.l.bf16 %v5744
        %v6326 = vunpack.c.l.bf16 %v5745
        %v6327 = vmul.f32 %v6283, %v6316
        %v6328 = vmul.f32 %v6287, %v6318
        %v6329 = vmul.f32 %v6293, %v6320
        %v6330 = vmul.f32 %v6297, %v6322
        %v6331 = vsub.f32 1.0, %v6316
        %v6332 = vsub.f32 1.0, %v6318
        %v6333 = vsub.f32 1.0, %v6320
        %v6334 = vsub.f32 1.0, %v6322
        %v6335 = vmul.f32 %v6323, %v6331
        %v6336 = vmul.f32 %v6324, %v6332
        %v6337 = vmul.f32 %v6325, %v6333
        %v6338 = vmul.f32 %v6326, %v6334
        %v6339 = vadd.f32 %v6327, %v6335
        %v6340 = vadd.f32 %v6328, %v6336
        %v6341 = vadd.f32 %v6329, %v6337
        %v6342 = vadd.f32 %v6330, %v6338
        %v6343 = vpack.c.bf16 %v6340, %v6339
        %v6344 = vpack.c.bf16 %v6342, %v6341
        %v6347 = vunpack.c.l.b16 %v6343
        %v6348 = vunpack.c.h.b16 %v6343
        %v6349 = vunpack.c.l.b16 %v6344
        %v6350 = vunpack.c.h.b16 %v6344
        %v6351 = vpack.c.b16 %v6347, %v6347
        %v6352 = vpack.c.b16 %v6348, %v6348
        %v6353 = vpack.c.b16 %v6349, %v6349
        %v6354 = vpack.c.b16 %v6350, %v6350
        %6359 = vst [vmem:[#allocation2 + $0x10] sm:$0xf] %v6351
        %6360 = vst [vmem:[#allocation2 + $0x14] sm:$0xf] %v6352
        %6361 = vst [vmem:[#allocation2 + $0x18] sm:$0xf] %v6353
        %6362 = vst [vmem:[#allocation2 + $0x1c] sm:$0xf] %v6354
        %v6363 = vld [vmem:[#allocation2 + $0xc] sm:$0x8]
        %v6364 = vld [vmem:[#allocation2 + $0x10] sm:$0xf]
        %v6365 = vld [vmem:[#allocation2 + $0x14] sm:$0xf]
        %v6366 = vld [vmem:[#allocation2 + $0x18] sm:$0xf]
        %v6367 = vld [vmem:[#allocation2 + $0x1c] sm:$0xf]
        %v6368 = vld [vmem:[#allocation2 + $0x20] sm:$0x1]
        %v6374 = vunpack.c.l.b16 %v6363
        %v6375 = vunpack.c.l.b16 %v6364
        %v6376 = vunpack.c.l.b16 %v6365
        %v6377 = vunpack.c.l.b16 %v6366
        %v6378 = vunpack.c.l.b16 %v6367
        %v6379 = vpack.c.b16 %v6375, %v6374
        %v6380 = vpack.c.b16 %v6377, %v6376
        %v6381 = vpack.c.b16 %v6378, %v6378
        %v6382 = vpack.c.b16 %v6376, %v6375
        %v6383 = vpack.c.b16 %v6378, %v6377
        %v6385 = vshrl.u32 %v6382, 16
        %v6387 = vrot.slane %v6385, 4
        %v6388 = vshll.u32 %v6382, 16
        %v6390 = vrot.slane %v6388, 5
        %v6391 = vor.u32 %v6387, %v6390
        %v6393 = vshrl.u32 %v6383, 16
        %v6395 = vrot.slane %v6393, 4
        %v6396 = vshll.u32 %v6383, 16
        %v6398 = vrot.slane %v6396, 5
        %v6399 = vor.u32 %v6395, %v6398
        %v6400 = vsel %vm1508, %v6391, %v6399
        %v6402 = vunpack.c.l.b16 %v6368
        %v6403 = vpack.c.b16 %v6402, %v6402
        %v6404 = vrot.slane %v6382, 5
        %v6405 = vrot.slane %v6383, 5
        %v6406 = vsel %vm1529, %v6404, %v6405
        %v6407 = vrot.slane %v6403, 5
        %v6408 = vsel %vm1529, %v6405, %v6407
        %v6409 = vld [vmem:[#allocation27] sm:$0xff]
        %v6410 = vld [vmem:[#allocation27 + $0x8] sm:$0xff]
        %v6411 = vld [vmem:[#allocation27 + $0x10] sm:$0xff]
        %v6412 = vld [vmem:[#allocation27 + $0x18] sm:$0xff]
        %v6413 = vld [vmem:[#allocation27 + $0x20] sm:$0xff]
        %v6414 = vld [vmem:[#allocation27 + $0x28] sm:$0xff]
        %v6415 = vld [vmem:[#allocation27 + $0x30] sm:$0xff]
        %v6416 = vld [vmem:[#allocation27 + $0x38] sm:$0xff]
        %v6417 = vld [vmem:[#allocation27 + $0x40] sm:$0xff]
        %v6418 = vld [vmem:[#allocation27 + $0x48] sm:$0xff]
        %v6419 = vld [vmem:[#allocation27 + $0x50] sm:$0xff]
        %v6420 = vld [vmem:[#allocation27 + $0x58] sm:$0xff]
        %v6421 = vld [vmem:[#allocation27 + $0x60] sm:$0xff]
        %v6422 = vld [vmem:[#allocation27 + $0x68] sm:$0xff]
        %v6423 = vld [vmem:[#allocation27 + $0x70] sm:$0xff]
        %v6424 = vld [vmem:[#allocation27 + $0x78] sm:$0xff]
        %v6425 = vld [vmem:[#allocation27 + $0x80] sm:$0xff]
        %v6426 = vld [vmem:[#allocation27 + $0x88] sm:$0xff]
        %v6427 = vld [vmem:[#allocation27 + $0x90] sm:$0xff]
        %v6428 = vld [vmem:[#allocation27 + $0x98] sm:$0xff]
        %v6429 = vld [vmem:[#allocation27 + $0xa0] sm:$0xff]
        %v6430 = vld [vmem:[#allocation27 + $0xa8] sm:$0xff]
        %v6431 = vld [vmem:[#allocation27 + $0xb0] sm:$0xff]
        %v6432 = vld [vmem:[#allocation27 + $0xb8] sm:$0xff]
        %v6433 = vld [vmem:[#allocation27 + $0xc0] sm:$0xff]
        %v6434 = vld [vmem:[#allocation27 + $0xc8] sm:$0xff]
        %v6435 = vld [vmem:[#allocation27 + $0xd0] sm:$0xff]
        %v6436 = vld [vmem:[#allocation27 + $0xd8] sm:$0xff]
        %v6437 = vld [vmem:[#allocation27 + $0xe0] sm:$0xff]
        %v6438 = vld [vmem:[#allocation27 + $0xe8] sm:$0xff]
        %v6439 = vld [vmem:[#allocation27 + $0xf0] sm:$0xff]
        %v6440 = vld [vmem:[#allocation27 + $0xf8] sm:$0xff]
        %v6441 = vld [vmem:[#allocation27 + $0x100] sm:$0xff]
        %v6442 = vld [vmem:[#allocation27 + $0x108] sm:$0xff]
        %v6443 = vld [vmem:[#allocation27 + $0x110] sm:$0xff]
        %v6444 = vld [vmem:[#allocation27 + $0x118] sm:$0xff]
        %v6445 = vld [vmem:[#allocation27 + $0x120] sm:$0xff]
        %v6446 = vld [vmem:[#allocation27 + $0x128] sm:$0xff]
        %v6447 = vld [vmem:[#allocation27 + $0x130] sm:$0xff]
        %v6448 = vld [vmem:[#allocation27 + $0x138] sm:$0xff]
        %v6449 = vld [vmem:[#allocation27 + $0x140] sm:$0xff]
        %v6450 = vld [vmem:[#allocation27 + $0x148] sm:$0xff]
        %v6451 = vld [vmem:[#allocation27 + $0x150] sm:$0xff]
        %v6452 = vld [vmem:[#allocation27 + $0x158] sm:$0xff]
        %v6453 = vld [vmem:[#allocation27 + $0x160] sm:$0xff]
        %v6454 = vld [vmem:[#allocation27 + $0x168] sm:$0xff]
        %v6455 = vld [vmem:[#allocation27 + $0x170] sm:$0xff]
        %v6456 = vld [vmem:[#allocation27 + $0x178] sm:$0xff]
        %v6457 = vld [vmem:[%s45] sm:$0x3]
        %v6459 = vlaneseq
        %v6460 = vshrl.u32 %v6459, 7
        %v6461 = vsub.s32 0, %v6460
        %v6462 = vrot.slane %v6457, %v6461
        %v6463 = vlaneseq
        %v6464 = vshrl.u32 %v6463, 7
        %v6465 = vsub.s32 1, %v6464
        %v6466 = vrot.slane %v6457, %v6465
        %v6470 = vshrl.u32 %v6379, 16
        %v6472 = vrot.slane %v6470, 3
        %v6473 = vshll.u32 %v6379, 16
        %v6475 = vrot.slane %v6473, 4
        %v6476 = vor.u32 %v6472, %v6475
        %v6478 = vshrl.u32 %v6380, 16
        %v6480 = vrot.slane %v6478, 3
        %v6481 = vshll.u32 %v6380, 16
        %v6483 = vrot.slane %v6481, 4
        %v6484 = vor.u32 %v6480, %v6483
        %v6485 = vsel %vm1595, %v6476, %v6484
        %v6487 = vshrl.u32 %v6391, 16
        %v6489 = vrot.slane %v6487, 3
        %v6490 = vshll.u32 %v6391, 16
        %v6492 = vrot.slane %v6490, 4
        %v6493 = vor.u32 %v6489, %v6492
        %v6495 = vshrl.u32 %v6400, 16
        %v6497 = vrot.slane %v6495, 3
        %v6498 = vshll.u32 %v6400, 16
        %v6500 = vrot.slane %v6498, 4
        %v6501 = vor.u32 %v6497, %v6500
        %v6502 = vsel %vm1595, %v6493, %v6501
        %v6504 = vshrl.u32 %v6404, 16
        %v6506 = vrot.slane %v6504, 3
        %v6507 = vshll.u32 %v6404, 16
        %v6509 = vrot.slane %v6507, 4
        %v6510 = vor.u32 %v6506, %v6509
        %v6512 = vshrl.u32 %v6406, 16
        %v6514 = vrot.slane %v6512, 3
        %v6515 = vshll.u32 %v6406, 16
        %v6517 = vrot.slane %v6515, 4
        %v6518 = vor.u32 %v6514, %v6517
        %v6519 = vsel %vm1595, %v6510, %v6518
        %v6521 = vshrl.u32 %v6381, 16
        %v6523 = vrot.slane %v6521, 3
        %v6524 = vshll.u32 %v6381, 16
        %v6526 = vrot.slane %v6524, 4
        %v6527 = vor.u32 %v6523, %v6526
        %v6528 = vsel %vm1595, %v6484, %v6527
        %v6530 = vshrl.u32 %v6399, 16
        %v6532 = vrot.slane %v6530, 3
        %v6533 = vshll.u32 %v6399, 16
        %v6535 = vrot.slane %v6533, 4
        %v6536 = vor.u32 %v6532, %v6535
        %v6537 = vsel %vm1595, %v6501, %v6536
        %v6539 = vshrl.u32 %v6408, 16
        %v6541 = vrot.slane %v6539, 3
        %v6542 = vshll.u32 %v6408, 16
        %v6544 = vrot.slane %v6542, 4
        %v6545 = vor.u32 %v6541, %v6544
        %v6546 = vsel %vm1595, %v6518, %v6545
        %v6601 = vunpack.c.l.b16 %v6409
        %v6602 = vunpack.c.h.b16 %v6409
        %v6603 = vunpack.c.l.b16 %v6410
        %v6604 = vunpack.c.h.b16 %v6410
        %v6605 = vunpack.c.l.b16 %v6411
        %v6606 = vunpack.c.h.b16 %v6411
        %v6607 = vunpack.c.l.b16 %v6412
        %v6608 = vunpack.c.h.b16 %v6412
        %v6609 = vunpack.c.l.b16 %v6413
        %v6610 = vunpack.c.h.b16 %v6413
        %v6611 = vunpack.c.l.b16 %v6414
        %v6612 = vunpack.c.h.b16 %v6414
        %v6613 = vunpack.c.l.b16 %v6415
        %v6614 = vunpack.c.h.b16 %v6415
        %v6615 = vunpack.c.l.b16 %v6416
        %v6616 = vunpack.c.h.b16 %v6416
        %v6617 = vunpack.c.l.b16 %v6417
        %v6618 = vunpack.c.h.b16 %v6417
        %v6619 = vunpack.c.l.b16 %v6418
        %v6620 = vunpack.c.h.b16 %v6418
        %v6621 = vunpack.c.l.b16 %v6419
        %v6622 = vunpack.c.h.b16 %v6419
        %v6623 = vunpack.c.l.b16 %v6420
        %v6624 = vunpack.c.h.b16 %v6420
        %v6625 = vunpack.c.l.b16 %v6421
        %v6626 = vunpack.c.h.b16 %v6421
        %v6627 = vunpack.c.l.b16 %v6422
        %v6628 = vunpack.c.h.b16 %v6422
        %v6629 = vunpack.c.l.b16 %v6423
        %v6630 = vunpack.c.h.b16 %v6423
        %v6631 = vunpack.c.l.b16 %v6424
        %v6632 = vunpack.c.h.b16 %v6424
        %v6633 = vunpack.c.l.b16 %v6425
        %v6634 = vunpack.c.h.b16 %v6425
        %v6635 = vunpack.c.l.b16 %v6426
        %v6636 = vunpack.c.h.b16 %v6426
        %v6637 = vunpack.c.l.b16 %v6427
        %v6638 = vunpack.c.h.b16 %v6427
        %v6639 = vunpack.c.l.b16 %v6428
        %v6640 = vunpack.c.h.b16 %v6428
        %v6641 = vunpack.c.l.b16 %v6429
        %v6642 = vunpack.c.h.b16 %v6429
        %v6643 = vunpack.c.l.b16 %v6430
        %v6644 = vunpack.c.h.b16 %v6430
        %v6645 = vunpack.c.l.b16 %v6431
        %v6646 = vunpack.c.h.b16 %v6431
        %v6647 = vunpack.c.l.b16 %v6432
        %v6648 = vunpack.c.h.b16 %v6432
        %v6649 = vunpack.c.l.b16 %v6433
        %v6650 = vunpack.c.h.b16 %v6433
        %v6651 = vunpack.c.l.b16 %v6434
        %v6652 = vunpack.c.h.b16 %v6434
        %v6653 = vunpack.c.l.b16 %v6435
        %v6654 = vunpack.c.h.b16 %v6435
        %v6655 = vunpack.c.l.b16 %v6436
        %v6656 = vunpack.c.h.b16 %v6436
        %v6657 = vunpack.c.l.b16 %v6437
        %v6658 = vunpack.c.h.b16 %v6437
        %v6659 = vunpack.c.l.b16 %v6438
        %v6660 = vunpack.c.h.b16 %v6438
        %v6661 = vunpack.c.l.b16 %v6439
        %v6662 = vunpack.c.h.b16 %v6439
        %v6663 = vunpack.c.l.b16 %v6440
        %v6664 = vunpack.c.h.b16 %v6440
        %v6665 = vunpack.c.l.b16 %v6441
        %v6666 = vunpack.c.h.b16 %v6441
        %v6667 = vunpack.c.l.b16 %v6442
        %v6668 = vunpack.c.h.b16 %v6442
        %v6669 = vunpack.c.l.b16 %v6443
        %v6670 = vunpack.c.h.b16 %v6443
        %v6671 = vunpack.c.l.b16 %v6444
        %v6672 = vunpack.c.h.b16 %v6444
        %v6673 = vunpack.c.l.b16 %v6445
        %v6674 = vunpack.c.h.b16 %v6445
        %v6675 = vunpack.c.l.b16 %v6446
        %v6676 = vunpack.c.h.b16 %v6446
        %v6677 = vunpack.c.l.b16 %v6447
        %v6678 = vunpack.c.h.b16 %v6447
        %v6679 = vunpack.c.l.b16 %v6448
        %v6680 = vunpack.c.h.b16 %v6448
        %v6681 = vunpack.c.l.b16 %v6449
        %v6682 = vunpack.c.h.b16 %v6449
        %v6683 = vunpack.c.l.b16 %v6450
        %v6684 = vunpack.c.h.b16 %v6450
        %v6685 = vunpack.c.l.b16 %v6451
        %v6686 = vunpack.c.h.b16 %v6451
        %v6687 = vunpack.c.l.b16 %v6452
        %v6688 = vunpack.c.h.b16 %v6452
        %v6689 = vunpack.c.l.b16 %v6453
        %v6690 = vunpack.c.h.b16 %v6453
        %v6691 = vunpack.c.l.b16 %v6454
        %v6692 = vunpack.c.h.b16 %v6454
        %v6693 = vunpack.c.l.b16 %v6455
        %v6694 = vunpack.c.h.b16 %v6455
        %v6695 = vunpack.c.l.b16 %v6456
        %v6696 = vunpack.c.h.b16 %v6456
        %v6697 = vpack.c.b16 %v6603, %v6601
        %v6698 = vpack.c.b16 %v6604, %v6602
        %v6699 = vpack.c.b16 %v6607, %v6605
        %v6700 = vpack.c.b16 %v6608, %v6606
        %v6701 = vpack.c.b16 %v6611, %v6609
        %v6702 = vpack.c.b16 %v6612, %v6610
        %v6703 = vpack.c.b16 %v6615, %v6613
        %v6704 = vpack.c.b16 %v6616, %v6614
        %v6705 = vpack.c.b16 %v6619, %v6617
        %v6706 = vpack.c.b16 %v6620, %v6618
        %v6707 = vpack.c.b16 %v6623, %v6621
        %v6708 = vpack.c.b16 %v6624, %v6622
        %v6709 = vpack.c.b16 %v6627, %v6625
        %v6710 = vpack.c.b16 %v6628, %v6626
        %v6711 = vpack.c.b16 %v6631, %v6629
        %v6712 = vpack.c.b16 %v6632, %v6630
        %v6713 = vpack.c.b16 %v6635, %v6633
        %v6714 = vpack.c.b16 %v6636, %v6634
        %v6715 = vpack.c.b16 %v6639, %v6637
        %v6716 = vpack.c.b16 %v6640, %v6638
        %v6717 = vpack.c.b16 %v6643, %v6641
        %v6718 = vpack.c.b16 %v6644, %v6642
        %v6719 = vpack.c.b16 %v6647, %v6645
        %v6720 = vpack.c.b16 %v6648, %v6646
        %v6721 = vpack.c.b16 %v6651, %v6649
        %v6722 = vpack.c.b16 %v6652, %v6650
        %v6723 = vpack.c.b16 %v6655, %v6653
        %v6724 = vpack.c.b16 %v6656, %v6654
        %v6725 = vpack.c.b16 %v6659, %v6657
        %v6726 = vpack.c.b16 %v6660, %v6658
        %v6727 = vpack.c.b16 %v6663, %v6661
        %v6728 = vpack.c.b16 %v6664, %v6662
        %v6729 = vpack.c.b16 %v6667, %v6665
        %v6730 = vpack.c.b16 %v6668, %v6666
        %v6731 = vpack.c.b16 %v6671, %v6669
        %v6732 = vpack.c.b16 %v6672, %v6670
        %v6733 = vpack.c.b16 %v6675, %v6673
        %v6734 = vpack.c.b16 %v6676, %v6674
        %v6735 = vpack.c.b16 %v6679, %v6677
        %v6736 = vpack.c.b16 %v6680, %v6678
        %v6737 = vpack.c.b16 %v6683, %v6681
        %v6738 = vpack.c.b16 %v6684, %v6682
        %v6739 = vpack.c.b16 %v6687, %v6685
        %v6740 = vpack.c.b16 %v6688, %v6686
        %v6741 = vpack.c.b16 %v6691, %v6689
        %v6742 = vpack.c.b16 %v6692, %v6690
        %v6743 = vpack.c.b16 %v6695, %v6693
        %v6744 = vpack.c.b16 %v6696, %v6694
        %6793 = vmatprep.subr.bf16.mxu0 %v6712
        %6794 = vmatpush1.bf16.msra.mxu0 %v6711
        %6795 = vmatprep.subr.bf16.mxu0 %v6710
        %6796 = vmatpush1.bf16.msra.mxu0 %v6709
        %6797 = vmatprep.subr.bf16.mxu0 %v6708
        %6798 = vmatpush1.bf16.msra.mxu0 %v6707
        %6799 = vmatprep.subr.bf16.mxu0 %v6706
        %6800 = vmatpush1.bf16.msra.mxu0 %v6705
        %6801 = vmatprep.subr.bf16.mxu0 %v6704
        %6802 = vmatpush1.bf16.msra.mxu0 %v6703
        %6803 = vmatprep.subr.bf16.mxu0 %v6702
        %6804 = vmatpush1.bf16.msra.mxu0 %v6701
        %6805 = vmatprep.subr.bf16.mxu0 %v6700
        %6806 = vmatpush1.bf16.msra.mxu0 %v6699
        %6807 = vmatprep.subr.bf16.mxu0 %v6698
        %6808 = vmatpush1.bf16.msra.mxu0 %v6697
        %6809 = vmatprep.subr.bf16.mxu0 %v6728
        %6810 = vmatpush2.bf16.msra.mxu0 %v6727
        %6811 = vmatprep.subr.bf16.mxu0 %v6726
        %6812 = vmatpush2.bf16.msra.mxu0 %v6725
        %6813 = vmatprep.subr.bf16.mxu0 %v6724
        %6814 = vmatpush2.bf16.msra.mxu0 %v6723
        %6815 = vmatprep.subr.bf16.mxu0 %v6722
        %6816 = vmatpush2.bf16.msra.mxu0 %v6721
        %6817 = vmatprep.subr.bf16.mxu0 %v6720
        %6818 = vmatpush2.bf16.msra.mxu0 %v6719
        %6819 = vmatprep.subr.bf16.mxu0 %v6718
        %6820 = vmatpush2.bf16.msra.mxu0 %v6717
        %6821 = vmatprep.subr.bf16.mxu0 %v6716
        %6822 = vmatpush2.bf16.msra.mxu0 %v6715
        %6823 = vmatprep.subr.bf16.mxu0 %v6714
        %6824 = vmatpush2.bf16.msra.mxu0 %v6713
        %6825 = vmatprep.mubr.bf16.mxu0 %v6502
        %6826 = vmatmul.mubr.bf16.gmra.mxu0 %v6485
        %v6827 = vpop.f32.mrf.mxu0
        %v6828 = vadd.f32 %v6462, %v6827
        %v6829 = vpop.f32.mrf.mxu0
        %v6830 = vadd.f32 %v6466, %v6829
        %v6831 = vpop.f32.mrf.mxu0
        %v6832 = vadd.f32 %v6462, %v6831
        %v6833 = vpop.f32.mrf.mxu0
        %v6834 = vadd.f32 %v6466, %v6833
        %6835 = vmatprep.mubr.bf16.mxu0 %v6537
        %6836 = vmatmul.mubr.bf16.gmra.mxu0 %v6528
        %v6837 = vpop.f32.mrf.mxu0
        %v6838 = vadd.f32 %v6462, %v6837
        %v6839 = vpop.f32.mrf.mxu0
        %v6840 = vadd.f32 %v6466, %v6839
        %v6841 = vpop.f32.mrf.mxu0
        %v6842 = vadd.f32 %v6462, %v6841
        %v6843 = vpop.f32.mrf.mxu0
        %v6844 = vadd.f32 %v6466, %v6843
        %6845 = vdwg.mxu0
        %6846 = vmatprep.subr.bf16.mxu0 %v6744
        %6847 = vmatpush1.bf16.msra.mxu0 %v6743
        %6848 = vmatprep.subr.bf16.mxu0 %v6742
        %6849 = vmatpush1.bf16.msra.mxu0 %v6741
        %6850 = vmatprep.subr.bf16.mxu0 %v6740
        %6851 = vmatpush1.bf16.msra.mxu0 %v6739
        %6852 = vmatprep.subr.bf16.mxu0 %v6738
        %6853 = vmatpush1.bf16.msra.mxu0 %v6737
        %6854 = vmatprep.subr.bf16.mxu0 %v6736
        %6855 = vmatpush1.bf16.msra.mxu0 %v6735
        %6856 = vmatprep.subr.bf16.mxu0 %v6734
        %6857 = vmatpush1.bf16.msra.mxu0 %v6733
        %6858 = vmatprep.subr.bf16.mxu0 %v6732
        %6859 = vmatpush1.bf16.msra.mxu0 %v6731
        %6860 = vmatprep.subr.bf16.mxu0 %v6730
        %6861 = vmatpush1.bf16.msra.mxu0 %v6729
        %6862 = vmatprep.subr.bf16.mxu0 0
        %6863 = vmatpush2.bf16.msra.mxu0 0
        %6864 = vmatprep.subr.bf16.mxu0 0
        %6865 = vmatpush2.bf16.msra.mxu0 0
        %6866 = vmatprep.subr.bf16.mxu0 0
        %6867 = vmatpush2.bf16.msra.mxu0 0
        %6868 = vmatprep.subr.bf16.mxu0 0
        %6869 = vmatpush2.bf16.msra.mxu0 0
        %6870 = vmatprep.subr.bf16.mxu0 0
        %6871 = vmatpush2.bf16.msra.mxu0 0
        %6872 = vmatprep.subr.bf16.mxu0 0
        %6873 = vmatpush2.bf16.msra.mxu0 0
        %6874 = vmatprep.subr.bf16.mxu0 0
        %6875 = vmatpush2.bf16.msra.mxu0 0
        %6876 = vmatprep.subr.bf16.mxu0 0
        %6877 = vmatpush2.bf16.msra.mxu0 0
        %6878 = vmatprep.mubr.bf16.mxu0 0
        %6879 = vmatmul.mubr.bf16.gmra.mxu0 %v6519
        %v6880 = vpop.f32.mrf.mxu0
        %v6881 = vadd.f32 %v6828, %v6880
        %v6882 = vpop.f32.mrf.mxu0
        %v6883 = vadd.f32 %v6830, %v6882
        %v6884 = vpop.f32.mrf.mxu0
        %v6885 = vadd.f32 %v6832, %v6884
        %v6886 = vpop.f32.mrf.mxu0
        %v6887 = vadd.f32 %v6834, %v6886
        %6888 = vmatprep.mubr.bf16.mxu0 0
        %6889 = vmatmul.mubr.bf16.gmra.mxu0 %v6546
        %v6890 = vpop.f32.mrf.mxu0
        %v6891 = vadd.f32 %v6838, %v6890
        %v6892 = vpop.f32.mrf.mxu0
        %v6893 = vadd.f32 %v6840, %v6892
        %v6894 = vpop.f32.mrf.mxu0
        %v6895 = vadd.f32 %v6842, %v6894
        %v6896 = vpop.f32.mrf.mxu0
        %v6897 = vadd.f32 %v6844, %v6896
        %6898 = vdwg.mxu0
        %v6899 = vxor.u32 %v6881, 2147483648
        %v6900 = vxor.u32 %v6885, 2147483648
        %v6901 = vxor.u32 %v6891, 2147483648
        %v6902 = vxor.u32 %v6895, 2147483648
        %v6903 = vmul.f32 %v6899, 1.442695
        %v6904 = vpow.pop %v6903
        %v6905 = vmul.f32 %v6900, 1.442695
        %v6906 = vpow.pop %v6905
        %v6907 = vmul.f32 %v6901, 1.442695
        %v6908 = vpow.pop %v6907
        %v6909 = vmul.f32 %v6902, 1.442695
        %v6910 = vpow.pop %v6909
        %v6911 = vadd.f32 %v6904, 1.0
        %v6912 = vadd.f32 %v6906, 1.0
        %v6913 = vadd.f32 %v6908, 1.0
        %v6914 = vadd.f32 %v6910, 1.0
        %v6915 = vrcp.pop %v6911
        %v6916 = vmul.f32 1.0, %v6915
        %v6917 = vrcp.pop %v6912
        %v6918 = vmul.f32 1.0, %v6917
        %v6919 = vrcp.pop %v6913
        %v6920 = vmul.f32 1.0, %v6919
        %v6921 = vrcp.pop %v6914
        %v6922 = vmul.f32 1.0, %v6921
        %v6923 = vunpack.c.l.bf16 %v6364
        %v6924 = vunpack.c.l.bf16 %v6365
        %v6925 = vunpack.c.l.bf16 %v6366
        %v6926 = vunpack.c.l.bf16 %v6367
        %v6927 = vmul.f32 %v6883, %v6916
        %v6928 = vmul.f32 %v6887, %v6918
        %v6929 = vmul.f32 %v6893, %v6920
        %v6930 = vmul.f32 %v6897, %v6922
        %v6931 = vsub.f32 1.0, %v6916
        %v6932 = vsub.f32 1.0, %v6918
        %v6933 = vsub.f32 1.0, %v6920
        %v6934 = vsub.f32 1.0, %v6922
        %v6935 = vmul.f32 %v6923, %v6931
        %v6936 = vmul.f32 %v6924, %v6932
        %v6937 = vmul.f32 %v6925, %v6933
        %v6938 = vmul.f32 %v6926, %v6934
        %v6939 = vadd.f32 %v6927, %v6935
        %v6940 = vadd.f32 %v6928, %v6936
        %v6941 = vadd.f32 %v6929, %v6937
        %v6942 = vadd.f32 %v6930, %v6938
        %v6943 = vpack.c.bf16 %v6940, %v6939
        %v6944 = vpack.c.bf16 %v6942, %v6941
        %v6947 = vunpack.c.l.b16 %v6943
        %v6948 = vunpack.c.h.b16 %v6943
        %v6949 = vunpack.c.l.b16 %v6944
        %v6950 = vunpack.c.h.b16 %v6944
        %v6951 = vpack.c.b16 %v6947, %v6947
        %v6952 = vpack.c.b16 %v6948, %v6948
        %v6953 = vpack.c.b16 %v6949, %v6949
        %v6954 = vpack.c.b16 %v6950, %v6950
        %6959 = vst [vmem:[#allocation3 + $0x10] sm:$0xf] %v6951
        %6960 = vst [vmem:[#allocation3 + $0x14] sm:$0xf] %v6952
        %6961 = vst [vmem:[#allocation3 + $0x18] sm:$0xf] %v6953
        %6962 = vst [vmem:[#allocation3 + $0x1c] sm:$0xf] %v6954
        %v6963 = vld [vmem:[#allocation3 + $0xc] sm:$0x8]
        %v6964 = vld [vmem:[#allocation3 + $0x10] sm:$0xf]
        %v6965 = vld [vmem:[#allocation3 + $0x14] sm:$0xf]
        %v6966 = vld [vmem:[#allocation3 + $0x18] sm:$0xf]
        %v6967 = vld [vmem:[#allocation3 + $0x1c] sm:$0xf]
        %v6968 = vld [vmem:[#allocation3 + $0x20] sm:$0x1]
        %v6974 = vunpack.c.l.b16 %v6963
        %v6975 = vunpack.c.l.b16 %v6964
        %v6976 = vunpack.c.l.b16 %v6965
        %v6977 = vunpack.c.l.b16 %v6966
        %v6978 = vunpack.c.l.b16 %v6967
        %v6979 = vpack.c.b16 %v6975, %v6974
        %v6980 = vpack.c.b16 %v6977, %v6976
        %v6981 = vpack.c.b16 %v6978, %v6978
        %v6982 = vpack.c.b16 %v6976, %v6975
        %v6983 = vpack.c.b16 %v6978, %v6977
        %v6985 = vshrl.u32 %v6982, 16
        %v6987 = vrot.slane %v6985, 4
        %v6988 = vshll.u32 %v6982, 16
        %v6990 = vrot.slane %v6988, 5
        %v6991 = vor.u32 %v6987, %v6990
        %v6993 = vshrl.u32 %v6983, 16
        %v6995 = vrot.slane %v6993, 4
        %v6996 = vshll.u32 %v6983, 16
        %v6998 = vrot.slane %v6996, 5
        %v6999 = vor.u32 %v6995, %v6998
        %v7000 = vsel %vm1508, %v6991, %v6999
        %v7002 = vunpack.c.l.b16 %v6968
        %v7003 = vpack.c.b16 %v7002, %v7002
        %v7004 = vrot.slane %v6982, 5
        %v7005 = vrot.slane %v6983, 5
        %v7006 = vsel %vm1529, %v7004, %v7005
        %v7007 = vrot.slane %v7003, 5
        %v7008 = vsel %vm1529, %v7005, %v7007
        %v7009 = vld [vmem:[#allocation28] sm:$0xff]
        %v7010 = vld [vmem:[#allocation28 + $0x8] sm:$0xff]
        %v7011 = vld [vmem:[#allocation28 + $0x10] sm:$0xff]
        %v7012 = vld [vmem:[#allocation28 + $0x18] sm:$0xff]
        %v7013 = vld [vmem:[#allocation28 + $0x20] sm:$0xff]
        %v7014 = vld [vmem:[#allocation28 + $0x28] sm:$0xff]
        %v7015 = vld [vmem:[#allocation28 + $0x30] sm:$0xff]
        %v7016 = vld [vmem:[#allocation28 + $0x38] sm:$0xff]
        %v7017 = vld [vmem:[#allocation28 + $0x40] sm:$0xff]
        %v7018 = vld [vmem:[#allocation28 + $0x48] sm:$0xff]
        %v7019 = vld [vmem:[#allocation28 + $0x50] sm:$0xff]
        %v7020 = vld [vmem:[#allocation28 + $0x58] sm:$0xff]
        %v7021 = vld [vmem:[#allocation28 + $0x60] sm:$0xff]
        %v7022 = vld [vmem:[#allocation28 + $0x68] sm:$0xff]
        %v7023 = vld [vmem:[#allocation28 + $0x70] sm:$0xff]
        %v7024 = vld [vmem:[#allocation28 + $0x78] sm:$0xff]
        %v7025 = vld [vmem:[#allocation28 + $0x80] sm:$0xff]
        %v7026 = vld [vmem:[#allocation28 + $0x88] sm:$0xff]
        %v7027 = vld [vmem:[#allocation28 + $0x90] sm:$0xff]
        %v7028 = vld [vmem:[#allocation28 + $0x98] sm:$0xff]
        %v7029 = vld [vmem:[#allocation28 + $0xa0] sm:$0xff]
        %v7030 = vld [vmem:[#allocation28 + $0xa8] sm:$0xff]
        %v7031 = vld [vmem:[#allocation28 + $0xb0] sm:$0xff]
        %v7032 = vld [vmem:[#allocation28 + $0xb8] sm:$0xff]
        %v7033 = vld [vmem:[#allocation28 + $0xc0] sm:$0xff]
        %v7034 = vld [vmem:[#allocation28 + $0xc8] sm:$0xff]
        %v7035 = vld [vmem:[#allocation28 + $0xd0] sm:$0xff]
        %v7036 = vld [vmem:[#allocation28 + $0xd8] sm:$0xff]
        %v7037 = vld [vmem:[#allocation28 + $0xe0] sm:$0xff]
        %v7038 = vld [vmem:[#allocation28 + $0xe8] sm:$0xff]
        %v7039 = vld [vmem:[#allocation28 + $0xf0] sm:$0xff]
        %v7040 = vld [vmem:[#allocation28 + $0xf8] sm:$0xff]
        %v7041 = vld [vmem:[#allocation28 + $0x100] sm:$0xff]
        %v7042 = vld [vmem:[#allocation28 + $0x108] sm:$0xff]
        %v7043 = vld [vmem:[#allocation28 + $0x110] sm:$0xff]
        %v7044 = vld [vmem:[#allocation28 + $0x118] sm:$0xff]
        %v7045 = vld [vmem:[#allocation28 + $0x120] sm:$0xff]
        %v7046 = vld [vmem:[#allocation28 + $0x128] sm:$0xff]
        %v7047 = vld [vmem:[#allocation28 + $0x130] sm:$0xff]
        %v7048 = vld [vmem:[#allocation28 + $0x138] sm:$0xff]
        %v7049 = vld [vmem:[#allocation28 + $0x140] sm:$0xff]
        %v7050 = vld [vmem:[#allocation28 + $0x148] sm:$0xff]
        %v7051 = vld [vmem:[#allocation28 + $0x150] sm:$0xff]
        %v7052 = vld [vmem:[#allocation28 + $0x158] sm:$0xff]
        %v7053 = vld [vmem:[#allocation28 + $0x160] sm:$0xff]
        %v7054 = vld [vmem:[#allocation28 + $0x168] sm:$0xff]
        %v7055 = vld [vmem:[#allocation28 + $0x170] sm:$0xff]
        %v7056 = vld [vmem:[#allocation28 + $0x178] sm:$0xff]
        %v7057 = vld [vmem:[%s49] sm:$0x3]
        %v7059 = vlaneseq
        %v7060 = vshrl.u32 %v7059, 7
        %v7061 = vsub.s32 0, %v7060
        %v7062 = vrot.slane %v7057, %v7061
        %v7063 = vlaneseq
        %v7064 = vshrl.u32 %v7063, 7
        %v7065 = vsub.s32 1, %v7064
        %v7066 = vrot.slane %v7057, %v7065
        %v7070 = vshrl.u32 %v6979, 16
        %v7072 = vrot.slane %v7070, 3
        %v7073 = vshll.u32 %v6979, 16
        %v7075 = vrot.slane %v7073, 4
        %v7076 = vor.u32 %v7072, %v7075
        %v7078 = vshrl.u32 %v6980, 16
        %v7080 = vrot.slane %v7078, 3
        %v7081 = vshll.u32 %v6980, 16
        %v7083 = vrot.slane %v7081, 4
        %v7084 = vor.u32 %v7080, %v7083
        %v7085 = vsel %vm1595, %v7076, %v7084
        %v7087 = vshrl.u32 %v6991, 16
        %v7089 = vrot.slane %v7087, 3
        %v7090 = vshll.u32 %v6991, 16
        %v7092 = vrot.slane %v7090, 4
        %v7093 = vor.u32 %v7089, %v7092
        %v7095 = vshrl.u32 %v7000, 16
        %v7097 = vrot.slane %v7095, 3
        %v7098 = vshll.u32 %v7000, 16
        %v7100 = vrot.slane %v7098, 4
        %v7101 = vor.u32 %v7097, %v7100
        %v7102 = vsel %vm1595, %v7093, %v7101
        %v7104 = vshrl.u32 %v7004, 16
        %v7106 = vrot.slane %v7104, 3
        %v7107 = vshll.u32 %v7004, 16
        %v7109 = vrot.slane %v7107, 4
        %v7110 = vor.u32 %v7106, %v7109
        %v7112 = vshrl.u32 %v7006, 16
        %v7114 = vrot.slane %v7112, 3
        %v7115 = vshll.u32 %v7006, 16
        %v7117 = vrot.slane %v7115, 4
        %v7118 = vor.u32 %v7114, %v7117
        %v7119 = vsel %vm1595, %v7110, %v7118
        %v7121 = vshrl.u32 %v6981, 16
        %v7123 = vrot.slane %v7121, 3
        %v7124 = vshll.u32 %v6981, 16
        %v7126 = vrot.slane %v7124, 4
        %v7127 = vor.u32 %v7123, %v7126
        %v7128 = vsel %vm1595, %v7084, %v7127
        %v7130 = vshrl.u32 %v6999, 16
        %v7132 = vrot.slane %v7130, 3
        %v7133 = vshll.u32 %v6999, 16
        %v7135 = vrot.slane %v7133, 4
        %v7136 = vor.u32 %v7132, %v7135
        %v7137 = vsel %vm1595, %v7101, %v7136
        %v7139 = vshrl.u32 %v7008, 16
        %v7141 = vrot.slane %v7139, 3
        %v7142 = vshll.u32 %v7008, 16
        %v7144 = vrot.slane %v7142, 4
        %v7145 = vor.u32 %v7141, %v7144
        %v7146 = vsel %vm1595, %v7118, %v7145
        %v7201 = vunpack.c.l.b16 %v7009
        %v7202 = vunpack.c.h.b16 %v7009
        %v7203 = vunpack.c.l.b16 %v7010
        %v7204 = vunpack.c.h.b16 %v7010
        %v7205 = vunpack.c.l.b16 %v7011
        %v7206 = vunpack.c.h.b16 %v7011
        %v7207 = vunpack.c.l.b16 %v7012
        %v7208 = vunpack.c.h.b16 %v7012
        %v7209 = vunpack.c.l.b16 %v7013
        %v7210 = vunpack.c.h.b16 %v7013
        %v7211 = vunpack.c.l.b16 %v7014
        %v7212 = vunpack.c.h.b16 %v7014
        %v7213 = vunpack.c.l.b16 %v7015
        %v7214 = vunpack.c.h.b16 %v7015
        %v7215 = vunpack.c.l.b16 %v7016
        %v7216 = vunpack.c.h.b16 %v7016
        %v7217 = vunpack.c.l.b16 %v7017
        %v7218 = vunpack.c.h.b16 %v7017
        %v7219 = vunpack.c.l.b16 %v7018
        %v7220 = vunpack.c.h.b16 %v7018
        %v7221 = vunpack.c.l.b16 %v7019
        %v7222 = vunpack.c.h.b16 %v7019
        %v7223 = vunpack.c.l.b16 %v7020
        %v7224 = vunpack.c.h.b16 %v7020
        %v7225 = vunpack.c.l.b16 %v7021
        %v7226 = vunpack.c.h.b16 %v7021
        %v7227 = vunpack.c.l.b16 %v7022
        %v7228 = vunpack.c.h.b16 %v7022
        %v7229 = vunpack.c.l.b16 %v7023
        %v7230 = vunpack.c.h.b16 %v7023
        %v7231 = vunpack.c.l.b16 %v7024
        %v7232 = vunpack.c.h.b16 %v7024
        %v7233 = vunpack.c.l.b16 %v7025
        %v7234 = vunpack.c.h.b16 %v7025
        %v7235 = vunpack.c.l.b16 %v7026
        %v7236 = vunpack.c.h.b16 %v7026
        %v7237 = vunpack.c.l.b16 %v7027
        %v7238 = vunpack.c.h.b16 %v7027
        %v7239 = vunpack.c.l.b16 %v7028
        %v7240 = vunpack.c.h.b16 %v7028
        %v7241 = vunpack.c.l.b16 %v7029
        %v7242 = vunpack.c.h.b16 %v7029
        %v7243 = vunpack.c.l.b16 %v7030
        %v7244 = vunpack.c.h.b16 %v7030
        %v7245 = vunpack.c.l.b16 %v7031
        %v7246 = vunpack.c.h.b16 %v7031
        %v7247 = vunpack.c.l.b16 %v7032
        %v7248 = vunpack.c.h.b16 %v7032
        %v7249 = vunpack.c.l.b16 %v7033
        %v7250 = vunpack.c.h.b16 %v7033
        %v7251 = vunpack.c.l.b16 %v7034
        %v7252 = vunpack.c.h.b16 %v7034
        %v7253 = vunpack.c.l.b16 %v7035
        %v7254 = vunpack.c.h.b16 %v7035
        %v7255 = vunpack.c.l.b16 %v7036
        %v7256 = vunpack.c.h.b16 %v7036
        %v7257 = vunpack.c.l.b16 %v7037
        %v7258 = vunpack.c.h.b16 %v7037
        %v7259 = vunpack.c.l.b16 %v7038
        %v7260 = vunpack.c.h.b16 %v7038
        %v7261 = vunpack.c.l.b16 %v7039
        %v7262 = vunpack.c.h.b16 %v7039
        %v7263 = vunpack.c.l.b16 %v7040
        %v7264 = vunpack.c.h.b16 %v7040
        %v7265 = vunpack.c.l.b16 %v7041
        %v7266 = vunpack.c.h.b16 %v7041
        %v7267 = vunpack.c.l.b16 %v7042
        %v7268 = vunpack.c.h.b16 %v7042
        %v7269 = vunpack.c.l.b16 %v7043
        %v7270 = vunpack.c.h.b16 %v7043
        %v7271 = vunpack.c.l.b16 %v7044
        %v7272 = vunpack.c.h.b16 %v7044
        %v7273 = vunpack.c.l.b16 %v7045
        %v7274 = vunpack.c.h.b16 %v7045
        %v7275 = vunpack.c.l.b16 %v7046
        %v7276 = vunpack.c.h.b16 %v7046
        %v7277 = vunpack.c.l.b16 %v7047
        %v7278 = vunpack.c.h.b16 %v7047
        %v7279 = vunpack.c.l.b16 %v7048
        %v7280 = vunpack.c.h.b16 %v7048
        %v7281 = vunpack.c.l.b16 %v7049
        %v7282 = vunpack.c.h.b16 %v7049
        %v7283 = vunpack.c.l.b16 %v7050
        %v7284 = vunpack.c.h.b16 %v7050
        %v7285 = vunpack.c.l.b16 %v7051
        %v7286 = vunpack.c.h.b16 %v7051
        %v7287 = vunpack.c.l.b16 %v7052
        %v7288 = vunpack.c.h.b16 %v7052
        %v7289 = vunpack.c.l.b16 %v7053
        %v7290 = vunpack.c.h.b16 %v7053
        %v7291 = vunpack.c.l.b16 %v7054
        %v7292 = vunpack.c.h.b16 %v7054
        %v7293 = vunpack.c.l.b16 %v7055
        %v7294 = vunpack.c.h.b16 %v7055
        %v7295 = vunpack.c.l.b16 %v7056
        %v7296 = vunpack.c.h.b16 %v7056
        %v7297 = vpack.c.b16 %v7203, %v7201
        %v7298 = vpack.c.b16 %v7204, %v7202
        %v7299 = vpack.c.b16 %v7207, %v7205
        %v7300 = vpack.c.b16 %v7208, %v7206
        %v7301 = vpack.c.b16 %v7211, %v7209
        %v7302 = vpack.c.b16 %v7212, %v7210
        %v7303 = vpack.c.b16 %v7215, %v7213
        %v7304 = vpack.c.b16 %v7216, %v7214
        %v7305 = vpack.c.b16 %v7219, %v7217
        %v7306 = vpack.c.b16 %v7220, %v7218
        %v7307 = vpack.c.b16 %v7223, %v7221
        %v7308 = vpack.c.b16 %v7224, %v7222
        %v7309 = vpack.c.b16 %v7227, %v7225
        %v7310 = vpack.c.b16 %v7228, %v7226
        %v7311 = vpack.c.b16 %v7231, %v7229
        %v7312 = vpack.c.b16 %v7232, %v7230
        %v7313 = vpack.c.b16 %v7235, %v7233
        %v7314 = vpack.c.b16 %v7236, %v7234
        %v7315 = vpack.c.b16 %v7239, %v7237
        %v7316 = vpack.c.b16 %v7240, %v7238
        %v7317 = vpack.c.b16 %v7243, %v7241
        %v7318 = vpack.c.b16 %v7244, %v7242
        %v7319 = vpack.c.b16 %v7247, %v7245
        %v7320 = vpack.c.b16 %v7248, %v7246
        %v7321 = vpack.c.b16 %v7251, %v7249
        %v7322 = vpack.c.b16 %v7252, %v7250
        %v7323 = vpack.c.b16 %v7255, %v7253
        %v7324 = vpack.c.b16 %v7256, %v7254
        %v7325 = vpack.c.b16 %v7259, %v7257
        %v7326 = vpack.c.b16 %v7260, %v7258
        %v7327 = vpack.c.b16 %v7263, %v7261
        %v7328 = vpack.c.b16 %v7264, %v7262
        %v7329 = vpack.c.b16 %v7267, %v7265
        %v7330 = vpack.c.b16 %v7268, %v7266
        %v7331 = vpack.c.b16 %v7271, %v7269
        %v7332 = vpack.c.b16 %v7272, %v7270
        %v7333 = vpack.c.b16 %v7275, %v7273
        %v7334 = vpack.c.b16 %v7276, %v7274
        %v7335 = vpack.c.b16 %v7279, %v7277
        %v7336 = vpack.c.b16 %v7280, %v7278
        %v7337 = vpack.c.b16 %v7283, %v7281
        %v7338 = vpack.c.b16 %v7284, %v7282
        %v7339 = vpack.c.b16 %v7287, %v7285
        %v7340 = vpack.c.b16 %v7288, %v7286
        %v7341 = vpack.c.b16 %v7291, %v7289
        %v7342 = vpack.c.b16 %v7292, %v7290
        %v7343 = vpack.c.b16 %v7295, %v7293
        %v7344 = vpack.c.b16 %v7296, %v7294
        %7393 = vmatprep.subr.bf16.mxu0 %v7312
        %7394 = vmatpush1.bf16.msra.mxu0 %v7311
        %7395 = vmatprep.subr.bf16.mxu0 %v7310
        %7396 = vmatpush1.bf16.msra.mxu0 %v7309
        %7397 = vmatprep.subr.bf16.mxu0 %v7308
        %7398 = vmatpush1.bf16.msra.mxu0 %v7307
        %7399 = vmatprep.subr.bf16.mxu0 %v7306
        %7400 = vmatpush1.bf16.msra.mxu0 %v7305
        %7401 = vmatprep.subr.bf16.mxu0 %v7304
        %7402 = vmatpush1.bf16.msra.mxu0 %v7303
        %7403 = vmatprep.subr.bf16.mxu0 %v7302
        %7404 = vmatpush1.bf16.msra.mxu0 %v7301
        %7405 = vmatprep.subr.bf16.mxu0 %v7300
        %7406 = vmatpush1.bf16.msra.mxu0 %v7299
        %7407 = vmatprep.subr.bf16.mxu0 %v7298
        %7408 = vmatpush1.bf16.msra.mxu0 %v7297
        %7409 = vmatprep.subr.bf16.mxu0 %v7328
        %7410 = vmatpush2.bf16.msra.mxu0 %v7327
        %7411 = vmatprep.subr.bf16.mxu0 %v7326
        %7412 = vmatpush2.bf16.msra.mxu0 %v7325
        %7413 = vmatprep.subr.bf16.mxu0 %v7324
        %7414 = vmatpush2.bf16.msra.mxu0 %v7323
        %7415 = vmatprep.subr.bf16.mxu0 %v7322
        %7416 = vmatpush2.bf16.msra.mxu0 %v7321
        %7417 = vmatprep.subr.bf16.mxu0 %v7320
        %7418 = vmatpush2.bf16.msra.mxu0 %v7319
        %7419 = vmatprep.subr.bf16.mxu0 %v7318
        %7420 = vmatpush2.bf16.msra.mxu0 %v7317
        %7421 = vmatprep.subr.bf16.mxu0 %v7316
        %7422 = vmatpush2.bf16.msra.mxu0 %v7315
        %7423 = vmatprep.subr.bf16.mxu0 %v7314
        %7424 = vmatpush2.bf16.msra.mxu0 %v7313
        %7425 = vmatprep.mubr.bf16.mxu0 %v7102
        %7426 = vmatmul.mubr.bf16.gmra.mxu0 %v7085
        %v7427 = vpop.f32.mrf.mxu0
        %v7428 = vadd.f32 %v7062, %v7427
        %v7429 = vpop.f32.mrf.mxu0
        %v7430 = vadd.f32 %v7066, %v7429
        %v7431 = vpop.f32.mrf.mxu0
        %v7432 = vadd.f32 %v7062, %v7431
        %v7433 = vpop.f32.mrf.mxu0
        %v7434 = vadd.f32 %v7066, %v7433
        %7435 = vmatprep.mubr.bf16.mxu0 %v7137
        %7436 = vmatmul.mubr.bf16.gmra.mxu0 %v7128
        %v7437 = vpop.f32.mrf.mxu0
        %v7438 = vadd.f32 %v7062, %v7437
        %v7439 = vpop.f32.mrf.mxu0
        %v7440 = vadd.f32 %v7066, %v7439
        %v7441 = vpop.f32.mrf.mxu0
        %v7442 = vadd.f32 %v7062, %v7441
        %v7443 = vpop.f32.mrf.mxu0
        %v7444 = vadd.f32 %v7066, %v7443
        %7445 = vdwg.mxu0
        %7446 = vmatprep.subr.bf16.mxu0 %v7344
        %7447 = vmatpush1.bf16.msra.mxu0 %v7343
        %7448 = vmatprep.subr.bf16.mxu0 %v7342
        %7449 = vmatpush1.bf16.msra.mxu0 %v7341
        %7450 = vmatprep.subr.bf16.mxu0 %v7340
        %7451 = vmatpush1.bf16.msra.mxu0 %v7339
        %7452 = vmatprep.subr.bf16.mxu0 %v7338
        %7453 = vmatpush1.bf16.msra.mxu0 %v7337
        %7454 = vmatprep.subr.bf16.mxu0 %v7336
        %7455 = vmatpush1.bf16.msra.mxu0 %v7335
        %7456 = vmatprep.subr.bf16.mxu0 %v7334
        %7457 = vmatpush1.bf16.msra.mxu0 %v7333
        %7458 = vmatprep.subr.bf16.mxu0 %v7332
        %7459 = vmatpush1.bf16.msra.mxu0 %v7331
        %7460 = vmatprep.subr.bf16.mxu0 %v7330
        %7461 = vmatpush1.bf16.msra.mxu0 %v7329
        %7462 = vmatprep.subr.bf16.mxu0 0
        %7463 = vmatpush2.bf16.msra.mxu0 0
        %7464 = vmatprep.subr.bf16.mxu0 0
        %7465 = vmatpush2.bf16.msra.mxu0 0
        %7466 = vmatprep.subr.bf16.mxu0 0
        %7467 = vmatpush2.bf16.msra.mxu0 0
        %7468 = vmatprep.subr.bf16.mxu0 0
        %7469 = vmatpush2.bf16.msra.mxu0 0
        %7470 = vmatprep.subr.bf16.mxu0 0
        %7471 = vmatpush2.bf16.msra.mxu0 0
        %7472 = vmatprep.subr.bf16.mxu0 0
        %7473 = vmatpush2.bf16.msra.mxu0 0
        %7474 = vmatprep.subr.bf16.mxu0 0
        %7475 = vmatpush2.bf16.msra.mxu0 0
        %7476 = vmatprep.subr.bf16.mxu0 0
        %7477 = vmatpush2.bf16.msra.mxu0 0
        %7478 = vmatprep.mubr.bf16.mxu0 0
        %7479 = vmatmul.mubr.bf16.gmra.mxu0 %v7119
        %v7480 = vpop.f32.mrf.mxu0
        %v7481 = vadd.f32 %v7428, %v7480
        %v7482 = vpop.f32.mrf.mxu0
        %v7483 = vadd.f32 %v7430, %v7482
        %v7484 = vpop.f32.mrf.mxu0
        %v7485 = vadd.f32 %v7432, %v7484
        %v7486 = vpop.f32.mrf.mxu0
        %v7487 = vadd.f32 %v7434, %v7486
        %7488 = vmatprep.mubr.bf16.mxu0 0
        %7489 = vmatmul.mubr.bf16.gmra.mxu0 %v7146
        %v7490 = vpop.f32.mrf.mxu0
        %v7491 = vadd.f32 %v7438, %v7490
        %v7492 = vpop.f32.mrf.mxu0
        %v7493 = vadd.f32 %v7440, %v7492
        %v7494 = vpop.f32.mrf.mxu0
        %v7495 = vadd.f32 %v7442, %v7494
        %v7496 = vpop.f32.mrf.mxu0
        %v7497 = vadd.f32 %v7444, %v7496
        %7498 = vdwg.mxu0
        %v7499 = vxor.u32 %v7481, 2147483648
        %v7500 = vxor.u32 %v7485, 2147483648
        %v7501 = vxor.u32 %v7491, 2147483648
        %v7502 = vxor.u32 %v7495, 2147483648
        %v7503 = vmul.f32 %v7499, 1.442695
        %v7504 = vpow.pop %v7503
        %v7505 = vmul.f32 %v7500, 1.442695
        %v7506 = vpow.pop %v7505
        %v7507 = vmul.f32 %v7501, 1.442695
        %v7508 = vpow.pop %v7507
        %v7509 = vmul.f32 %v7502, 1.442695
        %v7510 = vpow.pop %v7509
        %v7511 = vadd.f32 %v7504, 1.0
        %v7512 = vadd.f32 %v7506, 1.0
        %v7513 = vadd.f32 %v7508, 1.0
        %v7514 = vadd.f32 %v7510, 1.0
        %v7515 = vrcp.pop %v7511
        %v7516 = vmul.f32 1.0, %v7515
        %v7517 = vrcp.pop %v7512
        %v7518 = vmul.f32 1.0, %v7517
        %v7519 = vrcp.pop %v7513
        %v7520 = vmul.f32 1.0, %v7519
        %v7521 = vrcp.pop %v7514
        %v7522 = vmul.f32 1.0, %v7521
        %v7523 = vunpack.c.l.bf16 %v6964
        %v7524 = vunpack.c.l.bf16 %v6965
        %v7525 = vunpack.c.l.bf16 %v6966
        %v7526 = vunpack.c.l.bf16 %v6967
        %v7527 = vmul.f32 %v7483, %v7516
        %v7528 = vmul.f32 %v7487, %v7518
        %v7529 = vmul.f32 %v7493, %v7520
        %v7530 = vmul.f32 %v7497, %v7522
        %v7531 = vsub.f32 1.0, %v7516
        %v7532 = vsub.f32 1.0, %v7518
        %v7533 = vsub.f32 1.0, %v7520
        %v7534 = vsub.f32 1.0, %v7522
        %v7535 = vmul.f32 %v7523, %v7531
        %v7536 = vmul.f32 %v7524, %v7532
        %v7537 = vmul.f32 %v7525, %v7533
        %v7538 = vmul.f32 %v7526, %v7534
        %v7539 = vadd.f32 %v7527, %v7535
        %v7540 = vadd.f32 %v7528, %v7536
        %v7541 = vadd.f32 %v7529, %v7537
        %v7542 = vadd.f32 %v7530, %v7538
        %v7543 = vpack.c.bf16 %v7540, %v7539
        %v7544 = vpack.c.bf16 %v7542, %v7541
        %v7547 = vunpack.c.l.b16 %v7543
        %v7548 = vunpack.c.h.b16 %v7543
        %v7549 = vunpack.c.l.b16 %v7544
        %v7550 = vunpack.c.h.b16 %v7544
        %v7551 = vpack.c.b16 %v7547, %v7547
        %v7552 = vpack.c.b16 %v7548, %v7548
        %v7553 = vpack.c.b16 %v7549, %v7549
        %v7554 = vpack.c.b16 %v7550, %v7550
        %7559 = vst [vmem:[#allocation2 + $0x10] sm:$0xf] %v7551
        %7560 = vst [vmem:[#allocation2 + $0x14] sm:$0xf] %v7552
        %7561 = vst [vmem:[#allocation2 + $0x18] sm:$0xf] %v7553
        %7562 = vst [vmem:[#allocation2 + $0x1c] sm:$0xf] %v7554
        %v7563 = vld [vmem:[#allocation2 + $0x10] sm:$0xf]
        %v7564 = vld [vmem:[#allocation2 + $0x14] sm:$0xf]
        %v7565 = vld [vmem:[#allocation2 + $0x18] sm:$0xf]
        %v7566 = vld [vmem:[#allocation2 + $0x1c] sm:$0xf]
        %v7567 = vld [vmem:[#allocation30] sm:$0xff]
        %v7568 = vld [vmem:[#allocation30 + $0x8] sm:$0xff]
        %v7569 = vld [vmem:[#allocation30 + $0x10] sm:$0xff]
        %v7570 = vld [vmem:[#allocation30 + $0x18] sm:$0xff]
        %v7571 = vld [vmem:[#allocation30 + $0x20] sm:$0xff]
        %v7572 = vld [vmem:[#allocation30 + $0x28] sm:$0xff]
        %v7573 = vld [vmem:[#allocation30 + $0x30] sm:$0xff]
        %v7574 = vld [vmem:[#allocation30 + $0x38] sm:$0xff]
        %v7575 = vld [vmem:[#allocation30 + $0x40] sm:$0xff]
        %v7576 = vld [vmem:[#allocation30 + $0x48] sm:$0xff]
        %v7577 = vld [vmem:[#allocation30 + $0x50] sm:$0xff]
        %v7578 = vld [vmem:[#allocation30 + $0x58] sm:$0xff]
        %v7579 = vld [vmem:[#allocation30 + $0x60] sm:$0xff]
        %v7580 = vld [vmem:[#allocation30 + $0x68] sm:$0xff]
        %v7581 = vld [vmem:[#allocation30 + $0x70] sm:$0xff]
        %v7582 = vld [vmem:[#allocation30 + $0x78] sm:$0xff]
        %v7583 = vld [vmem:[%s53] sm:$0x3]
        %v7585 = vlaneseq
        %v7586 = vshrl.u32 %v7585, 7
        %v7587 = vsub.s32 0, %v7586
        %v7588 = vrot.slane %v7583, %v7587
        %v7589 = vlaneseq
        %v7590 = vshrl.u32 %v7589, 7
        %v7591 = vsub.s32 1, %v7590
        %v7592 = vrot.slane %v7583, %v7591
        %v7599 = vunpack.c.l.b16 %v7563
        %v7600 = vunpack.c.l.b16 %v7564
        %v7601 = vunpack.c.l.b16 %v7565
        %v7602 = vunpack.c.l.b16 %v7566
        %v7603 = vpack.c.b16 %v7600, %v7599
        %v7604 = vpack.c.b16 %v7602, %v7601
        %v7623 = vunpack.c.l.b16 %v7567
        %v7624 = vunpack.c.h.b16 %v7567
        %v7625 = vunpack.c.l.b16 %v7568
        %v7626 = vunpack.c.h.b16 %v7568
        %v7627 = vunpack.c.l.b16 %v7569
        %v7628 = vunpack.c.h.b16 %v7569
        %v7629 = vunpack.c.l.b16 %v7570
        %v7630 = vunpack.c.h.b16 %v7570
        %v7631 = vunpack.c.l.b16 %v7571
        %v7632 = vunpack.c.h.b16 %v7571
        %v7633 = vunpack.c.l.b16 %v7572
        %v7634 = vunpack.c.h.b16 %v7572
        %v7635 = vunpack.c.l.b16 %v7573
        %v7636 = vunpack.c.h.b16 %v7573
        %v7637 = vunpack.c.l.b16 %v7574
        %v7638 = vunpack.c.h.b16 %v7574
        %v7639 = vunpack.c.l.b16 %v7575
        %v7640 = vunpack.c.h.b16 %v7575
        %v7641 = vunpack.c.l.b16 %v7576
        %v7642 = vunpack.c.h.b16 %v7576
        %v7643 = vunpack.c.l.b16 %v7577
        %v7644 = vunpack.c.h.b16 %v7577
        %v7645 = vunpack.c.l.b16 %v7578
        %v7646 = vunpack.c.h.b16 %v7578
        %v7647 = vunpack.c.l.b16 %v7579
        %v7648 = vunpack.c.h.b16 %v7579
        %v7649 = vunpack.c.l.b16 %v7580
        %v7650 = vunpack.c.h.b16 %v7580
        %v7651 = vunpack.c.l.b16 %v7581
        %v7652 = vunpack.c.h.b16 %v7581
        %v7653 = vunpack.c.l.b16 %v7582
        %v7654 = vunpack.c.h.b16 %v7582
        %v7655 = vpack.c.b16 %v7625, %v7623
        %v7656 = vpack.c.b16 %v7626, %v7624
        %v7657 = vpack.c.b16 %v7629, %v7627
        %v7658 = vpack.c.b16 %v7630, %v7628
        %v7659 = vpack.c.b16 %v7633, %v7631
        %v7660 = vpack.c.b16 %v7634, %v7632
        %v7661 = vpack.c.b16 %v7637, %v7635
        %v7662 = vpack.c.b16 %v7638, %v7636
        %v7663 = vpack.c.b16 %v7641, %v7639
        %v7664 = vpack.c.b16 %v7642, %v7640
        %v7665 = vpack.c.b16 %v7645, %v7643
        %v7666 = vpack.c.b16 %v7646, %v7644
        %v7667 = vpack.c.b16 %v7649, %v7647
        %v7668 = vpack.c.b16 %v7650, %v7648
        %v7669 = vpack.c.b16 %v7653, %v7651
        %v7670 = vpack.c.b16 %v7654, %v7652
        %7687 = vmatprep.subr.bf16.mxu0 %v7670
        %7688 = vmatpush1.bf16.msra.mxu0 %v7669
        %7689 = vmatprep.subr.bf16.mxu0 %v7668
        %7690 = vmatpush1.bf16.msra.mxu0 %v7667
        %7691 = vmatprep.subr.bf16.mxu0 %v7666
        %7692 = vmatpush1.bf16.msra.mxu0 %v7665
        %7693 = vmatprep.subr.bf16.mxu0 %v7664
        %7694 = vmatpush1.bf16.msra.mxu0 %v7663
        %7695 = vmatprep.subr.bf16.mxu0 %v7662
        %7696 = vmatpush1.bf16.msra.mxu0 %v7661
        %7697 = vmatprep.subr.bf16.mxu0 %v7660
        %7698 = vmatpush1.bf16.msra.mxu0 %v7659
        %7699 = vmatprep.subr.bf16.mxu0 %v7658
        %7700 = vmatpush1.bf16.msra.mxu0 %v7657
        %7701 = vmatprep.subr.bf16.mxu0 %v7656
        %7702 = vmatpush1.bf16.msra.mxu0 %v7655
        %7703 = vmatprep.subr.bf16.mxu0 0
        %7704 = vmatpush2.bf16.msra.mxu0 0
        %7705 = vmatprep.subr.bf16.mxu0 0
        %7706 = vmatpush2.bf16.msra.mxu0 0
        %7707 = vmatprep.subr.bf16.mxu0 0
        %7708 = vmatpush2.bf16.msra.mxu0 0
        %7709 = vmatprep.subr.bf16.mxu0 0
        %7710 = vmatpush2.bf16.msra.mxu0 0
        %7711 = vmatprep.subr.bf16.mxu0 0
        %7712 = vmatpush2.bf16.msra.mxu0 0
        %7713 = vmatprep.subr.bf16.mxu0 0
        %7714 = vmatpush2.bf16.msra.mxu0 0
        %7715 = vmatprep.subr.bf16.mxu0 0
        %7716 = vmatpush2.bf16.msra.mxu0 0
        %7717 = vmatprep.subr.bf16.mxu0 0
        %7718 = vmatpush2.bf16.msra.mxu0 0
        %7719 = vmatprep.mubr.bf16.mxu0 0
        %7720 = vmatmul.mubr.bf16.gmra.mxu0 %v7603
        %v7721 = vpop.f32.mrf.mxu0
        %v7722 = vadd.f32 %v7588, %v7721
        %v7723 = vpop.f32.mrf.mxu0
        %v7724 = vadd.f32 %v7592, %v7723
        %v7725 = vpop.f32.mrf.mxu0
        %v7726 = vadd.f32 %v7588, %v7725
        %v7727 = vpop.f32.mrf.mxu0
        %v7728 = vadd.f32 %v7592, %v7727
        %7729 = vmatprep.mubr.bf16.mxu0 0
        %7730 = vmatmul.mubr.bf16.gmra.mxu0 %v7604
        %v7731 = vpop.f32.mrf.mxu0
        %v7732 = vadd.f32 %v7588, %v7731
        %v7733 = vpop.f32.mrf.mxu0
        %v7734 = vadd.f32 %v7592, %v7733
        %v7735 = vpop.f32.mrf.mxu0
        %v7736 = vadd.f32 %v7588, %v7735
        %v7737 = vpop.f32.mrf.mxu0
        %v7738 = vadd.f32 %v7592, %v7737
        %7739 = vdwg.mxu0
        %v7740 = vxor.u32 %v7722, 2147483648
        %v7741 = vxor.u32 %v7726, 2147483648
        %v7742 = vxor.u32 %v7732, 2147483648
        %v7743 = vxor.u32 %v7736, 2147483648
        %v7744 = vmul.f32 %v7740, 1.442695
        %v7745 = vpow.pop %v7744
        %v7746 = vmul.f32 %v7741, 1.442695
        %v7747 = vpow.pop %v7746
        %v7748 = vmul.f32 %v7742, 1.442695
        %v7749 = vpow.pop %v7748
        %v7750 = vmul.f32 %v7743, 1.442695
        %v7751 = vpow.pop %v7750
        %v7752 = vadd.f32 %v7745, 1.0
        %v7753 = vadd.f32 %v7747, 1.0
        %v7754 = vadd.f32 %v7749, 1.0
        %v7755 = vadd.f32 %v7751, 1.0
        %v7756 = vrcp.pop %v7752
        %v7757 = vmul.f32 1.0, %v7756
        %v7758 = vrcp.pop %v7753
        %v7759 = vmul.f32 1.0, %v7758
        %v7760 = vrcp.pop %v7754
        %v7761 = vmul.f32 1.0, %v7760
        %v7762 = vrcp.pop %v7755
        %v7763 = vmul.f32 1.0, %v7762
        %v7764 = vunpack.c.l.bf16 %v7563
        %v7765 = vunpack.c.l.bf16 %v7564
        %v7766 = vunpack.c.l.bf16 %v7565
        %v7767 = vunpack.c.l.bf16 %v7566
        %v7768 = vmul.f32 %v7724, %v7757
        %v7769 = vmul.f32 %v7728, %v7759
        %v7770 = vmul.f32 %v7734, %v7761
        %v7771 = vmul.f32 %v7738, %v7763
        %v7772 = vsub.f32 1.0, %v7757
        %v7773 = vsub.f32 1.0, %v7759
        %v7774 = vsub.f32 1.0, %v7761
        %v7775 = vsub.f32 1.0, %v7763
        %v7776 = vmul.f32 %v7764, %v7772
        %v7777 = vmul.f32 %v7765, %v7773
        %v7778 = vmul.f32 %v7766, %v7774
        %v7779 = vmul.f32 %v7767, %v7775
        %v7780 = vadd.f32 %v7768, %v7776
        %v7781 = vadd.f32 %v7769, %v7777
        %v7782 = vadd.f32 %v7770, %v7778
        %v7783 = vadd.f32 %v7771, %v7779
        %v7784 = vpack.c.bf16 %v7781, %v7780
        %v7785 = vpack.c.bf16 %v7783, %v7782
        %v7788 = vunpack.c.l.b16 %v7784
        %v7789 = vunpack.c.h.b16 %v7784
        %v7790 = vunpack.c.l.b16 %v7785
        %v7791 = vunpack.c.h.b16 %v7785
        %v7792 = vpack.c.b16 %v7788, %v7788
        %v7793 = vpack.c.b16 %v7789, %v7789
        %v7794 = vpack.c.b16 %v7790, %v7790
        %v7795 = vpack.c.b16 %v7791, %v7791
        %7800 = vst [vmem:[#allocation3 + $0x10] sm:$0xf] %v7792
        %7801 = vst [vmem:[#allocation3 + $0x14] sm:$0xf] %v7793
        %7802 = vst [vmem:[#allocation3 + $0x18] sm:$0xf] %v7794
        %7803 = vst [vmem:[#allocation3 + $0x1c] sm:$0xf] %v7795
        %v7804 = vld [vmem:[#allocation3 + $0x10] sm:$0xf]
        %v7805 = vld [vmem:[#allocation3 + $0x14] sm:$0xf]
        %v7806 = vld [vmem:[#allocation3 + $0x18] sm:$0xf]
        %v7807 = vld [vmem:[#allocation3 + $0x1c] sm:$0xf]
        %v7808 = vld [vmem:[%s55] sm:$0xff]
        %v7809 = vld [vmem:[%s55 + $0x8] sm:$0xff]
        %v7810 = vld [vmem:[%s55 + $0x10] sm:$0xff]
        %v7811 = vld [vmem:[%s55 + $0x18] sm:$0xff]
        %v7812 = vld [vmem:[%s55 + $0x20] sm:$0xff]
        %v7813 = vld [vmem:[%s55 + $0x28] sm:$0xff]
        %v7814 = vld [vmem:[%s55 + $0x30] sm:$0xff]
        %v7815 = vld [vmem:[%s55 + $0x38] sm:$0xff]
        %v7816 = vld [vmem:[%s55 + $0x40] sm:$0xff]
        %v7817 = vld [vmem:[%s55 + $0x48] sm:$0xff]
        %v7818 = vld [vmem:[%s55 + $0x50] sm:$0xff]
        %v7819 = vld [vmem:[%s55 + $0x58] sm:$0xff]
        %v7820 = vld [vmem:[%s55 + $0x60] sm:$0xff]
        %v7821 = vld [vmem:[%s55 + $0x68] sm:$0xff]
        %v7822 = vld [vmem:[%s55 + $0x70] sm:$0xff]
        %v7823 = vld [vmem:[%s55 + $0x78] sm:$0xff]
        %v7824 = vld [vmem:[%s57] sm:$0x3]
        %v7826 = vlaneseq
        %v7827 = vshrl.u32 %v7826, 7
        %v7828 = vsub.s32 0, %v7827
        %v7829 = vrot.slane %v7824, %v7828
        %v7830 = vlaneseq
        %v7831 = vshrl.u32 %v7830, 7
        %v7832 = vsub.s32 1, %v7831
        %v7833 = vrot.slane %v7824, %v7832
        %v7840 = vunpack.c.l.b16 %v7804
        %v7841 = vunpack.c.l.b16 %v7805
        %v7842 = vunpack.c.l.b16 %v7806
        %v7843 = vunpack.c.l.b16 %v7807
        %v7844 = vpack.c.b16 %v7841, %v7840
        %v7845 = vpack.c.b16 %v7843, %v7842
        %v7864 = vunpack.c.l.b16 %v7808
        %v7865 = vunpack.c.h.b16 %v7808
        %v7866 = vunpack.c.l.b16 %v7809
        %v7867 = vunpack.c.h.b16 %v7809
        %v7868 = vunpack.c.l.b16 %v7810
        %v7869 = vunpack.c.h.b16 %v7810
        %v7870 = vunpack.c.l.b16 %v7811
        %v7871 = vunpack.c.h.b16 %v7811
        %v7872 = vunpack.c.l.b16 %v7812
        %v7873 = vunpack.c.h.b16 %v7812
        %v7874 = vunpack.c.l.b16 %v7813
        %v7875 = vunpack.c.h.b16 %v7813
        %v7876 = vunpack.c.l.b16 %v7814
        %v7877 = vunpack.c.h.b16 %v7814
        %v7878 = vunpack.c.l.b16 %v7815
        %v7879 = vunpack.c.h.b16 %v7815
        %v7880 = vunpack.c.l.b16 %v7816
        %v7881 = vunpack.c.h.b16 %v7816
        %v7882 = vunpack.c.l.b16 %v7817
        %v7883 = vunpack.c.h.b16 %v7817
        %v7884 = vunpack.c.l.b16 %v7818
        %v7885 = vunpack.c.h.b16 %v7818
        %v7886 = vunpack.c.l.b16 %v7819
        %v7887 = vunpack.c.h.b16 %v7819
        %v7888 = vunpack.c.l.b16 %v7820
        %v7889 = vunpack.c.h.b16 %v7820
        %v7890 = vunpack.c.l.b16 %v7821
        %v7891 = vunpack.c.h.b16 %v7821
        %v7892 = vunpack.c.l.b16 %v7822
        %v7893 = vunpack.c.h.b16 %v7822
        %v7894 = vunpack.c.l.b16 %v7823
        %v7895 = vunpack.c.h.b16 %v7823
        %v7896 = vpack.c.b16 %v7866, %v7864
        %v7897 = vpack.c.b16 %v7867, %v7865
        %v7898 = vpack.c.b16 %v7870, %v7868
        %v7899 = vpack.c.b16 %v7871, %v7869
        %v7900 = vpack.c.b16 %v7874, %v7872
        %v7901 = vpack.c.b16 %v7875, %v7873
        %v7902 = vpack.c.b16 %v7878, %v7876
        %v7903 = vpack.c.b16 %v7879, %v7877
        %v7904 = vpack.c.b16 %v7882, %v7880
        %v7905 = vpack.c.b16 %v7883, %v7881
        %v7906 = vpack.c.b16 %v7886, %v7884
        %v7907 = vpack.c.b16 %v7887, %v7885
        %v7908 = vpack.c.b16 %v7890, %v7888
        %v7909 = vpack.c.b16 %v7891, %v7889
        %v7910 = vpack.c.b16 %v7894, %v7892
        %v7911 = vpack.c.b16 %v7895, %v7893
        %7928 = vmatprep.subr.bf16.mxu0 %v7911
        %7929 = vmatpush1.bf16.msra.mxu0 %v7910
        %7930 = vmatprep.subr.bf16.mxu0 %v7909
        %7931 = vmatpush1.bf16.msra.mxu0 %v7908
        %7932 = vmatprep.subr.bf16.mxu0 %v7907
        %7933 = vmatpush1.bf16.msra.mxu0 %v7906
        %7934 = vmatprep.subr.bf16.mxu0 %v7905
        %7935 = vmatpush1.bf16.msra.mxu0 %v7904
        %7936 = vmatprep.subr.bf16.mxu0 %v7903
        %7937 = vmatpush1.bf16.msra.mxu0 %v7902
        %7938 = vmatprep.subr.bf16.mxu0 %v7901
        %7939 = vmatpush1.bf16.msra.mxu0 %v7900
        %7940 = vmatprep.subr.bf16.mxu0 %v7899
        %7941 = vmatpush1.bf16.msra.mxu0 %v7898
        %7942 = vmatprep.subr.bf16.mxu0 %v7897
        %7943 = vmatpush1.bf16.msra.mxu0 %v7896
        %7944 = vmatprep.subr.bf16.mxu0 0
        %7945 = vmatpush2.bf16.msra.mxu0 0
        %7946 = vmatprep.subr.bf16.mxu0 0
        %7947 = vmatpush2.bf16.msra.mxu0 0
        %7948 = vmatprep.subr.bf16.mxu0 0
        %7949 = vmatpush2.bf16.msra.mxu0 0
        %7950 = vmatprep.subr.bf16.mxu0 0
        %7951 = vmatpush2.bf16.msra.mxu0 0
        %7952 = vmatprep.subr.bf16.mxu0 0
        %7953 = vmatpush2.bf16.msra.mxu0 0
        %7954 = vmatprep.subr.bf16.mxu0 0
        %7955 = vmatpush2.bf16.msra.mxu0 0
        %7956 = vmatprep.subr.bf16.mxu0 0
        %7957 = vmatpush2.bf16.msra.mxu0 0
        %7958 = vmatprep.subr.bf16.mxu0 0
        %7959 = vmatpush2.bf16.msra.mxu0 0
        %7960 = vmatprep.mubr.bf16.mxu0 0
        %7961 = vmatmul.mubr.bf16.gmra.mxu0 %v7844
        %v7962 = vpop.f32.mrf.mxu0
        %v7963 = vadd.f32 %v7829, %v7962
        %v7964 = vpop.f32.mrf.mxu0
        %v7965 = vadd.f32 %v7833, %v7964
        %v7966 = vpop.f32.mrf.mxu0
        %v7967 = vadd.f32 %v7829, %v7966
        %v7968 = vpop.f32.mrf.mxu0
        %v7969 = vadd.f32 %v7833, %v7968
        %7970 = vmatprep.mubr.bf16.mxu0 0
        %7971 = vmatmul.mubr.bf16.gmra.mxu0 %v7845
        %v7972 = vpop.f32.mrf.mxu0
        %v7973 = vadd.f32 %v7829, %v7972
        %v7974 = vpop.f32.mrf.mxu0
        %v7975 = vadd.f32 %v7833, %v7974
        %v7976 = vpop.f32.mrf.mxu0
        %v7977 = vadd.f32 %v7829, %v7976
        %v7978 = vpop.f32.mrf.mxu0
        %v7979 = vadd.f32 %v7833, %v7978
        %7980 = vdwg.mxu0
        %v7981 = vxor.u32 %v7963, 2147483648
        %v7982 = vxor.u32 %v7967, 2147483648
        %v7983 = vxor.u32 %v7973, 2147483648
        %v7984 = vxor.u32 %v7977, 2147483648
        %v7985 = vmul.f32 %v7981, 1.442695
        %v7986 = vpow.pop %v7985
        %v7987 = vmul.f32 %v7982, 1.442695
        %v7988 = vpow.pop %v7987
        %v7989 = vmul.f32 %v7983, 1.442695
        %v7990 = vpow.pop %v7989
        %v7991 = vmul.f32 %v7984, 1.442695
        %v7992 = vpow.pop %v7991
        %v7993 = vadd.f32 %v7986, 1.0
        %v7994 = vadd.f32 %v7988, 1.0
        %v7995 = vadd.f32 %v7990, 1.0
        %v7996 = vadd.f32 %v7992, 1.0
        %v7997 = vrcp.pop %v7993
        %v7998 = vmul.f32 1.0, %v7997
        %v7999 = vrcp.pop %v7994
        %v8000 = vmul.f32 1.0, %v7999
        %v8001 = vrcp.pop %v7995
        %v8002 = vmul.f32 1.0, %v8001
        %v8003 = vrcp.pop %v7996
        %v8004 = vmul.f32 1.0, %v8003
        %v8005 = vunpack.c.l.bf16 %v7804
        %v8006 = vunpack.c.l.bf16 %v7805
        %v8007 = vunpack.c.l.bf16 %v7806
        %v8008 = vunpack.c.l.bf16 %v7807
        %v8009 = vmul.f32 %v7965, %v7998
        %v8010 = vmul.f32 %v7969, %v8000
        %v8011 = vmul.f32 %v7975, %v8002
        %v8012 = vmul.f32 %v7979, %v8004
        %v8013 = vsub.f32 1.0, %v7998
        %v8014 = vsub.f32 1.0, %v8000
        %v8015 = vsub.f32 1.0, %v8002
        %v8016 = vsub.f32 1.0, %v8004
        %v8017 = vmul.f32 %v8005, %v8013
        %v8018 = vmul.f32 %v8006, %v8014
        %v8019 = vmul.f32 %v8007, %v8015
        %v8020 = vmul.f32 %v8008, %v8016
        %v8021 = vadd.f32 %v8009, %v8017
        %v8022 = vadd.f32 %v8010, %v8018
        %v8023 = vadd.f32 %v8011, %v8019
        %v8024 = vadd.f32 %v8012, %v8020
        %8025 = vst [vmem:[%s1132] sm:$0xff] %v8021
        %8026 = vst [vmem:[%s1132 + $0x8] sm:$0xff] %v8022
        %8027 = vst [vmem:[%s1132 + $0x10] sm:$0xff] %v8023
        %8028 = vst [vmem:[%s1132 + $0x18] sm:$0xff] %v8024
        %s8029 = sand.u32 %s704, 1
        %s8030 = scalar_lea.sflag [#allocation6], %s8029
        %s8031 = sand.u32 %s704, 1
        %s8032 = smul.addr %s8031, 32
        %s8033 = scalar_lea.vmem [#allocation31], %s8032
        // Predicated region
        $region205: #{_lambda_.1} parent=135 // pred_check
          %p8034 = pneg %p714
        $region206: #{_lambda_.1} parent=135 // pred_check_branch
          %8036 = sbr.rel (%p8034) target = $region208
        $region207: #{_lambda_.1} parent=135 // pred_region
          %s8038 = ssub.s32 512, 512
          %8039 = vsyncadd %s8030, %s8038
          %s8040 = smul.addr %s82, 4
          %s8041 = smul.addr %s8040, 128
          %s8042 = scalar_lea.hbm %s59, %s8041
          %s8043 = sshll.u32 %s8033, 4
          %s8044 = int_to_ptr.vmem [resolvable:$true] %s8043
          %8049 = dma.vmem_to_hbm [thread:$0]  %s8044, 512, %s8042, %s8030, 128, 128, 8
        $region208: #{_lambda_.1} parent=135 // pred_fallthru
          _
      $region136: #{_lambda_.1} parent=5 // pred_fallthru
        _
      %p8050 = scmp.le.s32.totalorder 2, %s77
      // Predicated region
      $region209: #{_lambda_.1} parent=5 // pred_check
        %p8051 = pneg %p8050
      $region210: #{_lambda_.1} parent=5 // pred_check_branch
        %8053 = sbr.rel (%p8051) target = $region212
      $region211: #{_lambda_.1} parent=5 // pred_region
        %s8054 = ssub.s32 %s77, 2
        // Predicated region
        $region213: #{_lambda_.1} parent=211 // pred_check
          %p8055 = pneg %p720
        $region214: #{_lambda_.1} parent=211 // pred_check_branch
          %8057 = sbr.rel (%p8055) target = $region216
        $region215: #{_lambda_.1} parent=211 // pred_region
          %s8058 = sand.u32 %s705, 1
          %s8059 = scalar_lea.sflag [#allocation6], %s8058
          %s8060 = sand.u32 %s705, 1
          %s8061 = smul.addr %s8060, 32
          %s8062 = scalar_lea.vmem [#allocation31], %s8061
          %8063 = dma.done %s8059, 512
        $region216: #{_lambda_.1} parent=211 // pred_fallthru
          _
      $region212: #{_lambda_.1} parent=5 // pred_fallthru
        _
    $region6: #{_lambda_.1} parent=1 // loop_footer
      %s81 = sadd.s32 1, %s77
    $region7: #{_lambda_.1} parent=1 // loop_footer_branch
      %76 = sbr.rel target = $region3
    $region8: #{_lambda_.1} parent=1 // loop_exit
      _
    %8064 = vsyncpa [#allocation5], 1
    %s8065 = scalar_lea.sflag [#allocation5], 1
    %8066 = vsyncpa %s8065, 1
    %8067 = vsyncpa [#allocation8], 1
    %8068 = vsyncpa [#allocation11], 1
    %8069 = vsyncpa [#allocation14], 1
    %8070 = vsyncpa [#allocation17], 1
    %8071 = vsyncpa [#allocation20], 1
    %8072 = vsyncpa [#allocation23], 1
    %8073 = vsyncpa [#allocation26], 1
    %8074 = vsyncpa [#allocation29], 1
    %8075 = vsyncpa [#allocation6], 1
    %s8076 = scalar_lea.sflag [#allocation6], 1
    %8077 = vsyncpa %s8076, 1

</llo_original>
